<compile_context>
chip_gen: v5e
topology: v5e:2x2
jax: 0.10.0
libtpu: 0.0.40
codegen_flags: <defaults>
</compile_context>

<pallas_src>
import jax
import jax.numpy as jnp
from jax import lax
from jax.experimental import pallas as pl
from jax.experimental.pallas import tpu as pltpu

# Keep kernel MXU dots and the pure-JAX reference at the same (full f32)
# matmul precision so the correctness check is tight.
jax.config.update("jax_default_matmul_precision", "highest")

_EPS = 1e-3
_N_PIECES = 6  # x1, x2, x3, x4, x5, x6


# --------------------------------------------------------------------------
# Pass 1: per-(n, channel) reduction stats, accumulated over lane tiles.
# --------------------------------------------------------------------------
def _stats_kernel(q_ref, *refs):
    """q_ref: (Lt, 5) f32.  Columns 0..3: adaptive-pool quadrant weights
    (1/count inside the region, 0 outside); column 4: ones (raw spatial sum).

    xs[i]:        (1, Ci, Lt) input tile (channels on sublanes, HW on lanes).
    pool_out[i]:  (1, Ci, 5)  accumulator [avg_tl, avg_tr, avg_bl, avg_br, sum].
    ssq_out[i]:   (1, Ci, 1)  accumulator sum(x*x).
    """
    xs = refs[:_N_PIECES]
    pool_out = refs[_N_PIECES:2 * _N_PIECES]
    ssq_out = refs[2 * _N_PIECES:]

    l = pl.program_id(1)

    @pl.when(l == 0)
    def _init():
        for o in pool_out:
            o[...] = jnp.zeros_like(o)
        for o in ssq_out:
            o[...] = jnp.zeros_like(o)

    q = q_ref[...].astype(jnp.float32)                       # (Lt, 5)
    for x_ref, p_ref, s_ref in zip(xs, pool_out, ssq_out):
        x = x_ref[0].astype(jnp.float32)                     # (Ci, Lt)
        # Pool sums on the MXU; sum-of-squares lane reduce on the XLU so the
        # two reductions overlap on different units.
        p_ref[0] = p_ref[0] + jnp.dot(x, q, preferred_element_type=jnp.float32)
        s_ref[0] = s_ref[0] + jnp.sum(x * x, axis=1, keepdims=True)


# --------------------------------------------------------------------------
# Pass 2: fused (folded BN + PMCA weight) affine -> PReLU -> 1x1 conv.
# --------------------------------------------------------------------------
def _apply_kernel(*refs):
    """out = sum_i W1x1_i @ prelu(scale_i * x_i + bias_i), per lane tile."""
    xs = refs[:_N_PIECES]
    ps = refs[_N_PIECES:2 * _N_PIECES]
    ws = refs[2 * _N_PIECES:3 * _N_PIECES]
    out_ref = refs[3 * _N_PIECES]

    acc = None
    for x_ref, p_ref, w_ref in zip(xs, ps, ws):
        x = x_ref[0].astype(jnp.float32)                     # (Ci, Lt)
        p = p_ref[0].astype(jnp.float32)                     # (Ci, 3)
        scale = p[:, 0:1]
        bias = p[:, 1:2]
        alpha = p[:, 2:3]
        y = x * scale + bias                                 # folded BN (+ SE weight)
        y = jnp.where(y >= 0.0, y, alpha * y)                # per-channel PReLU
        part = jnp.dot(w_ref[...].astype(jnp.float32), y,
                       preferred_element_type=jnp.float32)   # (C_out, Lt)
        acc = part if acc is None else acc + part
    out_ref[0] = acc.astype(out_ref.dtype)


# --------------------------------------------------------------------------
# Small host-side helpers (static-shape, tiny arrays).
# --------------------------------------------------------------------------
def _adaptive_pool_weights(size, out_size=2):
    """(size, out_size): column i is 1/count over PyTorch adaptive region i."""
    idx = jnp.arange(size)
    cols = []
    for i in range(out_size):
        start = (i * size) // out_size
        end = -((-(i + 1) * size) // out_size)               # ceil
        mask = (idx >= start) & (idx < end)
        cols.append(mask.astype(jnp.float32) / float(end - start))
    return jnp.stack(cols, axis=1)


def _pool_matrix(H, W):
    rh = _adaptive_pool_weights(H)                           # (H, 2)
    rw = _adaptive_pool_weights(W)                           # (W, 2)
    # Column order (h_out*2 + w_out) = [tl, tr, bl, br]; row index = h*W + w,
    # matching the lane flattening of x.reshape(N, C, H*W).
    quad = (rh[:, None, :, None] * rw[None, :, None, :]).reshape(H * W, 4)
    ones = jnp.ones((H * W, 1), jnp.float32)
    return jnp.concatenate([quad, ones], axis=1)             # (HW, 5)


def _pick_tile(hw, cap=2048):
    """Largest multiple of 128 that divides hw (<= cap); else the full extent."""
    best = 0
    t = 128
    while t <= min(hw, cap):
        if hw % t == 0:
            best = t
        t += 128
    return best if best > 0 else hw


# --------------------------------------------------------------------------
# FFM_B2 forward.
# --------------------------------------------------------------------------
def ffm_b2(xs, w_conv2x2, w_fc1, w_fc2, alpha_se, gamma, beta, alpha_bn, w1x1,
           *, eps=_EPS):
    """xs: tuple (x1..x6), each (N, Ci, H, W); channel-concat order [x1,x2,x3..x6].
    w_conv2x2: (Cp,1,2,2) depthwise conv; w_fc1: (Cp//r, Cp); w_fc2: (Cp, Cp//r);
    alpha_se: scalar; gamma/beta/alpha_bn: (C_in,); w1x1: (C_out, C_in)."""
    assert len(xs) == _N_PIECES
    N, _, H, W = xs[0].shape
    Cs = [int(x.shape[1]) for x in xs]
    c12 = Cs[0] + Cs[1]
    Cp = sum(Cs[2:])
    C_in = c12 + Cp
    C_out = int(w1x1.shape[0])
    HW = H * W
    Lt = _pick_tile(HW)
    n_l = HW // Lt

    # Free reshapes only (no transposes): NCHW -> (N, C, H*W).
    xf = [x.reshape(N, c, HW) for x, c in zip(xs, Cs)]
    q = _pool_matrix(H, W)

    # ---------------- Pass 1: reductions ----------------
    pool_shapes = tuple(jax.ShapeDtypeStruct((N, c, 5), jnp.float32) for c in Cs)
    ssq_shapes = tuple(jax.ShapeDtypeStruct((N, c, 1), jnp.float32) for c in Cs)
    in_specs = [pl.BlockSpec((Lt, 5), lambda n, l: (l, 0))]
    in_specs += [pl.BlockSpec((1, c, Lt), lambda n, l: (n, 0, l)) for c in Cs]
    out_specs = [pl.BlockSpec((1, c, 5), lambda n, l: (n, 0, 0)) for c in Cs]
    out_specs += [pl.BlockSpec((1, c, 1), lambda n, l: (n, 0, 0)) for c in Cs]

    stats = pl.pallas_call(
        _stats_kernel,
        out_shape=pool_shapes + ssq_shapes,
        grid_spec=pltpu.PrefetchScalarGridSpec(
            num_scalar_prefetch=0,
            grid=(N, n_l),                                   # reduce axis last
            in_specs=in_specs,
            out_specs=out_specs,
        ),
        compiler_params=pltpu.CompilerParams(
            dimension_semantics=("parallel", "arbitrary")),
    )(q, *xf)
    pool_stats = stats[:_N_PIECES]
    ssq_stats = stats[_N_PIECES:]

    # ------------- Tiny finalize (PMCA head + SE + BN folding) -------------
    # TODO(synk): this glue (depthwise 2x2 conv, SE MLP, BN-stat folding) is
    # O(N*C) scalar work and is intentionally done in plain JAX between passes.
    pooled = jnp.concatenate([s[:, :, 0:4] for s in pool_stats[2:]], axis=1)
    sum_p = jnp.concatenate([s[:, :, 4] for s in pool_stats[2:]], axis=1)
    ssq_p = jnp.concatenate([s[:, :, 0] for s in ssq_stats[2:]], axis=1)
    sum_12 = jnp.concatenate([pool_stats[0][:, :, 4], pool_stats[1][:, :, 4]], axis=1)
    ssq_12 = jnp.concatenate([ssq_stats[0][:, :, 0], ssq_stats[1][:, :, 0]], axis=1)

    w22 = w_conv2x2.reshape(Cp, 4).astype(jnp.float32)
    o1 = jnp.sum(pooled * w22[None, :, :], axis=-1)          # depthwise 2x2 conv
    o2 = sum_p / float(HW)                                   # global avg pool
    osum = o1 + o2
    h = osum @ w_fc1.T
    h = jnp.where(h >= 0.0, h, alpha_se * h)                 # SE PReLU (shared)
    wgt = jax.nn.sigmoid(h @ w_fc2.T)                        # (N, Cp)

    cnt = float(N * HW)
    mean = jnp.concatenate([jnp.sum(sum_12, axis=0),
                            jnp.sum(wgt * sum_p, axis=0)]) / cnt
    ex2 = jnp.concatenate([jnp.sum(ssq_12, axis=0),
                           jnp.sum(wgt * wgt * ssq_p, axis=0)]) / cnt
    var = jnp.maximum(ex2 - mean * mean, 0.0)                # biased var, guarded
    bn_scale = gamma * lax.rsqrt(var + eps)
    bn_bias = beta - mean * bn_scale

    scale_nc = jnp.concatenate(
        [jnp.broadcast_to(bn_scale[None, :c12], (N, c12)),
         wgt * bn_scale[None, c12:]], axis=1)                # (N, C_in)
    bias_nc = jnp.broadcast_to(bn_bias[None, :], (N, C_in))
    alpha_nc = jnp.broadcast_to(alpha_bn.astype(jnp.float32)[None, :], (N, C_in))
    params = jnp.stack([scale_nc, bias_nc, alpha_nc], axis=-1)  # (N, C_in, 3)

    offs = [0]
    for c in Cs:
        offs.append(offs[-1] + c)
    params_pieces = [params[:, offs[i]:offs[i + 1], :] for i in range(_N_PIECES)]
    w_pieces = [w1x1[:, offs[i]:offs[i + 1]].astype(jnp.float32)
                for i in range(_N_PIECES)]

    # ---------------- Pass 2: fused BN+PReLU+1x1 conv ----------------
    in_specs2 = [pl.BlockSpec((1, c, Lt), lambda n, l: (n, 0, l)) for c in Cs]
    in_specs2 += [pl.BlockSpec((1, c, 3), lambda n, l: (n, 0, 0)) for c in Cs]
    in_specs2 += [pl.BlockSpec((C_out, c), lambda n, l: (0, 0)) for c in Cs]

    out = pl.pallas_call(
        _apply_kernel,
        out_shape=jax.ShapeDtypeStruct((N, C_out, HW), xs[0].dtype),
        grid_spec=pltpu.PrefetchScalarGridSpec(
            num_scalar_prefetch=0,
            grid=(N, n_l),
            in_specs=in_specs2,
            out_specs=pl.BlockSpec((1, C_out, Lt), lambda n, l: (n, 0, l)),
        ),
        compiler_params=pltpu.CompilerParams(
            dimension_semantics=("parallel", "parallel")),
    )(*xf, *params_pieces, *w_pieces)

    return out.reshape(N, C_out, H, W)


# --------------------------------------------------------------------------
# Pure-JAX reference (mirrors the PyTorch forward, training-mode BN).
# --------------------------------------------------------------------------
def ffm_b2_reference(xs, w_conv2x2, w_fc1, w_fc2, alpha_se, gamma, beta,
                     alpha_bn, w1x1, *, eps=_EPS):
    x1, x2 = xs[0], xs[1]
    xp = jnp.concatenate(xs[2:], axis=1)
    N, Cp, H, W = xp.shape
    pool = xp.reshape(N, Cp, 2, H // 2, 2, W // 2).mean(axis=(3, 5))
    o1 = jnp.sum(pool * w_conv2x2.reshape(1, Cp, 2, 2), axis=(2, 3), keepdims=True)
    o2 = jnp.mean(xp, axis=(2, 3), keepdims=True)
    osum = (o1 + o2).reshape(N, Cp)
    h = osum @ w_fc1.T
    h = jnp.where(h >= 0.0, h, alpha_se * h)
    wgt = jax.nn.sigmoid(h @ w_fc2.T).reshape(N, Cp, 1, 1)
    y = jnp.concatenate([x1, x2, wgt * xp], axis=1)
    mean = jnp.mean(y, axis=(0, 2, 3), keepdims=True)
    var = jnp.mean((y - mean) ** 2, axis=(0, 2, 3), keepdims=True)
    yn = (y - mean) * lax.rsqrt(var + eps)
    yn = yn * gamma.reshape(1, -1, 1, 1) + beta.reshape(1, -1, 1, 1)
    yn = jnp.where(yn >= 0.0, yn, alpha_bn.reshape(1, -1, 1, 1) * yn)
    return jnp.einsum("oc,nchw->nohw", w1x1, yn)


if __name__ == "__main__":
    key = jax.random.PRNGKey(0)
    N, H, W = 2, 16, 16
    Cs = [4, 4, 4, 4, 4, 4]          # channels of x1, x2, x3..x6
    Cp = sum(Cs[2:])                 # 16 (PMCA channels)
    C_in = sum(Cs)                   # 24
    C_out = 32
    red = 8

    keys = jax.random.split(key, 12)
    xs = tuple(jax.random.normal(keys[i], (N, Cs[i], H, W), jnp.float32)
               for i in range(6))
    w_conv2x2 = 0.5 * jax.random.normal(keys[6], (Cp, 1, 2, 2), jnp.float32)
    w_fc1 = 0.5 * jax.random.normal(keys[7], (Cp // red, Cp), jnp.float32)
    w_fc2 = 0.5 * jax.random.normal(keys[8], (Cp, Cp // red), jnp.float32)
    alpha_se = jnp.float32(0.25)                        # nn.PReLU() default
    gamma = 1.0 + 0.1 * jax.random.normal(keys[9], (C_in,), jnp.float32)
    beta = 0.1 * jax.random.normal(keys[10], (C_in,), jnp.float32)
    alpha_bn = jnp.full((C_in,), 0.25, jnp.float32)     # nn.PReLU(nIn) default
    w1x1 = 0.2 * jax.random.normal(keys[11], (C_out, C_in), jnp.float32)

    out = jax.jit(ffm_b2)(xs, w_conv2x2, w_fc1, w_fc2, alpha_se, gamma, beta,
                          alpha_bn, w1x1)
    jax.block_until_ready(out)

    ref = ffm_b2_reference(xs, w_conv2x2, w_fc1, w_fc2, alpha_se, gamma, beta,
                           alpha_bn, w1x1)
    assert out.shape == (N, C_out, H, W)
    assert jnp.allclose(out, ref, atol=1e-4, rtol=1e-4), (
        "mismatch vs reference: max abs err = "
        f"{float(jnp.max(jnp.abs(out - ref)))}")
    print("KERNEL_OK")
</pallas_src>

<mosaic_0001>
module attributes {stable_mosaic.version = 11 : i64} {
  func.func @_stats_kernel(%arg0: i32, %arg1: i32, %arg2: memref<256x5xf32, #tpu.memory_space<vmem>>, %arg3: memref<1x4x256xf32, #tpu.memory_space<vmem>>, %arg4: memref<1x4x256xf32, #tpu.memory_space<vmem>>, %arg5: memref<1x4x256xf32, #tpu.memory_space<vmem>>, %arg6: memref<1x4x256xf32, #tpu.memory_space<vmem>>, %arg7: memref<1x4x256xf32, #tpu.memory_space<vmem>>, %arg8: memref<1x4x256xf32, #tpu.memory_space<vmem>>, %arg9: memref<1x4x5xf32, #tpu.memory_space<vmem>>, %arg10: memref<1x4x5xf32, #tpu.memory_space<vmem>>, %arg11: memref<1x4x5xf32, #tpu.memory_space<vmem>>, %arg12: memref<1x4x5xf32, #tpu.memory_space<vmem>>, %arg13: memref<1x4x5xf32, #tpu.memory_space<vmem>>, %arg14: memref<1x4x5xf32, #tpu.memory_space<vmem>>, %arg15: memref<1x4x1xf32, #tpu.memory_space<vmem>>, %arg16: memref<1x4x1xf32, #tpu.memory_space<vmem>>, %arg17: memref<1x4x1xf32, #tpu.memory_space<vmem>>, %arg18: memref<1x4x1xf32, #tpu.memory_space<vmem>>, %arg19: memref<1x4x1xf32, #tpu.memory_space<vmem>>, %arg20: memref<1x4x1xf32, #tpu.memory_space<vmem>>) attributes {dimension_semantics = [#tpu.dimension_semantics<parallel>, #tpu.dimension_semantics<arbitrary>], iteration_bounds = array<i64: 2, 1>, scalar_prefetch = 0 : i64, scratch_operands = 0 : i64, tpu.core_type = #tpu.core_type<tc>, window_params = [{transform_indices = @transform_0, window_bounds = array<i64: 256, 5>}, {transform_indices = @transform_1, window_bounds = array<i64: 1, 4, 256>}, {transform_indices = @transform_2, window_bounds = array<i64: 1, 4, 256>}, {transform_indices = @transform_3, window_bounds = array<i64: 1, 4, 256>}, {transform_indices = @transform_4, window_bounds = array<i64: 1, 4, 256>}, {transform_indices = @transform_5, window_bounds = array<i64: 1, 4, 256>}, {transform_indices = @transform_6, window_bounds = array<i64: 1, 4, 256>}, {transform_indices = @transform_7, window_bounds = array<i64: 1, 4, 5>}, {transform_indices = @transform_8, window_bounds = array<i64: 1, 4, 5>}, {transform_indices = @transform_9, window_bounds = array<i64: 1, 4, 5>}, {transform_indices = @transform_10, window_bounds = array<i64: 1, 4, 5>}, {transform_indices = @transform_11, window_bounds = array<i64: 1, 4, 5>}, {transform_indices = @transform_12, window_bounds = array<i64: 1, 4, 5>}, {transform_indices = @transform_13, window_bounds = array<i64: 1, 4, 1>}, {transform_indices = @transform_14, window_bounds = array<i64: 1, 4, 1>}, {transform_indices = @transform_15, window_bounds = array<i64: 1, 4, 1>}, {transform_indices = @transform_16, window_bounds = array<i64: 1, 4, 1>}, {transform_indices = @transform_17, window_bounds = array<i64: 1, 4, 1>}, {transform_indices = @transform_18, window_bounds = array<i64: 1, 4, 1>}]} {
    %c0_i32 = arith.constant 0 : i32
    %0 = arith.cmpi eq, %arg1, %c0_i32 : i32
    %1 = arith.extui %0 : i1 to i32
    %c0_i32_0 = arith.constant 0 : i32
    %2 = arith.cmpi ne, %1, %c0_i32_0 : i32
    scf.if %2 {
      %cst_103 = arith.constant 0.000000e+00 : f32
      %112 = vector.broadcast %cst_103 : f32 to vector<1x4x5xf32>
      %c0_104 = arith.constant 0 : index
      %c0_105 = arith.constant 0 : index
      %c0_106 = arith.constant 0 : index
      %113 = vector.load %arg9[%c0_104, %c0_105, %c0_106] : memref<1x4x5xf32, #tpu.memory_space<vmem>>, vector<1x4x5xf32>
      tpu.vector_store %arg9[%c0_104, %c0_105, %c0_106], %112 {strides = array<i32>} : memref<1x4x5xf32, #tpu.memory_space<vmem>>, vector<1x4x5xf32>,
      %cst_107 = arith.constant 0.000000e+00 : f32
      %114 = vector.broadcast %cst_107 : f32 to vector<1x4x5xf32>
      %c0_108 = arith.constant 0 : index
      %c0_109 = arith.constant 0 : index
      %c0_110 = arith.constant 0 : index
      %115 = vector.load %arg10[%c0_108, %c0_109, %c0_110] : memref<1x4x5xf32, #tpu.memory_space<vmem>>, vector<1x4x5xf32>
      tpu.vector_store %arg10[%c0_108, %c0_109, %c0_110], %114 {strides = array<i32>} : memref<1x4x5xf32, #tpu.memory_space<vmem>>, vector<1x4x5xf32>,
      %cst_111 = arith.constant 0.000000e+00 : f32
      %116 = vector.broadcast %cst_111 : f32 to vector<1x4x5xf32>
      %c0_112 = arith.constant 0 : index
      %c0_113 = arith.constant 0 : index
      %c0_114 = arith.constant 0 : index
      %117 = vector.load %arg11[%c0_112, %c0_113, %c0_114] : memref<1x4x5xf32, #tpu.memory_space<vmem>>, vector<1x4x5xf32>
      tpu.vector_store %arg11[%c0_112, %c0_113, %c0_114], %116 {strides = array<i32>} : memref<1x4x5xf32, #tpu.memory_space<vmem>>, vector<1x4x5xf32>,
      %cst_115 = arith.constant 0.000000e+00 : f32
      %118 = vector.broadcast %cst_115 : f32 to vector<1x4x5xf32>
      %c0_116 = arith.constant 0 : index
      %c0_117 = arith.constant 0 : index
      %c0_118 = arith.constant 0 : index
      %119 = vector.load %arg12[%c0_116, %c0_117, %c0_118] : memref<1x4x5xf32, #tpu.memory_space<vmem>>, vector<1x4x5xf32>
      tpu.vector_store %arg12[%c0_116, %c0_117, %c0_118], %118 {strides = array<i32>} : memref<1x4x5xf32, #tpu.memory_space<vmem>>, vector<1x4x5xf32>,
      %cst_119 = arith.constant 0.000000e+00 : f32
      %120 = vector.broadcast %cst_119 : f32 to vector<1x4x5xf32>
      %c0_120 = arith.constant 0 : index
      %c0_121 = arith.constant 0 : index
      %c0_122 = arith.constant 0 : index
      %121 = vector.load %arg13[%c0_120, %c0_121, %c0_122] : memref<1x4x5xf32, #tpu.memory_space<vmem>>, vector<1x4x5xf32>
      tpu.vector_store %arg13[%c0_120, %c0_121, %c0_122], %120 {strides = array<i32>} : memref<1x4x5xf32, #tpu.memory_space<vmem>>, vector<1x4x5xf32>,
      %cst_123 = arith.constant 0.000000e+00 : f32
      %122 = vector.broadcast %cst_123 : f32 to vector<1x4x5xf32>
      %c0_124 = arith.constant 0 : index
      %c0_125 = arith.constant 0 : index
      %c0_126 = arith.constant 0 : index
      %123 = vector.load %arg14[%c0_124, %c0_125, %c0_126] : memref<1x4x5xf32, #tpu.memory_space<vmem>>, vector<1x4x5xf32>
      tpu.vector_store %arg14[%c0_124, %c0_125, %c0_126], %122 {strides = array<i32>} : memref<1x4x5xf32, #tpu.memory_space<vmem>>, vector<1x4x5xf32>,
      %cst_127 = arith.constant 0.000000e+00 : f32
      %124 = vector.broadcast %cst_127 : f32 to vector<1x4x1xf32>
      %c0_128 = arith.constant 0 : index
      %c0_129 = arith.constant 0 : index
      %c0_130 = arith.constant 0 : index
      %125 = vector.load %arg15[%c0_128, %c0_129, %c0_130] : memref<1x4x1xf32, #tpu.memory_space<vmem>>, vector<1x4x1xf32>
      tpu.vector_store %arg15[%c0_128, %c0_129, %c0_130], %124 {strides = array<i32>} : memref<1x4x1xf32, #tpu.memory_space<vmem>>, vector<1x4x1xf32>,
      %cst_131 = arith.constant 0.000000e+00 : f32
      %126 = vector.broadcast %cst_131 : f32 to vector<1x4x1xf32>
      %c0_132 = arith.constant 0 : index
      %c0_133 = arith.constant 0 : index
      %c0_134 = arith.constant 0 : index
      %127 = vector.load %arg16[%c0_132, %c0_133, %c0_134] : memref<1x4x1xf32, #tpu.memory_space<vmem>>, vector<1x4x1xf32>
      tpu.vector_store %arg16[%c0_132, %c0_133, %c0_134], %126 {strides = array<i32>} : memref<1x4x1xf32, #tpu.memory_space<vmem>>, vector<1x4x1xf32>,
      %cst_135 = arith.constant 0.000000e+00 : f32
      %128 = vector.broadcast %cst_135 : f32 to vector<1x4x1xf32>
      %c0_136 = arith.constant 0 : index
      %c0_137 = arith.constant 0 : index
      %c0_138 = arith.constant 0 : index
      %129 = vector.load %arg17[%c0_136, %c0_137, %c0_138] : memref<1x4x1xf32, #tpu.memory_space<vmem>>, vector<1x4x1xf32>
      tpu.vector_store %arg17[%c0_136, %c0_137, %c0_138], %128 {strides = array<i32>} : memref<1x4x1xf32, #tpu.memory_space<vmem>>, vector<1x4x1xf32>,
      %cst_139 = arith.constant 0.000000e+00 : f32
      %130 = vector.broadcast %cst_139 : f32 to vector<1x4x1xf32>
      %c0_140 = arith.constant 0 : index
      %c0_141 = arith.constant 0 : index
      %c0_142 = arith.constant 0 : index
      %131 = vector.load %arg18[%c0_140, %c0_141, %c0_142] : memref<1x4x1xf32, #tpu.memory_space<vmem>>, vector<1x4x1xf32>
      tpu.vector_store %arg18[%c0_140, %c0_141, %c0_142], %130 {strides = array<i32>} : memref<1x4x1xf32, #tpu.memory_space<vmem>>, vector<1x4x1xf32>,
      %cst_143 = arith.constant 0.000000e+00 : f32
      %132 = vector.broadcast %cst_143 : f32 to vector<1x4x1xf32>
      %c0_144 = arith.constant 0 : index
      %c0_145 = arith.constant 0 : index
      %c0_146 = arith.constant 0 : index
      %133 = vector.load %arg19[%c0_144, %c0_145, %c0_146] : memref<1x4x1xf32, #tpu.memory_space<vmem>>, vector<1x4x1xf32>
      tpu.vector_store %arg19[%c0_144, %c0_145, %c0_146], %132 {strides = array<i32>} : memref<1x4x1xf32, #tpu.memory_space<vmem>>, vector<1x4x1xf32>,
      %cst_147 = arith.constant 0.000000e+00 : f32
      %134 = vector.broadcast %cst_147 : f32 to vector<1x4x1xf32>
      %c0_148 = arith.constant 0 : index
      %c0_149 = arith.constant 0 : index
      %c0_150 = arith.constant 0 : index
      %135 = vector.load %arg20[%c0_148, %c0_149, %c0_150] : memref<1x4x1xf32, #tpu.memory_space<vmem>>, vector<1x4x1xf32>
      tpu.vector_store %arg20[%c0_148, %c0_149, %c0_150], %134 {strides = array<i32>} : memref<1x4x1xf32, #tpu.memory_space<vmem>>, vector<1x4x1xf32>,
    } else {
    }
    %c0 = arith.constant 0 : index
    %c0_1 = arith.constant 0 : index
    %3 = vector.load %arg2[%c0, %c0_1] : memref<256x5xf32, #tpu.memory_space<vmem>>, vector<256x5xf32>
    %c0_2 = arith.constant 0 : index
    %c0_3 = arith.constant 0 : index
    %c0_4 = arith.constant 0 : index
    %4 = vector.load %arg3[%c0_2, %c0_3, %c0_4] : memref<1x4x256xf32, #tpu.memory_space<vmem>>, vector<1x4x256xf32>
    %5 = vector.shape_cast %4 : vector<1x4x256xf32> to vector<4x256xf32>
    %c0_5 = arith.constant 0 : index
    %c0_6 = arith.constant 0 : index
    %c0_7 = arith.constant 0 : index
    %6 = vector.load %arg9[%c0_5, %c0_6, %c0_7] : memref<1x4x5xf32, #tpu.memory_space<vmem>>, vector<1x4x5xf32>
    %7 = vector.shape_cast %6 : vector<1x4x5xf32> to vector<4x5xf32>
    %cst = arith.constant dense<0.000000e+00> : vector<4x5xf32>
    %8 = tpu.matmul %5, %3, %cst {dimension_numbers = #tpu.dot_dimension_numbers<[1], [0], [0], [1], [0, 0, 1, 1], [], []>, precision = #tpu.contract_precision<fp32>} : vector<4x256xf32>, vector<256x5xf32>, vector<4x5xf32> -> vector<4x5xf32>
    %9 = arith.addf %7, %8 : vector<4x5xf32>
    %c0_8 = arith.constant 0 : index
    %c0_9 = arith.constant 0 : index
    %c0_10 = arith.constant 0 : index
    %10 = vector.load %arg9[%c0_8, %c0_9, %c0_10] : memref<1x4x5xf32, #tpu.memory_space<vmem>>, vector<1x4x5xf32>
    %11 = vector.shape_cast %10 : vector<1x4x5xf32> to vector<4x5xf32>
    %12 = vector.shape_cast %9 : vector<4x5xf32> to vector<1x4x5xf32>
    tpu.vector_store %arg9[%c0_8, %c0_9, %c0_10], %12 {strides = array<i32>} : memref<1x4x5xf32, #tpu.memory_space<vmem>>, vector<1x4x5xf32>,
    %c0_11 = arith.constant 0 : index
    %c0_12 = arith.constant 0 : index
    %c0_13 = arith.constant 0 : index
    %13 = vector.load %arg15[%c0_11, %c0_12, %c0_13] : memref<1x4x1xf32, #tpu.memory_space<vmem>>, vector<1x4x1xf32>
    %14 = vector.shape_cast %13 : vector<1x4x1xf32> to vector<4x1xf32>
    %15 = arith.mulf %5, %5 : vector<4x256xf32>
    %cst_14 = arith.constant dense<0.000000e+00> : vector<4xf32>
    %16 = vector.multi_reduction <add>, %15, %cst_14 [1] : vector<4x256xf32> to vector<4xf32>
    %17 = vector.shape_cast %16 : vector<4xf32> to vector<4x1xf32>
    %18 = arith.addf %14, %17 : vector<4x1xf32>
    %c0_15 = arith.constant 0 : index
    %c0_16 = arith.constant 0 : index
    %c0_17 = arith.constant 0 : index
    %19 = vector.load %arg15[%c0_15, %c0_16, %c0_17] : memref<1x4x1xf32, #tpu.memory_space<vmem>>, vector<1x4x1xf32>
    %20 = vector.shape_cast %19 : vector<1x4x1xf32> to vector<4x1xf32>
    %21 = vector.shape_cast %18 : vector<4x1xf32> to vector<1x4x1xf32>
    tpu.vector_store %arg15[%c0_15, %c0_16, %c0_17], %21 {strides = array<i32>} : memref<1x4x1xf32, #tpu.memory_space<vmem>>, vector<1x4x1xf32>,
    %c0_18 = arith.constant 0 : index
    %c0_19 = arith.constant 0 : index
    %c0_20 = arith.constant 0 : index
    %22 = vector.load %arg4[%c0_18, %c0_19, %c0_20] : memref<1x4x256xf32, #tpu.memory_space<vmem>>, vector<1x4x256xf32>
    %23 = vector.shape_cast %22 : vector<1x4x256xf32> to vector<4x256xf32>
    %c0_21 = arith.constant 0 : index
    %c0_22 = arith.constant 0 : index
    %c0_23 = arith.constant 0 : index
    %24 = vector.load %arg10[%c0_21, %c0_22, %c0_23] : memref<1x4x5xf32, #tpu.memory_space<vmem>>, vector<1x4x5xf32>
    %25 = vector.shape_cast %24 : vector<1x4x5xf32> to vector<4x5xf32>
    %cst_24 = arith.constant dense<0.000000e+00> : vector<4x5xf32>
    %26 = tpu.matmul %23, %3, %cst_24 {dimension_numbers = #tpu.dot_dimension_numbers<[1], [0], [0], [1], [0, 0, 1, 1], [], []>, precision = #tpu.contract_precision<fp32>} : vector<4x256xf32>, vector<256x5xf32>, vector<4x5xf32> -> vector<4x5xf32>
    %27 = arith.addf %25, %26 : vector<4x5xf32>
    %c0_25 = arith.constant 0 : index
    %c0_26 = arith.constant 0 : index
    %c0_27 = arith.constant 0 : index
    %28 = vector.load %arg10[%c0_25, %c0_26, %c0_27] : memref<1x4x5xf32, #tpu.memory_space<vmem>>, vector<1x4x5xf32>
    %29 = vector.shape_cast %28 : vector<1x4x5xf32> to vector<4x5xf32>
    %30 = vector.shape_cast %27 : vector<4x5xf32> to vector<1x4x5xf32>
    tpu.vector_store %arg10[%c0_25, %c0_26, %c0_27], %30 {strides = array<i32>} : memref<1x4x5xf32, #tpu.memory_space<vmem>>, vector<1x4x5xf32>,
    %c0_28 = arith.constant 0 : index
    %c0_29 = arith.constant 0 : index
    %c0_30 = arith.constant 0 : index
    %31 = vector.load %arg16[%c0_28, %c0_29, %c0_30] : memref<1x4x1xf32, #tpu.memory_space<vmem>>, vector<1x4x1xf32>
    %32 = vector.shape_cast %31 : vector<1x4x1xf32> to vector<4x1xf32>
    %33 = arith.mulf %23, %23 : vector<4x256xf32>
    %cst_31 = arith.constant dense<0.000000e+00> : vector<4xf32>
    %34 = vector.multi_reduction <add>, %33, %cst_31 [1] : vector<4x256xf32> to vector<4xf32>
    %35 = vector.shape_cast %34 : vector<4xf32> to vector<4x1xf32>
    %36 = arith.addf %32, %35 : vector<4x1xf32>
    %c0_32 = arith.constant 0 : index
    %c0_33 = arith.constant 0 : index
    %c0_34 = arith.constant 0 : index
    %37 = vector.load %arg16[%c0_32, %c0_33, %c0_34] : memref<1x4x1xf32, #tpu.memory_space<vmem>>, vector<1x4x1xf32>
    %38 = vector.shape_cast %37 : vector<1x4x1xf32> to vector<4x1xf32>
    %39 = vector.shape_cast %36 : vector<4x1xf32> to vector<1x4x1xf32>
    tpu.vector_store %arg16[%c0_32, %c0_33, %c0_34], %39 {strides = array<i32>} : memref<1x4x1xf32, #tpu.memory_space<vmem>>, vector<1x4x1xf32>,
    %c0_35 = arith.constant 0 : index
    %c0_36 = arith.constant 0 : index
    %c0_37 = arith.constant 0 : index
    %40 = vector.load %arg5[%c0_35, %c0_36, %c0_37] : memref<1x4x256xf32, #tpu.memory_space<vmem>>, vector<1x4x256xf32>
    %41 = vector.shape_cast %40 : vector<1x4x256xf32> to vector<4x256xf32>
    %c0_38 = arith.constant 0 : index
    %c0_39 = arith.constant 0 : index
    %c0_40 = arith.constant 0 : index
    %42 = vector.load %arg11[%c0_38, %c0_39, %c0_40] : memref<1x4x5xf32, #tpu.memory_space<vmem>>, vector<1x4x5xf32>
    %43 = vector.shape_cast %42 : vector<1x4x5xf32> to vector<4x5xf32>
    %cst_41 = arith.constant dense<0.000000e+00> : vector<4x5xf32>
    %44 = tpu.matmul %41, %3, %cst_41 {dimension_numbers = #tpu.dot_dimension_numbers<[1], [0], [0], [1], [0, 0, 1, 1], [], []>, precision = #tpu.contract_precision<fp32>} : vector<4x256xf32>, vector<256x5xf32>, vector<4x5xf32> -> vector<4x5xf32>
    %45 = arith.addf %43, %44 : vector<4x5xf32>
    %c0_42 = arith.constant 0 : index
    %c0_43 = arith.constant 0 : index
    %c0_44 = arith.constant 0 : index
    %46 = vector.load %arg11[%c0_42, %c0_43, %c0_44] : memref<1x4x5xf32, #tpu.memory_space<vmem>>, vector<1x4x5xf32>
    %47 = vector.shape_cast %46 : vector<1x4x5xf32> to vector<4x5xf32>
    %48 = vector.shape_cast %45 : vector<4x5xf32> to vector<1x4x5xf32>
    tpu.vector_store %arg11[%c0_42, %c0_43, %c0_44], %48 {strides = array<i32>} : memref<1x4x5xf32, #tpu.memory_space<vmem>>, vector<1x4x5xf32>,
    %c0_45 = arith.constant 0 : index
    %c0_46 = arith.constant 0 : index
    %c0_47 = arith.constant 0 : index
    %49 = vector.load %arg17[%c0_45, %c0_46, %c0_47] : memref<1x4x1xf32, #tpu.memory_space<vmem>>, vector<1x4x1xf32>
    %50 = vector.shape_cast %49 : vector<1x4x1xf32> to vector<4x1xf32>
    %51 = arith.mulf %41, %41 : vector<4x256xf32>
    %cst_48 = arith.constant dense<0.000000e+00> : vector<4xf32>
    %52 = vector.multi_reduction <add>, %51, %cst_48 [1] : vector<4x256xf32> to vector<4xf32>
    %53 = vector.shape_cast %52 : vector<4xf32> to vector<4x1xf32>
    %54 = arith.addf %50, %53 : vector<4x1xf32>
    %c0_49 = arith.constant 0 : index
    %c0_50 = arith.constant 0 : index
    %c0_51 = arith.constant 0 : index
    %55 = vector.load %arg17[%c0_49, %c0_50, %c0_51] : memref<1x4x1xf32, #tpu.memory_space<vmem>>, vector<1x4x1xf32>
    %56 = vector.shape_cast %55 : vector<1x4x1xf32> to vector<4x1xf32>
    %57 = vector.shape_cast %54 : vector<4x1xf32> to vector<1x4x1xf32>
    tpu.vector_store %arg17[%c0_49, %c0_50, %c0_51], %57 {strides = array<i32>} : memref<1x4x1xf32, #tpu.memory_space<vmem>>, vector<1x4x1xf32>,
    %c0_52 = arith.constant 0 : index
    %c0_53 = arith.constant 0 : index
    %c0_54 = arith.constant 0 : index
    %58 = vector.load %arg6[%c0_52, %c0_53, %c0_54] : memref<1x4x256xf32, #tpu.memory_space<vmem>>, vector<1x4x256xf32>
    %59 = vector.shape_cast %58 : vector<1x4x256xf32> to vector<4x256xf32>
    %c0_55 = arith.constant 0 : index
    %c0_56 = arith.constant 0 : index
    %c0_57 = arith.constant 0 : index
    %60 = vector.load %arg12[%c0_55, %c0_56, %c0_57] : memref<1x4x5xf32, #tpu.memory_space<vmem>>, vector<1x4x5xf32>
    %61 = vector.shape_cast %60 : vector<1x4x5xf32> to vector<4x5xf32>
    %cst_58 = arith.constant dense<0.000000e+00> : vector<4x5xf32>
    %62 = tpu.matmul %59, %3, %cst_58 {dimension_numbers = #tpu.dot_dimension_numbers<[1], [0], [0], [1], [0, 0, 1, 1], [], []>, precision = #tpu.contract_precision<fp32>} : vector<4x256xf32>, vector<256x5xf32>, vector<4x5xf32> -> vector<4x5xf32>
    %63 = arith.addf %61, %62 : vector<4x5xf32>
    %c0_59 = arith.constant 0 : index
    %c0_60 = arith.constant 0 : index
    %c0_61 = arith.constant 0 : index
    %64 = vector.load %arg12[%c0_59, %c0_60, %c0_61] : memref<1x4x5xf32, #tpu.memory_space<vmem>>, vector<1x4x5xf32>
    %65 = vector.shape_cast %64 : vector<1x4x5xf32> to vector<4x5xf32>
    %66 = vector.shape_cast %63 : vector<4x5xf32> to vector<1x4x5xf32>
    tpu.vector_store %arg12[%c0_59, %c0_60, %c0_61], %66 {strides = array<i32>} : memref<1x4x5xf32, #tpu.memory_space<vmem>>, vector<1x4x5xf32>,
    %c0_62 = arith.constant 0 : index
    %c0_63 = arith.constant 0 : index
    %c0_64 = arith.constant 0 : index
    %67 = vector.load %arg18[%c0_62, %c0_63, %c0_64] : memref<1x4x1xf32, #tpu.memory_space<vmem>>, vector<1x4x1xf32>
    %68 = vector.shape_cast %67 : vector<1x4x1xf32> to vector<4x1xf32>
    %69 = arith.mulf %59, %59 : vector<4x256xf32>
    %cst_65 = arith.constant dense<0.000000e+00> : vector<4xf32>
    %70 = vector.multi_reduction <add>, %69, %cst_65 [1] : vector<4x256xf32> to vector<4xf32>
    %71 = vector.shape_cast %70 : vector<4xf32> to vector<4x1xf32>
    %72 = arith.addf %68, %71 : vector<4x1xf32>
    %c0_66 = arith.constant 0 : index
    %c0_67 = arith.constant 0 : index
    %c0_68 = arith.constant 0 : index
    %73 = vector.load %arg18[%c0_66, %c0_67, %c0_68] : memref<1x4x1xf32, #tpu.memory_space<vmem>>, vector<1x4x1xf32>
    %74 = vector.shape_cast %73 : vector<1x4x1xf32> to vector<4x1xf32>
    %75 = vector.shape_cast %72 : vector<4x1xf32> to vector<1x4x1xf32>
    tpu.vector_store %arg18[%c0_66, %c0_67, %c0_68], %75 {strides = array<i32>} : memref<1x4x1xf32, #tpu.memory_space<vmem>>, vector<1x4x1xf32>,
    %c0_69 = arith.constant 0 : index
    %c0_70 = arith.constant 0 : index
    %c0_71 = arith.constant 0 : index
    %76 = vector.load %arg7[%c0_69, %c0_70, %c0_71] : memref<1x4x256xf32, #tpu.memory_space<vmem>>, vector<1x4x256xf32>
    %77 = vector.shape_cast %76 : vector<1x4x256xf32> to vector<4x256xf32>
    %c0_72 = arith.constant 0 : index
    %c0_73 = arith.constant 0 : index
    %c0_74 = arith.constant 0 : index
    %78 = vector.load %arg13[%c0_72, %c0_73, %c0_74] : memref<1x4x5xf32, #tpu.memory_space<vmem>>, vector<1x4x5xf32>
    %79 = vector.shape_cast %78 : vector<1x4x5xf32> to vector<4x5xf32>
    %cst_75 = arith.constant dense<0.000000e+00> : vector<4x5xf32>
    %80 = tpu.matmul %77, %3, %cst_75 {dimension_numbers = #tpu.dot_dimension_numbers<[1], [0], [0], [1], [0, 0, 1, 1], [], []>, precision = #tpu.contract_precision<fp32>} : vector<4x256xf32>, vector<256x5xf32>, vector<4x5xf32> -> vector<4x5xf32>
    %81 = arith.addf %79, %80 : vector<4x5xf32>
    %c0_76 = arith.constant 0 : index
    %c0_77 = arith.constant 0 : index
    %c0_78 = arith.constant 0 : index
    %82 = vector.load %arg13[%c0_76, %c0_77, %c0_78] : memref<1x4x5xf32, #tpu.memory_space<vmem>>, vector<1x4x5xf32>
    %83 = vector.shape_cast %82 : vector<1x4x5xf32> to vector<4x5xf32>
    %84 = vector.shape_cast %81 : vector<4x5xf32> to vector<1x4x5xf32>
    tpu.vector_store %arg13[%c0_76, %c0_77, %c0_78], %84 {strides = array<i32>} : memref<1x4x5xf32, #tpu.memory_space<vmem>>, vector<1x4x5xf32>,
    %c0_79 = arith.constant 0 : index
    %c0_80 = arith.constant 0 : index
    %c0_81 = arith.constant 0 : index
    %85 = vector.load %arg19[%c0_79, %c0_80, %c0_81] : memref<1x4x1xf32, #tpu.memory_space<vmem>>, vector<1x4x1xf32>
    %86 = vector.shape_cast %85 : vector<1x4x1xf32> to vector<4x1xf32>
    %87 = arith.mulf %77, %77 : vector<4x256xf32>
    %cst_82 = arith.constant dense<0.000000e+00> : vector<4xf32>
    %88 = vector.multi_reduction <add>, %87, %cst_82 [1] : vector<4x256xf32> to vector<4xf32>
    %89 = vector.shape_cast %88 : vector<4xf32> to vector<4x1xf32>
    %90 = arith.addf %86, %89 : vector<4x1xf32>
    %c0_83 = arith.constant 0 : index
    %c0_84 = arith.constant 0 : index
    %c0_85 = arith.constant 0 : index
    %91 = vector.load %arg19[%c0_83, %c0_84, %c0_85] : memref<1x4x1xf32, #tpu.memory_space<vmem>>, vector<1x4x1xf32>
    %92 = vector.shape_cast %91 : vector<1x4x1xf32> to vector<4x1xf32>
    %93 = vector.shape_cast %90 : vector<4x1xf32> to vector<1x4x1xf32>
    tpu.vector_store %arg19[%c0_83, %c0_84, %c0_85], %93 {strides = array<i32>} : memref<1x4x1xf32, #tpu.memory_space<vmem>>, vector<1x4x1xf32>,
    %c0_86 = arith.constant 0 : index
    %c0_87 = arith.constant 0 : index
    %c0_88 = arith.constant 0 : index
    %94 = vector.load %arg8[%c0_86, %c0_87, %c0_88] : memref<1x4x256xf32, #tpu.memory_space<vmem>>, vector<1x4x256xf32>
    %95 = vector.shape_cast %94 : vector<1x4x256xf32> to vector<4x256xf32>
    %c0_89 = arith.constant 0 : index
    %c0_90 = arith.constant 0 : index
    %c0_91 = arith.constant 0 : index
    %96 = vector.load %arg14[%c0_89, %c0_90, %c0_91] : memref<1x4x5xf32, #tpu.memory_space<vmem>>, vector<1x4x5xf32>
    %97 = vector.shape_cast %96 : vector<1x4x5xf32> to vector<4x5xf32>
    %cst_92 = arith.constant dense<0.000000e+00> : vector<4x5xf32>
    %98 = tpu.matmul %95, %3, %cst_92 {dimension_numbers = #tpu.dot_dimension_numbers<[1], [0], [0], [1], [0, 0, 1, 1], [], []>, precision = #tpu.contract_precision<fp32>} : vector<4x256xf32>, vector<256x5xf32>, vector<4x5xf32> -> vector<4x5xf32>
    %99 = arith.addf %97, %98 : vector<4x5xf32>
    %c0_93 = arith.constant 0 : index
    %c0_94 = arith.constant 0 : index
    %c0_95 = arith.constant 0 : index
    %100 = vector.load %arg14[%c0_93, %c0_94, %c0_95] : memref<1x4x5xf32, #tpu.memory_space<vmem>>, vector<1x4x5xf32>
    %101 = vector.shape_cast %100 : vector<1x4x5xf32> to vector<4x5xf32>
    %102 = vector.shape_cast %99 : vector<4x5xf32> to vector<1x4x5xf32>
    tpu.vector_store %arg14[%c0_93, %c0_94, %c0_95], %102 {strides = array<i32>} : memref<1x4x5xf32, #tpu.memory_space<vmem>>, vector<1x4x5xf32>,
    %c0_96 = arith.constant 0 : index
    %c0_97 = arith.constant 0 : index
    %c0_98 = arith.constant 0 : index
    %103 = vector.load %arg20[%c0_96, %c0_97, %c0_98] : memref<1x4x1xf32, #tpu.memory_space<vmem>>, vector<1x4x1xf32>
    %104 = vector.shape_cast %103 : vector<1x4x1xf32> to vector<4x1xf32>
    %105 = arith.mulf %95, %95 : vector<4x256xf32>
    %cst_99 = arith.constant dense<0.000000e+00> : vector<4xf32>
    %106 = vector.multi_reduction <add>, %105, %cst_99 [1] : vector<4x256xf32> to vector<4xf32>
    %107 = vector.shape_cast %106 : vector<4xf32> to vector<4x1xf32>
    %108 = arith.addf %104, %107 : vector<4x1xf32>
    %c0_100 = arith.constant 0 : index
    %c0_101 = arith.constant 0 : index
    %c0_102 = arith.constant 0 : index
    %109 = vector.load %arg20[%c0_100, %c0_101, %c0_102] : memref<1x4x1xf32, #tpu.memory_space<vmem>>, vector<1x4x1xf32>
    %110 = vector.shape_cast %109 : vector<1x4x1xf32> to vector<4x1xf32>
    %111 = vector.shape_cast %108 : vector<4x1xf32> to vector<1x4x1xf32>
    tpu.vector_store %arg20[%c0_100, %c0_101, %c0_102], %111 {strides = array<i32>} : memref<1x4x1xf32, #tpu.memory_space<vmem>>, vector<1x4x1xf32>,
    return
  }
  func.func @transform_0(%arg0: i32, %arg1: i32) -> (i32, i32) {
    %c0_i32 = arith.constant 0 : i32
    %c0_i32_0 = arith.constant 0 : i32
    return %arg1, %c0_i32 : i32, i32
  }
  func.func @transform_1(%arg0: i32, %arg1: i32) -> (i32, i32, i32) {
    %c0_i32 = arith.constant 0 : i32
    %c0_i32_0 = arith.constant 0 : i32
    return %arg0, %c0_i32, %arg1 : i32, i32, i32
  }
  func.func @transform_2(%arg0: i32, %arg1: i32) -> (i32, i32, i32) {
    %c0_i32 = arith.constant 0 : i32
    %c0_i32_0 = arith.constant 0 : i32
    return %arg0, %c0_i32, %arg1 : i32, i32, i32
  }
  func.func @transform_3(%arg0: i32, %arg1: i32) -> (i32, i32, i32) {
    %c0_i32 = arith.constant 0 : i32
    %c0_i32_0 = arith.constant 0 : i32
    return %arg0, %c0_i32, %arg1 : i32, i32, i32
  }
  func.func @transform_4(%arg0: i32, %arg1: i32) -> (i32, i32, i32) {
    %c0_i32 = arith.constant 0 : i32
    %c0_i32_0 = arith.constant 0 : i32
    return %arg0, %c0_i32, %arg1 : i32, i32, i32
  }
  func.func @transform_5(%arg0: i32, %arg1: i32) -> (i32, i32, i32) {
    %c0_i32 = arith.constant 0 : i32
    %c0_i32_0 = arith.constant 0 : i32
    return %arg0, %c0_i32, %arg1 : i32, i32, i32
  }
  func.func @transform_6(%arg0: i32, %arg1: i32) -> (i32, i32, i32) {
    %c0_i32 = arith.constant 0 : i32
    %c0_i32_0 = arith.constant 0 : i32
    return %arg0, %c0_i32, %arg1 : i32, i32, i32
  }
  func.func @transform_7(%arg0: i32, %arg1: i32) -> (i32, i32, i32) {
    %c0_i32 = arith.constant 0 : i32
    %c0_i32_0 = arith.constant 0 : i32
    %c0_i32_1 = arith.constant 0 : i32
    return %arg0, %c0_i32, %c0_i32_0 : i32, i32, i32
  }
  func.func @transform_8(%arg0: i32, %arg1: i32) -> (i32, i32, i32) {
    %c0_i32 = arith.constant 0 : i32
    %c0_i32_0 = arith.constant 0 : i32
    %c0_i32_1 = arith.constant 0 : i32
    return %arg0, %c0_i32, %c0_i32_0 : i32, i32, i32
  }
  func.func @transform_9(%arg0: i32, %arg1: i32) -> (i32, i32, i32) {
    %c0_i32 = arith.constant 0 : i32
    %c0_i32_0 = arith.constant 0 : i32
    %c0_i32_1 = arith.constant 0 : i32
    return %arg0, %c0_i32, %c0_i32_0 : i32, i32, i32
  }
  func.func @transform_10(%arg0: i32, %arg1: i32) -> (i32, i32, i32) {
    %c0_i32 = arith.constant 0 : i32
    %c0_i32_0 = arith.constant 0 : i32
    %c0_i32_1 = arith.constant 0 : i32
    return %arg0, %c0_i32, %c0_i32_0 : i32, i32, i32
  }
  func.func @transform_11(%arg0: i32, %arg1: i32) -> (i32, i32, i32) {
    %c0_i32 = arith.constant 0 : i32
    %c0_i32_0 = arith.constant 0 : i32
    %c0_i32_1 = arith.constant 0 : i32
    return %arg0, %c0_i32, %c0_i32_0 : i32, i32, i32
  }
  func.func @transform_12(%arg0: i32, %arg1: i32) -> (i32, i32, i32) {
    %c0_i32 = arith.constant 0 : i32
    %c0_i32_0 = arith.constant 0 : i32
    %c0_i32_1 = arith.constant 0 : i32
    return %arg0, %c0_i32, %c0_i32_0 : i32, i32, i32
  }
  func.func @transform_13(%arg0: i32, %arg1: i32) -> (i32, i32, i32) {
    %c0_i32 = arith.constant 0 : i32
    %c0_i32_0 = arith.constant 0 : i32
    %c0_i32_1 = arith.constant 0 : i32
    return %arg0, %c0_i32, %c0_i32_0 : i32, i32, i32
  }
  func.func @transform_14(%arg0: i32, %arg1: i32) -> (i32, i32, i32) {
    %c0_i32 = arith.constant 0 : i32
    %c0_i32_0 = arith.constant 0 : i32
    %c0_i32_1 = arith.constant 0 : i32
    return %arg0, %c0_i32, %c0_i32_0 : i32, i32, i32
  }
  func.func @transform_15(%arg0: i32, %arg1: i32) -> (i32, i32, i32) {
    %c0_i32 = arith.constant 0 : i32
    %c0_i32_0 = arith.constant 0 : i32
    %c0_i32_1 = arith.constant 0 : i32
    return %arg0, %c0_i32, %c0_i32_0 : i32, i32, i32
  }
  func.func @transform_16(%arg0: i32, %arg1: i32) -> (i32, i32, i32) {
    %c0_i32 = arith.constant 0 : i32
    %c0_i32_0 = arith.constant 0 : i32
    %c0_i32_1 = arith.constant 0 : i32
    return %arg0, %c0_i32, %c0_i32_0 : i32, i32, i32
  }
  func.func @transform_17(%arg0: i32, %arg1: i32) -> (i32, i32, i32) {
    %c0_i32 = arith.constant 0 : i32
    %c0_i32_0 = arith.constant 0 : i32
    %c0_i32_1 = arith.constant 0 : i32
    return %arg0, %c0_i32, %c0_i32_0 : i32, i32, i32
  }
  func.func @transform_18(%arg0: i32, %arg1: i32) -> (i32, i32, i32) {
    %c0_i32 = arith.constant 0 : i32
    %c0_i32_0 = arith.constant 0 : i32
    %c0_i32_1 = arith.constant 0 : i32
    return %arg0, %c0_i32, %c0_i32_0 : i32, i32, i32
  }
}

module attributes {stable_mosaic.version = 11 : i64} {
  func.func @_apply_kernel(%arg0: i32, %arg1: i32, %arg2: memref<1x4x256xf32, #tpu.memory_space<vmem>>, %arg3: memref<1x4x256xf32, #tpu.memory_space<vmem>>, %arg4: memref<1x4x256xf32, #tpu.memory_space<vmem>>, %arg5: memref<1x4x256xf32, #tpu.memory_space<vmem>>, %arg6: memref<1x4x256xf32, #tpu.memory_space<vmem>>, %arg7: memref<1x4x256xf32, #tpu.memory_space<vmem>>, %arg8: memref<1x4x3xf32, #tpu.memory_space<vmem>>, %arg9: memref<1x4x3xf32, #tpu.memory_space<vmem>>, %arg10: memref<1x4x3xf32, #tpu.memory_space<vmem>>, %arg11: memref<1x4x3xf32, #tpu.memory_space<vmem>>, %arg12: memref<1x4x3xf32, #tpu.memory_space<vmem>>, %arg13: memref<1x4x3xf32, #tpu.memory_space<vmem>>, %arg14: memref<32x4xf32, #tpu.memory_space<vmem>>, %arg15: memref<32x4xf32, #tpu.memory_space<vmem>>, %arg16: memref<32x4xf32, #tpu.memory_space<vmem>>, %arg17: memref<32x4xf32, #tpu.memory_space<vmem>>, %arg18: memref<32x4xf32, #tpu.memory_space<vmem>>, %arg19: memref<32x4xf32, #tpu.memory_space<vmem>>, %arg20: memref<1x32x256xf32, #tpu.memory_space<vmem>>) attributes {dimension_semantics = [#tpu.dimension_semantics<parallel>, #tpu.dimension_semantics<parallel>], iteration_bounds = array<i64: 2, 1>, scalar_prefetch = 0 : i64, scratch_operands = 0 : i64, tpu.core_type = #tpu.core_type<tc>, window_params = [{transform_indices = @transform_0, window_bounds = array<i64: 1, 4, 256>}, {transform_indices = @transform_1, window_bounds = array<i64: 1, 4, 256>}, {transform_indices = @transform_2, window_bounds = array<i64: 1, 4, 256>}, {transform_indices = @transform_3, window_bounds = array<i64: 1, 4, 256>}, {transform_indices = @transform_4, window_bounds = array<i64: 1, 4, 256>}, {transform_indices = @transform_5, window_bounds = array<i64: 1, 4, 256>}, {transform_indices = @transform_6, window_bounds = array<i64: 1, 4, 3>}, {transform_indices = @transform_7, window_bounds = array<i64: 1, 4, 3>}, {transform_indices = @transform_8, window_bounds = array<i64: 1, 4, 3>}, {transform_indices = @transform_9, window_bounds = array<i64: 1, 4, 3>}, {transform_indices = @transform_10, window_bounds = array<i64: 1, 4, 3>}, {transform_indices = @transform_11, window_bounds = array<i64: 1, 4, 3>}, {pipeline_mode = #tpu.pipeline_mode<synchronous>, transform_indices = @transform_12, window_bounds = array<i64: 32, 4>}, {pipeline_mode = #tpu.pipeline_mode<synchronous>, transform_indices = @transform_13, window_bounds = array<i64: 32, 4>}, {pipeline_mode = #tpu.pipeline_mode<synchronous>, transform_indices = @transform_14, window_bounds = array<i64: 32, 4>}, {pipeline_mode = #tpu.pipeline_mode<synchronous>, transform_indices = @transform_15, window_bounds = array<i64: 32, 4>}, {pipeline_mode = #tpu.pipeline_mode<synchronous>, transform_indices = @transform_16, window_bounds = array<i64: 32, 4>}, {pipeline_mode = #tpu.pipeline_mode<synchronous>, transform_indices = @transform_17, window_bounds = array<i64: 32, 4>}, {transform_indices = @transform_18, window_bounds = array<i64: 1, 32, 256>}]} {
    %c0 = arith.constant 0 : index
    %c0_0 = arith.constant 0 : index
    %c0_1 = arith.constant 0 : index
    %0 = vector.load %arg2[%c0, %c0_0, %c0_1] : memref<1x4x256xf32, #tpu.memory_space<vmem>>, vector<1x4x256xf32>
    %1 = vector.shape_cast %0 : vector<1x4x256xf32> to vector<4x256xf32>
    %c0_2 = arith.constant 0 : index
    %c0_3 = arith.constant 0 : index
    %c0_4 = arith.constant 0 : index
    %2 = vector.load %arg8[%c0_2, %c0_3, %c0_4] : memref<1x4x3xf32, #tpu.memory_space<vmem>>, vector<1x4x3xf32>
    %3 = vector.shape_cast %2 : vector<1x4x3xf32> to vector<4x3xf32>
    %4 = vector.extract_strided_slice %3 {offsets = [0, 0], sizes = [4, 1], strides = [1, 1]} : vector<4x3xf32> to vector<4x1xf32>
    %5 = vector.extract_strided_slice %3 {offsets = [0, 1], sizes = [4, 1], strides = [1, 1]} : vector<4x3xf32> to vector<4x1xf32>
    %6 = vector.extract_strided_slice %3 {offsets = [0, 2], sizes = [4, 1], strides = [1, 1]} : vector<4x3xf32> to vector<4x1xf32>
    %7 = vector.broadcast %4 : vector<4x1xf32> to vector<4x256xf32>
    %8 = arith.mulf %1, %7 : vector<4x256xf32>
    %9 = vector.broadcast %5 : vector<4x1xf32> to vector<4x256xf32>
    %10 = arith.addf %8, %9 : vector<4x256xf32>
    %cst = arith.constant 0.000000e+00 : f32
    %11 = vector.broadcast %cst : f32 to vector<4x256xf32>
    %12 = arith.cmpf oge, %10, %11 : vector<4x256xf32>
    %13 = vector.broadcast %6 : vector<4x1xf32> to vector<4x256xf32>
    %14 = arith.mulf %13, %10 : vector<4x256xf32>
    %15 = arith.select %12, %10, %14 : vector<4x256xi1>, vector<4x256xf32>
    %c0_5 = arith.constant 0 : index
    %c0_6 = arith.constant 0 : index
    %16 = vector.load %arg14[%c0_5, %c0_6] : memref<32x4xf32, #tpu.memory_space<vmem>>, vector<32x4xf32>
    %cst_7 = arith.constant dense<0.000000e+00> : vector<32x256xf32>
    %17 = tpu.matmul %16, %15, %cst_7 {dimension_numbers = #tpu.dot_dimension_numbers<[1], [0], [0], [1], [0, 0, 1, 1], [], []>, precision = #tpu.contract_precision<fp32>} : vector<32x4xf32>, vector<4x256xf32>, vector<32x256xf32> -> vector<32x256xf32>
    %c0_8 = arith.constant 0 : index
    %c0_9 = arith.constant 0 : index
    %c0_10 = arith.constant 0 : index
    %18 = vector.load %arg3[%c0_8, %c0_9, %c0_10] : memref<1x4x256xf32, #tpu.memory_space<vmem>>, vector<1x4x256xf32>
    %19 = vector.shape_cast %18 : vector<1x4x256xf32> to vector<4x256xf32>
    %c0_11 = arith.constant 0 : index
    %c0_12 = arith.constant 0 : index
    %c0_13 = arith.constant 0 : index
    %20 = vector.load %arg9[%c0_11, %c0_12, %c0_13] : memref<1x4x3xf32, #tpu.memory_space<vmem>>, vector<1x4x3xf32>
    %21 = vector.shape_cast %20 : vector<1x4x3xf32> to vector<4x3xf32>
    %22 = vector.extract_strided_slice %21 {offsets = [0, 0], sizes = [4, 1], strides = [1, 1]} : vector<4x3xf32> to vector<4x1xf32>
    %23 = vector.extract_strided_slice %21 {offsets = [0, 1], sizes = [4, 1], strides = [1, 1]} : vector<4x3xf32> to vector<4x1xf32>
    %24 = vector.extract_strided_slice %21 {offsets = [0, 2], sizes = [4, 1], strides = [1, 1]} : vector<4x3xf32> to vector<4x1xf32>
    %25 = vector.broadcast %22 : vector<4x1xf32> to vector<4x256xf32>
    %26 = arith.mulf %19, %25 : vector<4x256xf32>
    %27 = vector.broadcast %23 : vector<4x1xf32> to vector<4x256xf32>
    %28 = arith.addf %26, %27 : vector<4x256xf32>
    %cst_14 = arith.constant 0.000000e+00 : f32
    %29 = vector.broadcast %cst_14 : f32 to vector<4x256xf32>
    %30 = arith.cmpf oge, %28, %29 : vector<4x256xf32>
    %31 = vector.broadcast %24 : vector<4x1xf32> to vector<4x256xf32>
    %32 = arith.mulf %31, %28 : vector<4x256xf32>
    %33 = arith.select %30, %28, %32 : vector<4x256xi1>, vector<4x256xf32>
    %c0_15 = arith.constant 0 : index
    %c0_16 = arith.constant 0 : index
    %34 = vector.load %arg15[%c0_15, %c0_16] : memref<32x4xf32, #tpu.memory_space<vmem>>, vector<32x4xf32>
    %cst_17 = arith.constant dense<0.000000e+00> : vector<32x256xf32>
    %35 = tpu.matmul %34, %33, %cst_17 {dimension_numbers = #tpu.dot_dimension_numbers<[1], [0], [0], [1], [0, 0, 1, 1], [], []>, precision = #tpu.contract_precision<fp32>} : vector<32x4xf32>, vector<4x256xf32>, vector<32x256xf32> -> vector<32x256xf32>
    %36 = arith.addf %17, %35 : vector<32x256xf32>
    %c0_18 = arith.constant 0 : index
    %c0_19 = arith.constant 0 : index
    %c0_20 = arith.constant 0 : index
    %37 = vector.load %arg4[%c0_18, %c0_19, %c0_20] : memref<1x4x256xf32, #tpu.memory_space<vmem>>, vector<1x4x256xf32>
    %38 = vector.shape_cast %37 : vector<1x4x256xf32> to vector<4x256xf32>
    %c0_21 = arith.constant 0 : index
    %c0_22 = arith.constant 0 : index
    %c0_23 = arith.constant 0 : index
    %39 = vector.load %arg10[%c0_21, %c0_22, %c0_23] : memref<1x4x3xf32, #tpu.memory_space<vmem>>, vector<1x4x3xf32>
    %40 = vector.shape_cast %39 : vector<1x4x3xf32> to vector<4x3xf32>
    %41 = vector.extract_strided_slice %40 {offsets = [0, 0], sizes = [4, 1], strides = [1, 1]} : vector<4x3xf32> to vector<4x1xf32>
    %42 = vector.extract_strided_slice %40 {offsets = [0, 1], sizes = [4, 1], strides = [1, 1]} : vector<4x3xf32> to vector<4x1xf32>
    %43 = vector.extract_strided_slice %40 {offsets = [0, 2], sizes = [4, 1], strides = [1, 1]} : vector<4x3xf32> to vector<4x1xf32>
    %44 = vector.broadcast %41 : vector<4x1xf32> to vector<4x256xf32>
    %45 = arith.mulf %38, %44 : vector<4x256xf32>
    %46 = vector.broadcast %42 : vector<4x1xf32> to vector<4x256xf32>
    %47 = arith.addf %45, %46 : vector<4x256xf32>
    %cst_24 = arith.constant 0.000000e+00 : f32
    %48 = vector.broadcast %cst_24 : f32 to vector<4x256xf32>
    %49 = arith.cmpf oge, %47, %48 : vector<4x256xf32>
    %50 = vector.broadcast %43 : vector<4x1xf32> to vector<4x256xf32>
    %51 = arith.mulf %50, %47 : vector<4x256xf32>
    %52 = arith.select %49, %47, %51 : vector<4x256xi1>, vector<4x256xf32>
    %c0_25 = arith.constant 0 : index
    %c0_26 = arith.constant 0 : index
    %53 = vector.load %arg16[%c0_25, %c0_26] : memref<32x4xf32, #tpu.memory_space<vmem>>, vector<32x4xf32>
    %cst_27 = arith.constant dense<0.000000e+00> : vector<32x256xf32>
    %54 = tpu.matmul %53, %52, %cst_27 {dimension_numbers = #tpu.dot_dimension_numbers<[1], [0], [0], [1], [0, 0, 1, 1], [], []>, precision = #tpu.contract_precision<fp32>} : vector<32x4xf32>, vector<4x256xf32>, vector<32x256xf32> -> vector<32x256xf32>
    %55 = arith.addf %36, %54 : vector<32x256xf32>
    %c0_28 = arith.constant 0 : index
    %c0_29 = arith.constant 0 : index
    %c0_30 = arith.constant 0 : index
    %56 = vector.load %arg5[%c0_28, %c0_29, %c0_30] : memref<1x4x256xf32, #tpu.memory_space<vmem>>, vector<1x4x256xf32>
    %57 = vector.shape_cast %56 : vector<1x4x256xf32> to vector<4x256xf32>
    %c0_31 = arith.constant 0 : index
    %c0_32 = arith.constant 0 : index
    %c0_33 = arith.constant 0 : index
    %58 = vector.load %arg11[%c0_31, %c0_32, %c0_33] : memref<1x4x3xf32, #tpu.memory_space<vmem>>, vector<1x4x3xf32>
    %59 = vector.shape_cast %58 : vector<1x4x3xf32> to vector<4x3xf32>
    %60 = vector.extract_strided_slice %59 {offsets = [0, 0], sizes = [4, 1], strides = [1, 1]} : vector<4x3xf32> to vector<4x1xf32>
    %61 = vector.extract_strided_slice %59 {offsets = [0, 1], sizes = [4, 1], strides = [1, 1]} : vector<4x3xf32> to vector<4x1xf32>
    %62 = vector.extract_strided_slice %59 {offsets = [0, 2], sizes = [4, 1], strides = [1, 1]} : vector<4x3xf32> to vector<4x1xf32>
    %63 = vector.broadcast %60 : vector<4x1xf32> to vector<4x256xf32>
    %64 = arith.mulf %57, %63 : vector<4x256xf32>
    %65 = vector.broadcast %61 : vector<4x1xf32> to vector<4x256xf32>
    %66 = arith.addf %64, %65 : vector<4x256xf32>
    %cst_34 = arith.constant 0.000000e+00 : f32
    %67 = vector.broadcast %cst_34 : f32 to vector<4x256xf32>
    %68 = arith.cmpf oge, %66, %67 : vector<4x256xf32>
    %69 = vector.broadcast %62 : vector<4x1xf32> to vector<4x256xf32>
    %70 = arith.mulf %69, %66 : vector<4x256xf32>
    %71 = arith.select %68, %66, %70 : vector<4x256xi1>, vector<4x256xf32>
    %c0_35 = arith.constant 0 : index
    %c0_36 = arith.constant 0 : index
    %72 = vector.load %arg17[%c0_35, %c0_36] : memref<32x4xf32, #tpu.memory_space<vmem>>, vector<32x4xf32>
    %cst_37 = arith.constant dense<0.000000e+00> : vector<32x256xf32>
    %73 = tpu.matmul %72, %71, %cst_37 {dimension_numbers = #tpu.dot_dimension_numbers<[1], [0], [0], [1], [0, 0, 1, 1], [], []>, precision = #tpu.contract_precision<fp32>} : vector<32x4xf32>, vector<4x256xf32>, vector<32x256xf32> -> vector<32x256xf32>
    %74 = arith.addf %55, %73 : vector<32x256xf32>
    %c0_38 = arith.constant 0 : index
    %c0_39 = arith.constant 0 : index
    %c0_40 = arith.constant 0 : index
    %75 = vector.load %arg6[%c0_38, %c0_39, %c0_40] : memref<1x4x256xf32, #tpu.memory_space<vmem>>, vector<1x4x256xf32>
    %76 = vector.shape_cast %75 : vector<1x4x256xf32> to vector<4x256xf32>
    %c0_41 = arith.constant 0 : index
    %c0_42 = arith.constant 0 : index
    %c0_43 = arith.constant 0 : index
    %77 = vector.load %arg12[%c0_41, %c0_42, %c0_43] : memref<1x4x3xf32, #tpu.memory_space<vmem>>, vector<1x4x3xf32>
    %78 = vector.shape_cast %77 : vector<1x4x3xf32> to vector<4x3xf32>
    %79 = vector.extract_strided_slice %78 {offsets = [0, 0], sizes = [4, 1], strides = [1, 1]} : vector<4x3xf32> to vector<4x1xf32>
    %80 = vector.extract_strided_slice %78 {offsets = [0, 1], sizes = [4, 1], strides = [1, 1]} : vector<4x3xf32> to vector<4x1xf32>
    %81 = vector.extract_strided_slice %78 {offsets = [0, 2], sizes = [4, 1], strides = [1, 1]} : vector<4x3xf32> to vector<4x1xf32>
    %82 = vector.broadcast %79 : vector<4x1xf32> to vector<4x256xf32>
    %83 = arith.mulf %76, %82 : vector<4x256xf32>
    %84 = vector.broadcast %80 : vector<4x1xf32> to vector<4x256xf32>
    %85 = arith.addf %83, %84 : vector<4x256xf32>
    %cst_44 = arith.constant 0.000000e+00 : f32
    %86 = vector.broadcast %cst_44 : f32 to vector<4x256xf32>
    %87 = arith.cmpf oge, %85, %86 : vector<4x256xf32>
    %88 = vector.broadcast %81 : vector<4x1xf32> to vector<4x256xf32>
    %89 = arith.mulf %88, %85 : vector<4x256xf32>
    %90 = arith.select %87, %85, %89 : vector<4x256xi1>, vector<4x256xf32>
    %c0_45 = arith.constant 0 : index
    %c0_46 = arith.constant 0 : index
    %91 = vector.load %arg18[%c0_45, %c0_46] : memref<32x4xf32, #tpu.memory_space<vmem>>, vector<32x4xf32>
    %cst_47 = arith.constant dense<0.000000e+00> : vector<32x256xf32>
    %92 = tpu.matmul %91, %90, %cst_47 {dimension_numbers = #tpu.dot_dimension_numbers<[1], [0], [0], [1], [0, 0, 1, 1], [], []>, precision = #tpu.contract_precision<fp32>} : vector<32x4xf32>, vector<4x256xf32>, vector<32x256xf32> -> vector<32x256xf32>
    %93 = arith.addf %74, %92 : vector<32x256xf32>
    %c0_48 = arith.constant 0 : index
    %c0_49 = arith.constant 0 : index
    %c0_50 = arith.constant 0 : index
    %94 = vector.load %arg7[%c0_48, %c0_49, %c0_50] : memref<1x4x256xf32, #tpu.memory_space<vmem>>, vector<1x4x256xf32>
    %95 = vector.shape_cast %94 : vector<1x4x256xf32> to vector<4x256xf32>
    %c0_51 = arith.constant 0 : index
    %c0_52 = arith.constant 0 : index
    %c0_53 = arith.constant 0 : index
    %96 = vector.load %arg13[%c0_51, %c0_52, %c0_53] : memref<1x4x3xf32, #tpu.memory_space<vmem>>, vector<1x4x3xf32>
    %97 = vector.shape_cast %96 : vector<1x4x3xf32> to vector<4x3xf32>
    %98 = vector.extract_strided_slice %97 {offsets = [0, 0], sizes = [4, 1], strides = [1, 1]} : vector<4x3xf32> to vector<4x1xf32>
    %99 = vector.extract_strided_slice %97 {offsets = [0, 1], sizes = [4, 1], strides = [1, 1]} : vector<4x3xf32> to vector<4x1xf32>
    %100 = vector.extract_strided_slice %97 {offsets = [0, 2], sizes = [4, 1], strides = [1, 1]} : vector<4x3xf32> to vector<4x1xf32>
    %101 = vector.broadcast %98 : vector<4x1xf32> to vector<4x256xf32>
    %102 = arith.mulf %95, %101 : vector<4x256xf32>
    %103 = vector.broadcast %99 : vector<4x1xf32> to vector<4x256xf32>
    %104 = arith.addf %102, %103 : vector<4x256xf32>
    %cst_54 = arith.constant 0.000000e+00 : f32
    %105 = vector.broadcast %cst_54 : f32 to vector<4x256xf32>
    %106 = arith.cmpf oge, %104, %105 : vector<4x256xf32>
    %107 = vector.broadcast %100 : vector<4x1xf32> to vector<4x256xf32>
    %108 = arith.mulf %107, %104 : vector<4x256xf32>
    %109 = arith.select %106, %104, %108 : vector<4x256xi1>, vector<4x256xf32>
    %c0_55 = arith.constant 0 : index
    %c0_56 = arith.constant 0 : index
    %110 = vector.load %arg19[%c0_55, %c0_56] : memref<32x4xf32, #tpu.memory_space<vmem>>, vector<32x4xf32>
    %cst_57 = arith.constant dense<0.000000e+00> : vector<32x256xf32>
    %111 = tpu.matmul %110, %109, %cst_57 {dimension_numbers = #tpu.dot_dimension_numbers<[1], [0], [0], [1], [0, 0, 1, 1], [], []>, precision = #tpu.contract_precision<fp32>} : vector<32x4xf32>, vector<4x256xf32>, vector<32x256xf32> -> vector<32x256xf32>
    %112 = arith.addf %93, %111 : vector<32x256xf32>
    %c0_58 = arith.constant 0 : index
    %c0_59 = arith.constant 0 : index
    %c0_60 = arith.constant 0 : index
    %113 = vector.load %arg20[%c0_58, %c0_59, %c0_60] : memref<1x32x256xf32, #tpu.memory_space<vmem>>, vector<1x32x256xf32>
    %114 = vector.shape_cast %113 : vector<1x32x256xf32> to vector<32x256xf32>
    %115 = vector.shape_cast %112 : vector<32x256xf32> to vector<1x32x256xf32>
    tpu.vector_store %arg20[%c0_58, %c0_59, %c0_60], %115 {strides = array<i32>} : memref<1x32x256xf32, #tpu.memory_space<vmem>>, vector<1x32x256xf32>,
    return
  }
  func.func @transform_0(%arg0: i32, %arg1: i32) -> (i32, i32, i32) {
    %c0_i32 = arith.constant 0 : i32
    %c0_i32_0 = arith.constant 0 : i32
    return %arg0, %c0_i32, %arg1 : i32, i32, i32
  }
  func.func @transform_1(%arg0: i32, %arg1: i32) -> (i32, i32, i32) {
    %c0_i32 = arith.constant 0 : i32
    %c0_i32_0 = arith.constant 0 : i32
    return %arg0, %c0_i32, %arg1 : i32, i32, i32
  }
  func.func @transform_2(%arg0: i32, %arg1: i32) -> (i32, i32, i32) {
    %c0_i32 = arith.constant 0 : i32
    %c0_i32_0 = arith.constant 0 : i32
    return %arg0, %c0_i32, %arg1 : i32, i32, i32
  }
  func.func @transform_3(%arg0: i32, %arg1: i32) -> (i32, i32, i32) {
    %c0_i32 = arith.constant 0 : i32
    %c0_i32_0 = arith.constant 0 : i32
    return %arg0, %c0_i32, %arg1 : i32, i32, i32
  }
  func.func @transform_4(%arg0: i32, %arg1: i32) -> (i32, i32, i32) {
    %c0_i32 = arith.constant 0 : i32
    %c0_i32_0 = arith.constant 0 : i32
    return %arg0, %c0_i32, %arg1 : i32, i32, i32
  }
  func.func @transform_5(%arg0: i32, %arg1: i32) -> (i32, i32, i32) {
    %c0_i32 = arith.constant 0 : i32
    %c0_i32_0 = arith.constant 0 : i32
    return %arg0, %c0_i32, %arg1 : i32, i32, i32
  }
  func.func @transform_6(%arg0: i32, %arg1: i32) -> (i32, i32, i32) {
    %c0_i32 = arith.constant 0 : i32
    %c0_i32_0 = arith.constant 0 : i32
    %c0_i32_1 = arith.constant 0 : i32
    return %arg0, %c0_i32, %c0_i32_0 : i32, i32, i32
  }
  func.func @transform_7(%arg0: i32, %arg1: i32) -> (i32, i32, i32) {
    %c0_i32 = arith.constant 0 : i32
    %c0_i32_0 = arith.constant 0 : i32
    %c0_i32_1 = arith.constant 0 : i32
    return %arg0, %c0_i32, %c0_i32_0 : i32, i32, i32
  }
  func.func @transform_8(%arg0: i32, %arg1: i32) -> (i32, i32, i32) {
    %c0_i32 = arith.constant 0 : i32
    %c0_i32_0 = arith.constant 0 : i32
    %c0_i32_1 = arith.constant 0 : i32
    return %arg0, %c0_i32, %c0_i32_0 : i32, i32, i32
  }
  func.func @transform_9(%arg0: i32, %arg1: i32) -> (i32, i32, i32) {
    %c0_i32 = arith.constant 0 : i32
    %c0_i32_0 = arith.constant 0 : i32
    %c0_i32_1 = arith.constant 0 : i32
    return %arg0, %c0_i32, %c0_i32_0 : i32, i32, i32
  }
  func.func @transform_10(%arg0: i32, %arg1: i32) -> (i32, i32, i32) {
    %c0_i32 = arith.constant 0 : i32
    %c0_i32_0 = arith.constant 0 : i32
    %c0_i32_1 = arith.constant 0 : i32
    return %arg0, %c0_i32, %c0_i32_0 : i32, i32, i32
  }
  func.func @transform_11(%arg0: i32, %arg1: i32) -> (i32, i32, i32) {
    %c0_i32 = arith.constant 0 : i32
    %c0_i32_0 = arith.constant 0 : i32
    %c0_i32_1 = arith.constant 0 : i32
    return %arg0, %c0_i32, %c0_i32_0 : i32, i32, i32
  }
  func.func @transform_12(%arg0: i32, %arg1: i32) -> (i32, i32) {
    %c0_i32 = arith.constant 0 : i32
    %c0_i32_0 = arith.constant 0 : i32
    %c0_i32_1 = arith.constant 0 : i32
    return %c0_i32, %c0_i32_0 : i32, i32
  }
  func.func @transform_13(%arg0: i32, %arg1: i32) -> (i32, i32) {
    %c0_i32 = arith.constant 0 : i32
    %c0_i32_0 = arith.constant 0 : i32
    %c0_i32_1 = arith.constant 0 : i32
    return %c0_i32, %c0_i32_0 : i32, i32
  }
  func.func @transform_14(%arg0: i32, %arg1: i32) -> (i32, i32) {
    %c0_i32 = arith.constant 0 : i32
    %c0_i32_0 = arith.constant 0 : i32
    %c0_i32_1 = arith.constant 0 : i32
    return %c0_i32, %c0_i32_0 : i32, i32
  }
  func.func @transform_15(%arg0: i32, %arg1: i32) -> (i32, i32) {
    %c0_i32 = arith.constant 0 : i32
    %c0_i32_0 = arith.constant 0 : i32
    %c0_i32_1 = arith.constant 0 : i32
    return %c0_i32, %c0_i32_0 : i32, i32
  }
  func.func @transform_16(%arg0: i32, %arg1: i32) -> (i32, i32) {
    %c0_i32 = arith.constant 0 : i32
    %c0_i32_0 = arith.constant 0 : i32
    %c0_i32_1 = arith.constant 0 : i32
    return %c0_i32, %c0_i32_0 : i32, i32
  }
  func.func @transform_17(%arg0: i32, %arg1: i32) -> (i32, i32) {
    %c0_i32 = arith.constant 0 : i32
    %c0_i32_0 = arith.constant 0 : i32
    %c0_i32_1 = arith.constant 0 : i32
    return %c0_i32, %c0_i32_0 : i32, i32
  }
  func.func @transform_18(%arg0: i32, %arg1: i32) -> (i32, i32, i32) {
    %c0_i32 = arith.constant 0 : i32
    %c0_i32_0 = arith.constant 0 : i32
    return %arg0, %c0_i32, %arg1 : i32, i32, i32
  }
}

</mosaic_0001>

<llo_original>
// kernel: ffm_b2.2
$region0: #{ffm_b2.2}
  #allocation0 [shape = 'u32[]', space=smem, size = 0x4, offset = 0x4, fixed_abs, tag = 'smem constant byte address 0x4 - core index']
  #allocation1 [shape = 'u32[72,128]{1,0:T(1,128)}', space=vmem, size = 0x9000, scoped, tag = 'internal scratch']
  %s0 = inlined_call_operand.vmem [shape: f32[256,5], index: 0, kind: input, shape index: {}]
  %s1 = inlined_call_operand.vmem [shape: f32[2,4,256], index: 1, kind: input, shape index: {}]
  %s2 = inlined_call_operand.vmem [shape: f32[2,4,256], index: 2, kind: input, shape index: {}]
  %s3 = inlined_call_operand.vmem [shape: f32[2,4,256], index: 3, kind: input, shape index: {}]
  %s4 = inlined_call_operand.vmem [shape: f32[2,4,256], index: 4, kind: input, shape index: {}]
  %s5 = inlined_call_operand.vmem [shape: f32[2,4,256], index: 5, kind: input, shape index: {}]
  %s6 = inlined_call_operand.vmem [shape: f32[2,4,256], index: 6, kind: input, shape index: {}]
  %s7 = inlined_call_operand.vmem [shape: f32[2,4,5], index: 7, kind: output, shape index: {0}]
  %s8 = inlined_call_operand.vmem [shape: f32[2,4,5], index: 8, kind: output, shape index: {1}]
  %s9 = inlined_call_operand.vmem [shape: f32[2,4,5], index: 9, kind: output, shape index: {2}]
  %s10 = inlined_call_operand.vmem [shape: f32[2,4,5], index: 10, kind: output, shape index: {3}]
  %s11 = inlined_call_operand.vmem [shape: f32[2,4,5], index: 11, kind: output, shape index: {4}]
  %s12 = inlined_call_operand.vmem [shape: f32[2,4,5], index: 12, kind: output, shape index: {5}]
  %s13 = inlined_call_operand.vmem [shape: f32[2,4,1], index: 13, kind: output, shape index: {6}]
  %s14 = inlined_call_operand.vmem [shape: f32[2,4,1], index: 14, kind: output, shape index: {7}]
  %s15 = inlined_call_operand.vmem [shape: f32[2,4,1], index: 15, kind: output, shape index: {8}]
  %s16 = inlined_call_operand.vmem [shape: f32[2,4,1], index: 16, kind: output, shape index: {9}]
  %s17 = inlined_call_operand.vmem [shape: f32[2,4,1], index: 17, kind: output, shape index: {10}]
  %s18 = inlined_call_operand.vmem [shape: f32[2,4,1], index: 18, kind: output, shape index: {11}]
  %19 = xla_tuple %s7, %s8, %s9, %s10, %s11, %s12, %s13, %s14, %s15, %s16, %s17, %s18
  %s20 = sld [smem:[#allocation0]]
  $region153: #{ffm_b2.2} parent=0
    _
  %s22 = ssub.s32 1, %s20
  %s23 = scalar_select 0, %s22, %s20
  loop: start=0, step=1, limit=4
  $region2: #{ffm_b2.2} parent=0 // loop_pre_header
    _
  $region3: #{ffm_b2.2} parent=0 // loop_header
    %s25 = sphi 0, %s29
    %p26 = scmp.ge.s32.totalorder %s25, 4
    %s32 = sphi 0, %s44
    %s33 = sphi 0, %s40
    %s34 = sphi 0, %s32
    %s35 = sphi 0, %s33
    %s36 = sphi 0, %s34
    %s37 = sphi 0, %s35
    %s47 = sphi 0, %s49
    %s50 = sphi 0, %s47
    %s51 = sphi 0, %s50
    %s67 = sphi 0, %s51
    %s75 = sphi 0, %s77
    %s78 = sphi 0, %s75
    %s79 = sphi 0, %s78
    %s95 = sphi 0, %s79
    %s103 = sphi 0, %s105
    %s106 = sphi 0, %s103
    %s107 = sphi 0, %s106
    %s123 = sphi 0, %s107
    %s131 = sphi 0, %s133
    %s134 = sphi 0, %s131
    %s135 = sphi 0, %s134
    %s151 = sphi 0, %s135
    %s159 = sphi 0, %s161
    %s162 = sphi 0, %s159
    %s163 = sphi 0, %s162
    %s179 = sphi 0, %s163
    %s187 = sphi 0, %s189
    %s190 = sphi 0, %s187
    %s191 = sphi 0, %s190
    %s207 = sphi 0, %s191
    %s215 = sphi 0, %s217
    %s218 = sphi 0, %s215
    %s219 = sphi 0, %s218
    %s235 = sphi 0, %s219
    %s241 = sphi 0, %s243
    %s244 = sphi 0, %s241
    %s245 = sphi 0, %s244
    %s261 = sphi 0, %s245
    %s267 = sphi 0, %s269
    %s270 = sphi 0, %s267
    %s271 = sphi 0, %s270
    %s287 = sphi 0, %s271
    %s293 = sphi 0, %s295
    %s296 = sphi 0, %s293
    %s297 = sphi 0, %s296
    %s313 = sphi 0, %s297
    %s319 = sphi 0, %s321
    %s322 = sphi 0, %s319
    %s323 = sphi 0, %s322
    %s339 = sphi 0, %s323
    %s345 = sphi 0, %s347
    %s348 = sphi 0, %s345
    %s349 = sphi 0, %s348
    %s365 = sphi 0, %s349
    %s371 = sphi 0, %s373
    %s374 = sphi 0, %s371
    %s375 = sphi 0, %s374
    %s391 = sphi 0, %s375
    %s397 = sphi 0, %s399
    %s400 = sphi 0, %s397
    %s401 = sphi 0, %s400
    %s417 = sphi 0, %s401
    %s423 = sphi 0, %s425
    %s426 = sphi 0, %s423
    %s427 = sphi 0, %s426
    %s443 = sphi 0, %s427
    %s449 = sphi 0, %s451
    %s452 = sphi 0, %s449
    %s453 = sphi 0, %s452
    %s469 = sphi 0, %s453
    %s475 = sphi 0, %s477
    %s478 = sphi 0, %s475
    %s479 = sphi 0, %s478
    %s495 = sphi 0, %s479
    %s501 = sphi 0, %s503
    %s504 = sphi 0, %s501
    %s505 = sphi 0, %s504
    %s521 = sphi 0, %s505
    %s527 = sphi 0, %s529
    %s530 = sphi 0, %s527
    %s531 = sphi 0, %s530
    %s547 = sphi 0, %s531
  $region4: #{ffm_b2.2} parent=0 // loop_header_branch
    %28 = sbr.rel (%p26) target = $region8
  $region5: #{ffm_b2.2} parent=0 // loop_body
    %s30 = ssub.s32 %s25, 1
    %s31 = ssub.s32 %s25, 2
    %s38 = sadd.s32 1, %s33
    %p39 = scmp.ge.s32.totalorder %s38, 1
    %s40 = scalar_select %p39, 0, %s38
    %s41 = sadd.s32 1, %s32
    %s42 = scalar_select %p39, %s41, %s32
    %p43 = scmp.ge.s32.totalorder %s42, 2
    %s44 = scalar_select %p43, 0, %s42
    %s45 = ssub.s32 %s33, %s40
    %p46 = scmp.eq.s32.totalorder %s45, 0
    %s48 = sadd.s32 %s47, 1
    %s49 = scalar_select %p46, %s47, %s48
    %p52 = pneg %p46
    %p53 = scmp.eq.s32.totalorder %s25, 1
    %p54 = por %p52, %p53
    %p55 = scmp.ne.s32.totalorder %s47, %s50
    %p56 = scmp.eq.s32.totalorder %s25, 0
    %p57 = por %p55, %p56
    %p58 = scmp.ne.s32.totalorder %s47, %s50
    %p59 = scmp.eq.s32.totalorder %s30, 1
    %p60 = por %p58, %p59
    %p61 = scmp.ne.s32.totalorder %s50, %s51
    %p62 = scmp.eq.s32.totalorder %s30, 0
    %p63 = por %p61, %p62
    %p64 = scmp.ne.s32.totalorder %s50, %s51
    %p65 = scmp.eq.s32.totalorder %s31, 1
    %p66 = por %p64, %p65
    %p68 = scmp.ne.s32.totalorder %s51, %s67
    %p69 = scmp.eq.s32.totalorder %s31, 0
    %p70 = por %p68, %p69
    %s71 = ssub.s32 %s32, %s44
    %s72 = ssub.s32 %s33, %s40
    %s73 = sor.u32 %s71, %s72
    %p74 = scmp.eq.s32.totalorder %s73, 0
    %s76 = sadd.s32 %s75, 1
    %s77 = scalar_select %p74, %s75, %s76
    %p80 = pneg %p74
    %p81 = scmp.eq.s32.totalorder %s25, 1
    %p82 = por %p80, %p81
    %p83 = scmp.ne.s32.totalorder %s75, %s78
    %p84 = scmp.eq.s32.totalorder %s25, 0
    %p85 = por %p83, %p84
    %p86 = scmp.ne.s32.totalorder %s75, %s78
    %p87 = scmp.eq.s32.totalorder %s30, 1
    %p88 = por %p86, %p87
    %p89 = scmp.ne.s32.totalorder %s78, %s79
    %p90 = scmp.eq.s32.totalorder %s30, 0
    %p91 = por %p89, %p90
    %p92 = scmp.ne.s32.totalorder %s78, %s79
    %p93 = scmp.eq.s32.totalorder %s31, 1
    %p94 = por %p92, %p93
    %p96 = scmp.ne.s32.totalorder %s79, %s95
    %p97 = scmp.eq.s32.totalorder %s31, 0
    %p98 = por %p96, %p97
    %s99 = ssub.s32 %s32, %s44
    %s100 = ssub.s32 %s33, %s40
    %s101 = sor.u32 %s99, %s100
    %p102 = scmp.eq.s32.totalorder %s101, 0
    %s104 = sadd.s32 %s103, 1
    %s105 = scalar_select %p102, %s103, %s104
    %p108 = pneg %p102
    %p109 = scmp.eq.s32.totalorder %s25, 1
    %p110 = por %p108, %p109
    %p111 = scmp.ne.s32.totalorder %s103, %s106
    %p112 = scmp.eq.s32.totalorder %s25, 0
    %p113 = por %p111, %p112
    %p114 = scmp.ne.s32.totalorder %s103, %s106
    %p115 = scmp.eq.s32.totalorder %s30, 1
    %p116 = por %p114, %p115
    %p117 = scmp.ne.s32.totalorder %s106, %s107
    %p118 = scmp.eq.s32.totalorder %s30, 0
    %p119 = por %p117, %p118
    %p120 = scmp.ne.s32.totalorder %s106, %s107
    %p121 = scmp.eq.s32.totalorder %s31, 1
    %p122 = por %p120, %p121
    %p124 = scmp.ne.s32.totalorder %s107, %s123
    %p125 = scmp.eq.s32.totalorder %s31, 0
    %p126 = por %p124, %p125
    %s127 = ssub.s32 %s32, %s44
    %s128 = ssub.s32 %s33, %s40
    %s129 = sor.u32 %s127, %s128
    %p130 = scmp.eq.s32.totalorder %s129, 0
    %s132 = sadd.s32 %s131, 1
    %s133 = scalar_select %p130, %s131, %s132
    %p136 = pneg %p130
    %p137 = scmp.eq.s32.totalorder %s25, 1
    %p138 = por %p136, %p137
    %p139 = scmp.ne.s32.totalorder %s131, %s134
    %p140 = scmp.eq.s32.totalorder %s25, 0
    %p141 = por %p139, %p140
    %p142 = scmp.ne.s32.totalorder %s131, %s134
    %p143 = scmp.eq.s32.totalorder %s30, 1
    %p144 = por %p142, %p143
    %p145 = scmp.ne.s32.totalorder %s134, %s135
    %p146 = scmp.eq.s32.totalorder %s30, 0
    %p147 = por %p145, %p146
    %p148 = scmp.ne.s32.totalorder %s134, %s135
    %p149 = scmp.eq.s32.totalorder %s31, 1
    %p150 = por %p148, %p149
    %p152 = scmp.ne.s32.totalorder %s135, %s151
    %p153 = scmp.eq.s32.totalorder %s31, 0
    %p154 = por %p152, %p153
    %s155 = ssub.s32 %s32, %s44
    %s156 = ssub.s32 %s33, %s40
    %s157 = sor.u32 %s155, %s156
    %p158 = scmp.eq.s32.totalorder %s157, 0
    %s160 = sadd.s32 %s159, 1
    %s161 = scalar_select %p158, %s159, %s160
    %p164 = pneg %p158
    %p165 = scmp.eq.s32.totalorder %s25, 1
    %p166 = por %p164, %p165
    %p167 = scmp.ne.s32.totalorder %s159, %s162
    %p168 = scmp.eq.s32.totalorder %s25, 0
    %p169 = por %p167, %p168
    %p170 = scmp.ne.s32.totalorder %s159, %s162
    %p171 = scmp.eq.s32.totalorder %s30, 1
    %p172 = por %p170, %p171
    %p173 = scmp.ne.s32.totalorder %s162, %s163
    %p174 = scmp.eq.s32.totalorder %s30, 0
    %p175 = por %p173, %p174
    %p176 = scmp.ne.s32.totalorder %s162, %s163
    %p177 = scmp.eq.s32.totalorder %s31, 1
    %p178 = por %p176, %p177
    %p180 = scmp.ne.s32.totalorder %s163, %s179
    %p181 = scmp.eq.s32.totalorder %s31, 0
    %p182 = por %p180, %p181
    %s183 = ssub.s32 %s32, %s44
    %s184 = ssub.s32 %s33, %s40
    %s185 = sor.u32 %s183, %s184
    %p186 = scmp.eq.s32.totalorder %s185, 0
    %s188 = sadd.s32 %s187, 1
    %s189 = scalar_select %p186, %s187, %s188
    %p192 = pneg %p186
    %p193 = scmp.eq.s32.totalorder %s25, 1
    %p194 = por %p192, %p193
    %p195 = scmp.ne.s32.totalorder %s187, %s190
    %p196 = scmp.eq.s32.totalorder %s25, 0
    %p197 = por %p195, %p196
    %p198 = scmp.ne.s32.totalorder %s187, %s190
    %p199 = scmp.eq.s32.totalorder %s30, 1
    %p200 = por %p198, %p199
    %p201 = scmp.ne.s32.totalorder %s190, %s191
    %p202 = scmp.eq.s32.totalorder %s30, 0
    %p203 = por %p201, %p202
    %p204 = scmp.ne.s32.totalorder %s190, %s191
    %p205 = scmp.eq.s32.totalorder %s31, 1
    %p206 = por %p204, %p205
    %p208 = scmp.ne.s32.totalorder %s191, %s207
    %p209 = scmp.eq.s32.totalorder %s31, 0
    %p210 = por %p208, %p209
    %s211 = ssub.s32 %s32, %s44
    %s212 = ssub.s32 %s33, %s40
    %s213 = sor.u32 %s211, %s212
    %p214 = scmp.eq.s32.totalorder %s213, 0
    %s216 = sadd.s32 %s215, 1
    %s217 = scalar_select %p214, %s215, %s216
    %p220 = pneg %p214
    %p221 = scmp.eq.s32.totalorder %s25, 1
    %p222 = por %p220, %p221
    %p223 = scmp.ne.s32.totalorder %s215, %s218
    %p224 = scmp.eq.s32.totalorder %s25, 0
    %p225 = por %p223, %p224
    %p226 = scmp.ne.s32.totalorder %s215, %s218
    %p227 = scmp.eq.s32.totalorder %s30, 1
    %p228 = por %p226, %p227
    %p229 = scmp.ne.s32.totalorder %s218, %s219
    %p230 = scmp.eq.s32.totalorder %s30, 0
    %p231 = por %p229, %p230
    %p232 = scmp.ne.s32.totalorder %s218, %s219
    %p233 = scmp.eq.s32.totalorder %s31, 1
    %p234 = por %p232, %p233
    %p236 = scmp.ne.s32.totalorder %s219, %s235
    %p237 = scmp.eq.s32.totalorder %s31, 0
    %p238 = por %p236, %p237
    %s239 = ssub.s32 %s32, %s44
    %p240 = scmp.eq.s32.totalorder %s239, 0
    %s242 = sadd.s32 %s241, 1
    %s243 = scalar_select %p240, %s241, %s242
    %p246 = pneg %p240
    %p247 = scmp.eq.s32.totalorder %s25, 1
    %p248 = por %p246, %p247
    %p249 = scmp.ne.s32.totalorder %s241, %s244
    %p250 = scmp.eq.s32.totalorder %s25, 0
    %p251 = por %p249, %p250
    %p252 = scmp.ne.s32.totalorder %s241, %s244
    %p253 = scmp.eq.s32.totalorder %s30, 1
    %p254 = por %p252, %p253
    %p255 = scmp.ne.s32.totalorder %s244, %s245
    %p256 = scmp.eq.s32.totalorder %s30, 0
    %p257 = por %p255, %p256
    %p258 = scmp.ne.s32.totalorder %s244, %s245
    %p259 = scmp.eq.s32.totalorder %s31, 1
    %p260 = por %p258, %p259
    %p262 = scmp.ne.s32.totalorder %s245, %s261
    %p263 = scmp.eq.s32.totalorder %s31, 0
    %p264 = por %p262, %p263
    %s265 = ssub.s32 %s32, %s44
    %p266 = scmp.eq.s32.totalorder %s265, 0
    %s268 = sadd.s32 %s267, 1
    %s269 = scalar_select %p266, %s267, %s268
    %p272 = pneg %p266
    %p273 = scmp.eq.s32.totalorder %s25, 1
    %p274 = por %p272, %p273
    %p275 = scmp.ne.s32.totalorder %s267, %s270
    %p276 = scmp.eq.s32.totalorder %s25, 0
    %p277 = por %p275, %p276
    %p278 = scmp.ne.s32.totalorder %s267, %s270
    %p279 = scmp.eq.s32.totalorder %s30, 1
    %p280 = por %p278, %p279
    %p281 = scmp.ne.s32.totalorder %s270, %s271
    %p282 = scmp.eq.s32.totalorder %s30, 0
    %p283 = por %p281, %p282
    %p284 = scmp.ne.s32.totalorder %s270, %s271
    %p285 = scmp.eq.s32.totalorder %s31, 1
    %p286 = por %p284, %p285
    %p288 = scmp.ne.s32.totalorder %s271, %s287
    %p289 = scmp.eq.s32.totalorder %s31, 0
    %p290 = por %p288, %p289
    %s291 = ssub.s32 %s32, %s44
    %p292 = scmp.eq.s32.totalorder %s291, 0
    %s294 = sadd.s32 %s293, 1
    %s295 = scalar_select %p292, %s293, %s294
    %p298 = pneg %p292
    %p299 = scmp.eq.s32.totalorder %s25, 1
    %p300 = por %p298, %p299
    %p301 = scmp.ne.s32.totalorder %s293, %s296
    %p302 = scmp.eq.s32.totalorder %s25, 0
    %p303 = por %p301, %p302
    %p304 = scmp.ne.s32.totalorder %s293, %s296
    %p305 = scmp.eq.s32.totalorder %s30, 1
    %p306 = por %p304, %p305
    %p307 = scmp.ne.s32.totalorder %s296, %s297
    %p308 = scmp.eq.s32.totalorder %s30, 0
    %p309 = por %p307, %p308
    %p310 = scmp.ne.s32.totalorder %s296, %s297
    %p311 = scmp.eq.s32.totalorder %s31, 1
    %p312 = por %p310, %p311
    %p314 = scmp.ne.s32.totalorder %s297, %s313
    %p315 = scmp.eq.s32.totalorder %s31, 0
    %p316 = por %p314, %p315
    %s317 = ssub.s32 %s32, %s44
    %p318 = scmp.eq.s32.totalorder %s317, 0
    %s320 = sadd.s32 %s319, 1
    %s321 = scalar_select %p318, %s319, %s320
    %p324 = pneg %p318
    %p325 = scmp.eq.s32.totalorder %s25, 1
    %p326 = por %p324, %p325
    %p327 = scmp.ne.s32.totalorder %s319, %s322
    %p328 = scmp.eq.s32.totalorder %s25, 0
    %p329 = por %p327, %p328
    %p330 = scmp.ne.s32.totalorder %s319, %s322
    %p331 = scmp.eq.s32.totalorder %s30, 1
    %p332 = por %p330, %p331
    %p333 = scmp.ne.s32.totalorder %s322, %s323
    %p334 = scmp.eq.s32.totalorder %s30, 0
    %p335 = por %p333, %p334
    %p336 = scmp.ne.s32.totalorder %s322, %s323
    %p337 = scmp.eq.s32.totalorder %s31, 1
    %p338 = por %p336, %p337
    %p340 = scmp.ne.s32.totalorder %s323, %s339
    %p341 = scmp.eq.s32.totalorder %s31, 0
    %p342 = por %p340, %p341
    %s343 = ssub.s32 %s32, %s44
    %p344 = scmp.eq.s32.totalorder %s343, 0
    %s346 = sadd.s32 %s345, 1
    %s347 = scalar_select %p344, %s345, %s346
    %p350 = pneg %p344
    %p351 = scmp.eq.s32.totalorder %s25, 1
    %p352 = por %p350, %p351
    %p353 = scmp.ne.s32.totalorder %s345, %s348
    %p354 = scmp.eq.s32.totalorder %s25, 0
    %p355 = por %p353, %p354
    %p356 = scmp.ne.s32.totalorder %s345, %s348
    %p357 = scmp.eq.s32.totalorder %s30, 1
    %p358 = por %p356, %p357
    %p359 = scmp.ne.s32.totalorder %s348, %s349
    %p360 = scmp.eq.s32.totalorder %s30, 0
    %p361 = por %p359, %p360
    %p362 = scmp.ne.s32.totalorder %s348, %s349
    %p363 = scmp.eq.s32.totalorder %s31, 1
    %p364 = por %p362, %p363
    %p366 = scmp.ne.s32.totalorder %s349, %s365
    %p367 = scmp.eq.s32.totalorder %s31, 0
    %p368 = por %p366, %p367
    %s369 = ssub.s32 %s32, %s44
    %p370 = scmp.eq.s32.totalorder %s369, 0
    %s372 = sadd.s32 %s371, 1
    %s373 = scalar_select %p370, %s371, %s372
    %p376 = pneg %p370
    %p377 = scmp.eq.s32.totalorder %s25, 1
    %p378 = por %p376, %p377
    %p379 = scmp.ne.s32.totalorder %s371, %s374
    %p380 = scmp.eq.s32.totalorder %s25, 0
    %p381 = por %p379, %p380
    %p382 = scmp.ne.s32.totalorder %s371, %s374
    %p383 = scmp.eq.s32.totalorder %s30, 1
    %p384 = por %p382, %p383
    %p385 = scmp.ne.s32.totalorder %s374, %s375
    %p386 = scmp.eq.s32.totalorder %s30, 0
    %p387 = por %p385, %p386
    %p388 = scmp.ne.s32.totalorder %s374, %s375
    %p389 = scmp.eq.s32.totalorder %s31, 1
    %p390 = por %p388, %p389
    %p392 = scmp.ne.s32.totalorder %s375, %s391
    %p393 = scmp.eq.s32.totalorder %s31, 0
    %p394 = por %p392, %p393
    %s395 = ssub.s32 %s32, %s44
    %p396 = scmp.eq.s32.totalorder %s395, 0
    %s398 = sadd.s32 %s397, 1
    %s399 = scalar_select %p396, %s397, %s398
    %p402 = pneg %p396
    %p403 = scmp.eq.s32.totalorder %s25, 1
    %p404 = por %p402, %p403
    %p405 = scmp.ne.s32.totalorder %s397, %s400
    %p406 = scmp.eq.s32.totalorder %s25, 0
    %p407 = por %p405, %p406
    %p408 = scmp.ne.s32.totalorder %s397, %s400
    %p409 = scmp.eq.s32.totalorder %s30, 1
    %p410 = por %p408, %p409
    %p411 = scmp.ne.s32.totalorder %s400, %s401
    %p412 = scmp.eq.s32.totalorder %s30, 0
    %p413 = por %p411, %p412
    %p414 = scmp.ne.s32.totalorder %s400, %s401
    %p415 = scmp.eq.s32.totalorder %s31, 1
    %p416 = por %p414, %p415
    %p418 = scmp.ne.s32.totalorder %s401, %s417
    %p419 = scmp.eq.s32.totalorder %s31, 0
    %p420 = por %p418, %p419
    %s421 = ssub.s32 %s32, %s44
    %p422 = scmp.eq.s32.totalorder %s421, 0
    %s424 = sadd.s32 %s423, 1
    %s425 = scalar_select %p422, %s423, %s424
    %p428 = pneg %p422
    %p429 = scmp.eq.s32.totalorder %s25, 1
    %p430 = por %p428, %p429
    %p431 = scmp.ne.s32.totalorder %s423, %s426
    %p432 = scmp.eq.s32.totalorder %s25, 0
    %p433 = por %p431, %p432
    %p434 = scmp.ne.s32.totalorder %s423, %s426
    %p435 = scmp.eq.s32.totalorder %s30, 1
    %p436 = por %p434, %p435
    %p437 = scmp.ne.s32.totalorder %s426, %s427
    %p438 = scmp.eq.s32.totalorder %s30, 0
    %p439 = por %p437, %p438
    %p440 = scmp.ne.s32.totalorder %s426, %s427
    %p441 = scmp.eq.s32.totalorder %s31, 1
    %p442 = por %p440, %p441
    %p444 = scmp.ne.s32.totalorder %s427, %s443
    %p445 = scmp.eq.s32.totalorder %s31, 0
    %p446 = por %p444, %p445
    %s447 = ssub.s32 %s32, %s44
    %p448 = scmp.eq.s32.totalorder %s447, 0
    %s450 = sadd.s32 %s449, 1
    %s451 = scalar_select %p448, %s449, %s450
    %p454 = pneg %p448
    %p455 = scmp.eq.s32.totalorder %s25, 1
    %p456 = por %p454, %p455
    %p457 = scmp.ne.s32.totalorder %s449, %s452
    %p458 = scmp.eq.s32.totalorder %s25, 0
    %p459 = por %p457, %p458
    %p460 = scmp.ne.s32.totalorder %s449, %s452
    %p461 = scmp.eq.s32.totalorder %s30, 1
    %p462 = por %p460, %p461
    %p463 = scmp.ne.s32.totalorder %s452, %s453
    %p464 = scmp.eq.s32.totalorder %s30, 0
    %p465 = por %p463, %p464
    %p466 = scmp.ne.s32.totalorder %s452, %s453
    %p467 = scmp.eq.s32.totalorder %s31, 1
    %p468 = por %p466, %p467
    %p470 = scmp.ne.s32.totalorder %s453, %s469
    %p471 = scmp.eq.s32.totalorder %s31, 0
    %p472 = por %p470, %p471
    %s473 = ssub.s32 %s32, %s44
    %p474 = scmp.eq.s32.totalorder %s473, 0
    %s476 = sadd.s32 %s475, 1
    %s477 = scalar_select %p474, %s475, %s476
    %p480 = pneg %p474
    %p481 = scmp.eq.s32.totalorder %s25, 1
    %p482 = por %p480, %p481
    %p483 = scmp.ne.s32.totalorder %s475, %s478
    %p484 = scmp.eq.s32.totalorder %s25, 0
    %p485 = por %p483, %p484
    %p486 = scmp.ne.s32.totalorder %s475, %s478
    %p487 = scmp.eq.s32.totalorder %s30, 1
    %p488 = por %p486, %p487
    %p489 = scmp.ne.s32.totalorder %s478, %s479
    %p490 = scmp.eq.s32.totalorder %s30, 0
    %p491 = por %p489, %p490
    %p492 = scmp.ne.s32.totalorder %s478, %s479
    %p493 = scmp.eq.s32.totalorder %s31, 1
    %p494 = por %p492, %p493
    %p496 = scmp.ne.s32.totalorder %s479, %s495
    %p497 = scmp.eq.s32.totalorder %s31, 0
    %p498 = por %p496, %p497
    %s499 = ssub.s32 %s32, %s44
    %p500 = scmp.eq.s32.totalorder %s499, 0
    %s502 = sadd.s32 %s501, 1
    %s503 = scalar_select %p500, %s501, %s502
    %p506 = pneg %p500
    %p507 = scmp.eq.s32.totalorder %s25, 1
    %p508 = por %p506, %p507
    %p509 = scmp.ne.s32.totalorder %s501, %s504
    %p510 = scmp.eq.s32.totalorder %s25, 0
    %p511 = por %p509, %p510
    %p512 = scmp.ne.s32.totalorder %s501, %s504
    %p513 = scmp.eq.s32.totalorder %s30, 1
    %p514 = por %p512, %p513
    %p515 = scmp.ne.s32.totalorder %s504, %s505
    %p516 = scmp.eq.s32.totalorder %s30, 0
    %p517 = por %p515, %p516
    %p518 = scmp.ne.s32.totalorder %s504, %s505
    %p519 = scmp.eq.s32.totalorder %s31, 1
    %p520 = por %p518, %p519
    %p522 = scmp.ne.s32.totalorder %s505, %s521
    %p523 = scmp.eq.s32.totalorder %s31, 0
    %p524 = por %p522, %p523
    %s525 = ssub.s32 %s32, %s44
    %p526 = scmp.eq.s32.totalorder %s525, 0
    %s528 = sadd.s32 %s527, 1
    %s529 = scalar_select %p526, %s527, %s528
    %p532 = pneg %p526
    %p533 = scmp.eq.s32.totalorder %s25, 1
    %p534 = por %p532, %p533
    %p535 = scmp.ne.s32.totalorder %s527, %s530
    %p536 = scmp.eq.s32.totalorder %s25, 0
    %p537 = por %p535, %p536
    %p538 = scmp.ne.s32.totalorder %s527, %s530
    %p539 = scmp.eq.s32.totalorder %s30, 1
    %p540 = por %p538, %p539
    %p541 = scmp.ne.s32.totalorder %s530, %s531
    %p542 = scmp.eq.s32.totalorder %s30, 0
    %p543 = por %p541, %p542
    %p544 = scmp.ne.s32.totalorder %s530, %s531
    %p545 = scmp.eq.s32.totalorder %s31, 1
    %p546 = por %p544, %p545
    %p548 = scmp.ne.s32.totalorder %s531, %s547
    %p549 = scmp.eq.s32.totalorder %s31, 0
    %p550 = por %p548, %p549
    %p551 = scmp.le.s32.totalorder 1, %s25
    %p552 = scmp.lt.s32.totalorder %s25, 3
    %p553 = pnand %p551, %p552
    %p554 = pneg %p553
    // Predicated region
    $region9: #{ffm_b2.2} parent=5 // pred_check
      _
    $region10: #{ffm_b2.2} parent=5 // pred_check_branch
      %556 = sbr.rel (%p553) target = $region12
    $region11: #{ffm_b2.2} parent=5 // pred_region
      %s557 = ssub.s32 %s25, 1
      // Predicated region
      $region13: #{ffm_b2.2} parent=11 // pred_check
        %p558 = pneg %p63
      $region14: #{ffm_b2.2} parent=11 // pred_check_branch
        %560 = sbr.rel (%p558) target = $region16
      $region15: #{ffm_b2.2} parent=11 // pred_region
        %s561 = smul.u32 32, %s35
        %p562 = scmp.lt.s32.totalorder %s561, 31
        %s563 = scalar_select %p562, %s561, 31
        %s564 = smul.addr %s563, 8
        %s565 = scalar_lea.vmem %s0, %s564
        %s566 = smul.u32 32, %s35
      $region16: #{ffm_b2.2} parent=11 // pred_fallthru
        _
    $region12: #{ffm_b2.2} parent=5 // pred_fallthru
      _
    %p567 = scmp.lt.s32.totalorder %s25, 2
    // Predicated region
    $region17: #{ffm_b2.2} parent=5 // pred_check
      %p568 = pneg %p567
    $region18: #{ffm_b2.2} parent=5 // pred_check_branch
      %570 = sbr.rel (%p568) target = $region20
    $region19: #{ffm_b2.2} parent=5 // pred_region
      // Predicated region
      $region21: #{ffm_b2.2} parent=19 // pred_check
        %p571 = pneg %p85
      $region22: #{ffm_b2.2} parent=19 // pred_check_branch
        %573 = sbr.rel (%p571) target = $region24
      $region23: #{ffm_b2.2} parent=19 // pred_region
        %s574 = smul.u32 2, %s33
        %p575 = scmp.lt.s32.totalorder %s32, 1
        %s576 = scalar_select %p575, %s32, 1
        %p577 = scmp.lt.s32.totalorder %s574, 1
        %s578 = scalar_select %p577, %s574, 1
        %s579 = smul.addr %s576, 2
        %s580 = sadd.s32 %s578, %s579
        %s581 = smul.addr %s580, 4
        %s582 = scalar_lea.vmem %s1, %s581
        %s583 = smul.u32 2, %s33
      $region24: #{ffm_b2.2} parent=19 // pred_fallthru
        _
      // Predicated region
      $region25: #{ffm_b2.2} parent=19 // pred_check
        %p584 = pneg %p113
      $region26: #{ffm_b2.2} parent=19 // pred_check_branch
        %586 = sbr.rel (%p584) target = $region28
      $region27: #{ffm_b2.2} parent=19 // pred_region
        %s587 = smul.u32 2, %s33
        %p588 = scmp.lt.s32.totalorder %s32, 1
        %s589 = scalar_select %p588, %s32, 1
        %p590 = scmp.lt.s32.totalorder %s587, 1
        %s591 = scalar_select %p590, %s587, 1
        %s592 = smul.addr %s589, 2
        %s593 = sadd.s32 %s591, %s592
        %s594 = smul.addr %s593, 4
        %s595 = scalar_lea.vmem %s2, %s594
        %s596 = smul.u32 2, %s33
      $region28: #{ffm_b2.2} parent=19 // pred_fallthru
        _
      // Predicated region
      $region29: #{ffm_b2.2} parent=19 // pred_check
        %p597 = pneg %p141
      $region30: #{ffm_b2.2} parent=19 // pred_check_branch
        %599 = sbr.rel (%p597) target = $region32
      $region31: #{ffm_b2.2} parent=19 // pred_region
        %s600 = smul.u32 2, %s33
        %p601 = scmp.lt.s32.totalorder %s32, 1
        %s602 = scalar_select %p601, %s32, 1
        %p603 = scmp.lt.s32.totalorder %s600, 1
        %s604 = scalar_select %p603, %s600, 1
        %s605 = smul.addr %s602, 2
        %s606 = sadd.s32 %s604, %s605
        %s607 = smul.addr %s606, 4
        %s608 = scalar_lea.vmem %s3, %s607
        %s609 = smul.u32 2, %s33
      $region32: #{ffm_b2.2} parent=19 // pred_fallthru
        _
      // Predicated region
      $region33: #{ffm_b2.2} parent=19 // pred_check
        %p610 = pneg %p169
      $region34: #{ffm_b2.2} parent=19 // pred_check_branch
        %612 = sbr.rel (%p610) target = $region36
      $region35: #{ffm_b2.2} parent=19 // pred_region
        %s613 = smul.u32 2, %s33
        %p614 = scmp.lt.s32.totalorder %s32, 1
        %s615 = scalar_select %p614, %s32, 1
        %p616 = scmp.lt.s32.totalorder %s613, 1
        %s617 = scalar_select %p616, %s613, 1
        %s618 = smul.addr %s615, 2
        %s619 = sadd.s32 %s617, %s618
        %s620 = smul.addr %s619, 4
        %s621 = scalar_lea.vmem %s4, %s620
        %s622 = smul.u32 2, %s33
      $region36: #{ffm_b2.2} parent=19 // pred_fallthru
        _
      // Predicated region
      $region37: #{ffm_b2.2} parent=19 // pred_check
        %p623 = pneg %p197
      $region38: #{ffm_b2.2} parent=19 // pred_check_branch
        %625 = sbr.rel (%p623) target = $region40
      $region39: #{ffm_b2.2} parent=19 // pred_region
        %s626 = smul.u32 2, %s33
        %p627 = scmp.lt.s32.totalorder %s32, 1
        %s628 = scalar_select %p627, %s32, 1
        %p629 = scmp.lt.s32.totalorder %s626, 1
        %s630 = scalar_select %p629, %s626, 1
        %s631 = smul.addr %s628, 2
        %s632 = sadd.s32 %s630, %s631
        %s633 = smul.addr %s632, 4
        %s634 = scalar_lea.vmem %s5, %s633
        %s635 = smul.u32 2, %s33
      $region40: #{ffm_b2.2} parent=19 // pred_fallthru
        _
      // Predicated region
      $region41: #{ffm_b2.2} parent=19 // pred_check
        %p636 = pneg %p225
      $region42: #{ffm_b2.2} parent=19 // pred_check_branch
        %638 = sbr.rel (%p636) target = $region44
      $region43: #{ffm_b2.2} parent=19 // pred_region
        %s639 = smul.u32 2, %s33
        %p640 = scmp.lt.s32.totalorder %s32, 1
        %s641 = scalar_select %p640, %s32, 1
        %p642 = scmp.lt.s32.totalorder %s639, 1
        %s643 = scalar_select %p642, %s639, 1
        %s644 = smul.addr %s641, 2
        %s645 = sadd.s32 %s643, %s644
        %s646 = smul.addr %s645, 4
        %s647 = scalar_lea.vmem %s6, %s646
        %s648 = smul.u32 2, %s33
      $region44: #{ffm_b2.2} parent=19 // pred_fallthru
        _
    $region20: #{ffm_b2.2} parent=5 // pred_fallthru
      _
    %p649 = scmp.le.s32.totalorder 1, %s25
    %p650 = scmp.lt.s32.totalorder %s25, 3
    %p651 = pnand %p649, %p650
    %p652 = pneg %p651
    // Predicated region
    $region45: #{ffm_b2.2} parent=5 // pred_check
      _
    $region46: #{ffm_b2.2} parent=5 // pred_check_branch
      %654 = sbr.rel (%p651) target = $region48
    $region47: #{ffm_b2.2} parent=5 // pred_region
      %s655 = ssub.s32 %s25, 1
      %s656 = smul.u32 32, %s35
      %p657 = scmp.lt.s32.totalorder %s656, 31
      %s658 = scalar_select %p657, %s656, 31
      %s659 = smul.addr %s658, 8
      %s660 = scalar_lea.vmem %s0, %s659
      %p661 = pneg %p63
      %p662 = pneg %p60
      %s663 = smul.u32 2, %s35
      %p664 = scmp.lt.s32.totalorder %s34, 1
      %s665 = scalar_select %p664, %s34, 1
      %p666 = scmp.lt.s32.totalorder %s663, 1
      %s667 = scalar_select %p666, %s663, 1
      %s668 = smul.addr %s665, 2
      %s669 = sadd.s32 %s667, %s668
      %s670 = smul.addr %s669, 4
      %s671 = scalar_lea.vmem %s1, %s670
      %p672 = pneg %p91
      %p673 = pneg %p88
      %s674 = smul.u32 2, %s35
      %p675 = scmp.lt.s32.totalorder %s34, 1
      %s676 = scalar_select %p675, %s34, 1
      %p677 = scmp.lt.s32.totalorder %s674, 1
      %s678 = scalar_select %p677, %s674, 1
      %s679 = smul.addr %s676, 2
      %s680 = sadd.s32 %s678, %s679
      %s681 = smul.addr %s680, 4
      %s682 = scalar_lea.vmem %s2, %s681
      %p683 = pneg %p119
      %p684 = pneg %p116
      %s685 = smul.u32 2, %s35
      %p686 = scmp.lt.s32.totalorder %s34, 1
      %s687 = scalar_select %p686, %s34, 1
      %p688 = scmp.lt.s32.totalorder %s685, 1
      %s689 = scalar_select %p688, %s685, 1
      %s690 = smul.addr %s687, 2
      %s691 = sadd.s32 %s689, %s690
      %s692 = smul.addr %s691, 4
      %s693 = scalar_lea.vmem %s3, %s692
      %p694 = pneg %p147
      %p695 = pneg %p144
      %s696 = smul.u32 2, %s35
      %p697 = scmp.lt.s32.totalorder %s34, 1
      %s698 = scalar_select %p697, %s34, 1
      %p699 = scmp.lt.s32.totalorder %s696, 1
      %s700 = scalar_select %p699, %s696, 1
      %s701 = smul.addr %s698, 2
      %s702 = sadd.s32 %s700, %s701
      %s703 = smul.addr %s702, 4
      %s704 = scalar_lea.vmem %s4, %s703
      %p705 = pneg %p175
      %p706 = pneg %p172
      %s707 = smul.u32 2, %s35
      %p708 = scmp.lt.s32.totalorder %s34, 1
      %s709 = scalar_select %p708, %s34, 1
      %p710 = scmp.lt.s32.totalorder %s707, 1
      %s711 = scalar_select %p710, %s707, 1
      %s712 = smul.addr %s709, 2
      %s713 = sadd.s32 %s711, %s712
      %s714 = smul.addr %s713, 4
      %s715 = scalar_lea.vmem %s5, %s714
      %p716 = pneg %p203
      %p717 = pneg %p200
      %s718 = smul.u32 2, %s35
      %p719 = scmp.lt.s32.totalorder %s34, 1
      %s720 = scalar_select %p719, %s34, 1
      %p721 = scmp.lt.s32.totalorder %s718, 1
      %s722 = scalar_select %p721, %s718, 1
      %s723 = smul.addr %s720, 2
      %s724 = sadd.s32 %s722, %s723
      %s725 = smul.addr %s724, 4
      %s726 = scalar_lea.vmem %s6, %s725
      %p727 = pneg %p231
      %p728 = pneg %p228
      %p729 = pneg %p257
      %p730 = pneg %p254
      %p731 = scmp.lt.s32.totalorder %s34, 1
      %s732 = scalar_select %p731, %s34, 1
      %s733 = smul.addr %s732, 4
      %s734 = scalar_lea.vmem %s7, %s733
      %p735 = pneg %p283
      %p736 = pneg %p280
      %p737 = scmp.lt.s32.totalorder %s34, 1
      %s738 = scalar_select %p737, %s34, 1
      %s739 = smul.addr %s738, 4
      %s740 = scalar_lea.vmem %s8, %s739
      %p741 = pneg %p309
      %p742 = pneg %p306
      %p743 = scmp.lt.s32.totalorder %s34, 1
      %s744 = scalar_select %p743, %s34, 1
      %s745 = smul.addr %s744, 4
      %s746 = scalar_lea.vmem %s9, %s745
      %p747 = pneg %p335
      %p748 = pneg %p332
      %p749 = scmp.lt.s32.totalorder %s34, 1
      %s750 = scalar_select %p749, %s34, 1
      %s751 = smul.addr %s750, 4
      %s752 = scalar_lea.vmem %s10, %s751
      %p753 = pneg %p361
      %p754 = pneg %p358
      %p755 = scmp.lt.s32.totalorder %s34, 1
      %s756 = scalar_select %p755, %s34, 1
      %s757 = smul.addr %s756, 4
      %s758 = scalar_lea.vmem %s11, %s757
      %p759 = pneg %p387
      %p760 = pneg %p384
      %p761 = scmp.lt.s32.totalorder %s34, 1
      %s762 = scalar_select %p761, %s34, 1
      %s763 = smul.addr %s762, 4
      %s764 = scalar_lea.vmem %s12, %s763
      %p765 = pneg %p413
      %p766 = pneg %p410
      %p767 = scmp.lt.s32.totalorder %s34, 1
      %s768 = scalar_select %p767, %s34, 1
      %s769 = smul.addr %s768, 4
      %s770 = scalar_lea.vmem %s13, %s769
      %p771 = pneg %p439
      %p772 = pneg %p436
      %p773 = scmp.lt.s32.totalorder %s34, 1
      %s774 = scalar_select %p773, %s34, 1
      %s775 = smul.addr %s774, 4
      %s776 = scalar_lea.vmem %s14, %s775
      %p777 = pneg %p465
      %p778 = pneg %p462
      %p779 = scmp.lt.s32.totalorder %s34, 1
      %s780 = scalar_select %p779, %s34, 1
      %s781 = smul.addr %s780, 4
      %s782 = scalar_lea.vmem %s15, %s781
      %p783 = pneg %p491
      %p784 = pneg %p488
      %p785 = scmp.lt.s32.totalorder %s34, 1
      %s786 = scalar_select %p785, %s34, 1
      %s787 = smul.addr %s786, 4
      %s788 = scalar_lea.vmem %s16, %s787
      %p789 = pneg %p517
      %p790 = pneg %p514
      %p791 = scmp.lt.s32.totalorder %s34, 1
      %s792 = scalar_select %p791, %s34, 1
      %s793 = smul.addr %s792, 4
      %s794 = scalar_lea.vmem %s17, %s793
      %p795 = pneg %p543
      %p796 = pneg %p540
      %p797 = scmp.lt.s32.totalorder %s34, 1
      %s798 = scalar_select %p797, %s34, 1
      %s799 = smul.addr %s798, 4
      %s800 = scalar_lea.vmem %s18, %s799
      %s801 = smul.u32 32, %s35
      %p802 = scmp.lt.s32.totalorder %s801, 31
      %s803 = scalar_select %p802, %s801, 31
      %s804 = smul.addr %s803, 8
      %s805 = scalar_lea.vmem %s0, %s804
      %s806 = smul.u32 32, %s35
      %s807 = smul.u32 2, %s35
      %p808 = scmp.lt.s32.totalorder %s34, 1
      %s809 = scalar_select %p808, %s34, 1
      %p810 = scmp.lt.s32.totalorder %s807, 1
      %s811 = scalar_select %p810, %s807, 1
      %s812 = smul.addr %s809, 2
      %s813 = sadd.s32 %s811, %s812
      %s814 = smul.addr %s813, 4
      %s815 = scalar_lea.vmem %s1, %s814
      %s816 = smul.u32 2, %s35
      %s817 = smul.u32 2, %s35
      %p818 = scmp.lt.s32.totalorder %s34, 1
      %s819 = scalar_select %p818, %s34, 1
      %p820 = scmp.lt.s32.totalorder %s817, 1
      %s821 = scalar_select %p820, %s817, 1
      %s822 = smul.addr %s819, 2
      %s823 = sadd.s32 %s821, %s822
      %s824 = smul.addr %s823, 4
      %s825 = scalar_lea.vmem %s2, %s824
      %s826 = smul.u32 2, %s35
      %s827 = smul.u32 2, %s35
      %p828 = scmp.lt.s32.totalorder %s34, 1
      %s829 = scalar_select %p828, %s34, 1
      %p830 = scmp.lt.s32.totalorder %s827, 1
      %s831 = scalar_select %p830, %s827, 1
      %s832 = smul.addr %s829, 2
      %s833 = sadd.s32 %s831, %s832
      %s834 = smul.addr %s833, 4
      %s835 = scalar_lea.vmem %s3, %s834
      %s836 = smul.u32 2, %s35
      %s837 = smul.u32 2, %s35
      %p838 = scmp.lt.s32.totalorder %s34, 1
      %s839 = scalar_select %p838, %s34, 1
      %p840 = scmp.lt.s32.totalorder %s837, 1
      %s841 = scalar_select %p840, %s837, 1
      %s842 = smul.addr %s839, 2
      %s843 = sadd.s32 %s841, %s842
      %s844 = smul.addr %s843, 4
      %s845 = scalar_lea.vmem %s4, %s844
      %s846 = smul.u32 2, %s35
      %s847 = smul.u32 2, %s35
      %p848 = scmp.lt.s32.totalorder %s34, 1
      %s849 = scalar_select %p848, %s34, 1
      %p850 = scmp.lt.s32.totalorder %s847, 1
      %s851 = scalar_select %p850, %s847, 1
      %s852 = smul.addr %s849, 2
      %s853 = sadd.s32 %s851, %s852
      %s854 = smul.addr %s853, 4
      %s855 = scalar_lea.vmem %s5, %s854
      %s856 = smul.u32 2, %s35
      %s857 = smul.u32 2, %s35
      %p858 = scmp.lt.s32.totalorder %s34, 1
      %s859 = scalar_select %p858, %s34, 1
      %p860 = scmp.lt.s32.totalorder %s857, 1
      %s861 = scalar_select %p860, %s857, 1
      %s862 = smul.addr %s859, 2
      %s863 = sadd.s32 %s861, %s862
      %s864 = smul.addr %s863, 4
      %s865 = scalar_lea.vmem %s6, %s864
      %s866 = smul.u32 2, %s35
      %p867 = scmp.lt.s32.totalorder %s34, 1
      %s868 = scalar_select %p867, %s34, 1
      %s869 = smul.addr %s868, 4
      %s870 = scalar_lea.vmem %s7, %s869
      %p871 = scmp.lt.s32.totalorder %s34, 1
      %s872 = scalar_select %p871, %s34, 1
      %s873 = smul.addr %s872, 4
      %s874 = scalar_lea.vmem %s8, %s873
      %p875 = scmp.lt.s32.totalorder %s34, 1
      %s876 = scalar_select %p875, %s34, 1
      %s877 = smul.addr %s876, 4
      %s878 = scalar_lea.vmem %s9, %s877
      %p879 = scmp.lt.s32.totalorder %s34, 1
      %s880 = scalar_select %p879, %s34, 1
      %s881 = smul.addr %s880, 4
      %s882 = scalar_lea.vmem %s10, %s881
      %p883 = scmp.lt.s32.totalorder %s34, 1
      %s884 = scalar_select %p883, %s34, 1
      %s885 = smul.addr %s884, 4
      %s886 = scalar_lea.vmem %s11, %s885
      %p887 = scmp.lt.s32.totalorder %s34, 1
      %s888 = scalar_select %p887, %s34, 1
      %s889 = smul.addr %s888, 4
      %s890 = scalar_lea.vmem %s12, %s889
      %p891 = scmp.lt.s32.totalorder %s34, 1
      %s892 = scalar_select %p891, %s34, 1
      %s893 = smul.addr %s892, 4
      %s894 = scalar_lea.vmem %s13, %s893
      %p895 = scmp.lt.s32.totalorder %s34, 1
      %s896 = scalar_select %p895, %s34, 1
      %s897 = smul.addr %s896, 4
      %s898 = scalar_lea.vmem %s14, %s897
      %p899 = scmp.lt.s32.totalorder %s34, 1
      %s900 = scalar_select %p899, %s34, 1
      %s901 = smul.addr %s900, 4
      %s902 = scalar_lea.vmem %s15, %s901
      %p903 = scmp.lt.s32.totalorder %s34, 1
      %s904 = scalar_select %p903, %s34, 1
      %s905 = smul.addr %s904, 4
      %s906 = scalar_lea.vmem %s16, %s905
      %p907 = scmp.lt.s32.totalorder %s34, 1
      %s908 = scalar_select %p907, %s34, 1
      %s909 = smul.addr %s908, 4
      %s910 = scalar_lea.vmem %s17, %s909
      %p911 = scmp.lt.s32.totalorder %s34, 1
      %s912 = scalar_select %p911, %s34, 1
      %s913 = smul.addr %s912, 4
      %s914 = scalar_lea.vmem %s18, %s913
      %p915 = scmp.eq.s32.totalorder %s35, 0
      // Predicated region
      $region49: #{ffm_b2.2} parent=47 // pred_check
        %p916 = pneg %p915
      $region50: #{ffm_b2.2} parent=47 // pred_check_branch
        %918 = sbr.rel (%p916) target = $region52
      $region51: #{ffm_b2.2} parent=47 // pred_region
        %vm919 = vcmask 35840
        %920 = vst.msk [vmem:[%s870] sm:$0xf] %vm919, 0.0
        %921 = vst.msk [vmem:[%s874] sm:$0xf] %vm919, 0.0
        %922 = vst.msk [vmem:[%s878] sm:$0xf] %vm919, 0.0
        %923 = vst.msk [vmem:[%s882] sm:$0xf] %vm919, 0.0
        %924 = vst.msk [vmem:[%s886] sm:$0xf] %vm919, 0.0
        %925 = vst.msk [vmem:[%s890] sm:$0xf] %vm919, 0.0
        %vm926 = vcmask 3072
        %927 = vst.msk [vmem:[%s894] sm:$0xf] %vm926, 0.0
        %928 = vst.msk [vmem:[%s898] sm:$0xf] %vm926, 0.0
        %929 = vst.msk [vmem:[%s902] sm:$0xf] %vm926, 0.0
        %930 = vst.msk [vmem:[%s906] sm:$0xf] %vm926, 0.0
        %931 = vst.msk [vmem:[%s910] sm:$0xf] %vm926, 0.0
        %932 = vst.msk [vmem:[%s914] sm:$0xf] %vm926, 0.0
      $region52: #{ffm_b2.2} parent=47 // pred_fallthru
        _
      %v933 = vld [vmem:[%s805] sm:$0xff]
      %v934 = vld [vmem:[%s805 + $0x8] sm:$0xff]
      %v935 = vld [vmem:[%s805 + $0x10] sm:$0xff]
      %v936 = vld [vmem:[%s805 + $0x18] sm:$0xff]
      %v937 = vld [vmem:[%s805 + $0x20] sm:$0xff]
      %v938 = vld [vmem:[%s805 + $0x28] sm:$0xff]
      %v939 = vld [vmem:[%s805 + $0x30] sm:$0xff]
      %v940 = vld [vmem:[%s805 + $0x38] sm:$0xff]
      %v941 = vld [vmem:[%s805 + $0x40] sm:$0xff]
      %v942 = vld [vmem:[%s805 + $0x48] sm:$0xff]
      %v943 = vld [vmem:[%s805 + $0x50] sm:$0xff]
      %v944 = vld [vmem:[%s805 + $0x58] sm:$0xff]
      %v945 = vld [vmem:[%s805 + $0x60] sm:$0xff]
      %v946 = vld [vmem:[%s805 + $0x68] sm:$0xff]
      %v947 = vld [vmem:[%s805 + $0x70] sm:$0xff]
      %v948 = vld [vmem:[%s805 + $0x78] sm:$0xff]
      %v949 = vld [vmem:[%s805 + $0x80] sm:$0xff]
      %v950 = vld [vmem:[%s805 + $0x88] sm:$0xff]
      %v951 = vld [vmem:[%s805 + $0x90] sm:$0xff]
      %v952 = vld [vmem:[%s805 + $0x98] sm:$0xff]
      %v953 = vld [vmem:[%s805 + $0xa0] sm:$0xff]
      %v954 = vld [vmem:[%s805 + $0xa8] sm:$0xff]
      %v955 = vld [vmem:[%s805 + $0xb0] sm:$0xff]
      %v956 = vld [vmem:[%s805 + $0xb8] sm:$0xff]
      %v957 = vld [vmem:[%s805 + $0xc0] sm:$0xff]
      %v958 = vld [vmem:[%s805 + $0xc8] sm:$0xff]
      %v959 = vld [vmem:[%s805 + $0xd0] sm:$0xff]
      %v960 = vld [vmem:[%s805 + $0xd8] sm:$0xff]
      %v961 = vld [vmem:[%s805 + $0xe0] sm:$0xff]
      %v962 = vld [vmem:[%s805 + $0xe8] sm:$0xff]
      %v963 = vld [vmem:[%s805 + $0xf0] sm:$0xff]
      %v964 = vld [vmem:[%s805 + $0xf8] sm:$0xff]
      %v965 = vld [vmem:[%s815] sm:$0xff]
      %v966 = vld [vmem:[%s870] sm:$0xf]
      %968 = vst [vmem:[#allocation1] ss:$2 sm:$0xff] %v965
      %v969 = vld.sshfl [vmem:[#allocation1] sm:$0xff pattern:$0x75316420]
      %v970 = vld.sshfl [vmem:[#allocation1 + $0x8] sm:$0xff pattern:$0x75316420]
      %v973 = vand.u32 %v948, 4294901760
      %974 = vmatpush.msra.mxu0 %v973
      %v975 = vand.u32 %v947, 4294901760
      %976 = vmatpush.msra.mxu0 %v975
      %v977 = vand.u32 %v946, 4294901760
      %978 = vmatpush.msra.mxu0 %v977
      %v979 = vand.u32 %v945, 4294901760
      %980 = vmatpush.msra.mxu0 %v979
      %v981 = vand.u32 %v944, 4294901760
      %982 = vmatpush.msra.mxu0 %v981
      %v983 = vand.u32 %v943, 4294901760
      %984 = vmatpush.msra.mxu0 %v983
      %v985 = vand.u32 %v942, 4294901760
      %986 = vmatpush.msra.mxu0 %v985
      %v987 = vand.u32 %v941, 4294901760
      %988 = vmatpush.msra.mxu0 %v987
      %v989 = vand.u32 %v940, 4294901760
      %990 = vmatpush.msra.mxu0 %v989
      %v991 = vand.u32 %v939, 4294901760
      %992 = vmatpush.msra.mxu0 %v991
      %v993 = vand.u32 %v938, 4294901760
      %994 = vmatpush.msra.mxu0 %v993
      %v995 = vand.u32 %v937, 4294901760
      %996 = vmatpush.msra.mxu0 %v995
      %v997 = vand.u32 %v936, 4294901760
      %998 = vmatpush.msra.mxu0 %v997
      %v999 = vand.u32 %v935, 4294901760
      %1000 = vmatpush.msra.mxu0 %v999
      %v1001 = vand.u32 %v934, 4294901760
      %1002 = vmatpush.msra.mxu0 %v1001
      %v1003 = vand.u32 %v933, 4294901760
      %1004 = vmatpush.msra.mxu0 %v1003
      %v1005 = vand.u32 %v969, 4294901760
      %v1006 = vsub.f32 %v969, %v1005
      %v1007 = vand.u32 %v1006, 4294901760
      %v1008 = vsub.f32 %v1006, %v1007
      %v1009 = vand.u32 %v1008, 4294901760
      %1010 = vmatmul.f32.gmra.mxu0 %v1009
      %v1011 = vpop.f32.mrf.mxu0
      %v1012 = vadd.f32 0.0, %v1011
      %1013 = vdwg.mxu0
      %v1014 = vand.u32 %v948, 4294901760
      %v1015 = vsub.f32 %v948, %v1014
      %v1016 = vand.u32 %v1015, 4294901760
      %v1017 = vsub.f32 %v1015, %v1016
      %v1018 = vand.u32 %v1017, 4294901760
      %1019 = vmatpush.msra.mxu0 %v1018
      %v1020 = vand.u32 %v947, 4294901760
      %v1021 = vsub.f32 %v947, %v1020
      %v1022 = vand.u32 %v1021, 4294901760
      %v1023 = vsub.f32 %v1021, %v1022
      %v1024 = vand.u32 %v1023, 4294901760
      %1025 = vmatpush.msra.mxu0 %v1024
      %v1026 = vand.u32 %v946, 4294901760
      %v1027 = vsub.f32 %v946, %v1026
      %v1028 = vand.u32 %v1027, 4294901760
      %v1029 = vsub.f32 %v1027, %v1028
      %v1030 = vand.u32 %v1029, 4294901760
      %1031 = vmatpush.msra.mxu0 %v1030
      %v1032 = vand.u32 %v945, 4294901760
      %v1033 = vsub.f32 %v945, %v1032
      %v1034 = vand.u32 %v1033, 4294901760
      %v1035 = vsub.f32 %v1033, %v1034
      %v1036 = vand.u32 %v1035, 4294901760
      %1037 = vmatpush.msra.mxu0 %v1036
      %v1038 = vand.u32 %v944, 4294901760
      %v1039 = vsub.f32 %v944, %v1038
      %v1040 = vand.u32 %v1039, 4294901760
      %v1041 = vsub.f32 %v1039, %v1040
      %v1042 = vand.u32 %v1041, 4294901760
      %1043 = vmatpush.msra.mxu0 %v1042
      %v1044 = vand.u32 %v943, 4294901760
      %v1045 = vsub.f32 %v943, %v1044
      %v1046 = vand.u32 %v1045, 4294901760
      %v1047 = vsub.f32 %v1045, %v1046
      %v1048 = vand.u32 %v1047, 4294901760
      %1049 = vmatpush.msra.mxu0 %v1048
      %v1050 = vand.u32 %v942, 4294901760
      %v1051 = vsub.f32 %v942, %v1050
      %v1052 = vand.u32 %v1051, 4294901760
      %v1053 = vsub.f32 %v1051, %v1052
      %v1054 = vand.u32 %v1053, 4294901760
      %1055 = vmatpush.msra.mxu0 %v1054
      %v1056 = vand.u32 %v941, 4294901760
      %v1057 = vsub.f32 %v941, %v1056
      %v1058 = vand.u32 %v1057, 4294901760
      %v1059 = vsub.f32 %v1057, %v1058
      %v1060 = vand.u32 %v1059, 4294901760
      %1061 = vmatpush.msra.mxu0 %v1060
      %v1062 = vand.u32 %v940, 4294901760
      %v1063 = vsub.f32 %v940, %v1062
      %v1064 = vand.u32 %v1063, 4294901760
      %v1065 = vsub.f32 %v1063, %v1064
      %v1066 = vand.u32 %v1065, 4294901760
      %1067 = vmatpush.msra.mxu0 %v1066
      %v1068 = vand.u32 %v939, 4294901760
      %v1069 = vsub.f32 %v939, %v1068
      %v1070 = vand.u32 %v1069, 4294901760
      %v1071 = vsub.f32 %v1069, %v1070
      %v1072 = vand.u32 %v1071, 4294901760
      %1073 = vmatpush.msra.mxu0 %v1072
      %v1074 = vand.u32 %v938, 4294901760
      %v1075 = vsub.f32 %v938, %v1074
      %v1076 = vand.u32 %v1075, 4294901760
      %v1077 = vsub.f32 %v1075, %v1076
      %v1078 = vand.u32 %v1077, 4294901760
      %1079 = vmatpush.msra.mxu0 %v1078
      %v1080 = vand.u32 %v937, 4294901760
      %v1081 = vsub.f32 %v937, %v1080
      %v1082 = vand.u32 %v1081, 4294901760
      %v1083 = vsub.f32 %v1081, %v1082
      %v1084 = vand.u32 %v1083, 4294901760
      %1085 = vmatpush.msra.mxu0 %v1084
      %v1086 = vand.u32 %v936, 4294901760
      %v1087 = vsub.f32 %v936, %v1086
      %v1088 = vand.u32 %v1087, 4294901760
      %v1089 = vsub.f32 %v1087, %v1088
      %v1090 = vand.u32 %v1089, 4294901760
      %1091 = vmatpush.msra.mxu0 %v1090
      %v1092 = vand.u32 %v935, 4294901760
      %v1093 = vsub.f32 %v935, %v1092
      %v1094 = vand.u32 %v1093, 4294901760
      %v1095 = vsub.f32 %v1093, %v1094
      %v1096 = vand.u32 %v1095, 4294901760
      %1097 = vmatpush.msra.mxu0 %v1096
      %v1098 = vand.u32 %v934, 4294901760
      %v1099 = vsub.f32 %v934, %v1098
      %v1100 = vand.u32 %v1099, 4294901760
      %v1101 = vsub.f32 %v1099, %v1100
      %v1102 = vand.u32 %v1101, 4294901760
      %1103 = vmatpush.msra.mxu0 %v1102
      %v1104 = vand.u32 %v933, 4294901760
      %v1105 = vsub.f32 %v933, %v1104
      %v1106 = vand.u32 %v1105, 4294901760
      %v1107 = vsub.f32 %v1105, %v1106
      %v1108 = vand.u32 %v1107, 4294901760
      %1109 = vmatpush.msra.mxu0 %v1108
      %v1110 = vand.u32 %v969, 4294901760
      %1111 = vmatmul.f32.gmra.mxu0 %v1110
      %v1112 = vpop.f32.mrf.mxu0
      %v1113 = vadd.f32 %v1012, %v1112
      %1114 = vdwg.mxu0
      %v1115 = vand.u32 %v948, 4294901760
      %v1116 = vsub.f32 %v948, %v1115
      %1117 = vmatpush.msra.mxu0 %v1116
      %v1118 = vand.u32 %v947, 4294901760
      %v1119 = vsub.f32 %v947, %v1118
      %1120 = vmatpush.msra.mxu0 %v1119
      %v1121 = vand.u32 %v946, 4294901760
      %v1122 = vsub.f32 %v946, %v1121
      %1123 = vmatpush.msra.mxu0 %v1122
      %v1124 = vand.u32 %v945, 4294901760
      %v1125 = vsub.f32 %v945, %v1124
      %1126 = vmatpush.msra.mxu0 %v1125
      %v1127 = vand.u32 %v944, 4294901760
      %v1128 = vsub.f32 %v944, %v1127
      %1129 = vmatpush.msra.mxu0 %v1128
      %v1130 = vand.u32 %v943, 4294901760
      %v1131 = vsub.f32 %v943, %v1130
      %1132 = vmatpush.msra.mxu0 %v1131
      %v1133 = vand.u32 %v942, 4294901760
      %v1134 = vsub.f32 %v942, %v1133
      %1135 = vmatpush.msra.mxu0 %v1134
      %v1136 = vand.u32 %v941, 4294901760
      %v1137 = vsub.f32 %v941, %v1136
      %1138 = vmatpush.msra.mxu0 %v1137
      %v1139 = vand.u32 %v940, 4294901760
      %v1140 = vsub.f32 %v940, %v1139
      %1141 = vmatpush.msra.mxu0 %v1140
      %v1142 = vand.u32 %v939, 4294901760
      %v1143 = vsub.f32 %v939, %v1142
      %1144 = vmatpush.msra.mxu0 %v1143
      %v1145 = vand.u32 %v938, 4294901760
      %v1146 = vsub.f32 %v938, %v1145
      %1147 = vmatpush.msra.mxu0 %v1146
      %v1148 = vand.u32 %v937, 4294901760
      %v1149 = vsub.f32 %v937, %v1148
      %1150 = vmatpush.msra.mxu0 %v1149
      %v1151 = vand.u32 %v936, 4294901760
      %v1152 = vsub.f32 %v936, %v1151
      %1153 = vmatpush.msra.mxu0 %v1152
      %v1154 = vand.u32 %v935, 4294901760
      %v1155 = vsub.f32 %v935, %v1154
      %1156 = vmatpush.msra.mxu0 %v1155
      %v1157 = vand.u32 %v934, 4294901760
      %v1158 = vsub.f32 %v934, %v1157
      %1159 = vmatpush.msra.mxu0 %v1158
      %v1160 = vand.u32 %v933, 4294901760
      %v1161 = vsub.f32 %v933, %v1160
      %1162 = vmatpush.msra.mxu0 %v1161
      %v1163 = vand.u32 %v969, 4294901760
      %v1164 = vsub.f32 %v969, %v1163
      %1165 = vmatmul.f32.gmra.mxu0 %v1164
      %v1166 = vpop.f32.mrf.mxu0
      %v1167 = vadd.f32 %v1113, %v1166
      %1168 = vdwg.mxu0
      %v1169 = vand.u32 %v948, 4294901760
      %1170 = vmatpush.msra.mxu0 %v1169
      %v1171 = vand.u32 %v947, 4294901760
      %1172 = vmatpush.msra.mxu0 %v1171
      %v1173 = vand.u32 %v946, 4294901760
      %1174 = vmatpush.msra.mxu0 %v1173
      %v1175 = vand.u32 %v945, 4294901760
      %1176 = vmatpush.msra.mxu0 %v1175
      %v1177 = vand.u32 %v944, 4294901760
      %1178 = vmatpush.msra.mxu0 %v1177
      %v1179 = vand.u32 %v943, 4294901760
      %1180 = vmatpush.msra.mxu0 %v1179
      %v1181 = vand.u32 %v942, 4294901760
      %1182 = vmatpush.msra.mxu0 %v1181
      %v1183 = vand.u32 %v941, 4294901760
      %1184 = vmatpush.msra.mxu0 %v1183
      %v1185 = vand.u32 %v940, 4294901760
      %1186 = vmatpush.msra.mxu0 %v1185
      %v1187 = vand.u32 %v939, 4294901760
      %1188 = vmatpush.msra.mxu0 %v1187
      %v1189 = vand.u32 %v938, 4294901760
      %1190 = vmatpush.msra.mxu0 %v1189
      %v1191 = vand.u32 %v937, 4294901760
      %1192 = vmatpush.msra.mxu0 %v1191
      %v1193 = vand.u32 %v936, 4294901760
      %1194 = vmatpush.msra.mxu0 %v1193
      %v1195 = vand.u32 %v935, 4294901760
      %1196 = vmatpush.msra.mxu0 %v1195
      %v1197 = vand.u32 %v934, 4294901760
      %1198 = vmatpush.msra.mxu0 %v1197
      %v1199 = vand.u32 %v933, 4294901760
      %1200 = vmatpush.msra.mxu0 %v1199
      %v1201 = vand.u32 %v969, 4294901760
      %v1202 = vsub.f32 %v969, %v1201
      %v1203 = vand.u32 %v1202, 4294901760
      %1204 = vmatmul.f32.gmra.mxu0 %v1203
      %v1205 = vpop.f32.mrf.mxu0
      %v1206 = vadd.f32 %v1167, %v1205
      %1207 = vdwg.mxu0
      %v1208 = vand.u32 %v948, 4294901760
      %v1209 = vsub.f32 %v948, %v1208
      %v1210 = vand.u32 %v1209, 4294901760
      %1211 = vmatpush.msra.mxu0 %v1210
      %v1212 = vand.u32 %v947, 4294901760
      %v1213 = vsub.f32 %v947, %v1212
      %v1214 = vand.u32 %v1213, 4294901760
      %1215 = vmatpush.msra.mxu0 %v1214
      %v1216 = vand.u32 %v946, 4294901760
      %v1217 = vsub.f32 %v946, %v1216
      %v1218 = vand.u32 %v1217, 4294901760
      %1219 = vmatpush.msra.mxu0 %v1218
      %v1220 = vand.u32 %v945, 4294901760
      %v1221 = vsub.f32 %v945, %v1220
      %v1222 = vand.u32 %v1221, 4294901760
      %1223 = vmatpush.msra.mxu0 %v1222
      %v1224 = vand.u32 %v944, 4294901760
      %v1225 = vsub.f32 %v944, %v1224
      %v1226 = vand.u32 %v1225, 4294901760
      %1227 = vmatpush.msra.mxu0 %v1226
      %v1228 = vand.u32 %v943, 4294901760
      %v1229 = vsub.f32 %v943, %v1228
      %v1230 = vand.u32 %v1229, 4294901760
      %1231 = vmatpush.msra.mxu0 %v1230
      %v1232 = vand.u32 %v942, 4294901760
      %v1233 = vsub.f32 %v942, %v1232
      %v1234 = vand.u32 %v1233, 4294901760
      %1235 = vmatpush.msra.mxu0 %v1234
      %v1236 = vand.u32 %v941, 4294901760
      %v1237 = vsub.f32 %v941, %v1236
      %v1238 = vand.u32 %v1237, 4294901760
      %1239 = vmatpush.msra.mxu0 %v1238
      %v1240 = vand.u32 %v940, 4294901760
      %v1241 = vsub.f32 %v940, %v1240
      %v1242 = vand.u32 %v1241, 4294901760
      %1243 = vmatpush.msra.mxu0 %v1242
      %v1244 = vand.u32 %v939, 4294901760
      %v1245 = vsub.f32 %v939, %v1244
      %v1246 = vand.u32 %v1245, 4294901760
      %1247 = vmatpush.msra.mxu0 %v1246
      %v1248 = vand.u32 %v938, 4294901760
      %v1249 = vsub.f32 %v938, %v1248
      %v1250 = vand.u32 %v1249, 4294901760
      %1251 = vmatpush.msra.mxu0 %v1250
      %v1252 = vand.u32 %v937, 4294901760
      %v1253 = vsub.f32 %v937, %v1252
      %v1254 = vand.u32 %v1253, 4294901760
      %1255 = vmatpush.msra.mxu0 %v1254
      %v1256 = vand.u32 %v936, 4294901760
      %v1257 = vsub.f32 %v936, %v1256
      %v1258 = vand.u32 %v1257, 4294901760
      %1259 = vmatpush.msra.mxu0 %v1258
      %v1260 = vand.u32 %v935, 4294901760
      %v1261 = vsub.f32 %v935, %v1260
      %v1262 = vand.u32 %v1261, 4294901760
      %1263 = vmatpush.msra.mxu0 %v1262
      %v1264 = vand.u32 %v934, 4294901760
      %v1265 = vsub.f32 %v934, %v1264
      %v1266 = vand.u32 %v1265, 4294901760
      %1267 = vmatpush.msra.mxu0 %v1266
      %v1268 = vand.u32 %v933, 4294901760
      %v1269 = vsub.f32 %v933, %v1268
      %v1270 = vand.u32 %v1269, 4294901760
      %1271 = vmatpush.msra.mxu0 %v1270
      %v1272 = vand.u32 %v969, 4294901760
      %1273 = vmatmul.f32.gmra.mxu0 %v1272
      %v1274 = vpop.f32.mrf.mxu0
      %v1275 = vadd.f32 %v1206, %v1274
      %1276 = vdwg.mxu0
      %v1277 = vand.u32 %v948, 4294901760
      %1278 = vmatpush.msra.mxu0 %v1277
      %v1279 = vand.u32 %v947, 4294901760
      %1280 = vmatpush.msra.mxu0 %v1279
      %v1281 = vand.u32 %v946, 4294901760
      %1282 = vmatpush.msra.mxu0 %v1281
      %v1283 = vand.u32 %v945, 4294901760
      %1284 = vmatpush.msra.mxu0 %v1283
      %v1285 = vand.u32 %v944, 4294901760
      %1286 = vmatpush.msra.mxu0 %v1285
      %v1287 = vand.u32 %v943, 4294901760
      %1288 = vmatpush.msra.mxu0 %v1287
      %v1289 = vand.u32 %v942, 4294901760
      %1290 = vmatpush.msra.mxu0 %v1289
      %v1291 = vand.u32 %v941, 4294901760
      %1292 = vmatpush.msra.mxu0 %v1291
      %v1293 = vand.u32 %v940, 4294901760
      %1294 = vmatpush.msra.mxu0 %v1293
      %v1295 = vand.u32 %v939, 4294901760
      %1296 = vmatpush.msra.mxu0 %v1295
      %v1297 = vand.u32 %v938, 4294901760
      %1298 = vmatpush.msra.mxu0 %v1297
      %v1299 = vand.u32 %v937, 4294901760
      %1300 = vmatpush.msra.mxu0 %v1299
      %v1301 = vand.u32 %v936, 4294901760
      %1302 = vmatpush.msra.mxu0 %v1301
      %v1303 = vand.u32 %v935, 4294901760
      %1304 = vmatpush.msra.mxu0 %v1303
      %v1305 = vand.u32 %v934, 4294901760
      %1306 = vmatpush.msra.mxu0 %v1305
      %v1307 = vand.u32 %v933, 4294901760
      %1308 = vmatpush.msra.mxu0 %v1307
      %v1309 = vand.u32 %v969, 4294901760
      %1310 = vmatmul.f32.gmra.mxu0 %v1309
      %v1311 = vpop.f32.mrf.mxu0
      %v1312 = vadd.f32 %v1275, %v1311
      %1313 = vdwg.mxu0
      %v1314 = vand.u32 %v964, 4294901760
      %1315 = vmatpush.msra.mxu0 %v1314
      %v1316 = vand.u32 %v963, 4294901760
      %1317 = vmatpush.msra.mxu0 %v1316
      %v1318 = vand.u32 %v962, 4294901760
      %1319 = vmatpush.msra.mxu0 %v1318
      %v1320 = vand.u32 %v961, 4294901760
      %1321 = vmatpush.msra.mxu0 %v1320
      %v1322 = vand.u32 %v960, 4294901760
      %1323 = vmatpush.msra.mxu0 %v1322
      %v1324 = vand.u32 %v959, 4294901760
      %1325 = vmatpush.msra.mxu0 %v1324
      %v1326 = vand.u32 %v958, 4294901760
      %1327 = vmatpush.msra.mxu0 %v1326
      %v1328 = vand.u32 %v957, 4294901760
      %1329 = vmatpush.msra.mxu0 %v1328
      %v1330 = vand.u32 %v956, 4294901760
      %1331 = vmatpush.msra.mxu0 %v1330
      %v1332 = vand.u32 %v955, 4294901760
      %1333 = vmatpush.msra.mxu0 %v1332
      %v1334 = vand.u32 %v954, 4294901760
      %1335 = vmatpush.msra.mxu0 %v1334
      %v1336 = vand.u32 %v953, 4294901760
      %1337 = vmatpush.msra.mxu0 %v1336
      %v1338 = vand.u32 %v952, 4294901760
      %1339 = vmatpush.msra.mxu0 %v1338
      %v1340 = vand.u32 %v951, 4294901760
      %1341 = vmatpush.msra.mxu0 %v1340
      %v1342 = vand.u32 %v950, 4294901760
      %1343 = vmatpush.msra.mxu0 %v1342
      %v1344 = vand.u32 %v949, 4294901760
      %1345 = vmatpush.msra.mxu0 %v1344
      %v1346 = vand.u32 %v970, 4294901760
      %v1347 = vsub.f32 %v970, %v1346
      %v1348 = vand.u32 %v1347, 4294901760
      %v1349 = vsub.f32 %v1347, %v1348
      %v1350 = vand.u32 %v1349, 4294901760
      %1351 = vmatmul.f32.gmra.mxu0 %v1350
      %v1352 = vpop.f32.mrf.mxu0
      %v1353 = vadd.f32 %v1312, %v1352
      %1354 = vdwg.mxu0
      %v1355 = vand.u32 %v964, 4294901760
      %v1356 = vsub.f32 %v964, %v1355
      %v1357 = vand.u32 %v1356, 4294901760
      %v1358 = vsub.f32 %v1356, %v1357
      %v1359 = vand.u32 %v1358, 4294901760
      %1360 = vmatpush.msra.mxu0 %v1359
      %v1361 = vand.u32 %v963, 4294901760
      %v1362 = vsub.f32 %v963, %v1361
      %v1363 = vand.u32 %v1362, 4294901760
      %v1364 = vsub.f32 %v1362, %v1363
      %v1365 = vand.u32 %v1364, 4294901760
      %1366 = vmatpush.msra.mxu0 %v1365
      %v1367 = vand.u32 %v962, 4294901760
      %v1368 = vsub.f32 %v962, %v1367
      %v1369 = vand.u32 %v1368, 4294901760
      %v1370 = vsub.f32 %v1368, %v1369
      %v1371 = vand.u32 %v1370, 4294901760
      %1372 = vmatpush.msra.mxu0 %v1371
      %v1373 = vand.u32 %v961, 4294901760
      %v1374 = vsub.f32 %v961, %v1373
      %v1375 = vand.u32 %v1374, 4294901760
      %v1376 = vsub.f32 %v1374, %v1375
      %v1377 = vand.u32 %v1376, 4294901760
      %1378 = vmatpush.msra.mxu0 %v1377
      %v1379 = vand.u32 %v960, 4294901760
      %v1380 = vsub.f32 %v960, %v1379
      %v1381 = vand.u32 %v1380, 4294901760
      %v1382 = vsub.f32 %v1380, %v1381
      %v1383 = vand.u32 %v1382, 4294901760
      %1384 = vmatpush.msra.mxu0 %v1383
      %v1385 = vand.u32 %v959, 4294901760
      %v1386 = vsub.f32 %v959, %v1385
      %v1387 = vand.u32 %v1386, 4294901760
      %v1388 = vsub.f32 %v1386, %v1387
      %v1389 = vand.u32 %v1388, 4294901760
      %1390 = vmatpush.msra.mxu0 %v1389
      %v1391 = vand.u32 %v958, 4294901760
      %v1392 = vsub.f32 %v958, %v1391
      %v1393 = vand.u32 %v1392, 4294901760
      %v1394 = vsub.f32 %v1392, %v1393
      %v1395 = vand.u32 %v1394, 4294901760
      %1396 = vmatpush.msra.mxu0 %v1395
      %v1397 = vand.u32 %v957, 4294901760
      %v1398 = vsub.f32 %v957, %v1397
      %v1399 = vand.u32 %v1398, 4294901760
      %v1400 = vsub.f32 %v1398, %v1399
      %v1401 = vand.u32 %v1400, 4294901760
      %1402 = vmatpush.msra.mxu0 %v1401
      %v1403 = vand.u32 %v956, 4294901760
      %v1404 = vsub.f32 %v956, %v1403
      %v1405 = vand.u32 %v1404, 4294901760
      %v1406 = vsub.f32 %v1404, %v1405
      %v1407 = vand.u32 %v1406, 4294901760
      %1408 = vmatpush.msra.mxu0 %v1407
      %v1409 = vand.u32 %v955, 4294901760
      %v1410 = vsub.f32 %v955, %v1409
      %v1411 = vand.u32 %v1410, 4294901760
      %v1412 = vsub.f32 %v1410, %v1411
      %v1413 = vand.u32 %v1412, 4294901760
      %1414 = vmatpush.msra.mxu0 %v1413
      %v1415 = vand.u32 %v954, 4294901760
      %v1416 = vsub.f32 %v954, %v1415
      %v1417 = vand.u32 %v1416, 4294901760
      %v1418 = vsub.f32 %v1416, %v1417
      %v1419 = vand.u32 %v1418, 4294901760
      %1420 = vmatpush.msra.mxu0 %v1419
      %v1421 = vand.u32 %v953, 4294901760
      %v1422 = vsub.f32 %v953, %v1421
      %v1423 = vand.u32 %v1422, 4294901760
      %v1424 = vsub.f32 %v1422, %v1423
      %v1425 = vand.u32 %v1424, 4294901760
      %1426 = vmatpush.msra.mxu0 %v1425
      %v1427 = vand.u32 %v952, 4294901760
      %v1428 = vsub.f32 %v952, %v1427
      %v1429 = vand.u32 %v1428, 4294901760
      %v1430 = vsub.f32 %v1428, %v1429
      %v1431 = vand.u32 %v1430, 4294901760
      %1432 = vmatpush.msra.mxu0 %v1431
      %v1433 = vand.u32 %v951, 4294901760
      %v1434 = vsub.f32 %v951, %v1433
      %v1435 = vand.u32 %v1434, 4294901760
      %v1436 = vsub.f32 %v1434, %v1435
      %v1437 = vand.u32 %v1436, 4294901760
      %1438 = vmatpush.msra.mxu0 %v1437
      %v1439 = vand.u32 %v950, 4294901760
      %v1440 = vsub.f32 %v950, %v1439
      %v1441 = vand.u32 %v1440, 4294901760
      %v1442 = vsub.f32 %v1440, %v1441
      %v1443 = vand.u32 %v1442, 4294901760
      %1444 = vmatpush.msra.mxu0 %v1443
      %v1445 = vand.u32 %v949, 4294901760
      %v1446 = vsub.f32 %v949, %v1445
      %v1447 = vand.u32 %v1446, 4294901760
      %v1448 = vsub.f32 %v1446, %v1447
      %v1449 = vand.u32 %v1448, 4294901760
      %1450 = vmatpush.msra.mxu0 %v1449
      %v1451 = vand.u32 %v970, 4294901760
      %1452 = vmatmul.f32.gmra.mxu0 %v1451
      %v1453 = vpop.f32.mrf.mxu0
      %v1454 = vadd.f32 %v1353, %v1453
      %1455 = vdwg.mxu0
      %v1456 = vand.u32 %v964, 4294901760
      %v1457 = vsub.f32 %v964, %v1456
      %1458 = vmatpush.msra.mxu0 %v1457
      %v1459 = vand.u32 %v963, 4294901760
      %v1460 = vsub.f32 %v963, %v1459
      %1461 = vmatpush.msra.mxu0 %v1460
      %v1462 = vand.u32 %v962, 4294901760
      %v1463 = vsub.f32 %v962, %v1462
      %1464 = vmatpush.msra.mxu0 %v1463
      %v1465 = vand.u32 %v961, 4294901760
      %v1466 = vsub.f32 %v961, %v1465
      %1467 = vmatpush.msra.mxu0 %v1466
      %v1468 = vand.u32 %v960, 4294901760
      %v1469 = vsub.f32 %v960, %v1468
      %1470 = vmatpush.msra.mxu0 %v1469
      %v1471 = vand.u32 %v959, 4294901760
      %v1472 = vsub.f32 %v959, %v1471
      %1473 = vmatpush.msra.mxu0 %v1472
      %v1474 = vand.u32 %v958, 4294901760
      %v1475 = vsub.f32 %v958, %v1474
      %1476 = vmatpush.msra.mxu0 %v1475
      %v1477 = vand.u32 %v957, 4294901760
      %v1478 = vsub.f32 %v957, %v1477
      %1479 = vmatpush.msra.mxu0 %v1478
      %v1480 = vand.u32 %v956, 4294901760
      %v1481 = vsub.f32 %v956, %v1480
      %1482 = vmatpush.msra.mxu0 %v1481
      %v1483 = vand.u32 %v955, 4294901760
      %v1484 = vsub.f32 %v955, %v1483
      %1485 = vmatpush.msra.mxu0 %v1484
      %v1486 = vand.u32 %v954, 4294901760
      %v1487 = vsub.f32 %v954, %v1486
      %1488 = vmatpush.msra.mxu0 %v1487
      %v1489 = vand.u32 %v953, 4294901760
      %v1490 = vsub.f32 %v953, %v1489
      %1491 = vmatpush.msra.mxu0 %v1490
      %v1492 = vand.u32 %v952, 4294901760
      %v1493 = vsub.f32 %v952, %v1492
      %1494 = vmatpush.msra.mxu0 %v1493
      %v1495 = vand.u32 %v951, 4294901760
      %v1496 = vsub.f32 %v951, %v1495
      %1497 = vmatpush.msra.mxu0 %v1496
      %v1498 = vand.u32 %v950, 4294901760
      %v1499 = vsub.f32 %v950, %v1498
      %1500 = vmatpush.msra.mxu0 %v1499
      %v1501 = vand.u32 %v949, 4294901760
      %v1502 = vsub.f32 %v949, %v1501
      %1503 = vmatpush.msra.mxu0 %v1502
      %v1504 = vand.u32 %v970, 4294901760
      %v1505 = vsub.f32 %v970, %v1504
      %1506 = vmatmul.f32.gmra.mxu0 %v1505
      %v1507 = vpop.f32.mrf.mxu0
      %v1508 = vadd.f32 %v1454, %v1507
      %1509 = vdwg.mxu0
      %v1510 = vand.u32 %v964, 4294901760
      %1511 = vmatpush.msra.mxu0 %v1510
      %v1512 = vand.u32 %v963, 4294901760
      %1513 = vmatpush.msra.mxu0 %v1512
      %v1514 = vand.u32 %v962, 4294901760
      %1515 = vmatpush.msra.mxu0 %v1514
      %v1516 = vand.u32 %v961, 4294901760
      %1517 = vmatpush.msra.mxu0 %v1516
      %v1518 = vand.u32 %v960, 4294901760
      %1519 = vmatpush.msra.mxu0 %v1518
      %v1520 = vand.u32 %v959, 4294901760
      %1521 = vmatpush.msra.mxu0 %v1520
      %v1522 = vand.u32 %v958, 4294901760
      %1523 = vmatpush.msra.mxu0 %v1522
      %v1524 = vand.u32 %v957, 4294901760
      %1525 = vmatpush.msra.mxu0 %v1524
      %v1526 = vand.u32 %v956, 4294901760
      %1527 = vmatpush.msra.mxu0 %v1526
      %v1528 = vand.u32 %v955, 4294901760
      %1529 = vmatpush.msra.mxu0 %v1528
      %v1530 = vand.u32 %v954, 4294901760
      %1531 = vmatpush.msra.mxu0 %v1530
      %v1532 = vand.u32 %v953, 4294901760
      %1533 = vmatpush.msra.mxu0 %v1532
      %v1534 = vand.u32 %v952, 4294901760
      %1535 = vmatpush.msra.mxu0 %v1534
      %v1536 = vand.u32 %v951, 4294901760
      %1537 = vmatpush.msra.mxu0 %v1536
      %v1538 = vand.u32 %v950, 4294901760
      %1539 = vmatpush.msra.mxu0 %v1538
      %v1540 = vand.u32 %v949, 4294901760
      %1541 = vmatpush.msra.mxu0 %v1540
      %v1542 = vand.u32 %v970, 4294901760
      %v1543 = vsub.f32 %v970, %v1542
      %v1544 = vand.u32 %v1543, 4294901760
      %1545 = vmatmul.f32.gmra.mxu0 %v1544
      %v1546 = vpop.f32.mrf.mxu0
      %v1547 = vadd.f32 %v1508, %v1546
      %1548 = vdwg.mxu0
      %v1549 = vand.u32 %v964, 4294901760
      %v1550 = vsub.f32 %v964, %v1549
      %v1551 = vand.u32 %v1550, 4294901760
      %1552 = vmatpush.msra.mxu0 %v1551
      %v1553 = vand.u32 %v963, 4294901760
      %v1554 = vsub.f32 %v963, %v1553
      %v1555 = vand.u32 %v1554, 4294901760
      %1556 = vmatpush.msra.mxu0 %v1555
      %v1557 = vand.u32 %v962, 4294901760
      %v1558 = vsub.f32 %v962, %v1557
      %v1559 = vand.u32 %v1558, 4294901760
      %1560 = vmatpush.msra.mxu0 %v1559
      %v1561 = vand.u32 %v961, 4294901760
      %v1562 = vsub.f32 %v961, %v1561
      %v1563 = vand.u32 %v1562, 4294901760
      %1564 = vmatpush.msra.mxu0 %v1563
      %v1565 = vand.u32 %v960, 4294901760
      %v1566 = vsub.f32 %v960, %v1565
      %v1567 = vand.u32 %v1566, 4294901760
      %1568 = vmatpush.msra.mxu0 %v1567
      %v1569 = vand.u32 %v959, 4294901760
      %v1570 = vsub.f32 %v959, %v1569
      %v1571 = vand.u32 %v1570, 4294901760
      %1572 = vmatpush.msra.mxu0 %v1571
      %v1573 = vand.u32 %v958, 4294901760
      %v1574 = vsub.f32 %v958, %v1573
      %v1575 = vand.u32 %v1574, 4294901760
      %1576 = vmatpush.msra.mxu0 %v1575
      %v1577 = vand.u32 %v957, 4294901760
      %v1578 = vsub.f32 %v957, %v1577
      %v1579 = vand.u32 %v1578, 4294901760
      %1580 = vmatpush.msra.mxu0 %v1579
      %v1581 = vand.u32 %v956, 4294901760
      %v1582 = vsub.f32 %v956, %v1581
      %v1583 = vand.u32 %v1582, 4294901760
      %1584 = vmatpush.msra.mxu0 %v1583
      %v1585 = vand.u32 %v955, 4294901760
      %v1586 = vsub.f32 %v955, %v1585
      %v1587 = vand.u32 %v1586, 4294901760
      %1588 = vmatpush.msra.mxu0 %v1587
      %v1589 = vand.u32 %v954, 4294901760
      %v1590 = vsub.f32 %v954, %v1589
      %v1591 = vand.u32 %v1590, 4294901760
      %1592 = vmatpush.msra.mxu0 %v1591
      %v1593 = vand.u32 %v953, 4294901760
      %v1594 = vsub.f32 %v953, %v1593
      %v1595 = vand.u32 %v1594, 4294901760
      %1596 = vmatpush.msra.mxu0 %v1595
      %v1597 = vand.u32 %v952, 4294901760
      %v1598 = vsub.f32 %v952, %v1597
      %v1599 = vand.u32 %v1598, 4294901760
      %1600 = vmatpush.msra.mxu0 %v1599
      %v1601 = vand.u32 %v951, 4294901760
      %v1602 = vsub.f32 %v951, %v1601
      %v1603 = vand.u32 %v1602, 4294901760
      %1604 = vmatpush.msra.mxu0 %v1603
      %v1605 = vand.u32 %v950, 4294901760
      %v1606 = vsub.f32 %v950, %v1605
      %v1607 = vand.u32 %v1606, 4294901760
      %1608 = vmatpush.msra.mxu0 %v1607
      %v1609 = vand.u32 %v949, 4294901760
      %v1610 = vsub.f32 %v949, %v1609
      %v1611 = vand.u32 %v1610, 4294901760
      %1612 = vmatpush.msra.mxu0 %v1611
      %v1613 = vand.u32 %v970, 4294901760
      %1614 = vmatmul.f32.gmra.mxu0 %v1613
      %v1615 = vpop.f32.mrf.mxu0
      %v1616 = vadd.f32 %v1547, %v1615
      %1617 = vdwg.mxu0
      %v1618 = vand.u32 %v964, 4294901760
      %1619 = vmatpush.msra.mxu0 %v1618
      %v1620 = vand.u32 %v963, 4294901760
      %1621 = vmatpush.msra.mxu0 %v1620
      %v1622 = vand.u32 %v962, 4294901760
      %1623 = vmatpush.msra.mxu0 %v1622
      %v1624 = vand.u32 %v961, 4294901760
      %1625 = vmatpush.msra.mxu0 %v1624
      %v1626 = vand.u32 %v960, 4294901760
      %1627 = vmatpush.msra.mxu0 %v1626
      %v1628 = vand.u32 %v959, 4294901760
      %1629 = vmatpush.msra.mxu0 %v1628
      %v1630 = vand.u32 %v958, 4294901760
      %1631 = vmatpush.msra.mxu0 %v1630
      %v1632 = vand.u32 %v957, 4294901760
      %1633 = vmatpush.msra.mxu0 %v1632
      %v1634 = vand.u32 %v956, 4294901760
      %1635 = vmatpush.msra.mxu0 %v1634
      %v1636 = vand.u32 %v955, 4294901760
      %1637 = vmatpush.msra.mxu0 %v1636
      %v1638 = vand.u32 %v954, 4294901760
      %1639 = vmatpush.msra.mxu0 %v1638
      %v1640 = vand.u32 %v953, 4294901760
      %1641 = vmatpush.msra.mxu0 %v1640
      %v1642 = vand.u32 %v952, 4294901760
      %1643 = vmatpush.msra.mxu0 %v1642
      %v1644 = vand.u32 %v951, 4294901760
      %1645 = vmatpush.msra.mxu0 %v1644
      %v1646 = vand.u32 %v950, 4294901760
      %1647 = vmatpush.msra.mxu0 %v1646
      %v1648 = vand.u32 %v949, 4294901760
      %1649 = vmatpush.msra.mxu0 %v1648
      %v1650 = vand.u32 %v970, 4294901760
      %1651 = vmatmul.f32.gmra.mxu0 %v1650
      %v1652 = vpop.f32.mrf.mxu0
      %v1653 = vadd.f32 %v1616, %v1652
      %1654 = vdwg.mxu0
      %v1655 = vadd.f32 %v966, %v1653
      %vm1656 = vcmask 35840
      %1657 = vst.msk [vmem:[%s870] sm:$0xf] %vm1656, %v1655
      %v1658 = vld [vmem:[%s894] sm:$0xf]
      %v1659 = vmul.f32 %v965, %v965
      %1661 = vst [vmem:[#allocation1] ss:$2 sm:$0xff] %v1659
      %v1662 = vld.sshfl [vmem:[#allocation1] sm:$0xff pattern:$0x75316420]
      %v1663 = vld.sshfl [vmem:[#allocation1 + $0x8] sm:$0xff pattern:$0x75316420]
      %vm1666 = vcmask 1043456
      %v1667 = vsel %vm1666, %v1662, 0.0
      %v1668 = vsel %vm1666, %v1663, 0.0
      %v1669 = vadd.f32 %v1667, %v1668
      %1670 = vadd.xlane.f32.xlu0 %v1669
      %v1671 = vpop.xlane.xlu0 %1670
      %v1672 = vadd.f32 %v1658, %v1671
      %vm1673 = vcmask 3072
      %1674 = vst.msk [vmem:[%s894] sm:$0xf] %vm1673, %v1672
      %v1675 = vld [vmem:[%s825] sm:$0xff]
      %v1676 = vld [vmem:[%s874] sm:$0xf]
      %1678 = vst [vmem:[#allocation1] ss:$2 sm:$0xff] %v1675
      %v1679 = vld.sshfl [vmem:[#allocation1] sm:$0xff pattern:$0x75316420]
      %v1680 = vld.sshfl [vmem:[#allocation1 + $0x8] sm:$0xff pattern:$0x75316420]
      %v1683 = vand.u32 %v948, 4294901760
      %1684 = vmatpush.msra.mxu0 %v1683
      %v1685 = vand.u32 %v947, 4294901760
      %1686 = vmatpush.msra.mxu0 %v1685
      %v1687 = vand.u32 %v946, 4294901760
      %1688 = vmatpush.msra.mxu0 %v1687
      %v1689 = vand.u32 %v945, 4294901760
      %1690 = vmatpush.msra.mxu0 %v1689
      %v1691 = vand.u32 %v944, 4294901760
      %1692 = vmatpush.msra.mxu0 %v1691
      %v1693 = vand.u32 %v943, 4294901760
      %1694 = vmatpush.msra.mxu0 %v1693
      %v1695 = vand.u32 %v942, 4294901760
      %1696 = vmatpush.msra.mxu0 %v1695
      %v1697 = vand.u32 %v941, 4294901760
      %1698 = vmatpush.msra.mxu0 %v1697
      %v1699 = vand.u32 %v940, 4294901760
      %1700 = vmatpush.msra.mxu0 %v1699
      %v1701 = vand.u32 %v939, 4294901760
      %1702 = vmatpush.msra.mxu0 %v1701
      %v1703 = vand.u32 %v938, 4294901760
      %1704 = vmatpush.msra.mxu0 %v1703
      %v1705 = vand.u32 %v937, 4294901760
      %1706 = vmatpush.msra.mxu0 %v1705
      %v1707 = vand.u32 %v936, 4294901760
      %1708 = vmatpush.msra.mxu0 %v1707
      %v1709 = vand.u32 %v935, 4294901760
      %1710 = vmatpush.msra.mxu0 %v1709
      %v1711 = vand.u32 %v934, 4294901760
      %1712 = vmatpush.msra.mxu0 %v1711
      %v1713 = vand.u32 %v933, 4294901760
      %1714 = vmatpush.msra.mxu0 %v1713
      %v1715 = vand.u32 %v1679, 4294901760
      %v1716 = vsub.f32 %v1679, %v1715
      %v1717 = vand.u32 %v1716, 4294901760
      %v1718 = vsub.f32 %v1716, %v1717
      %v1719 = vand.u32 %v1718, 4294901760
      %1720 = vmatmul.f32.gmra.mxu0 %v1719
      %v1721 = vpop.f32.mrf.mxu0
      %v1722 = vadd.f32 0.0, %v1721
      %1723 = vdwg.mxu0
      %v1724 = vand.u32 %v948, 4294901760
      %v1725 = vsub.f32 %v948, %v1724
      %v1726 = vand.u32 %v1725, 4294901760
      %v1727 = vsub.f32 %v1725, %v1726
      %v1728 = vand.u32 %v1727, 4294901760
      %1729 = vmatpush.msra.mxu0 %v1728
      %v1730 = vand.u32 %v947, 4294901760
      %v1731 = vsub.f32 %v947, %v1730
      %v1732 = vand.u32 %v1731, 4294901760
      %v1733 = vsub.f32 %v1731, %v1732
      %v1734 = vand.u32 %v1733, 4294901760
      %1735 = vmatpush.msra.mxu0 %v1734
      %v1736 = vand.u32 %v946, 4294901760
      %v1737 = vsub.f32 %v946, %v1736
      %v1738 = vand.u32 %v1737, 4294901760
      %v1739 = vsub.f32 %v1737, %v1738
      %v1740 = vand.u32 %v1739, 4294901760
      %1741 = vmatpush.msra.mxu0 %v1740
      %v1742 = vand.u32 %v945, 4294901760
      %v1743 = vsub.f32 %v945, %v1742
      %v1744 = vand.u32 %v1743, 4294901760
      %v1745 = vsub.f32 %v1743, %v1744
      %v1746 = vand.u32 %v1745, 4294901760
      %1747 = vmatpush.msra.mxu0 %v1746
      %v1748 = vand.u32 %v944, 4294901760
      %v1749 = vsub.f32 %v944, %v1748
      %v1750 = vand.u32 %v1749, 4294901760
      %v1751 = vsub.f32 %v1749, %v1750
      %v1752 = vand.u32 %v1751, 4294901760
      %1753 = vmatpush.msra.mxu0 %v1752
      %v1754 = vand.u32 %v943, 4294901760
      %v1755 = vsub.f32 %v943, %v1754
      %v1756 = vand.u32 %v1755, 4294901760
      %v1757 = vsub.f32 %v1755, %v1756
      %v1758 = vand.u32 %v1757, 4294901760
      %1759 = vmatpush.msra.mxu0 %v1758
      %v1760 = vand.u32 %v942, 4294901760
      %v1761 = vsub.f32 %v942, %v1760
      %v1762 = vand.u32 %v1761, 4294901760
      %v1763 = vsub.f32 %v1761, %v1762
      %v1764 = vand.u32 %v1763, 4294901760
      %1765 = vmatpush.msra.mxu0 %v1764
      %v1766 = vand.u32 %v941, 4294901760
      %v1767 = vsub.f32 %v941, %v1766
      %v1768 = vand.u32 %v1767, 4294901760
      %v1769 = vsub.f32 %v1767, %v1768
      %v1770 = vand.u32 %v1769, 4294901760
      %1771 = vmatpush.msra.mxu0 %v1770
      %v1772 = vand.u32 %v940, 4294901760
      %v1773 = vsub.f32 %v940, %v1772
      %v1774 = vand.u32 %v1773, 4294901760
      %v1775 = vsub.f32 %v1773, %v1774
      %v1776 = vand.u32 %v1775, 4294901760
      %1777 = vmatpush.msra.mxu0 %v1776
      %v1778 = vand.u32 %v939, 4294901760
      %v1779 = vsub.f32 %v939, %v1778
      %v1780 = vand.u32 %v1779, 4294901760
      %v1781 = vsub.f32 %v1779, %v1780
      %v1782 = vand.u32 %v1781, 4294901760
      %1783 = vmatpush.msra.mxu0 %v1782
      %v1784 = vand.u32 %v938, 4294901760
      %v1785 = vsub.f32 %v938, %v1784
      %v1786 = vand.u32 %v1785, 4294901760
      %v1787 = vsub.f32 %v1785, %v1786
      %v1788 = vand.u32 %v1787, 4294901760
      %1789 = vmatpush.msra.mxu0 %v1788
      %v1790 = vand.u32 %v937, 4294901760
      %v1791 = vsub.f32 %v937, %v1790
      %v1792 = vand.u32 %v1791, 4294901760
      %v1793 = vsub.f32 %v1791, %v1792
      %v1794 = vand.u32 %v1793, 4294901760
      %1795 = vmatpush.msra.mxu0 %v1794
      %v1796 = vand.u32 %v936, 4294901760
      %v1797 = vsub.f32 %v936, %v1796
      %v1798 = vand.u32 %v1797, 4294901760
      %v1799 = vsub.f32 %v1797, %v1798
      %v1800 = vand.u32 %v1799, 4294901760
      %1801 = vmatpush.msra.mxu0 %v1800
      %v1802 = vand.u32 %v935, 4294901760
      %v1803 = vsub.f32 %v935, %v1802
      %v1804 = vand.u32 %v1803, 4294901760
      %v1805 = vsub.f32 %v1803, %v1804
      %v1806 = vand.u32 %v1805, 4294901760
      %1807 = vmatpush.msra.mxu0 %v1806
      %v1808 = vand.u32 %v934, 4294901760
      %v1809 = vsub.f32 %v934, %v1808
      %v1810 = vand.u32 %v1809, 4294901760
      %v1811 = vsub.f32 %v1809, %v1810
      %v1812 = vand.u32 %v1811, 4294901760
      %1813 = vmatpush.msra.mxu0 %v1812
      %v1814 = vand.u32 %v933, 4294901760
      %v1815 = vsub.f32 %v933, %v1814
      %v1816 = vand.u32 %v1815, 4294901760
      %v1817 = vsub.f32 %v1815, %v1816
      %v1818 = vand.u32 %v1817, 4294901760
      %1819 = vmatpush.msra.mxu0 %v1818
      %v1820 = vand.u32 %v1679, 4294901760
      %1821 = vmatmul.f32.gmra.mxu0 %v1820
      %v1822 = vpop.f32.mrf.mxu0
      %v1823 = vadd.f32 %v1722, %v1822
      %1824 = vdwg.mxu0
      %v1825 = vand.u32 %v948, 4294901760
      %v1826 = vsub.f32 %v948, %v1825
      %1827 = vmatpush.msra.mxu0 %v1826
      %v1828 = vand.u32 %v947, 4294901760
      %v1829 = vsub.f32 %v947, %v1828
      %1830 = vmatpush.msra.mxu0 %v1829
      %v1831 = vand.u32 %v946, 4294901760
      %v1832 = vsub.f32 %v946, %v1831
      %1833 = vmatpush.msra.mxu0 %v1832
      %v1834 = vand.u32 %v945, 4294901760
      %v1835 = vsub.f32 %v945, %v1834
      %1836 = vmatpush.msra.mxu0 %v1835
      %v1837 = vand.u32 %v944, 4294901760
      %v1838 = vsub.f32 %v944, %v1837
      %1839 = vmatpush.msra.mxu0 %v1838
      %v1840 = vand.u32 %v943, 4294901760
      %v1841 = vsub.f32 %v943, %v1840
      %1842 = vmatpush.msra.mxu0 %v1841
      %v1843 = vand.u32 %v942, 4294901760
      %v1844 = vsub.f32 %v942, %v1843
      %1845 = vmatpush.msra.mxu0 %v1844
      %v1846 = vand.u32 %v941, 4294901760
      %v1847 = vsub.f32 %v941, %v1846
      %1848 = vmatpush.msra.mxu0 %v1847
      %v1849 = vand.u32 %v940, 4294901760
      %v1850 = vsub.f32 %v940, %v1849
      %1851 = vmatpush.msra.mxu0 %v1850
      %v1852 = vand.u32 %v939, 4294901760
      %v1853 = vsub.f32 %v939, %v1852
      %1854 = vmatpush.msra.mxu0 %v1853
      %v1855 = vand.u32 %v938, 4294901760
      %v1856 = vsub.f32 %v938, %v1855
      %1857 = vmatpush.msra.mxu0 %v1856
      %v1858 = vand.u32 %v937, 4294901760
      %v1859 = vsub.f32 %v937, %v1858
      %1860 = vmatpush.msra.mxu0 %v1859
      %v1861 = vand.u32 %v936, 4294901760
      %v1862 = vsub.f32 %v936, %v1861
      %1863 = vmatpush.msra.mxu0 %v1862
      %v1864 = vand.u32 %v935, 4294901760
      %v1865 = vsub.f32 %v935, %v1864
      %1866 = vmatpush.msra.mxu0 %v1865
      %v1867 = vand.u32 %v934, 4294901760
      %v1868 = vsub.f32 %v934, %v1867
      %1869 = vmatpush.msra.mxu0 %v1868
      %v1870 = vand.u32 %v933, 4294901760
      %v1871 = vsub.f32 %v933, %v1870
      %1872 = vmatpush.msra.mxu0 %v1871
      %v1873 = vand.u32 %v1679, 4294901760
      %v1874 = vsub.f32 %v1679, %v1873
      %1875 = vmatmul.f32.gmra.mxu0 %v1874
      %v1876 = vpop.f32.mrf.mxu0
      %v1877 = vadd.f32 %v1823, %v1876
      %1878 = vdwg.mxu0
      %v1879 = vand.u32 %v948, 4294901760
      %1880 = vmatpush.msra.mxu0 %v1879
      %v1881 = vand.u32 %v947, 4294901760
      %1882 = vmatpush.msra.mxu0 %v1881
      %v1883 = vand.u32 %v946, 4294901760
      %1884 = vmatpush.msra.mxu0 %v1883
      %v1885 = vand.u32 %v945, 4294901760
      %1886 = vmatpush.msra.mxu0 %v1885
      %v1887 = vand.u32 %v944, 4294901760
      %1888 = vmatpush.msra.mxu0 %v1887
      %v1889 = vand.u32 %v943, 4294901760
      %1890 = vmatpush.msra.mxu0 %v1889
      %v1891 = vand.u32 %v942, 4294901760
      %1892 = vmatpush.msra.mxu0 %v1891
      %v1893 = vand.u32 %v941, 4294901760
      %1894 = vmatpush.msra.mxu0 %v1893
      %v1895 = vand.u32 %v940, 4294901760
      %1896 = vmatpush.msra.mxu0 %v1895
      %v1897 = vand.u32 %v939, 4294901760
      %1898 = vmatpush.msra.mxu0 %v1897
      %v1899 = vand.u32 %v938, 4294901760
      %1900 = vmatpush.msra.mxu0 %v1899
      %v1901 = vand.u32 %v937, 4294901760
      %1902 = vmatpush.msra.mxu0 %v1901
      %v1903 = vand.u32 %v936, 4294901760
      %1904 = vmatpush.msra.mxu0 %v1903
      %v1905 = vand.u32 %v935, 4294901760
      %1906 = vmatpush.msra.mxu0 %v1905
      %v1907 = vand.u32 %v934, 4294901760
      %1908 = vmatpush.msra.mxu0 %v1907
      %v1909 = vand.u32 %v933, 4294901760
      %1910 = vmatpush.msra.mxu0 %v1909
      %v1911 = vand.u32 %v1679, 4294901760
      %v1912 = vsub.f32 %v1679, %v1911
      %v1913 = vand.u32 %v1912, 4294901760
      %1914 = vmatmul.f32.gmra.mxu0 %v1913
      %v1915 = vpop.f32.mrf.mxu0
      %v1916 = vadd.f32 %v1877, %v1915
      %1917 = vdwg.mxu0
      %v1918 = vand.u32 %v948, 4294901760
      %v1919 = vsub.f32 %v948, %v1918
      %v1920 = vand.u32 %v1919, 4294901760
      %1921 = vmatpush.msra.mxu0 %v1920
      %v1922 = vand.u32 %v947, 4294901760
      %v1923 = vsub.f32 %v947, %v1922
      %v1924 = vand.u32 %v1923, 4294901760
      %1925 = vmatpush.msra.mxu0 %v1924
      %v1926 = vand.u32 %v946, 4294901760
      %v1927 = vsub.f32 %v946, %v1926
      %v1928 = vand.u32 %v1927, 4294901760
      %1929 = vmatpush.msra.mxu0 %v1928
      %v1930 = vand.u32 %v945, 4294901760
      %v1931 = vsub.f32 %v945, %v1930
      %v1932 = vand.u32 %v1931, 4294901760
      %1933 = vmatpush.msra.mxu0 %v1932
      %v1934 = vand.u32 %v944, 4294901760
      %v1935 = vsub.f32 %v944, %v1934
      %v1936 = vand.u32 %v1935, 4294901760
      %1937 = vmatpush.msra.mxu0 %v1936
      %v1938 = vand.u32 %v943, 4294901760
      %v1939 = vsub.f32 %v943, %v1938
      %v1940 = vand.u32 %v1939, 4294901760
      %1941 = vmatpush.msra.mxu0 %v1940
      %v1942 = vand.u32 %v942, 4294901760
      %v1943 = vsub.f32 %v942, %v1942
      %v1944 = vand.u32 %v1943, 4294901760
      %1945 = vmatpush.msra.mxu0 %v1944
      %v1946 = vand.u32 %v941, 4294901760
      %v1947 = vsub.f32 %v941, %v1946
      %v1948 = vand.u32 %v1947, 4294901760
      %1949 = vmatpush.msra.mxu0 %v1948
      %v1950 = vand.u32 %v940, 4294901760
      %v1951 = vsub.f32 %v940, %v1950
      %v1952 = vand.u32 %v1951, 4294901760
      %1953 = vmatpush.msra.mxu0 %v1952
      %v1954 = vand.u32 %v939, 4294901760
      %v1955 = vsub.f32 %v939, %v1954
      %v1956 = vand.u32 %v1955, 4294901760
      %1957 = vmatpush.msra.mxu0 %v1956
      %v1958 = vand.u32 %v938, 4294901760
      %v1959 = vsub.f32 %v938, %v1958
      %v1960 = vand.u32 %v1959, 4294901760
      %1961 = vmatpush.msra.mxu0 %v1960
      %v1962 = vand.u32 %v937, 4294901760
      %v1963 = vsub.f32 %v937, %v1962
      %v1964 = vand.u32 %v1963, 4294901760
      %1965 = vmatpush.msra.mxu0 %v1964
      %v1966 = vand.u32 %v936, 4294901760
      %v1967 = vsub.f32 %v936, %v1966
      %v1968 = vand.u32 %v1967, 4294901760
      %1969 = vmatpush.msra.mxu0 %v1968
      %v1970 = vand.u32 %v935, 4294901760
      %v1971 = vsub.f32 %v935, %v1970
      %v1972 = vand.u32 %v1971, 4294901760
      %1973 = vmatpush.msra.mxu0 %v1972
      %v1974 = vand.u32 %v934, 4294901760
      %v1975 = vsub.f32 %v934, %v1974
      %v1976 = vand.u32 %v1975, 4294901760
      %1977 = vmatpush.msra.mxu0 %v1976
      %v1978 = vand.u32 %v933, 4294901760
      %v1979 = vsub.f32 %v933, %v1978
      %v1980 = vand.u32 %v1979, 4294901760
      %1981 = vmatpush.msra.mxu0 %v1980
      %v1982 = vand.u32 %v1679, 4294901760
      %1983 = vmatmul.f32.gmra.mxu0 %v1982
      %v1984 = vpop.f32.mrf.mxu0
      %v1985 = vadd.f32 %v1916, %v1984
      %1986 = vdwg.mxu0
      %v1987 = vand.u32 %v948, 4294901760
      %1988 = vmatpush.msra.mxu0 %v1987
      %v1989 = vand.u32 %v947, 4294901760
      %1990 = vmatpush.msra.mxu0 %v1989
      %v1991 = vand.u32 %v946, 4294901760
      %1992 = vmatpush.msra.mxu0 %v1991
      %v1993 = vand.u32 %v945, 4294901760
      %1994 = vmatpush.msra.mxu0 %v1993
      %v1995 = vand.u32 %v944, 4294901760
      %1996 = vmatpush.msra.mxu0 %v1995
      %v1997 = vand.u32 %v943, 4294901760
      %1998 = vmatpush.msra.mxu0 %v1997
      %v1999 = vand.u32 %v942, 4294901760
      %2000 = vmatpush.msra.mxu0 %v1999
      %v2001 = vand.u32 %v941, 4294901760
      %2002 = vmatpush.msra.mxu0 %v2001
      %v2003 = vand.u32 %v940, 4294901760
      %2004 = vmatpush.msra.mxu0 %v2003
      %v2005 = vand.u32 %v939, 4294901760
      %2006 = vmatpush.msra.mxu0 %v2005
      %v2007 = vand.u32 %v938, 4294901760
      %2008 = vmatpush.msra.mxu0 %v2007
      %v2009 = vand.u32 %v937, 4294901760
      %2010 = vmatpush.msra.mxu0 %v2009
      %v2011 = vand.u32 %v936, 4294901760
      %2012 = vmatpush.msra.mxu0 %v2011
      %v2013 = vand.u32 %v935, 4294901760
      %2014 = vmatpush.msra.mxu0 %v2013
      %v2015 = vand.u32 %v934, 4294901760
      %2016 = vmatpush.msra.mxu0 %v2015
      %v2017 = vand.u32 %v933, 4294901760
      %2018 = vmatpush.msra.mxu0 %v2017
      %v2019 = vand.u32 %v1679, 4294901760
      %2020 = vmatmul.f32.gmra.mxu0 %v2019
      %v2021 = vpop.f32.mrf.mxu0
      %v2022 = vadd.f32 %v1985, %v2021
      %2023 = vdwg.mxu0
      %v2024 = vand.u32 %v964, 4294901760
      %2025 = vmatpush.msra.mxu0 %v2024
      %v2026 = vand.u32 %v963, 4294901760
      %2027 = vmatpush.msra.mxu0 %v2026
      %v2028 = vand.u32 %v962, 4294901760
      %2029 = vmatpush.msra.mxu0 %v2028
      %v2030 = vand.u32 %v961, 4294901760
      %2031 = vmatpush.msra.mxu0 %v2030
      %v2032 = vand.u32 %v960, 4294901760
      %2033 = vmatpush.msra.mxu0 %v2032
      %v2034 = vand.u32 %v959, 4294901760
      %2035 = vmatpush.msra.mxu0 %v2034
      %v2036 = vand.u32 %v958, 4294901760
      %2037 = vmatpush.msra.mxu0 %v2036
      %v2038 = vand.u32 %v957, 4294901760
      %2039 = vmatpush.msra.mxu0 %v2038
      %v2040 = vand.u32 %v956, 4294901760
      %2041 = vmatpush.msra.mxu0 %v2040
      %v2042 = vand.u32 %v955, 4294901760
      %2043 = vmatpush.msra.mxu0 %v2042
      %v2044 = vand.u32 %v954, 4294901760
      %2045 = vmatpush.msra.mxu0 %v2044
      %v2046 = vand.u32 %v953, 4294901760
      %2047 = vmatpush.msra.mxu0 %v2046
      %v2048 = vand.u32 %v952, 4294901760
      %2049 = vmatpush.msra.mxu0 %v2048
      %v2050 = vand.u32 %v951, 4294901760
      %2051 = vmatpush.msra.mxu0 %v2050
      %v2052 = vand.u32 %v950, 4294901760
      %2053 = vmatpush.msra.mxu0 %v2052
      %v2054 = vand.u32 %v949, 4294901760
      %2055 = vmatpush.msra.mxu0 %v2054
      %v2056 = vand.u32 %v1680, 4294901760
      %v2057 = vsub.f32 %v1680, %v2056
      %v2058 = vand.u32 %v2057, 4294901760
      %v2059 = vsub.f32 %v2057, %v2058
      %v2060 = vand.u32 %v2059, 4294901760
      %2061 = vmatmul.f32.gmra.mxu0 %v2060
      %v2062 = vpop.f32.mrf.mxu0
      %v2063 = vadd.f32 %v2022, %v2062
      %2064 = vdwg.mxu0
      %v2065 = vand.u32 %v964, 4294901760
      %v2066 = vsub.f32 %v964, %v2065
      %v2067 = vand.u32 %v2066, 4294901760
      %v2068 = vsub.f32 %v2066, %v2067
      %v2069 = vand.u32 %v2068, 4294901760
      %2070 = vmatpush.msra.mxu0 %v2069
      %v2071 = vand.u32 %v963, 4294901760
      %v2072 = vsub.f32 %v963, %v2071
      %v2073 = vand.u32 %v2072, 4294901760
      %v2074 = vsub.f32 %v2072, %v2073
      %v2075 = vand.u32 %v2074, 4294901760
      %2076 = vmatpush.msra.mxu0 %v2075
      %v2077 = vand.u32 %v962, 4294901760
      %v2078 = vsub.f32 %v962, %v2077
      %v2079 = vand.u32 %v2078, 4294901760
      %v2080 = vsub.f32 %v2078, %v2079
      %v2081 = vand.u32 %v2080, 4294901760
      %2082 = vmatpush.msra.mxu0 %v2081
      %v2083 = vand.u32 %v961, 4294901760
      %v2084 = vsub.f32 %v961, %v2083
      %v2085 = vand.u32 %v2084, 4294901760
      %v2086 = vsub.f32 %v2084, %v2085
      %v2087 = vand.u32 %v2086, 4294901760
      %2088 = vmatpush.msra.mxu0 %v2087
      %v2089 = vand.u32 %v960, 4294901760
      %v2090 = vsub.f32 %v960, %v2089
      %v2091 = vand.u32 %v2090, 4294901760
      %v2092 = vsub.f32 %v2090, %v2091
      %v2093 = vand.u32 %v2092, 4294901760
      %2094 = vmatpush.msra.mxu0 %v2093
      %v2095 = vand.u32 %v959, 4294901760
      %v2096 = vsub.f32 %v959, %v2095
      %v2097 = vand.u32 %v2096, 4294901760
      %v2098 = vsub.f32 %v2096, %v2097
      %v2099 = vand.u32 %v2098, 4294901760
      %2100 = vmatpush.msra.mxu0 %v2099
      %v2101 = vand.u32 %v958, 4294901760
      %v2102 = vsub.f32 %v958, %v2101
      %v2103 = vand.u32 %v2102, 4294901760
      %v2104 = vsub.f32 %v2102, %v2103
      %v2105 = vand.u32 %v2104, 4294901760
      %2106 = vmatpush.msra.mxu0 %v2105
      %v2107 = vand.u32 %v957, 4294901760
      %v2108 = vsub.f32 %v957, %v2107
      %v2109 = vand.u32 %v2108, 4294901760
      %v2110 = vsub.f32 %v2108, %v2109
      %v2111 = vand.u32 %v2110, 4294901760
      %2112 = vmatpush.msra.mxu0 %v2111
      %v2113 = vand.u32 %v956, 4294901760
      %v2114 = vsub.f32 %v956, %v2113
      %v2115 = vand.u32 %v2114, 4294901760
      %v2116 = vsub.f32 %v2114, %v2115
      %v2117 = vand.u32 %v2116, 4294901760
      %2118 = vmatpush.msra.mxu0 %v2117
      %v2119 = vand.u32 %v955, 4294901760
      %v2120 = vsub.f32 %v955, %v2119
      %v2121 = vand.u32 %v2120, 4294901760
      %v2122 = vsub.f32 %v2120, %v2121
      %v2123 = vand.u32 %v2122, 4294901760
      %2124 = vmatpush.msra.mxu0 %v2123
      %v2125 = vand.u32 %v954, 4294901760
      %v2126 = vsub.f32 %v954, %v2125
      %v2127 = vand.u32 %v2126, 4294901760
      %v2128 = vsub.f32 %v2126, %v2127
      %v2129 = vand.u32 %v2128, 4294901760
      %2130 = vmatpush.msra.mxu0 %v2129
      %v2131 = vand.u32 %v953, 4294901760
      %v2132 = vsub.f32 %v953, %v2131
      %v2133 = vand.u32 %v2132, 4294901760
      %v2134 = vsub.f32 %v2132, %v2133
      %v2135 = vand.u32 %v2134, 4294901760
      %2136 = vmatpush.msra.mxu0 %v2135
      %v2137 = vand.u32 %v952, 4294901760
      %v2138 = vsub.f32 %v952, %v2137
      %v2139 = vand.u32 %v2138, 4294901760
      %v2140 = vsub.f32 %v2138, %v2139
      %v2141 = vand.u32 %v2140, 4294901760
      %2142 = vmatpush.msra.mxu0 %v2141
      %v2143 = vand.u32 %v951, 4294901760
      %v2144 = vsub.f32 %v951, %v2143
      %v2145 = vand.u32 %v2144, 4294901760
      %v2146 = vsub.f32 %v2144, %v2145
      %v2147 = vand.u32 %v2146, 4294901760
      %2148 = vmatpush.msra.mxu0 %v2147
      %v2149 = vand.u32 %v950, 4294901760
      %v2150 = vsub.f32 %v950, %v2149
      %v2151 = vand.u32 %v2150, 4294901760
      %v2152 = vsub.f32 %v2150, %v2151
      %v2153 = vand.u32 %v2152, 4294901760
      %2154 = vmatpush.msra.mxu0 %v2153
      %v2155 = vand.u32 %v949, 4294901760
      %v2156 = vsub.f32 %v949, %v2155
      %v2157 = vand.u32 %v2156, 4294901760
      %v2158 = vsub.f32 %v2156, %v2157
      %v2159 = vand.u32 %v2158, 4294901760
      %2160 = vmatpush.msra.mxu0 %v2159
      %v2161 = vand.u32 %v1680, 4294901760
      %2162 = vmatmul.f32.gmra.mxu0 %v2161
      %v2163 = vpop.f32.mrf.mxu0
      %v2164 = vadd.f32 %v2063, %v2163
      %2165 = vdwg.mxu0
      %v2166 = vand.u32 %v964, 4294901760
      %v2167 = vsub.f32 %v964, %v2166
      %2168 = vmatpush.msra.mxu0 %v2167
      %v2169 = vand.u32 %v963, 4294901760
      %v2170 = vsub.f32 %v963, %v2169
      %2171 = vmatpush.msra.mxu0 %v2170
      %v2172 = vand.u32 %v962, 4294901760
      %v2173 = vsub.f32 %v962, %v2172
      %2174 = vmatpush.msra.mxu0 %v2173
      %v2175 = vand.u32 %v961, 4294901760
      %v2176 = vsub.f32 %v961, %v2175
      %2177 = vmatpush.msra.mxu0 %v2176
      %v2178 = vand.u32 %v960, 4294901760
      %v2179 = vsub.f32 %v960, %v2178
      %2180 = vmatpush.msra.mxu0 %v2179
      %v2181 = vand.u32 %v959, 4294901760
      %v2182 = vsub.f32 %v959, %v2181
      %2183 = vmatpush.msra.mxu0 %v2182
      %v2184 = vand.u32 %v958, 4294901760
      %v2185 = vsub.f32 %v958, %v2184
      %2186 = vmatpush.msra.mxu0 %v2185
      %v2187 = vand.u32 %v957, 4294901760
      %v2188 = vsub.f32 %v957, %v2187
      %2189 = vmatpush.msra.mxu0 %v2188
      %v2190 = vand.u32 %v956, 4294901760
      %v2191 = vsub.f32 %v956, %v2190
      %2192 = vmatpush.msra.mxu0 %v2191
      %v2193 = vand.u32 %v955, 4294901760
      %v2194 = vsub.f32 %v955, %v2193
      %2195 = vmatpush.msra.mxu0 %v2194
      %v2196 = vand.u32 %v954, 4294901760
      %v2197 = vsub.f32 %v954, %v2196
      %2198 = vmatpush.msra.mxu0 %v2197
      %v2199 = vand.u32 %v953, 4294901760
      %v2200 = vsub.f32 %v953, %v2199
      %2201 = vmatpush.msra.mxu0 %v2200
      %v2202 = vand.u32 %v952, 4294901760
      %v2203 = vsub.f32 %v952, %v2202
      %2204 = vmatpush.msra.mxu0 %v2203
      %v2205 = vand.u32 %v951, 4294901760
      %v2206 = vsub.f32 %v951, %v2205
      %2207 = vmatpush.msra.mxu0 %v2206
      %v2208 = vand.u32 %v950, 4294901760
      %v2209 = vsub.f32 %v950, %v2208
      %2210 = vmatpush.msra.mxu0 %v2209
      %v2211 = vand.u32 %v949, 4294901760
      %v2212 = vsub.f32 %v949, %v2211
      %2213 = vmatpush.msra.mxu0 %v2212
      %v2214 = vand.u32 %v1680, 4294901760
      %v2215 = vsub.f32 %v1680, %v2214
      %2216 = vmatmul.f32.gmra.mxu0 %v2215
      %v2217 = vpop.f32.mrf.mxu0
      %v2218 = vadd.f32 %v2164, %v2217
      %2219 = vdwg.mxu0
      %v2220 = vand.u32 %v964, 4294901760
      %2221 = vmatpush.msra.mxu0 %v2220
      %v2222 = vand.u32 %v963, 4294901760
      %2223 = vmatpush.msra.mxu0 %v2222
      %v2224 = vand.u32 %v962, 4294901760
      %2225 = vmatpush.msra.mxu0 %v2224
      %v2226 = vand.u32 %v961, 4294901760
      %2227 = vmatpush.msra.mxu0 %v2226
      %v2228 = vand.u32 %v960, 4294901760
      %2229 = vmatpush.msra.mxu0 %v2228
      %v2230 = vand.u32 %v959, 4294901760
      %2231 = vmatpush.msra.mxu0 %v2230
      %v2232 = vand.u32 %v958, 4294901760
      %2233 = vmatpush.msra.mxu0 %v2232
      %v2234 = vand.u32 %v957, 4294901760
      %2235 = vmatpush.msra.mxu0 %v2234
      %v2236 = vand.u32 %v956, 4294901760
      %2237 = vmatpush.msra.mxu0 %v2236
      %v2238 = vand.u32 %v955, 4294901760
      %2239 = vmatpush.msra.mxu0 %v2238
      %v2240 = vand.u32 %v954, 4294901760
      %2241 = vmatpush.msra.mxu0 %v2240
      %v2242 = vand.u32 %v953, 4294901760
      %2243 = vmatpush.msra.mxu0 %v2242
      %v2244 = vand.u32 %v952, 4294901760
      %2245 = vmatpush.msra.mxu0 %v2244
      %v2246 = vand.u32 %v951, 4294901760
      %2247 = vmatpush.msra.mxu0 %v2246
      %v2248 = vand.u32 %v950, 4294901760
      %2249 = vmatpush.msra.mxu0 %v2248
      %v2250 = vand.u32 %v949, 4294901760
      %2251 = vmatpush.msra.mxu0 %v2250
      %v2252 = vand.u32 %v1680, 4294901760
      %v2253 = vsub.f32 %v1680, %v2252
      %v2254 = vand.u32 %v2253, 4294901760
      %2255 = vmatmul.f32.gmra.mxu0 %v2254
      %v2256 = vpop.f32.mrf.mxu0
      %v2257 = vadd.f32 %v2218, %v2256
      %2258 = vdwg.mxu0
      %v2259 = vand.u32 %v964, 4294901760
      %v2260 = vsub.f32 %v964, %v2259
      %v2261 = vand.u32 %v2260, 4294901760
      %2262 = vmatpush.msra.mxu0 %v2261
      %v2263 = vand.u32 %v963, 4294901760
      %v2264 = vsub.f32 %v963, %v2263
      %v2265 = vand.u32 %v2264, 4294901760
      %2266 = vmatpush.msra.mxu0 %v2265
      %v2267 = vand.u32 %v962, 4294901760
      %v2268 = vsub.f32 %v962, %v2267
      %v2269 = vand.u32 %v2268, 4294901760
      %2270 = vmatpush.msra.mxu0 %v2269
      %v2271 = vand.u32 %v961, 4294901760
      %v2272 = vsub.f32 %v961, %v2271
      %v2273 = vand.u32 %v2272, 4294901760
      %2274 = vmatpush.msra.mxu0 %v2273
      %v2275 = vand.u32 %v960, 4294901760
      %v2276 = vsub.f32 %v960, %v2275
      %v2277 = vand.u32 %v2276, 4294901760
      %2278 = vmatpush.msra.mxu0 %v2277
      %v2279 = vand.u32 %v959, 4294901760
      %v2280 = vsub.f32 %v959, %v2279
      %v2281 = vand.u32 %v2280, 4294901760
      %2282 = vmatpush.msra.mxu0 %v2281
      %v2283 = vand.u32 %v958, 4294901760
      %v2284 = vsub.f32 %v958, %v2283
      %v2285 = vand.u32 %v2284, 4294901760
      %2286 = vmatpush.msra.mxu0 %v2285
      %v2287 = vand.u32 %v957, 4294901760
      %v2288 = vsub.f32 %v957, %v2287
      %v2289 = vand.u32 %v2288, 4294901760
      %2290 = vmatpush.msra.mxu0 %v2289
      %v2291 = vand.u32 %v956, 4294901760
      %v2292 = vsub.f32 %v956, %v2291
      %v2293 = vand.u32 %v2292, 4294901760
      %2294 = vmatpush.msra.mxu0 %v2293
      %v2295 = vand.u32 %v955, 4294901760
      %v2296 = vsub.f32 %v955, %v2295
      %v2297 = vand.u32 %v2296, 4294901760
      %2298 = vmatpush.msra.mxu0 %v2297
      %v2299 = vand.u32 %v954, 4294901760
      %v2300 = vsub.f32 %v954, %v2299
      %v2301 = vand.u32 %v2300, 4294901760
      %2302 = vmatpush.msra.mxu0 %v2301
      %v2303 = vand.u32 %v953, 4294901760
      %v2304 = vsub.f32 %v953, %v2303
      %v2305 = vand.u32 %v2304, 4294901760
      %2306 = vmatpush.msra.mxu0 %v2305
      %v2307 = vand.u32 %v952, 4294901760
      %v2308 = vsub.f32 %v952, %v2307
      %v2309 = vand.u32 %v2308, 4294901760
      %2310 = vmatpush.msra.mxu0 %v2309
      %v2311 = vand.u32 %v951, 4294901760
      %v2312 = vsub.f32 %v951, %v2311
      %v2313 = vand.u32 %v2312, 4294901760
      %2314 = vmatpush.msra.mxu0 %v2313
      %v2315 = vand.u32 %v950, 4294901760
      %v2316 = vsub.f32 %v950, %v2315
      %v2317 = vand.u32 %v2316, 4294901760
      %2318 = vmatpush.msra.mxu0 %v2317
      %v2319 = vand.u32 %v949, 4294901760
      %v2320 = vsub.f32 %v949, %v2319
      %v2321 = vand.u32 %v2320, 4294901760
      %2322 = vmatpush.msra.mxu0 %v2321
      %v2323 = vand.u32 %v1680, 4294901760
      %2324 = vmatmul.f32.gmra.mxu0 %v2323
      %v2325 = vpop.f32.mrf.mxu0
      %v2326 = vadd.f32 %v2257, %v2325
      %2327 = vdwg.mxu0
      %v2328 = vand.u32 %v964, 4294901760
      %2329 = vmatpush.msra.mxu0 %v2328
      %v2330 = vand.u32 %v963, 4294901760
      %2331 = vmatpush.msra.mxu0 %v2330
      %v2332 = vand.u32 %v962, 4294901760
      %2333 = vmatpush.msra.mxu0 %v2332
      %v2334 = vand.u32 %v961, 4294901760
      %2335 = vmatpush.msra.mxu0 %v2334
      %v2336 = vand.u32 %v960, 4294901760
      %2337 = vmatpush.msra.mxu0 %v2336
      %v2338 = vand.u32 %v959, 4294901760
      %2339 = vmatpush.msra.mxu0 %v2338
      %v2340 = vand.u32 %v958, 4294901760
      %2341 = vmatpush.msra.mxu0 %v2340
      %v2342 = vand.u32 %v957, 4294901760
      %2343 = vmatpush.msra.mxu0 %v2342
      %v2344 = vand.u32 %v956, 4294901760
      %2345 = vmatpush.msra.mxu0 %v2344
      %v2346 = vand.u32 %v955, 4294901760
      %2347 = vmatpush.msra.mxu0 %v2346
      %v2348 = vand.u32 %v954, 4294901760
      %2349 = vmatpush.msra.mxu0 %v2348
      %v2350 = vand.u32 %v953, 4294901760
      %2351 = vmatpush.msra.mxu0 %v2350
      %v2352 = vand.u32 %v952, 4294901760
      %2353 = vmatpush.msra.mxu0 %v2352
      %v2354 = vand.u32 %v951, 4294901760
      %2355 = vmatpush.msra.mxu0 %v2354
      %v2356 = vand.u32 %v950, 4294901760
      %2357 = vmatpush.msra.mxu0 %v2356
      %v2358 = vand.u32 %v949, 4294901760
      %2359 = vmatpush.msra.mxu0 %v2358
      %v2360 = vand.u32 %v1680, 4294901760
      %2361 = vmatmul.f32.gmra.mxu0 %v2360
      %v2362 = vpop.f32.mrf.mxu0
      %v2363 = vadd.f32 %v2326, %v2362
      %2364 = vdwg.mxu0
      %v2365 = vadd.f32 %v1676, %v2363
      %2366 = vst.msk [vmem:[%s874] sm:$0xf] %vm1656, %v2365
      %v2367 = vld [vmem:[%s898] sm:$0xf]
      %v2368 = vmul.f32 %v1675, %v1675
      %2370 = vst [vmem:[#allocation1] ss:$2 sm:$0xff] %v2368
      %v2371 = vld.sshfl [vmem:[#allocation1] sm:$0xff pattern:$0x75316420]
      %v2372 = vld.sshfl [vmem:[#allocation1 + $0x8] sm:$0xff pattern:$0x75316420]
      %v2375 = vsel %vm1666, %v2371, 0.0
      %v2376 = vsel %vm1666, %v2372, 0.0
      %v2377 = vadd.f32 %v2375, %v2376
      %2378 = vadd.xlane.f32.xlu0 %v2377
      %v2379 = vpop.xlane.xlu0 %2378
      %v2380 = vadd.f32 %v2367, %v2379
      %2381 = vst.msk [vmem:[%s898] sm:$0xf] %vm1673, %v2380
      %v2382 = vld [vmem:[%s835] sm:$0xff]
      %v2383 = vld [vmem:[%s878] sm:$0xf]
      %2385 = vst [vmem:[#allocation1] ss:$2 sm:$0xff] %v2382
      %v2386 = vld.sshfl [vmem:[#allocation1] sm:$0xff pattern:$0x75316420]
      %v2387 = vld.sshfl [vmem:[#allocation1 + $0x8] sm:$0xff pattern:$0x75316420]
      %v2390 = vand.u32 %v948, 4294901760
      %2391 = vmatpush.msra.mxu0 %v2390
      %v2392 = vand.u32 %v947, 4294901760
      %2393 = vmatpush.msra.mxu0 %v2392
      %v2394 = vand.u32 %v946, 4294901760
      %2395 = vmatpush.msra.mxu0 %v2394
      %v2396 = vand.u32 %v945, 4294901760
      %2397 = vmatpush.msra.mxu0 %v2396
      %v2398 = vand.u32 %v944, 4294901760
      %2399 = vmatpush.msra.mxu0 %v2398
      %v2400 = vand.u32 %v943, 4294901760
      %2401 = vmatpush.msra.mxu0 %v2400
      %v2402 = vand.u32 %v942, 4294901760
      %2403 = vmatpush.msra.mxu0 %v2402
      %v2404 = vand.u32 %v941, 4294901760
      %2405 = vmatpush.msra.mxu0 %v2404
      %v2406 = vand.u32 %v940, 4294901760
      %2407 = vmatpush.msra.mxu0 %v2406
      %v2408 = vand.u32 %v939, 4294901760
      %2409 = vmatpush.msra.mxu0 %v2408
      %v2410 = vand.u32 %v938, 4294901760
      %2411 = vmatpush.msra.mxu0 %v2410
      %v2412 = vand.u32 %v937, 4294901760
      %2413 = vmatpush.msra.mxu0 %v2412
      %v2414 = vand.u32 %v936, 4294901760
      %2415 = vmatpush.msra.mxu0 %v2414
      %v2416 = vand.u32 %v935, 4294901760
      %2417 = vmatpush.msra.mxu0 %v2416
      %v2418 = vand.u32 %v934, 4294901760
      %2419 = vmatpush.msra.mxu0 %v2418
      %v2420 = vand.u32 %v933, 4294901760
      %2421 = vmatpush.msra.mxu0 %v2420
      %v2422 = vand.u32 %v2386, 4294901760
      %v2423 = vsub.f32 %v2386, %v2422
      %v2424 = vand.u32 %v2423, 4294901760
      %v2425 = vsub.f32 %v2423, %v2424
      %v2426 = vand.u32 %v2425, 4294901760
      %2427 = vmatmul.f32.gmra.mxu0 %v2426
      %v2428 = vpop.f32.mrf.mxu0
      %v2429 = vadd.f32 0.0, %v2428
      %2430 = vdwg.mxu0
      %v2431 = vand.u32 %v948, 4294901760
      %v2432 = vsub.f32 %v948, %v2431
      %v2433 = vand.u32 %v2432, 4294901760
      %v2434 = vsub.f32 %v2432, %v2433
      %v2435 = vand.u32 %v2434, 4294901760
      %2436 = vmatpush.msra.mxu0 %v2435
      %v2437 = vand.u32 %v947, 4294901760
      %v2438 = vsub.f32 %v947, %v2437
      %v2439 = vand.u32 %v2438, 4294901760
      %v2440 = vsub.f32 %v2438, %v2439
      %v2441 = vand.u32 %v2440, 4294901760
      %2442 = vmatpush.msra.mxu0 %v2441
      %v2443 = vand.u32 %v946, 4294901760
      %v2444 = vsub.f32 %v946, %v2443
      %v2445 = vand.u32 %v2444, 4294901760
      %v2446 = vsub.f32 %v2444, %v2445
      %v2447 = vand.u32 %v2446, 4294901760
      %2448 = vmatpush.msra.mxu0 %v2447
      %v2449 = vand.u32 %v945, 4294901760
      %v2450 = vsub.f32 %v945, %v2449
      %v2451 = vand.u32 %v2450, 4294901760
      %v2452 = vsub.f32 %v2450, %v2451
      %v2453 = vand.u32 %v2452, 4294901760
      %2454 = vmatpush.msra.mxu0 %v2453
      %v2455 = vand.u32 %v944, 4294901760
      %v2456 = vsub.f32 %v944, %v2455
      %v2457 = vand.u32 %v2456, 4294901760
      %v2458 = vsub.f32 %v2456, %v2457
      %v2459 = vand.u32 %v2458, 4294901760
      %2460 = vmatpush.msra.mxu0 %v2459
      %v2461 = vand.u32 %v943, 4294901760
      %v2462 = vsub.f32 %v943, %v2461
      %v2463 = vand.u32 %v2462, 4294901760
      %v2464 = vsub.f32 %v2462, %v2463
      %v2465 = vand.u32 %v2464, 4294901760
      %2466 = vmatpush.msra.mxu0 %v2465
      %v2467 = vand.u32 %v942, 4294901760
      %v2468 = vsub.f32 %v942, %v2467
      %v2469 = vand.u32 %v2468, 4294901760
      %v2470 = vsub.f32 %v2468, %v2469
      %v2471 = vand.u32 %v2470, 4294901760
      %2472 = vmatpush.msra.mxu0 %v2471
      %v2473 = vand.u32 %v941, 4294901760
      %v2474 = vsub.f32 %v941, %v2473
      %v2475 = vand.u32 %v2474, 4294901760
      %v2476 = vsub.f32 %v2474, %v2475
      %v2477 = vand.u32 %v2476, 4294901760
      %2478 = vmatpush.msra.mxu0 %v2477
      %v2479 = vand.u32 %v940, 4294901760
      %v2480 = vsub.f32 %v940, %v2479
      %v2481 = vand.u32 %v2480, 4294901760
      %v2482 = vsub.f32 %v2480, %v2481
      %v2483 = vand.u32 %v2482, 4294901760
      %2484 = vmatpush.msra.mxu0 %v2483
      %v2485 = vand.u32 %v939, 4294901760
      %v2486 = vsub.f32 %v939, %v2485
      %v2487 = vand.u32 %v2486, 4294901760
      %v2488 = vsub.f32 %v2486, %v2487
      %v2489 = vand.u32 %v2488, 4294901760
      %2490 = vmatpush.msra.mxu0 %v2489
      %v2491 = vand.u32 %v938, 4294901760
      %v2492 = vsub.f32 %v938, %v2491
      %v2493 = vand.u32 %v2492, 4294901760
      %v2494 = vsub.f32 %v2492, %v2493
      %v2495 = vand.u32 %v2494, 4294901760
      %2496 = vmatpush.msra.mxu0 %v2495
      %v2497 = vand.u32 %v937, 4294901760
      %v2498 = vsub.f32 %v937, %v2497
      %v2499 = vand.u32 %v2498, 4294901760
      %v2500 = vsub.f32 %v2498, %v2499
      %v2501 = vand.u32 %v2500, 4294901760
      %2502 = vmatpush.msra.mxu0 %v2501
      %v2503 = vand.u32 %v936, 4294901760
      %v2504 = vsub.f32 %v936, %v2503
      %v2505 = vand.u32 %v2504, 4294901760
      %v2506 = vsub.f32 %v2504, %v2505
      %v2507 = vand.u32 %v2506, 4294901760
      %2508 = vmatpush.msra.mxu0 %v2507
      %v2509 = vand.u32 %v935, 4294901760
      %v2510 = vsub.f32 %v935, %v2509
      %v2511 = vand.u32 %v2510, 4294901760
      %v2512 = vsub.f32 %v2510, %v2511
      %v2513 = vand.u32 %v2512, 4294901760
      %2514 = vmatpush.msra.mxu0 %v2513
      %v2515 = vand.u32 %v934, 4294901760
      %v2516 = vsub.f32 %v934, %v2515
      %v2517 = vand.u32 %v2516, 4294901760
      %v2518 = vsub.f32 %v2516, %v2517
      %v2519 = vand.u32 %v2518, 4294901760
      %2520 = vmatpush.msra.mxu0 %v2519
      %v2521 = vand.u32 %v933, 4294901760
      %v2522 = vsub.f32 %v933, %v2521
      %v2523 = vand.u32 %v2522, 4294901760
      %v2524 = vsub.f32 %v2522, %v2523
      %v2525 = vand.u32 %v2524, 4294901760
      %2526 = vmatpush.msra.mxu0 %v2525
      %v2527 = vand.u32 %v2386, 4294901760
      %2528 = vmatmul.f32.gmra.mxu0 %v2527
      %v2529 = vpop.f32.mrf.mxu0
      %v2530 = vadd.f32 %v2429, %v2529
      %2531 = vdwg.mxu0
      %v2532 = vand.u32 %v948, 4294901760
      %v2533 = vsub.f32 %v948, %v2532
      %2534 = vmatpush.msra.mxu0 %v2533
      %v2535 = vand.u32 %v947, 4294901760
      %v2536 = vsub.f32 %v947, %v2535
      %2537 = vmatpush.msra.mxu0 %v2536
      %v2538 = vand.u32 %v946, 4294901760
      %v2539 = vsub.f32 %v946, %v2538
      %2540 = vmatpush.msra.mxu0 %v2539
      %v2541 = vand.u32 %v945, 4294901760
      %v2542 = vsub.f32 %v945, %v2541
      %2543 = vmatpush.msra.mxu0 %v2542
      %v2544 = vand.u32 %v944, 4294901760
      %v2545 = vsub.f32 %v944, %v2544
      %2546 = vmatpush.msra.mxu0 %v2545
      %v2547 = vand.u32 %v943, 4294901760
      %v2548 = vsub.f32 %v943, %v2547
      %2549 = vmatpush.msra.mxu0 %v2548
      %v2550 = vand.u32 %v942, 4294901760
      %v2551 = vsub.f32 %v942, %v2550
      %2552 = vmatpush.msra.mxu0 %v2551
      %v2553 = vand.u32 %v941, 4294901760
      %v2554 = vsub.f32 %v941, %v2553
      %2555 = vmatpush.msra.mxu0 %v2554
      %v2556 = vand.u32 %v940, 4294901760
      %v2557 = vsub.f32 %v940, %v2556
      %2558 = vmatpush.msra.mxu0 %v2557
      %v2559 = vand.u32 %v939, 4294901760
      %v2560 = vsub.f32 %v939, %v2559
      %2561 = vmatpush.msra.mxu0 %v2560
      %v2562 = vand.u32 %v938, 4294901760
      %v2563 = vsub.f32 %v938, %v2562
      %2564 = vmatpush.msra.mxu0 %v2563
      %v2565 = vand.u32 %v937, 4294901760
      %v2566 = vsub.f32 %v937, %v2565
      %2567 = vmatpush.msra.mxu0 %v2566
      %v2568 = vand.u32 %v936, 4294901760
      %v2569 = vsub.f32 %v936, %v2568
      %2570 = vmatpush.msra.mxu0 %v2569
      %v2571 = vand.u32 %v935, 4294901760
      %v2572 = vsub.f32 %v935, %v2571
      %2573 = vmatpush.msra.mxu0 %v2572
      %v2574 = vand.u32 %v934, 4294901760
      %v2575 = vsub.f32 %v934, %v2574
      %2576 = vmatpush.msra.mxu0 %v2575
      %v2577 = vand.u32 %v933, 4294901760
      %v2578 = vsub.f32 %v933, %v2577
      %2579 = vmatpush.msra.mxu0 %v2578
      %v2580 = vand.u32 %v2386, 4294901760
      %v2581 = vsub.f32 %v2386, %v2580
      %2582 = vmatmul.f32.gmra.mxu0 %v2581
      %v2583 = vpop.f32.mrf.mxu0
      %v2584 = vadd.f32 %v2530, %v2583
      %2585 = vdwg.mxu0
      %v2586 = vand.u32 %v948, 4294901760
      %2587 = vmatpush.msra.mxu0 %v2586
      %v2588 = vand.u32 %v947, 4294901760
      %2589 = vmatpush.msra.mxu0 %v2588
      %v2590 = vand.u32 %v946, 4294901760
      %2591 = vmatpush.msra.mxu0 %v2590
      %v2592 = vand.u32 %v945, 4294901760
      %2593 = vmatpush.msra.mxu0 %v2592
      %v2594 = vand.u32 %v944, 4294901760
      %2595 = vmatpush.msra.mxu0 %v2594
      %v2596 = vand.u32 %v943, 4294901760
      %2597 = vmatpush.msra.mxu0 %v2596
      %v2598 = vand.u32 %v942, 4294901760
      %2599 = vmatpush.msra.mxu0 %v2598
      %v2600 = vand.u32 %v941, 4294901760
      %2601 = vmatpush.msra.mxu0 %v2600
      %v2602 = vand.u32 %v940, 4294901760
      %2603 = vmatpush.msra.mxu0 %v2602
      %v2604 = vand.u32 %v939, 4294901760
      %2605 = vmatpush.msra.mxu0 %v2604
      %v2606 = vand.u32 %v938, 4294901760
      %2607 = vmatpush.msra.mxu0 %v2606
      %v2608 = vand.u32 %v937, 4294901760
      %2609 = vmatpush.msra.mxu0 %v2608
      %v2610 = vand.u32 %v936, 4294901760
      %2611 = vmatpush.msra.mxu0 %v2610
      %v2612 = vand.u32 %v935, 4294901760
      %2613 = vmatpush.msra.mxu0 %v2612
      %v2614 = vand.u32 %v934, 4294901760
      %2615 = vmatpush.msra.mxu0 %v2614
      %v2616 = vand.u32 %v933, 4294901760
      %2617 = vmatpush.msra.mxu0 %v2616
      %v2618 = vand.u32 %v2386, 4294901760
      %v2619 = vsub.f32 %v2386, %v2618
      %v2620 = vand.u32 %v2619, 4294901760
      %2621 = vmatmul.f32.gmra.mxu0 %v2620
      %v2622 = vpop.f32.mrf.mxu0
      %v2623 = vadd.f32 %v2584, %v2622
      %2624 = vdwg.mxu0
      %v2625 = vand.u32 %v948, 4294901760
      %v2626 = vsub.f32 %v948, %v2625
      %v2627 = vand.u32 %v2626, 4294901760
      %2628 = vmatpush.msra.mxu0 %v2627
      %v2629 = vand.u32 %v947, 4294901760
      %v2630 = vsub.f32 %v947, %v2629
      %v2631 = vand.u32 %v2630, 4294901760
      %2632 = vmatpush.msra.mxu0 %v2631
      %v2633 = vand.u32 %v946, 4294901760
      %v2634 = vsub.f32 %v946, %v2633
      %v2635 = vand.u32 %v2634, 4294901760
      %2636 = vmatpush.msra.mxu0 %v2635
      %v2637 = vand.u32 %v945, 4294901760
      %v2638 = vsub.f32 %v945, %v2637
      %v2639 = vand.u32 %v2638, 4294901760
      %2640 = vmatpush.msra.mxu0 %v2639
      %v2641 = vand.u32 %v944, 4294901760
      %v2642 = vsub.f32 %v944, %v2641
      %v2643 = vand.u32 %v2642, 4294901760
      %2644 = vmatpush.msra.mxu0 %v2643
      %v2645 = vand.u32 %v943, 4294901760
      %v2646 = vsub.f32 %v943, %v2645
      %v2647 = vand.u32 %v2646, 4294901760
      %2648 = vmatpush.msra.mxu0 %v2647
      %v2649 = vand.u32 %v942, 4294901760
      %v2650 = vsub.f32 %v942, %v2649
      %v2651 = vand.u32 %v2650, 4294901760
      %2652 = vmatpush.msra.mxu0 %v2651
      %v2653 = vand.u32 %v941, 4294901760
      %v2654 = vsub.f32 %v941, %v2653
      %v2655 = vand.u32 %v2654, 4294901760
      %2656 = vmatpush.msra.mxu0 %v2655
      %v2657 = vand.u32 %v940, 4294901760
      %v2658 = vsub.f32 %v940, %v2657
      %v2659 = vand.u32 %v2658, 4294901760
      %2660 = vmatpush.msra.mxu0 %v2659
      %v2661 = vand.u32 %v939, 4294901760
      %v2662 = vsub.f32 %v939, %v2661
      %v2663 = vand.u32 %v2662, 4294901760
      %2664 = vmatpush.msra.mxu0 %v2663
      %v2665 = vand.u32 %v938, 4294901760
      %v2666 = vsub.f32 %v938, %v2665
      %v2667 = vand.u32 %v2666, 4294901760
      %2668 = vmatpush.msra.mxu0 %v2667
      %v2669 = vand.u32 %v937, 4294901760
      %v2670 = vsub.f32 %v937, %v2669
      %v2671 = vand.u32 %v2670, 4294901760
      %2672 = vmatpush.msra.mxu0 %v2671
      %v2673 = vand.u32 %v936, 4294901760
      %v2674 = vsub.f32 %v936, %v2673
      %v2675 = vand.u32 %v2674, 4294901760
      %2676 = vmatpush.msra.mxu0 %v2675
      %v2677 = vand.u32 %v935, 4294901760
      %v2678 = vsub.f32 %v935, %v2677
      %v2679 = vand.u32 %v2678, 4294901760
      %2680 = vmatpush.msra.mxu0 %v2679
      %v2681 = vand.u32 %v934, 4294901760
      %v2682 = vsub.f32 %v934, %v2681
      %v2683 = vand.u32 %v2682, 4294901760
      %2684 = vmatpush.msra.mxu0 %v2683
      %v2685 = vand.u32 %v933, 4294901760
      %v2686 = vsub.f32 %v933, %v2685
      %v2687 = vand.u32 %v2686, 4294901760
      %2688 = vmatpush.msra.mxu0 %v2687
      %v2689 = vand.u32 %v2386, 4294901760
      %2690 = vmatmul.f32.gmra.mxu0 %v2689
      %v2691 = vpop.f32.mrf.mxu0
      %v2692 = vadd.f32 %v2623, %v2691
      %2693 = vdwg.mxu0
      %v2694 = vand.u32 %v948, 4294901760
      %2695 = vmatpush.msra.mxu0 %v2694
      %v2696 = vand.u32 %v947, 4294901760
      %2697 = vmatpush.msra.mxu0 %v2696
      %v2698 = vand.u32 %v946, 4294901760
      %2699 = vmatpush.msra.mxu0 %v2698
      %v2700 = vand.u32 %v945, 4294901760
      %2701 = vmatpush.msra.mxu0 %v2700
      %v2702 = vand.u32 %v944, 4294901760
      %2703 = vmatpush.msra.mxu0 %v2702
      %v2704 = vand.u32 %v943, 4294901760
      %2705 = vmatpush.msra.mxu0 %v2704
      %v2706 = vand.u32 %v942, 4294901760
      %2707 = vmatpush.msra.mxu0 %v2706
      %v2708 = vand.u32 %v941, 4294901760
      %2709 = vmatpush.msra.mxu0 %v2708
      %v2710 = vand.u32 %v940, 4294901760
      %2711 = vmatpush.msra.mxu0 %v2710
      %v2712 = vand.u32 %v939, 4294901760
      %2713 = vmatpush.msra.mxu0 %v2712
      %v2714 = vand.u32 %v938, 4294901760
      %2715 = vmatpush.msra.mxu0 %v2714
      %v2716 = vand.u32 %v937, 4294901760
      %2717 = vmatpush.msra.mxu0 %v2716
      %v2718 = vand.u32 %v936, 4294901760
      %2719 = vmatpush.msra.mxu0 %v2718
      %v2720 = vand.u32 %v935, 4294901760
      %2721 = vmatpush.msra.mxu0 %v2720
      %v2722 = vand.u32 %v934, 4294901760
      %2723 = vmatpush.msra.mxu0 %v2722
      %v2724 = vand.u32 %v933, 4294901760
      %2725 = vmatpush.msra.mxu0 %v2724
      %v2726 = vand.u32 %v2386, 4294901760
      %2727 = vmatmul.f32.gmra.mxu0 %v2726
      %v2728 = vpop.f32.mrf.mxu0
      %v2729 = vadd.f32 %v2692, %v2728
      %2730 = vdwg.mxu0
      %v2731 = vand.u32 %v964, 4294901760
      %2732 = vmatpush.msra.mxu0 %v2731
      %v2733 = vand.u32 %v963, 4294901760
      %2734 = vmatpush.msra.mxu0 %v2733
      %v2735 = vand.u32 %v962, 4294901760
      %2736 = vmatpush.msra.mxu0 %v2735
      %v2737 = vand.u32 %v961, 4294901760
      %2738 = vmatpush.msra.mxu0 %v2737
      %v2739 = vand.u32 %v960, 4294901760
      %2740 = vmatpush.msra.mxu0 %v2739
      %v2741 = vand.u32 %v959, 4294901760
      %2742 = vmatpush.msra.mxu0 %v2741
      %v2743 = vand.u32 %v958, 4294901760
      %2744 = vmatpush.msra.mxu0 %v2743
      %v2745 = vand.u32 %v957, 4294901760
      %2746 = vmatpush.msra.mxu0 %v2745
      %v2747 = vand.u32 %v956, 4294901760
      %2748 = vmatpush.msra.mxu0 %v2747
      %v2749 = vand.u32 %v955, 4294901760
      %2750 = vmatpush.msra.mxu0 %v2749
      %v2751 = vand.u32 %v954, 4294901760
      %2752 = vmatpush.msra.mxu0 %v2751
      %v2753 = vand.u32 %v953, 4294901760
      %2754 = vmatpush.msra.mxu0 %v2753
      %v2755 = vand.u32 %v952, 4294901760
      %2756 = vmatpush.msra.mxu0 %v2755
      %v2757 = vand.u32 %v951, 4294901760
      %2758 = vmatpush.msra.mxu0 %v2757
      %v2759 = vand.u32 %v950, 4294901760
      %2760 = vmatpush.msra.mxu0 %v2759
      %v2761 = vand.u32 %v949, 4294901760
      %2762 = vmatpush.msra.mxu0 %v2761
      %v2763 = vand.u32 %v2387, 4294901760
      %v2764 = vsub.f32 %v2387, %v2763
      %v2765 = vand.u32 %v2764, 4294901760
      %v2766 = vsub.f32 %v2764, %v2765
      %v2767 = vand.u32 %v2766, 4294901760
      %2768 = vmatmul.f32.gmra.mxu0 %v2767
      %v2769 = vpop.f32.mrf.mxu0
      %v2770 = vadd.f32 %v2729, %v2769
      %2771 = vdwg.mxu0
      %v2772 = vand.u32 %v964, 4294901760
      %v2773 = vsub.f32 %v964, %v2772
      %v2774 = vand.u32 %v2773, 4294901760
      %v2775 = vsub.f32 %v2773, %v2774
      %v2776 = vand.u32 %v2775, 4294901760
      %2777 = vmatpush.msra.mxu0 %v2776
      %v2778 = vand.u32 %v963, 4294901760
      %v2779 = vsub.f32 %v963, %v2778
      %v2780 = vand.u32 %v2779, 4294901760
      %v2781 = vsub.f32 %v2779, %v2780
      %v2782 = vand.u32 %v2781, 4294901760
      %2783 = vmatpush.msra.mxu0 %v2782
      %v2784 = vand.u32 %v962, 4294901760
      %v2785 = vsub.f32 %v962, %v2784
      %v2786 = vand.u32 %v2785, 4294901760
      %v2787 = vsub.f32 %v2785, %v2786
      %v2788 = vand.u32 %v2787, 4294901760
      %2789 = vmatpush.msra.mxu0 %v2788
      %v2790 = vand.u32 %v961, 4294901760
      %v2791 = vsub.f32 %v961, %v2790
      %v2792 = vand.u32 %v2791, 4294901760
      %v2793 = vsub.f32 %v2791, %v2792
      %v2794 = vand.u32 %v2793, 4294901760
      %2795 = vmatpush.msra.mxu0 %v2794
      %v2796 = vand.u32 %v960, 4294901760
      %v2797 = vsub.f32 %v960, %v2796
      %v2798 = vand.u32 %v2797, 4294901760
      %v2799 = vsub.f32 %v2797, %v2798
      %v2800 = vand.u32 %v2799, 4294901760
      %2801 = vmatpush.msra.mxu0 %v2800
      %v2802 = vand.u32 %v959, 4294901760
      %v2803 = vsub.f32 %v959, %v2802
      %v2804 = vand.u32 %v2803, 4294901760
      %v2805 = vsub.f32 %v2803, %v2804
      %v2806 = vand.u32 %v2805, 4294901760
      %2807 = vmatpush.msra.mxu0 %v2806
      %v2808 = vand.u32 %v958, 4294901760
      %v2809 = vsub.f32 %v958, %v2808
      %v2810 = vand.u32 %v2809, 4294901760
      %v2811 = vsub.f32 %v2809, %v2810
      %v2812 = vand.u32 %v2811, 4294901760
      %2813 = vmatpush.msra.mxu0 %v2812
      %v2814 = vand.u32 %v957, 4294901760
      %v2815 = vsub.f32 %v957, %v2814
      %v2816 = vand.u32 %v2815, 4294901760
      %v2817 = vsub.f32 %v2815, %v2816
      %v2818 = vand.u32 %v2817, 4294901760
      %2819 = vmatpush.msra.mxu0 %v2818
      %v2820 = vand.u32 %v956, 4294901760
      %v2821 = vsub.f32 %v956, %v2820
      %v2822 = vand.u32 %v2821, 4294901760
      %v2823 = vsub.f32 %v2821, %v2822
      %v2824 = vand.u32 %v2823, 4294901760
      %2825 = vmatpush.msra.mxu0 %v2824
      %v2826 = vand.u32 %v955, 4294901760
      %v2827 = vsub.f32 %v955, %v2826
      %v2828 = vand.u32 %v2827, 4294901760
      %v2829 = vsub.f32 %v2827, %v2828
      %v2830 = vand.u32 %v2829, 4294901760
      %2831 = vmatpush.msra.mxu0 %v2830
      %v2832 = vand.u32 %v954, 4294901760
      %v2833 = vsub.f32 %v954, %v2832
      %v2834 = vand.u32 %v2833, 4294901760
      %v2835 = vsub.f32 %v2833, %v2834
      %v2836 = vand.u32 %v2835, 4294901760
      %2837 = vmatpush.msra.mxu0 %v2836
      %v2838 = vand.u32 %v953, 4294901760
      %v2839 = vsub.f32 %v953, %v2838
      %v2840 = vand.u32 %v2839, 4294901760
      %v2841 = vsub.f32 %v2839, %v2840
      %v2842 = vand.u32 %v2841, 4294901760
      %2843 = vmatpush.msra.mxu0 %v2842
      %v2844 = vand.u32 %v952, 4294901760
      %v2845 = vsub.f32 %v952, %v2844
      %v2846 = vand.u32 %v2845, 4294901760
      %v2847 = vsub.f32 %v2845, %v2846
      %v2848 = vand.u32 %v2847, 4294901760
      %2849 = vmatpush.msra.mxu0 %v2848
      %v2850 = vand.u32 %v951, 4294901760
      %v2851 = vsub.f32 %v951, %v2850
      %v2852 = vand.u32 %v2851, 4294901760
      %v2853 = vsub.f32 %v2851, %v2852
      %v2854 = vand.u32 %v2853, 4294901760
      %2855 = vmatpush.msra.mxu0 %v2854
      %v2856 = vand.u32 %v950, 4294901760
      %v2857 = vsub.f32 %v950, %v2856
      %v2858 = vand.u32 %v2857, 4294901760
      %v2859 = vsub.f32 %v2857, %v2858
      %v2860 = vand.u32 %v2859, 4294901760
      %2861 = vmatpush.msra.mxu0 %v2860
      %v2862 = vand.u32 %v949, 4294901760
      %v2863 = vsub.f32 %v949, %v2862
      %v2864 = vand.u32 %v2863, 4294901760
      %v2865 = vsub.f32 %v2863, %v2864
      %v2866 = vand.u32 %v2865, 4294901760
      %2867 = vmatpush.msra.mxu0 %v2866
      %v2868 = vand.u32 %v2387, 4294901760
      %2869 = vmatmul.f32.gmra.mxu0 %v2868
      %v2870 = vpop.f32.mrf.mxu0
      %v2871 = vadd.f32 %v2770, %v2870
      %2872 = vdwg.mxu0
      %v2873 = vand.u32 %v964, 4294901760
      %v2874 = vsub.f32 %v964, %v2873
      %2875 = vmatpush.msra.mxu0 %v2874
      %v2876 = vand.u32 %v963, 4294901760
      %v2877 = vsub.f32 %v963, %v2876
      %2878 = vmatpush.msra.mxu0 %v2877
      %v2879 = vand.u32 %v962, 4294901760
      %v2880 = vsub.f32 %v962, %v2879
      %2881 = vmatpush.msra.mxu0 %v2880
      %v2882 = vand.u32 %v961, 4294901760
      %v2883 = vsub.f32 %v961, %v2882
      %2884 = vmatpush.msra.mxu0 %v2883
      %v2885 = vand.u32 %v960, 4294901760
      %v2886 = vsub.f32 %v960, %v2885
      %2887 = vmatpush.msra.mxu0 %v2886
      %v2888 = vand.u32 %v959, 4294901760
      %v2889 = vsub.f32 %v959, %v2888
      %2890 = vmatpush.msra.mxu0 %v2889
      %v2891 = vand.u32 %v958, 4294901760
      %v2892 = vsub.f32 %v958, %v2891
      %2893 = vmatpush.msra.mxu0 %v2892
      %v2894 = vand.u32 %v957, 4294901760
      %v2895 = vsub.f32 %v957, %v2894
      %2896 = vmatpush.msra.mxu0 %v2895
      %v2897 = vand.u32 %v956, 4294901760
      %v2898 = vsub.f32 %v956, %v2897
      %2899 = vmatpush.msra.mxu0 %v2898
      %v2900 = vand.u32 %v955, 4294901760
      %v2901 = vsub.f32 %v955, %v2900
      %2902 = vmatpush.msra.mxu0 %v2901
      %v2903 = vand.u32 %v954, 4294901760
      %v2904 = vsub.f32 %v954, %v2903
      %2905 = vmatpush.msra.mxu0 %v2904
      %v2906 = vand.u32 %v953, 4294901760
      %v2907 = vsub.f32 %v953, %v2906
      %2908 = vmatpush.msra.mxu0 %v2907
      %v2909 = vand.u32 %v952, 4294901760
      %v2910 = vsub.f32 %v952, %v2909
      %2911 = vmatpush.msra.mxu0 %v2910
      %v2912 = vand.u32 %v951, 4294901760
      %v2913 = vsub.f32 %v951, %v2912
      %2914 = vmatpush.msra.mxu0 %v2913
      %v2915 = vand.u32 %v950, 4294901760
      %v2916 = vsub.f32 %v950, %v2915
      %2917 = vmatpush.msra.mxu0 %v2916
      %v2918 = vand.u32 %v949, 4294901760
      %v2919 = vsub.f32 %v949, %v2918
      %2920 = vmatpush.msra.mxu0 %v2919
      %v2921 = vand.u32 %v2387, 4294901760
      %v2922 = vsub.f32 %v2387, %v2921
      %2923 = vmatmul.f32.gmra.mxu0 %v2922
      %v2924 = vpop.f32.mrf.mxu0
      %v2925 = vadd.f32 %v2871, %v2924
      %2926 = vdwg.mxu0
      %v2927 = vand.u32 %v964, 4294901760
      %2928 = vmatpush.msra.mxu0 %v2927
      %v2929 = vand.u32 %v963, 4294901760
      %2930 = vmatpush.msra.mxu0 %v2929
      %v2931 = vand.u32 %v962, 4294901760
      %2932 = vmatpush.msra.mxu0 %v2931
      %v2933 = vand.u32 %v961, 4294901760
      %2934 = vmatpush.msra.mxu0 %v2933
      %v2935 = vand.u32 %v960, 4294901760
      %2936 = vmatpush.msra.mxu0 %v2935
      %v2937 = vand.u32 %v959, 4294901760
      %2938 = vmatpush.msra.mxu0 %v2937
      %v2939 = vand.u32 %v958, 4294901760
      %2940 = vmatpush.msra.mxu0 %v2939
      %v2941 = vand.u32 %v957, 4294901760
      %2942 = vmatpush.msra.mxu0 %v2941
      %v2943 = vand.u32 %v956, 4294901760
      %2944 = vmatpush.msra.mxu0 %v2943
      %v2945 = vand.u32 %v955, 4294901760
      %2946 = vmatpush.msra.mxu0 %v2945
      %v2947 = vand.u32 %v954, 4294901760
      %2948 = vmatpush.msra.mxu0 %v2947
      %v2949 = vand.u32 %v953, 4294901760
      %2950 = vmatpush.msra.mxu0 %v2949
      %v2951 = vand.u32 %v952, 4294901760
      %2952 = vmatpush.msra.mxu0 %v2951
      %v2953 = vand.u32 %v951, 4294901760
      %2954 = vmatpush.msra.mxu0 %v2953
      %v2955 = vand.u32 %v950, 4294901760
      %2956 = vmatpush.msra.mxu0 %v2955
      %v2957 = vand.u32 %v949, 4294901760
      %2958 = vmatpush.msra.mxu0 %v2957
      %v2959 = vand.u32 %v2387, 4294901760
      %v2960 = vsub.f32 %v2387, %v2959
      %v2961 = vand.u32 %v2960, 4294901760
      %2962 = vmatmul.f32.gmra.mxu0 %v2961
      %v2963 = vpop.f32.mrf.mxu0
      %v2964 = vadd.f32 %v2925, %v2963
      %2965 = vdwg.mxu0
      %v2966 = vand.u32 %v964, 4294901760
      %v2967 = vsub.f32 %v964, %v2966
      %v2968 = vand.u32 %v2967, 4294901760
      %2969 = vmatpush.msra.mxu0 %v2968
      %v2970 = vand.u32 %v963, 4294901760
      %v2971 = vsub.f32 %v963, %v2970
      %v2972 = vand.u32 %v2971, 4294901760
      %2973 = vmatpush.msra.mxu0 %v2972
      %v2974 = vand.u32 %v962, 4294901760
      %v2975 = vsub.f32 %v962, %v2974
      %v2976 = vand.u32 %v2975, 4294901760
      %2977 = vmatpush.msra.mxu0 %v2976
      %v2978 = vand.u32 %v961, 4294901760
      %v2979 = vsub.f32 %v961, %v2978
      %v2980 = vand.u32 %v2979, 4294901760
      %2981 = vmatpush.msra.mxu0 %v2980
      %v2982 = vand.u32 %v960, 4294901760
      %v2983 = vsub.f32 %v960, %v2982
      %v2984 = vand.u32 %v2983, 4294901760
      %2985 = vmatpush.msra.mxu0 %v2984
      %v2986 = vand.u32 %v959, 4294901760
      %v2987 = vsub.f32 %v959, %v2986
      %v2988 = vand.u32 %v2987, 4294901760
      %2989 = vmatpush.msra.mxu0 %v2988
      %v2990 = vand.u32 %v958, 4294901760
      %v2991 = vsub.f32 %v958, %v2990
      %v2992 = vand.u32 %v2991, 4294901760
      %2993 = vmatpush.msra.mxu0 %v2992
      %v2994 = vand.u32 %v957, 4294901760
      %v2995 = vsub.f32 %v957, %v2994
      %v2996 = vand.u32 %v2995, 4294901760
      %2997 = vmatpush.msra.mxu0 %v2996
      %v2998 = vand.u32 %v956, 4294901760
      %v2999 = vsub.f32 %v956, %v2998
      %v3000 = vand.u32 %v2999, 4294901760
      %3001 = vmatpush.msra.mxu0 %v3000
      %v3002 = vand.u32 %v955, 4294901760
      %v3003 = vsub.f32 %v955, %v3002
      %v3004 = vand.u32 %v3003, 4294901760
      %3005 = vmatpush.msra.mxu0 %v3004
      %v3006 = vand.u32 %v954, 4294901760
      %v3007 = vsub.f32 %v954, %v3006
      %v3008 = vand.u32 %v3007, 4294901760
      %3009 = vmatpush.msra.mxu0 %v3008
      %v3010 = vand.u32 %v953, 4294901760
      %v3011 = vsub.f32 %v953, %v3010
      %v3012 = vand.u32 %v3011, 4294901760
      %3013 = vmatpush.msra.mxu0 %v3012
      %v3014 = vand.u32 %v952, 4294901760
      %v3015 = vsub.f32 %v952, %v3014
      %v3016 = vand.u32 %v3015, 4294901760
      %3017 = vmatpush.msra.mxu0 %v3016
      %v3018 = vand.u32 %v951, 4294901760
      %v3019 = vsub.f32 %v951, %v3018
      %v3020 = vand.u32 %v3019, 4294901760
      %3021 = vmatpush.msra.mxu0 %v3020
      %v3022 = vand.u32 %v950, 4294901760
      %v3023 = vsub.f32 %v950, %v3022
      %v3024 = vand.u32 %v3023, 4294901760
      %3025 = vmatpush.msra.mxu0 %v3024
      %v3026 = vand.u32 %v949, 4294901760
      %v3027 = vsub.f32 %v949, %v3026
      %v3028 = vand.u32 %v3027, 4294901760
      %3029 = vmatpush.msra.mxu0 %v3028
      %v3030 = vand.u32 %v2387, 4294901760
      %3031 = vmatmul.f32.gmra.mxu0 %v3030
      %v3032 = vpop.f32.mrf.mxu0
      %v3033 = vadd.f32 %v2964, %v3032
      %3034 = vdwg.mxu0
      %v3035 = vand.u32 %v964, 4294901760
      %3036 = vmatpush.msra.mxu0 %v3035
      %v3037 = vand.u32 %v963, 4294901760
      %3038 = vmatpush.msra.mxu0 %v3037
      %v3039 = vand.u32 %v962, 4294901760
      %3040 = vmatpush.msra.mxu0 %v3039
      %v3041 = vand.u32 %v961, 4294901760
      %3042 = vmatpush.msra.mxu0 %v3041
      %v3043 = vand.u32 %v960, 4294901760
      %3044 = vmatpush.msra.mxu0 %v3043
      %v3045 = vand.u32 %v959, 4294901760
      %3046 = vmatpush.msra.mxu0 %v3045
      %v3047 = vand.u32 %v958, 4294901760
      %3048 = vmatpush.msra.mxu0 %v3047
      %v3049 = vand.u32 %v957, 4294901760
      %3050 = vmatpush.msra.mxu0 %v3049
      %v3051 = vand.u32 %v956, 4294901760
      %3052 = vmatpush.msra.mxu0 %v3051
      %v3053 = vand.u32 %v955, 4294901760
      %3054 = vmatpush.msra.mxu0 %v3053
      %v3055 = vand.u32 %v954, 4294901760
      %3056 = vmatpush.msra.mxu0 %v3055
      %v3057 = vand.u32 %v953, 4294901760
      %3058 = vmatpush.msra.mxu0 %v3057
      %v3059 = vand.u32 %v952, 4294901760
      %3060 = vmatpush.msra.mxu0 %v3059
      %v3061 = vand.u32 %v951, 4294901760
      %3062 = vmatpush.msra.mxu0 %v3061
      %v3063 = vand.u32 %v950, 4294901760
      %3064 = vmatpush.msra.mxu0 %v3063
      %v3065 = vand.u32 %v949, 4294901760
      %3066 = vmatpush.msra.mxu0 %v3065
      %v3067 = vand.u32 %v2387, 4294901760
      %3068 = vmatmul.f32.gmra.mxu0 %v3067
      %v3069 = vpop.f32.mrf.mxu0
      %v3070 = vadd.f32 %v3033, %v3069
      %3071 = vdwg.mxu0
      %v3072 = vadd.f32 %v2383, %v3070
      %3073 = vst.msk [vmem:[%s878] sm:$0xf] %vm1656, %v3072
      %v3074 = vld [vmem:[%s902] sm:$0xf]
      %v3075 = vmul.f32 %v2382, %v2382
      %3077 = vst [vmem:[#allocation1] ss:$2 sm:$0xff] %v3075
      %v3078 = vld.sshfl [vmem:[#allocation1] sm:$0xff pattern:$0x75316420]
      %v3079 = vld.sshfl [vmem:[#allocation1 + $0x8] sm:$0xff pattern:$0x75316420]
      %v3082 = vsel %vm1666, %v3078, 0.0
      %v3083 = vsel %vm1666, %v3079, 0.0
      %v3084 = vadd.f32 %v3082, %v3083
      %3085 = vadd.xlane.f32.xlu0 %v3084
      %v3086 = vpop.xlane.xlu0 %3085
      %v3087 = vadd.f32 %v3074, %v3086
      %3088 = vst.msk [vmem:[%s902] sm:$0xf] %vm1673, %v3087
      %v3089 = vld [vmem:[%s845] sm:$0xff]
      %v3090 = vld [vmem:[%s882] sm:$0xf]
      %3092 = vst [vmem:[#allocation1] ss:$2 sm:$0xff] %v3089
      %v3093 = vld.sshfl [vmem:[#allocation1] sm:$0xff pattern:$0x75316420]
      %v3094 = vld.sshfl [vmem:[#allocation1 + $0x8] sm:$0xff pattern:$0x75316420]
      %v3097 = vand.u32 %v948, 4294901760
      %3098 = vmatpush.msra.mxu0 %v3097
      %v3099 = vand.u32 %v947, 4294901760
      %3100 = vmatpush.msra.mxu0 %v3099
      %v3101 = vand.u32 %v946, 4294901760
      %3102 = vmatpush.msra.mxu0 %v3101
      %v3103 = vand.u32 %v945, 4294901760
      %3104 = vmatpush.msra.mxu0 %v3103
      %v3105 = vand.u32 %v944, 4294901760
      %3106 = vmatpush.msra.mxu0 %v3105
      %v3107 = vand.u32 %v943, 4294901760
      %3108 = vmatpush.msra.mxu0 %v3107
      %v3109 = vand.u32 %v942, 4294901760
      %3110 = vmatpush.msra.mxu0 %v3109
      %v3111 = vand.u32 %v941, 4294901760
      %3112 = vmatpush.msra.mxu0 %v3111
      %v3113 = vand.u32 %v940, 4294901760
      %3114 = vmatpush.msra.mxu0 %v3113
      %v3115 = vand.u32 %v939, 4294901760
      %3116 = vmatpush.msra.mxu0 %v3115
      %v3117 = vand.u32 %v938, 4294901760
      %3118 = vmatpush.msra.mxu0 %v3117
      %v3119 = vand.u32 %v937, 4294901760
      %3120 = vmatpush.msra.mxu0 %v3119
      %v3121 = vand.u32 %v936, 4294901760
      %3122 = vmatpush.msra.mxu0 %v3121
      %v3123 = vand.u32 %v935, 4294901760
      %3124 = vmatpush.msra.mxu0 %v3123
      %v3125 = vand.u32 %v934, 4294901760
      %3126 = vmatpush.msra.mxu0 %v3125
      %v3127 = vand.u32 %v933, 4294901760
      %3128 = vmatpush.msra.mxu0 %v3127
      %v3129 = vand.u32 %v3093, 4294901760
      %v3130 = vsub.f32 %v3093, %v3129
      %v3131 = vand.u32 %v3130, 4294901760
      %v3132 = vsub.f32 %v3130, %v3131
      %v3133 = vand.u32 %v3132, 4294901760
      %3134 = vmatmul.f32.gmra.mxu0 %v3133
      %v3135 = vpop.f32.mrf.mxu0
      %v3136 = vadd.f32 0.0, %v3135
      %3137 = vdwg.mxu0
      %v3138 = vand.u32 %v948, 4294901760
      %v3139 = vsub.f32 %v948, %v3138
      %v3140 = vand.u32 %v3139, 4294901760
      %v3141 = vsub.f32 %v3139, %v3140
      %v3142 = vand.u32 %v3141, 4294901760
      %3143 = vmatpush.msra.mxu0 %v3142
      %v3144 = vand.u32 %v947, 4294901760
      %v3145 = vsub.f32 %v947, %v3144
      %v3146 = vand.u32 %v3145, 4294901760
      %v3147 = vsub.f32 %v3145, %v3146
      %v3148 = vand.u32 %v3147, 4294901760
      %3149 = vmatpush.msra.mxu0 %v3148
      %v3150 = vand.u32 %v946, 4294901760
      %v3151 = vsub.f32 %v946, %v3150
      %v3152 = vand.u32 %v3151, 4294901760
      %v3153 = vsub.f32 %v3151, %v3152
      %v3154 = vand.u32 %v3153, 4294901760
      %3155 = vmatpush.msra.mxu0 %v3154
      %v3156 = vand.u32 %v945, 4294901760
      %v3157 = vsub.f32 %v945, %v3156
      %v3158 = vand.u32 %v3157, 4294901760
      %v3159 = vsub.f32 %v3157, %v3158
      %v3160 = vand.u32 %v3159, 4294901760
      %3161 = vmatpush.msra.mxu0 %v3160
      %v3162 = vand.u32 %v944, 4294901760
      %v3163 = vsub.f32 %v944, %v3162
      %v3164 = vand.u32 %v3163, 4294901760
      %v3165 = vsub.f32 %v3163, %v3164
      %v3166 = vand.u32 %v3165, 4294901760
      %3167 = vmatpush.msra.mxu0 %v3166
      %v3168 = vand.u32 %v943, 4294901760
      %v3169 = vsub.f32 %v943, %v3168
      %v3170 = vand.u32 %v3169, 4294901760
      %v3171 = vsub.f32 %v3169, %v3170
      %v3172 = vand.u32 %v3171, 4294901760
      %3173 = vmatpush.msra.mxu0 %v3172
      %v3174 = vand.u32 %v942, 4294901760
      %v3175 = vsub.f32 %v942, %v3174
      %v3176 = vand.u32 %v3175, 4294901760
      %v3177 = vsub.f32 %v3175, %v3176
      %v3178 = vand.u32 %v3177, 4294901760
      %3179 = vmatpush.msra.mxu0 %v3178
      %v3180 = vand.u32 %v941, 4294901760
      %v3181 = vsub.f32 %v941, %v3180
      %v3182 = vand.u32 %v3181, 4294901760
      %v3183 = vsub.f32 %v3181, %v3182
      %v3184 = vand.u32 %v3183, 4294901760
      %3185 = vmatpush.msra.mxu0 %v3184
      %v3186 = vand.u32 %v940, 4294901760
      %v3187 = vsub.f32 %v940, %v3186
      %v3188 = vand.u32 %v3187, 4294901760
      %v3189 = vsub.f32 %v3187, %v3188
      %v3190 = vand.u32 %v3189, 4294901760
      %3191 = vmatpush.msra.mxu0 %v3190
      %v3192 = vand.u32 %v939, 4294901760
      %v3193 = vsub.f32 %v939, %v3192
      %v3194 = vand.u32 %v3193, 4294901760
      %v3195 = vsub.f32 %v3193, %v3194
      %v3196 = vand.u32 %v3195, 4294901760
      %3197 = vmatpush.msra.mxu0 %v3196
      %v3198 = vand.u32 %v938, 4294901760
      %v3199 = vsub.f32 %v938, %v3198
      %v3200 = vand.u32 %v3199, 4294901760
      %v3201 = vsub.f32 %v3199, %v3200
      %v3202 = vand.u32 %v3201, 4294901760
      %3203 = vmatpush.msra.mxu0 %v3202
      %v3204 = vand.u32 %v937, 4294901760
      %v3205 = vsub.f32 %v937, %v3204
      %v3206 = vand.u32 %v3205, 4294901760
      %v3207 = vsub.f32 %v3205, %v3206
      %v3208 = vand.u32 %v3207, 4294901760
      %3209 = vmatpush.msra.mxu0 %v3208
      %v3210 = vand.u32 %v936, 4294901760
      %v3211 = vsub.f32 %v936, %v3210
      %v3212 = vand.u32 %v3211, 4294901760
      %v3213 = vsub.f32 %v3211, %v3212
      %v3214 = vand.u32 %v3213, 4294901760
      %3215 = vmatpush.msra.mxu0 %v3214
      %v3216 = vand.u32 %v935, 4294901760
      %v3217 = vsub.f32 %v935, %v3216
      %v3218 = vand.u32 %v3217, 4294901760
      %v3219 = vsub.f32 %v3217, %v3218
      %v3220 = vand.u32 %v3219, 4294901760
      %3221 = vmatpush.msra.mxu0 %v3220
      %v3222 = vand.u32 %v934, 4294901760
      %v3223 = vsub.f32 %v934, %v3222
      %v3224 = vand.u32 %v3223, 4294901760
      %v3225 = vsub.f32 %v3223, %v3224
      %v3226 = vand.u32 %v3225, 4294901760
      %3227 = vmatpush.msra.mxu0 %v3226
      %v3228 = vand.u32 %v933, 4294901760
      %v3229 = vsub.f32 %v933, %v3228
      %v3230 = vand.u32 %v3229, 4294901760
      %v3231 = vsub.f32 %v3229, %v3230
      %v3232 = vand.u32 %v3231, 4294901760
      %3233 = vmatpush.msra.mxu0 %v3232
      %v3234 = vand.u32 %v3093, 4294901760
      %3235 = vmatmul.f32.gmra.mxu0 %v3234
      %v3236 = vpop.f32.mrf.mxu0
      %v3237 = vadd.f32 %v3136, %v3236
      %3238 = vdwg.mxu0
      %v3239 = vand.u32 %v948, 4294901760
      %v3240 = vsub.f32 %v948, %v3239
      %3241 = vmatpush.msra.mxu0 %v3240
      %v3242 = vand.u32 %v947, 4294901760
      %v3243 = vsub.f32 %v947, %v3242
      %3244 = vmatpush.msra.mxu0 %v3243
      %v3245 = vand.u32 %v946, 4294901760
      %v3246 = vsub.f32 %v946, %v3245
      %3247 = vmatpush.msra.mxu0 %v3246
      %v3248 = vand.u32 %v945, 4294901760
      %v3249 = vsub.f32 %v945, %v3248
      %3250 = vmatpush.msra.mxu0 %v3249
      %v3251 = vand.u32 %v944, 4294901760
      %v3252 = vsub.f32 %v944, %v3251
      %3253 = vmatpush.msra.mxu0 %v3252
      %v3254 = vand.u32 %v943, 4294901760
      %v3255 = vsub.f32 %v943, %v3254
      %3256 = vmatpush.msra.mxu0 %v3255
      %v3257 = vand.u32 %v942, 4294901760
      %v3258 = vsub.f32 %v942, %v3257
      %3259 = vmatpush.msra.mxu0 %v3258
      %v3260 = vand.u32 %v941, 4294901760
      %v3261 = vsub.f32 %v941, %v3260
      %3262 = vmatpush.msra.mxu0 %v3261
      %v3263 = vand.u32 %v940, 4294901760
      %v3264 = vsub.f32 %v940, %v3263
      %3265 = vmatpush.msra.mxu0 %v3264
      %v3266 = vand.u32 %v939, 4294901760
      %v3267 = vsub.f32 %v939, %v3266
      %3268 = vmatpush.msra.mxu0 %v3267
      %v3269 = vand.u32 %v938, 4294901760
      %v3270 = vsub.f32 %v938, %v3269
      %3271 = vmatpush.msra.mxu0 %v3270
      %v3272 = vand.u32 %v937, 4294901760
      %v3273 = vsub.f32 %v937, %v3272
      %3274 = vmatpush.msra.mxu0 %v3273
      %v3275 = vand.u32 %v936, 4294901760
      %v3276 = vsub.f32 %v936, %v3275
      %3277 = vmatpush.msra.mxu0 %v3276
      %v3278 = vand.u32 %v935, 4294901760
      %v3279 = vsub.f32 %v935, %v3278
      %3280 = vmatpush.msra.mxu0 %v3279
      %v3281 = vand.u32 %v934, 4294901760
      %v3282 = vsub.f32 %v934, %v3281
      %3283 = vmatpush.msra.mxu0 %v3282
      %v3284 = vand.u32 %v933, 4294901760
      %v3285 = vsub.f32 %v933, %v3284
      %3286 = vmatpush.msra.mxu0 %v3285
      %v3287 = vand.u32 %v3093, 4294901760
      %v3288 = vsub.f32 %v3093, %v3287
      %3289 = vmatmul.f32.gmra.mxu0 %v3288
      %v3290 = vpop.f32.mrf.mxu0
      %v3291 = vadd.f32 %v3237, %v3290
      %3292 = vdwg.mxu0
      %v3293 = vand.u32 %v948, 4294901760
      %3294 = vmatpush.msra.mxu0 %v3293
      %v3295 = vand.u32 %v947, 4294901760
      %3296 = vmatpush.msra.mxu0 %v3295
      %v3297 = vand.u32 %v946, 4294901760
      %3298 = vmatpush.msra.mxu0 %v3297
      %v3299 = vand.u32 %v945, 4294901760
      %3300 = vmatpush.msra.mxu0 %v3299
      %v3301 = vand.u32 %v944, 4294901760
      %3302 = vmatpush.msra.mxu0 %v3301
      %v3303 = vand.u32 %v943, 4294901760
      %3304 = vmatpush.msra.mxu0 %v3303
      %v3305 = vand.u32 %v942, 4294901760
      %3306 = vmatpush.msra.mxu0 %v3305
      %v3307 = vand.u32 %v941, 4294901760
      %3308 = vmatpush.msra.mxu0 %v3307
      %v3309 = vand.u32 %v940, 4294901760
      %3310 = vmatpush.msra.mxu0 %v3309
      %v3311 = vand.u32 %v939, 4294901760
      %3312 = vmatpush.msra.mxu0 %v3311
      %v3313 = vand.u32 %v938, 4294901760
      %3314 = vmatpush.msra.mxu0 %v3313
      %v3315 = vand.u32 %v937, 4294901760
      %3316 = vmatpush.msra.mxu0 %v3315
      %v3317 = vand.u32 %v936, 4294901760
      %3318 = vmatpush.msra.mxu0 %v3317
      %v3319 = vand.u32 %v935, 4294901760
      %3320 = vmatpush.msra.mxu0 %v3319
      %v3321 = vand.u32 %v934, 4294901760
      %3322 = vmatpush.msra.mxu0 %v3321
      %v3323 = vand.u32 %v933, 4294901760
      %3324 = vmatpush.msra.mxu0 %v3323
      %v3325 = vand.u32 %v3093, 4294901760
      %v3326 = vsub.f32 %v3093, %v3325
      %v3327 = vand.u32 %v3326, 4294901760
      %3328 = vmatmul.f32.gmra.mxu0 %v3327
      %v3329 = vpop.f32.mrf.mxu0
      %v3330 = vadd.f32 %v3291, %v3329
      %3331 = vdwg.mxu0
      %v3332 = vand.u32 %v948, 4294901760
      %v3333 = vsub.f32 %v948, %v3332
      %v3334 = vand.u32 %v3333, 4294901760
      %3335 = vmatpush.msra.mxu0 %v3334
      %v3336 = vand.u32 %v947, 4294901760
      %v3337 = vsub.f32 %v947, %v3336
      %v3338 = vand.u32 %v3337, 4294901760
      %3339 = vmatpush.msra.mxu0 %v3338
      %v3340 = vand.u32 %v946, 4294901760
      %v3341 = vsub.f32 %v946, %v3340
      %v3342 = vand.u32 %v3341, 4294901760
      %3343 = vmatpush.msra.mxu0 %v3342
      %v3344 = vand.u32 %v945, 4294901760
      %v3345 = vsub.f32 %v945, %v3344
      %v3346 = vand.u32 %v3345, 4294901760
      %3347 = vmatpush.msra.mxu0 %v3346
      %v3348 = vand.u32 %v944, 4294901760
      %v3349 = vsub.f32 %v944, %v3348
      %v3350 = vand.u32 %v3349, 4294901760
      %3351 = vmatpush.msra.mxu0 %v3350
      %v3352 = vand.u32 %v943, 4294901760
      %v3353 = vsub.f32 %v943, %v3352
      %v3354 = vand.u32 %v3353, 4294901760
      %3355 = vmatpush.msra.mxu0 %v3354
      %v3356 = vand.u32 %v942, 4294901760
      %v3357 = vsub.f32 %v942, %v3356
      %v3358 = vand.u32 %v3357, 4294901760
      %3359 = vmatpush.msra.mxu0 %v3358
      %v3360 = vand.u32 %v941, 4294901760
      %v3361 = vsub.f32 %v941, %v3360
      %v3362 = vand.u32 %v3361, 4294901760
      %3363 = vmatpush.msra.mxu0 %v3362
      %v3364 = vand.u32 %v940, 4294901760
      %v3365 = vsub.f32 %v940, %v3364
      %v3366 = vand.u32 %v3365, 4294901760
      %3367 = vmatpush.msra.mxu0 %v3366
      %v3368 = vand.u32 %v939, 4294901760
      %v3369 = vsub.f32 %v939, %v3368
      %v3370 = vand.u32 %v3369, 4294901760
      %3371 = vmatpush.msra.mxu0 %v3370
      %v3372 = vand.u32 %v938, 4294901760
      %v3373 = vsub.f32 %v938, %v3372
      %v3374 = vand.u32 %v3373, 4294901760
      %3375 = vmatpush.msra.mxu0 %v3374
      %v3376 = vand.u32 %v937, 4294901760
      %v3377 = vsub.f32 %v937, %v3376
      %v3378 = vand.u32 %v3377, 4294901760
      %3379 = vmatpush.msra.mxu0 %v3378
      %v3380 = vand.u32 %v936, 4294901760
      %v3381 = vsub.f32 %v936, %v3380
      %v3382 = vand.u32 %v3381, 4294901760
      %3383 = vmatpush.msra.mxu0 %v3382
      %v3384 = vand.u32 %v935, 4294901760
      %v3385 = vsub.f32 %v935, %v3384
      %v3386 = vand.u32 %v3385, 4294901760
      %3387 = vmatpush.msra.mxu0 %v3386
      %v3388 = vand.u32 %v934, 4294901760
      %v3389 = vsub.f32 %v934, %v3388
      %v3390 = vand.u32 %v3389, 4294901760
      %3391 = vmatpush.msra.mxu0 %v3390
      %v3392 = vand.u32 %v933, 4294901760
      %v3393 = vsub.f32 %v933, %v3392
      %v3394 = vand.u32 %v3393, 4294901760
      %3395 = vmatpush.msra.mxu0 %v3394
      %v3396 = vand.u32 %v3093, 4294901760
      %3397 = vmatmul.f32.gmra.mxu0 %v3396
      %v3398 = vpop.f32.mrf.mxu0
      %v3399 = vadd.f32 %v3330, %v3398
      %3400 = vdwg.mxu0
      %v3401 = vand.u32 %v948, 4294901760
      %3402 = vmatpush.msra.mxu0 %v3401
      %v3403 = vand.u32 %v947, 4294901760
      %3404 = vmatpush.msra.mxu0 %v3403
      %v3405 = vand.u32 %v946, 4294901760
      %3406 = vmatpush.msra.mxu0 %v3405
      %v3407 = vand.u32 %v945, 4294901760
      %3408 = vmatpush.msra.mxu0 %v3407
      %v3409 = vand.u32 %v944, 4294901760
      %3410 = vmatpush.msra.mxu0 %v3409
      %v3411 = vand.u32 %v943, 4294901760
      %3412 = vmatpush.msra.mxu0 %v3411
      %v3413 = vand.u32 %v942, 4294901760
      %3414 = vmatpush.msra.mxu0 %v3413
      %v3415 = vand.u32 %v941, 4294901760
      %3416 = vmatpush.msra.mxu0 %v3415
      %v3417 = vand.u32 %v940, 4294901760
      %3418 = vmatpush.msra.mxu0 %v3417
      %v3419 = vand.u32 %v939, 4294901760
      %3420 = vmatpush.msra.mxu0 %v3419
      %v3421 = vand.u32 %v938, 4294901760
      %3422 = vmatpush.msra.mxu0 %v3421
      %v3423 = vand.u32 %v937, 4294901760
      %3424 = vmatpush.msra.mxu0 %v3423
      %v3425 = vand.u32 %v936, 4294901760
      %3426 = vmatpush.msra.mxu0 %v3425
      %v3427 = vand.u32 %v935, 4294901760
      %3428 = vmatpush.msra.mxu0 %v3427
      %v3429 = vand.u32 %v934, 4294901760
      %3430 = vmatpush.msra.mxu0 %v3429
      %v3431 = vand.u32 %v933, 4294901760
      %3432 = vmatpush.msra.mxu0 %v3431
      %v3433 = vand.u32 %v3093, 4294901760
      %3434 = vmatmul.f32.gmra.mxu0 %v3433
      %v3435 = vpop.f32.mrf.mxu0
      %v3436 = vadd.f32 %v3399, %v3435
      %3437 = vdwg.mxu0
      %v3438 = vand.u32 %v964, 4294901760
      %3439 = vmatpush.msra.mxu0 %v3438
      %v3440 = vand.u32 %v963, 4294901760
      %3441 = vmatpush.msra.mxu0 %v3440
      %v3442 = vand.u32 %v962, 4294901760
      %3443 = vmatpush.msra.mxu0 %v3442
      %v3444 = vand.u32 %v961, 4294901760
      %3445 = vmatpush.msra.mxu0 %v3444
      %v3446 = vand.u32 %v960, 4294901760
      %3447 = vmatpush.msra.mxu0 %v3446
      %v3448 = vand.u32 %v959, 4294901760
      %3449 = vmatpush.msra.mxu0 %v3448
      %v3450 = vand.u32 %v958, 4294901760
      %3451 = vmatpush.msra.mxu0 %v3450
      %v3452 = vand.u32 %v957, 4294901760
      %3453 = vmatpush.msra.mxu0 %v3452
      %v3454 = vand.u32 %v956, 4294901760
      %3455 = vmatpush.msra.mxu0 %v3454
      %v3456 = vand.u32 %v955, 4294901760
      %3457 = vmatpush.msra.mxu0 %v3456
      %v3458 = vand.u32 %v954, 4294901760
      %3459 = vmatpush.msra.mxu0 %v3458
      %v3460 = vand.u32 %v953, 4294901760
      %3461 = vmatpush.msra.mxu0 %v3460
      %v3462 = vand.u32 %v952, 4294901760
      %3463 = vmatpush.msra.mxu0 %v3462
      %v3464 = vand.u32 %v951, 4294901760
      %3465 = vmatpush.msra.mxu0 %v3464
      %v3466 = vand.u32 %v950, 4294901760
      %3467 = vmatpush.msra.mxu0 %v3466
      %v3468 = vand.u32 %v949, 4294901760
      %3469 = vmatpush.msra.mxu0 %v3468
      %v3470 = vand.u32 %v3094, 4294901760
      %v3471 = vsub.f32 %v3094, %v3470
      %v3472 = vand.u32 %v3471, 4294901760
      %v3473 = vsub.f32 %v3471, %v3472
      %v3474 = vand.u32 %v3473, 4294901760
      %3475 = vmatmul.f32.gmra.mxu0 %v3474
      %v3476 = vpop.f32.mrf.mxu0
      %v3477 = vadd.f32 %v3436, %v3476
      %3478 = vdwg.mxu0
      %v3479 = vand.u32 %v964, 4294901760
      %v3480 = vsub.f32 %v964, %v3479
      %v3481 = vand.u32 %v3480, 4294901760
      %v3482 = vsub.f32 %v3480, %v3481
      %v3483 = vand.u32 %v3482, 4294901760
      %3484 = vmatpush.msra.mxu0 %v3483
      %v3485 = vand.u32 %v963, 4294901760
      %v3486 = vsub.f32 %v963, %v3485
      %v3487 = vand.u32 %v3486, 4294901760
      %v3488 = vsub.f32 %v3486, %v3487
      %v3489 = vand.u32 %v3488, 4294901760
      %3490 = vmatpush.msra.mxu0 %v3489
      %v3491 = vand.u32 %v962, 4294901760
      %v3492 = vsub.f32 %v962, %v3491
      %v3493 = vand.u32 %v3492, 4294901760
      %v3494 = vsub.f32 %v3492, %v3493
      %v3495 = vand.u32 %v3494, 4294901760
      %3496 = vmatpush.msra.mxu0 %v3495
      %v3497 = vand.u32 %v961, 4294901760
      %v3498 = vsub.f32 %v961, %v3497
      %v3499 = vand.u32 %v3498, 4294901760
      %v3500 = vsub.f32 %v3498, %v3499
      %v3501 = vand.u32 %v3500, 4294901760
      %3502 = vmatpush.msra.mxu0 %v3501
      %v3503 = vand.u32 %v960, 4294901760
      %v3504 = vsub.f32 %v960, %v3503
      %v3505 = vand.u32 %v3504, 4294901760
      %v3506 = vsub.f32 %v3504, %v3505
      %v3507 = vand.u32 %v3506, 4294901760
      %3508 = vmatpush.msra.mxu0 %v3507
      %v3509 = vand.u32 %v959, 4294901760
      %v3510 = vsub.f32 %v959, %v3509
      %v3511 = vand.u32 %v3510, 4294901760
      %v3512 = vsub.f32 %v3510, %v3511
      %v3513 = vand.u32 %v3512, 4294901760
      %3514 = vmatpush.msra.mxu0 %v3513
      %v3515 = vand.u32 %v958, 4294901760
      %v3516 = vsub.f32 %v958, %v3515
      %v3517 = vand.u32 %v3516, 4294901760
      %v3518 = vsub.f32 %v3516, %v3517
      %v3519 = vand.u32 %v3518, 4294901760
      %3520 = vmatpush.msra.mxu0 %v3519
      %v3521 = vand.u32 %v957, 4294901760
      %v3522 = vsub.f32 %v957, %v3521
      %v3523 = vand.u32 %v3522, 4294901760
      %v3524 = vsub.f32 %v3522, %v3523
      %v3525 = vand.u32 %v3524, 4294901760
      %3526 = vmatpush.msra.mxu0 %v3525
      %v3527 = vand.u32 %v956, 4294901760
      %v3528 = vsub.f32 %v956, %v3527
      %v3529 = vand.u32 %v3528, 4294901760
      %v3530 = vsub.f32 %v3528, %v3529
      %v3531 = vand.u32 %v3530, 4294901760
      %3532 = vmatpush.msra.mxu0 %v3531
      %v3533 = vand.u32 %v955, 4294901760
      %v3534 = vsub.f32 %v955, %v3533
      %v3535 = vand.u32 %v3534, 4294901760
      %v3536 = vsub.f32 %v3534, %v3535
      %v3537 = vand.u32 %v3536, 4294901760
      %3538 = vmatpush.msra.mxu0 %v3537
      %v3539 = vand.u32 %v954, 4294901760
      %v3540 = vsub.f32 %v954, %v3539
      %v3541 = vand.u32 %v3540, 4294901760
      %v3542 = vsub.f32 %v3540, %v3541
      %v3543 = vand.u32 %v3542, 4294901760
      %3544 = vmatpush.msra.mxu0 %v3543
      %v3545 = vand.u32 %v953, 4294901760
      %v3546 = vsub.f32 %v953, %v3545
      %v3547 = vand.u32 %v3546, 4294901760
      %v3548 = vsub.f32 %v3546, %v3547
      %v3549 = vand.u32 %v3548, 4294901760
      %3550 = vmatpush.msra.mxu0 %v3549
      %v3551 = vand.u32 %v952, 4294901760
      %v3552 = vsub.f32 %v952, %v3551
      %v3553 = vand.u32 %v3552, 4294901760
      %v3554 = vsub.f32 %v3552, %v3553
      %v3555 = vand.u32 %v3554, 4294901760
      %3556 = vmatpush.msra.mxu0 %v3555
      %v3557 = vand.u32 %v951, 4294901760
      %v3558 = vsub.f32 %v951, %v3557
      %v3559 = vand.u32 %v3558, 4294901760
      %v3560 = vsub.f32 %v3558, %v3559
      %v3561 = vand.u32 %v3560, 4294901760
      %3562 = vmatpush.msra.mxu0 %v3561
      %v3563 = vand.u32 %v950, 4294901760
      %v3564 = vsub.f32 %v950, %v3563
      %v3565 = vand.u32 %v3564, 4294901760
      %v3566 = vsub.f32 %v3564, %v3565
      %v3567 = vand.u32 %v3566, 4294901760
      %3568 = vmatpush.msra.mxu0 %v3567
      %v3569 = vand.u32 %v949, 4294901760
      %v3570 = vsub.f32 %v949, %v3569
      %v3571 = vand.u32 %v3570, 4294901760
      %v3572 = vsub.f32 %v3570, %v3571
      %v3573 = vand.u32 %v3572, 4294901760
      %3574 = vmatpush.msra.mxu0 %v3573
      %v3575 = vand.u32 %v3094, 4294901760
      %3576 = vmatmul.f32.gmra.mxu0 %v3575
      %v3577 = vpop.f32.mrf.mxu0
      %v3578 = vadd.f32 %v3477, %v3577
      %3579 = vdwg.mxu0
      %v3580 = vand.u32 %v964, 4294901760
      %v3581 = vsub.f32 %v964, %v3580
      %3582 = vmatpush.msra.mxu0 %v3581
      %v3583 = vand.u32 %v963, 4294901760
      %v3584 = vsub.f32 %v963, %v3583
      %3585 = vmatpush.msra.mxu0 %v3584
      %v3586 = vand.u32 %v962, 4294901760
      %v3587 = vsub.f32 %v962, %v3586
      %3588 = vmatpush.msra.mxu0 %v3587
      %v3589 = vand.u32 %v961, 4294901760
      %v3590 = vsub.f32 %v961, %v3589
      %3591 = vmatpush.msra.mxu0 %v3590
      %v3592 = vand.u32 %v960, 4294901760
      %v3593 = vsub.f32 %v960, %v3592
      %3594 = vmatpush.msra.mxu0 %v3593
      %v3595 = vand.u32 %v959, 4294901760
      %v3596 = vsub.f32 %v959, %v3595
      %3597 = vmatpush.msra.mxu0 %v3596
      %v3598 = vand.u32 %v958, 4294901760
      %v3599 = vsub.f32 %v958, %v3598
      %3600 = vmatpush.msra.mxu0 %v3599
      %v3601 = vand.u32 %v957, 4294901760
      %v3602 = vsub.f32 %v957, %v3601
      %3603 = vmatpush.msra.mxu0 %v3602
      %v3604 = vand.u32 %v956, 4294901760
      %v3605 = vsub.f32 %v956, %v3604
      %3606 = vmatpush.msra.mxu0 %v3605
      %v3607 = vand.u32 %v955, 4294901760
      %v3608 = vsub.f32 %v955, %v3607
      %3609 = vmatpush.msra.mxu0 %v3608
      %v3610 = vand.u32 %v954, 4294901760
      %v3611 = vsub.f32 %v954, %v3610
      %3612 = vmatpush.msra.mxu0 %v3611
      %v3613 = vand.u32 %v953, 4294901760
      %v3614 = vsub.f32 %v953, %v3613
      %3615 = vmatpush.msra.mxu0 %v3614
      %v3616 = vand.u32 %v952, 4294901760
      %v3617 = vsub.f32 %v952, %v3616
      %3618 = vmatpush.msra.mxu0 %v3617
      %v3619 = vand.u32 %v951, 4294901760
      %v3620 = vsub.f32 %v951, %v3619
      %3621 = vmatpush.msra.mxu0 %v3620
      %v3622 = vand.u32 %v950, 4294901760
      %v3623 = vsub.f32 %v950, %v3622
      %3624 = vmatpush.msra.mxu0 %v3623
      %v3625 = vand.u32 %v949, 4294901760
      %v3626 = vsub.f32 %v949, %v3625
      %3627 = vmatpush.msra.mxu0 %v3626
      %v3628 = vand.u32 %v3094, 4294901760
      %v3629 = vsub.f32 %v3094, %v3628
      %3630 = vmatmul.f32.gmra.mxu0 %v3629
      %v3631 = vpop.f32.mrf.mxu0
      %v3632 = vadd.f32 %v3578, %v3631
      %3633 = vdwg.mxu0
      %v3634 = vand.u32 %v964, 4294901760
      %3635 = vmatpush.msra.mxu0 %v3634
      %v3636 = vand.u32 %v963, 4294901760
      %3637 = vmatpush.msra.mxu0 %v3636
      %v3638 = vand.u32 %v962, 4294901760
      %3639 = vmatpush.msra.mxu0 %v3638
      %v3640 = vand.u32 %v961, 4294901760
      %3641 = vmatpush.msra.mxu0 %v3640
      %v3642 = vand.u32 %v960, 4294901760
      %3643 = vmatpush.msra.mxu0 %v3642
      %v3644 = vand.u32 %v959, 4294901760
      %3645 = vmatpush.msra.mxu0 %v3644
      %v3646 = vand.u32 %v958, 4294901760
      %3647 = vmatpush.msra.mxu0 %v3646
      %v3648 = vand.u32 %v957, 4294901760
      %3649 = vmatpush.msra.mxu0 %v3648
      %v3650 = vand.u32 %v956, 4294901760
      %3651 = vmatpush.msra.mxu0 %v3650
      %v3652 = vand.u32 %v955, 4294901760
      %3653 = vmatpush.msra.mxu0 %v3652
      %v3654 = vand.u32 %v954, 4294901760
      %3655 = vmatpush.msra.mxu0 %v3654
      %v3656 = vand.u32 %v953, 4294901760
      %3657 = vmatpush.msra.mxu0 %v3656
      %v3658 = vand.u32 %v952, 4294901760
      %3659 = vmatpush.msra.mxu0 %v3658
      %v3660 = vand.u32 %v951, 4294901760
      %3661 = vmatpush.msra.mxu0 %v3660
      %v3662 = vand.u32 %v950, 4294901760
      %3663 = vmatpush.msra.mxu0 %v3662
      %v3664 = vand.u32 %v949, 4294901760
      %3665 = vmatpush.msra.mxu0 %v3664
      %v3666 = vand.u32 %v3094, 4294901760
      %v3667 = vsub.f32 %v3094, %v3666
      %v3668 = vand.u32 %v3667, 4294901760
      %3669 = vmatmul.f32.gmra.mxu0 %v3668
      %v3670 = vpop.f32.mrf.mxu0
      %v3671 = vadd.f32 %v3632, %v3670
      %3672 = vdwg.mxu0
      %v3673 = vand.u32 %v964, 4294901760
      %v3674 = vsub.f32 %v964, %v3673
      %v3675 = vand.u32 %v3674, 4294901760
      %3676 = vmatpush.msra.mxu0 %v3675
      %v3677 = vand.u32 %v963, 4294901760
      %v3678 = vsub.f32 %v963, %v3677
      %v3679 = vand.u32 %v3678, 4294901760
      %3680 = vmatpush.msra.mxu0 %v3679
      %v3681 = vand.u32 %v962, 4294901760
      %v3682 = vsub.f32 %v962, %v3681
      %v3683 = vand.u32 %v3682, 4294901760
      %3684 = vmatpush.msra.mxu0 %v3683
      %v3685 = vand.u32 %v961, 4294901760
      %v3686 = vsub.f32 %v961, %v3685
      %v3687 = vand.u32 %v3686, 4294901760
      %3688 = vmatpush.msra.mxu0 %v3687
      %v3689 = vand.u32 %v960, 4294901760
      %v3690 = vsub.f32 %v960, %v3689
      %v3691 = vand.u32 %v3690, 4294901760
      %3692 = vmatpush.msra.mxu0 %v3691
      %v3693 = vand.u32 %v959, 4294901760
      %v3694 = vsub.f32 %v959, %v3693
      %v3695 = vand.u32 %v3694, 4294901760
      %3696 = vmatpush.msra.mxu0 %v3695
      %v3697 = vand.u32 %v958, 4294901760
      %v3698 = vsub.f32 %v958, %v3697
      %v3699 = vand.u32 %v3698, 4294901760
      %3700 = vmatpush.msra.mxu0 %v3699
      %v3701 = vand.u32 %v957, 4294901760
      %v3702 = vsub.f32 %v957, %v3701
      %v3703 = vand.u32 %v3702, 4294901760
      %3704 = vmatpush.msra.mxu0 %v3703
      %v3705 = vand.u32 %v956, 4294901760
      %v3706 = vsub.f32 %v956, %v3705
      %v3707 = vand.u32 %v3706, 4294901760
      %3708 = vmatpush.msra.mxu0 %v3707
      %v3709 = vand.u32 %v955, 4294901760
      %v3710 = vsub.f32 %v955, %v3709
      %v3711 = vand.u32 %v3710, 4294901760
      %3712 = vmatpush.msra.mxu0 %v3711
      %v3713 = vand.u32 %v954, 4294901760
      %v3714 = vsub.f32 %v954, %v3713
      %v3715 = vand.u32 %v3714, 4294901760
      %3716 = vmatpush.msra.mxu0 %v3715
      %v3717 = vand.u32 %v953, 4294901760
      %v3718 = vsub.f32 %v953, %v3717
      %v3719 = vand.u32 %v3718, 4294901760
      %3720 = vmatpush.msra.mxu0 %v3719
      %v3721 = vand.u32 %v952, 4294901760
      %v3722 = vsub.f32 %v952, %v3721
      %v3723 = vand.u32 %v3722, 4294901760
      %3724 = vmatpush.msra.mxu0 %v3723
      %v3725 = vand.u32 %v951, 4294901760
      %v3726 = vsub.f32 %v951, %v3725
      %v3727 = vand.u32 %v3726, 4294901760
      %3728 = vmatpush.msra.mxu0 %v3727
      %v3729 = vand.u32 %v950, 4294901760
      %v3730 = vsub.f32 %v950, %v3729
      %v3731 = vand.u32 %v3730, 4294901760
      %3732 = vmatpush.msra.mxu0 %v3731
      %v3733 = vand.u32 %v949, 4294901760
      %v3734 = vsub.f32 %v949, %v3733
      %v3735 = vand.u32 %v3734, 4294901760
      %3736 = vmatpush.msra.mxu0 %v3735
      %v3737 = vand.u32 %v3094, 4294901760
      %3738 = vmatmul.f32.gmra.mxu0 %v3737
      %v3739 = vpop.f32.mrf.mxu0
      %v3740 = vadd.f32 %v3671, %v3739
      %3741 = vdwg.mxu0
      %v3742 = vand.u32 %v964, 4294901760
      %3743 = vmatpush.msra.mxu0 %v3742
      %v3744 = vand.u32 %v963, 4294901760
      %3745 = vmatpush.msra.mxu0 %v3744
      %v3746 = vand.u32 %v962, 4294901760
      %3747 = vmatpush.msra.mxu0 %v3746
      %v3748 = vand.u32 %v961, 4294901760
      %3749 = vmatpush.msra.mxu0 %v3748
      %v3750 = vand.u32 %v960, 4294901760
      %3751 = vmatpush.msra.mxu0 %v3750
      %v3752 = vand.u32 %v959, 4294901760
      %3753 = vmatpush.msra.mxu0 %v3752
      %v3754 = vand.u32 %v958, 4294901760
      %3755 = vmatpush.msra.mxu0 %v3754
      %v3756 = vand.u32 %v957, 4294901760
      %3757 = vmatpush.msra.mxu0 %v3756
      %v3758 = vand.u32 %v956, 4294901760
      %3759 = vmatpush.msra.mxu0 %v3758
      %v3760 = vand.u32 %v955, 4294901760
      %3761 = vmatpush.msra.mxu0 %v3760
      %v3762 = vand.u32 %v954, 4294901760
      %3763 = vmatpush.msra.mxu0 %v3762
      %v3764 = vand.u32 %v953, 4294901760
      %3765 = vmatpush.msra.mxu0 %v3764
      %v3766 = vand.u32 %v952, 4294901760
      %3767 = vmatpush.msra.mxu0 %v3766
      %v3768 = vand.u32 %v951, 4294901760
      %3769 = vmatpush.msra.mxu0 %v3768
      %v3770 = vand.u32 %v950, 4294901760
      %3771 = vmatpush.msra.mxu0 %v3770
      %v3772 = vand.u32 %v949, 4294901760
      %3773 = vmatpush.msra.mxu0 %v3772
      %v3774 = vand.u32 %v3094, 4294901760
      %3775 = vmatmul.f32.gmra.mxu0 %v3774
      %v3776 = vpop.f32.mrf.mxu0
      %v3777 = vadd.f32 %v3740, %v3776
      %3778 = vdwg.mxu0
      %v3779 = vadd.f32 %v3090, %v3777
      %3780 = vst.msk [vmem:[%s882] sm:$0xf] %vm1656, %v3779
      %v3781 = vld [vmem:[%s906] sm:$0xf]
      %v3782 = vmul.f32 %v3089, %v3089
      %3784 = vst [vmem:[#allocation1] ss:$2 sm:$0xff] %v3782
      %v3785 = vld.sshfl [vmem:[#allocation1] sm:$0xff pattern:$0x75316420]
      %v3786 = vld.sshfl [vmem:[#allocation1 + $0x8] sm:$0xff pattern:$0x75316420]
      %v3789 = vsel %vm1666, %v3785, 0.0
      %v3790 = vsel %vm1666, %v3786, 0.0
      %v3791 = vadd.f32 %v3789, %v3790
      %3792 = vadd.xlane.f32.xlu0 %v3791
      %v3793 = vpop.xlane.xlu0 %3792
      %v3794 = vadd.f32 %v3781, %v3793
      %3795 = vst.msk [vmem:[%s906] sm:$0xf] %vm1673, %v3794
      %v3796 = vld [vmem:[%s855] sm:$0xff]
      %v3797 = vld [vmem:[%s886] sm:$0xf]
      %3799 = vst [vmem:[#allocation1] ss:$2 sm:$0xff] %v3796
      %v3800 = vld.sshfl [vmem:[#allocation1] sm:$0xff pattern:$0x75316420]
      %v3801 = vld.sshfl [vmem:[#allocation1 + $0x8] sm:$0xff pattern:$0x75316420]
      %v3804 = vand.u32 %v948, 4294901760
      %3805 = vmatpush.msra.mxu0 %v3804
      %v3806 = vand.u32 %v947, 4294901760
      %3807 = vmatpush.msra.mxu0 %v3806
      %v3808 = vand.u32 %v946, 4294901760
      %3809 = vmatpush.msra.mxu0 %v3808
      %v3810 = vand.u32 %v945, 4294901760
      %3811 = vmatpush.msra.mxu0 %v3810
      %v3812 = vand.u32 %v944, 4294901760
      %3813 = vmatpush.msra.mxu0 %v3812
      %v3814 = vand.u32 %v943, 4294901760
      %3815 = vmatpush.msra.mxu0 %v3814
      %v3816 = vand.u32 %v942, 4294901760
      %3817 = vmatpush.msra.mxu0 %v3816
      %v3818 = vand.u32 %v941, 4294901760
      %3819 = vmatpush.msra.mxu0 %v3818
      %v3820 = vand.u32 %v940, 4294901760
      %3821 = vmatpush.msra.mxu0 %v3820
      %v3822 = vand.u32 %v939, 4294901760
      %3823 = vmatpush.msra.mxu0 %v3822
      %v3824 = vand.u32 %v938, 4294901760
      %3825 = vmatpush.msra.mxu0 %v3824
      %v3826 = vand.u32 %v937, 4294901760
      %3827 = vmatpush.msra.mxu0 %v3826
      %v3828 = vand.u32 %v936, 4294901760
      %3829 = vmatpush.msra.mxu0 %v3828
      %v3830 = vand.u32 %v935, 4294901760
      %3831 = vmatpush.msra.mxu0 %v3830
      %v3832 = vand.u32 %v934, 4294901760
      %3833 = vmatpush.msra.mxu0 %v3832
      %v3834 = vand.u32 %v933, 4294901760
      %3835 = vmatpush.msra.mxu0 %v3834
      %v3836 = vand.u32 %v3800, 4294901760
      %v3837 = vsub.f32 %v3800, %v3836
      %v3838 = vand.u32 %v3837, 4294901760
      %v3839 = vsub.f32 %v3837, %v3838
      %v3840 = vand.u32 %v3839, 4294901760
      %3841 = vmatmul.f32.gmra.mxu0 %v3840
      %v3842 = vpop.f32.mrf.mxu0
      %v3843 = vadd.f32 0.0, %v3842
      %3844 = vdwg.mxu0
      %v3845 = vand.u32 %v948, 4294901760
      %v3846 = vsub.f32 %v948, %v3845
      %v3847 = vand.u32 %v3846, 4294901760
      %v3848 = vsub.f32 %v3846, %v3847
      %v3849 = vand.u32 %v3848, 4294901760
      %3850 = vmatpush.msra.mxu0 %v3849
      %v3851 = vand.u32 %v947, 4294901760
      %v3852 = vsub.f32 %v947, %v3851
      %v3853 = vand.u32 %v3852, 4294901760
      %v3854 = vsub.f32 %v3852, %v3853
      %v3855 = vand.u32 %v3854, 4294901760
      %3856 = vmatpush.msra.mxu0 %v3855
      %v3857 = vand.u32 %v946, 4294901760
      %v3858 = vsub.f32 %v946, %v3857
      %v3859 = vand.u32 %v3858, 4294901760
      %v3860 = vsub.f32 %v3858, %v3859
      %v3861 = vand.u32 %v3860, 4294901760
      %3862 = vmatpush.msra.mxu0 %v3861
      %v3863 = vand.u32 %v945, 4294901760
      %v3864 = vsub.f32 %v945, %v3863
      %v3865 = vand.u32 %v3864, 4294901760
      %v3866 = vsub.f32 %v3864, %v3865
      %v3867 = vand.u32 %v3866, 4294901760
      %3868 = vmatpush.msra.mxu0 %v3867
      %v3869 = vand.u32 %v944, 4294901760
      %v3870 = vsub.f32 %v944, %v3869
      %v3871 = vand.u32 %v3870, 4294901760
      %v3872 = vsub.f32 %v3870, %v3871
      %v3873 = vand.u32 %v3872, 4294901760
      %3874 = vmatpush.msra.mxu0 %v3873
      %v3875 = vand.u32 %v943, 4294901760
      %v3876 = vsub.f32 %v943, %v3875
      %v3877 = vand.u32 %v3876, 4294901760
      %v3878 = vsub.f32 %v3876, %v3877
      %v3879 = vand.u32 %v3878, 4294901760
      %3880 = vmatpush.msra.mxu0 %v3879
      %v3881 = vand.u32 %v942, 4294901760
      %v3882 = vsub.f32 %v942, %v3881
      %v3883 = vand.u32 %v3882, 4294901760
      %v3884 = vsub.f32 %v3882, %v3883
      %v3885 = vand.u32 %v3884, 4294901760
      %3886 = vmatpush.msra.mxu0 %v3885
      %v3887 = vand.u32 %v941, 4294901760
      %v3888 = vsub.f32 %v941, %v3887
      %v3889 = vand.u32 %v3888, 4294901760
      %v3890 = vsub.f32 %v3888, %v3889
      %v3891 = vand.u32 %v3890, 4294901760
      %3892 = vmatpush.msra.mxu0 %v3891
      %v3893 = vand.u32 %v940, 4294901760
      %v3894 = vsub.f32 %v940, %v3893
      %v3895 = vand.u32 %v3894, 4294901760
      %v3896 = vsub.f32 %v3894, %v3895
      %v3897 = vand.u32 %v3896, 4294901760
      %3898 = vmatpush.msra.mxu0 %v3897
      %v3899 = vand.u32 %v939, 4294901760
      %v3900 = vsub.f32 %v939, %v3899
      %v3901 = vand.u32 %v3900, 4294901760
      %v3902 = vsub.f32 %v3900, %v3901
      %v3903 = vand.u32 %v3902, 4294901760
      %3904 = vmatpush.msra.mxu0 %v3903
      %v3905 = vand.u32 %v938, 4294901760
      %v3906 = vsub.f32 %v938, %v3905
      %v3907 = vand.u32 %v3906, 4294901760
      %v3908 = vsub.f32 %v3906, %v3907
      %v3909 = vand.u32 %v3908, 4294901760
      %3910 = vmatpush.msra.mxu0 %v3909
      %v3911 = vand.u32 %v937, 4294901760
      %v3912 = vsub.f32 %v937, %v3911
      %v3913 = vand.u32 %v3912, 4294901760
      %v3914 = vsub.f32 %v3912, %v3913
      %v3915 = vand.u32 %v3914, 4294901760
      %3916 = vmatpush.msra.mxu0 %v3915
      %v3917 = vand.u32 %v936, 4294901760
      %v3918 = vsub.f32 %v936, %v3917
      %v3919 = vand.u32 %v3918, 4294901760
      %v3920 = vsub.f32 %v3918, %v3919
      %v3921 = vand.u32 %v3920, 4294901760
      %3922 = vmatpush.msra.mxu0 %v3921
      %v3923 = vand.u32 %v935, 4294901760
      %v3924 = vsub.f32 %v935, %v3923
      %v3925 = vand.u32 %v3924, 4294901760
      %v3926 = vsub.f32 %v3924, %v3925
      %v3927 = vand.u32 %v3926, 4294901760
      %3928 = vmatpush.msra.mxu0 %v3927
      %v3929 = vand.u32 %v934, 4294901760
      %v3930 = vsub.f32 %v934, %v3929
      %v3931 = vand.u32 %v3930, 4294901760
      %v3932 = vsub.f32 %v3930, %v3931
      %v3933 = vand.u32 %v3932, 4294901760
      %3934 = vmatpush.msra.mxu0 %v3933
      %v3935 = vand.u32 %v933, 4294901760
      %v3936 = vsub.f32 %v933, %v3935
      %v3937 = vand.u32 %v3936, 4294901760
      %v3938 = vsub.f32 %v3936, %v3937
      %v3939 = vand.u32 %v3938, 4294901760
      %3940 = vmatpush.msra.mxu0 %v3939
      %v3941 = vand.u32 %v3800, 4294901760
      %3942 = vmatmul.f32.gmra.mxu0 %v3941
      %v3943 = vpop.f32.mrf.mxu0
      %v3944 = vadd.f32 %v3843, %v3943
      %3945 = vdwg.mxu0
      %v3946 = vand.u32 %v948, 4294901760
      %v3947 = vsub.f32 %v948, %v3946
      %3948 = vmatpush.msra.mxu0 %v3947
      %v3949 = vand.u32 %v947, 4294901760
      %v3950 = vsub.f32 %v947, %v3949
      %3951 = vmatpush.msra.mxu0 %v3950
      %v3952 = vand.u32 %v946, 4294901760
      %v3953 = vsub.f32 %v946, %v3952
      %3954 = vmatpush.msra.mxu0 %v3953
      %v3955 = vand.u32 %v945, 4294901760
      %v3956 = vsub.f32 %v945, %v3955
      %3957 = vmatpush.msra.mxu0 %v3956
      %v3958 = vand.u32 %v944, 4294901760
      %v3959 = vsub.f32 %v944, %v3958
      %3960 = vmatpush.msra.mxu0 %v3959
      %v3961 = vand.u32 %v943, 4294901760
      %v3962 = vsub.f32 %v943, %v3961
      %3963 = vmatpush.msra.mxu0 %v3962
      %v3964 = vand.u32 %v942, 4294901760
      %v3965 = vsub.f32 %v942, %v3964
      %3966 = vmatpush.msra.mxu0 %v3965
      %v3967 = vand.u32 %v941, 4294901760
      %v3968 = vsub.f32 %v941, %v3967
      %3969 = vmatpush.msra.mxu0 %v3968
      %v3970 = vand.u32 %v940, 4294901760
      %v3971 = vsub.f32 %v940, %v3970
      %3972 = vmatpush.msra.mxu0 %v3971
      %v3973 = vand.u32 %v939, 4294901760
      %v3974 = vsub.f32 %v939, %v3973
      %3975 = vmatpush.msra.mxu0 %v3974
      %v3976 = vand.u32 %v938, 4294901760
      %v3977 = vsub.f32 %v938, %v3976
      %3978 = vmatpush.msra.mxu0 %v3977
      %v3979 = vand.u32 %v937, 4294901760
      %v3980 = vsub.f32 %v937, %v3979
      %3981 = vmatpush.msra.mxu0 %v3980
      %v3982 = vand.u32 %v936, 4294901760
      %v3983 = vsub.f32 %v936, %v3982
      %3984 = vmatpush.msra.mxu0 %v3983
      %v3985 = vand.u32 %v935, 4294901760
      %v3986 = vsub.f32 %v935, %v3985
      %3987 = vmatpush.msra.mxu0 %v3986
      %v3988 = vand.u32 %v934, 4294901760
      %v3989 = vsub.f32 %v934, %v3988
      %3990 = vmatpush.msra.mxu0 %v3989
      %v3991 = vand.u32 %v933, 4294901760
      %v3992 = vsub.f32 %v933, %v3991
      %3993 = vmatpush.msra.mxu0 %v3992
      %v3994 = vand.u32 %v3800, 4294901760
      %v3995 = vsub.f32 %v3800, %v3994
      %3996 = vmatmul.f32.gmra.mxu0 %v3995
      %v3997 = vpop.f32.mrf.mxu0
      %v3998 = vadd.f32 %v3944, %v3997
      %3999 = vdwg.mxu0
      %v4000 = vand.u32 %v948, 4294901760
      %4001 = vmatpush.msra.mxu0 %v4000
      %v4002 = vand.u32 %v947, 4294901760
      %4003 = vmatpush.msra.mxu0 %v4002
      %v4004 = vand.u32 %v946, 4294901760
      %4005 = vmatpush.msra.mxu0 %v4004
      %v4006 = vand.u32 %v945, 4294901760
      %4007 = vmatpush.msra.mxu0 %v4006
      %v4008 = vand.u32 %v944, 4294901760
      %4009 = vmatpush.msra.mxu0 %v4008
      %v4010 = vand.u32 %v943, 4294901760
      %4011 = vmatpush.msra.mxu0 %v4010
      %v4012 = vand.u32 %v942, 4294901760
      %4013 = vmatpush.msra.mxu0 %v4012
      %v4014 = vand.u32 %v941, 4294901760
      %4015 = vmatpush.msra.mxu0 %v4014
      %v4016 = vand.u32 %v940, 4294901760
      %4017 = vmatpush.msra.mxu0 %v4016
      %v4018 = vand.u32 %v939, 4294901760
      %4019 = vmatpush.msra.mxu0 %v4018
      %v4020 = vand.u32 %v938, 4294901760
      %4021 = vmatpush.msra.mxu0 %v4020
      %v4022 = vand.u32 %v937, 4294901760
      %4023 = vmatpush.msra.mxu0 %v4022
      %v4024 = vand.u32 %v936, 4294901760
      %4025 = vmatpush.msra.mxu0 %v4024
      %v4026 = vand.u32 %v935, 4294901760
      %4027 = vmatpush.msra.mxu0 %v4026
      %v4028 = vand.u32 %v934, 4294901760
      %4029 = vmatpush.msra.mxu0 %v4028
      %v4030 = vand.u32 %v933, 4294901760
      %4031 = vmatpush.msra.mxu0 %v4030
      %v4032 = vand.u32 %v3800, 4294901760
      %v4033 = vsub.f32 %v3800, %v4032
      %v4034 = vand.u32 %v4033, 4294901760
      %4035 = vmatmul.f32.gmra.mxu0 %v4034
      %v4036 = vpop.f32.mrf.mxu0
      %v4037 = vadd.f32 %v3998, %v4036
      %4038 = vdwg.mxu0
      %v4039 = vand.u32 %v948, 4294901760
      %v4040 = vsub.f32 %v948, %v4039
      %v4041 = vand.u32 %v4040, 4294901760
      %4042 = vmatpush.msra.mxu0 %v4041
      %v4043 = vand.u32 %v947, 4294901760
      %v4044 = vsub.f32 %v947, %v4043
      %v4045 = vand.u32 %v4044, 4294901760
      %4046 = vmatpush.msra.mxu0 %v4045
      %v4047 = vand.u32 %v946, 4294901760
      %v4048 = vsub.f32 %v946, %v4047
      %v4049 = vand.u32 %v4048, 4294901760
      %4050 = vmatpush.msra.mxu0 %v4049
      %v4051 = vand.u32 %v945, 4294901760
      %v4052 = vsub.f32 %v945, %v4051
      %v4053 = vand.u32 %v4052, 4294901760
      %4054 = vmatpush.msra.mxu0 %v4053
      %v4055 = vand.u32 %v944, 4294901760
      %v4056 = vsub.f32 %v944, %v4055
      %v4057 = vand.u32 %v4056, 4294901760
      %4058 = vmatpush.msra.mxu0 %v4057
      %v4059 = vand.u32 %v943, 4294901760
      %v4060 = vsub.f32 %v943, %v4059
      %v4061 = vand.u32 %v4060, 4294901760
      %4062 = vmatpush.msra.mxu0 %v4061
      %v4063 = vand.u32 %v942, 4294901760
      %v4064 = vsub.f32 %v942, %v4063
      %v4065 = vand.u32 %v4064, 4294901760
      %4066 = vmatpush.msra.mxu0 %v4065
      %v4067 = vand.u32 %v941, 4294901760
      %v4068 = vsub.f32 %v941, %v4067
      %v4069 = vand.u32 %v4068, 4294901760
      %4070 = vmatpush.msra.mxu0 %v4069
      %v4071 = vand.u32 %v940, 4294901760
      %v4072 = vsub.f32 %v940, %v4071
      %v4073 = vand.u32 %v4072, 4294901760
      %4074 = vmatpush.msra.mxu0 %v4073
      %v4075 = vand.u32 %v939, 4294901760
      %v4076 = vsub.f32 %v939, %v4075
      %v4077 = vand.u32 %v4076, 4294901760
      %4078 = vmatpush.msra.mxu0 %v4077
      %v4079 = vand.u32 %v938, 4294901760
      %v4080 = vsub.f32 %v938, %v4079
      %v4081 = vand.u32 %v4080, 4294901760
      %4082 = vmatpush.msra.mxu0 %v4081
      %v4083 = vand.u32 %v937, 4294901760
      %v4084 = vsub.f32 %v937, %v4083
      %v4085 = vand.u32 %v4084, 4294901760
      %4086 = vmatpush.msra.mxu0 %v4085
      %v4087 = vand.u32 %v936, 4294901760
      %v4088 = vsub.f32 %v936, %v4087
      %v4089 = vand.u32 %v4088, 4294901760
      %4090 = vmatpush.msra.mxu0 %v4089
      %v4091 = vand.u32 %v935, 4294901760
      %v4092 = vsub.f32 %v935, %v4091
      %v4093 = vand.u32 %v4092, 4294901760
      %4094 = vmatpush.msra.mxu0 %v4093
      %v4095 = vand.u32 %v934, 4294901760
      %v4096 = vsub.f32 %v934, %v4095
      %v4097 = vand.u32 %v4096, 4294901760
      %4098 = vmatpush.msra.mxu0 %v4097
      %v4099 = vand.u32 %v933, 4294901760
      %v4100 = vsub.f32 %v933, %v4099
      %v4101 = vand.u32 %v4100, 4294901760
      %4102 = vmatpush.msra.mxu0 %v4101
      %v4103 = vand.u32 %v3800, 4294901760
      %4104 = vmatmul.f32.gmra.mxu0 %v4103
      %v4105 = vpop.f32.mrf.mxu0
      %v4106 = vadd.f32 %v4037, %v4105
      %4107 = vdwg.mxu0
      %v4108 = vand.u32 %v948, 4294901760
      %4109 = vmatpush.msra.mxu0 %v4108
      %v4110 = vand.u32 %v947, 4294901760
      %4111 = vmatpush.msra.mxu0 %v4110
      %v4112 = vand.u32 %v946, 4294901760
      %4113 = vmatpush.msra.mxu0 %v4112
      %v4114 = vand.u32 %v945, 4294901760
      %4115 = vmatpush.msra.mxu0 %v4114
      %v4116 = vand.u32 %v944, 4294901760
      %4117 = vmatpush.msra.mxu0 %v4116
      %v4118 = vand.u32 %v943, 4294901760
      %4119 = vmatpush.msra.mxu0 %v4118
      %v4120 = vand.u32 %v942, 4294901760
      %4121 = vmatpush.msra.mxu0 %v4120
      %v4122 = vand.u32 %v941, 4294901760
      %4123 = vmatpush.msra.mxu0 %v4122
      %v4124 = vand.u32 %v940, 4294901760
      %4125 = vmatpush.msra.mxu0 %v4124
      %v4126 = vand.u32 %v939, 4294901760
      %4127 = vmatpush.msra.mxu0 %v4126
      %v4128 = vand.u32 %v938, 4294901760
      %4129 = vmatpush.msra.mxu0 %v4128
      %v4130 = vand.u32 %v937, 4294901760
      %4131 = vmatpush.msra.mxu0 %v4130
      %v4132 = vand.u32 %v936, 4294901760
      %4133 = vmatpush.msra.mxu0 %v4132
      %v4134 = vand.u32 %v935, 4294901760
      %4135 = vmatpush.msra.mxu0 %v4134
      %v4136 = vand.u32 %v934, 4294901760
      %4137 = vmatpush.msra.mxu0 %v4136
      %v4138 = vand.u32 %v933, 4294901760
      %4139 = vmatpush.msra.mxu0 %v4138
      %v4140 = vand.u32 %v3800, 4294901760
      %4141 = vmatmul.f32.gmra.mxu0 %v4140
      %v4142 = vpop.f32.mrf.mxu0
      %v4143 = vadd.f32 %v4106, %v4142
      %4144 = vdwg.mxu0
      %v4145 = vand.u32 %v964, 4294901760
      %4146 = vmatpush.msra.mxu0 %v4145
      %v4147 = vand.u32 %v963, 4294901760
      %4148 = vmatpush.msra.mxu0 %v4147
      %v4149 = vand.u32 %v962, 4294901760
      %4150 = vmatpush.msra.mxu0 %v4149
      %v4151 = vand.u32 %v961, 4294901760
      %4152 = vmatpush.msra.mxu0 %v4151
      %v4153 = vand.u32 %v960, 4294901760
      %4154 = vmatpush.msra.mxu0 %v4153
      %v4155 = vand.u32 %v959, 4294901760
      %4156 = vmatpush.msra.mxu0 %v4155
      %v4157 = vand.u32 %v958, 4294901760
      %4158 = vmatpush.msra.mxu0 %v4157
      %v4159 = vand.u32 %v957, 4294901760
      %4160 = vmatpush.msra.mxu0 %v4159
      %v4161 = vand.u32 %v956, 4294901760
      %4162 = vmatpush.msra.mxu0 %v4161
      %v4163 = vand.u32 %v955, 4294901760
      %4164 = vmatpush.msra.mxu0 %v4163
      %v4165 = vand.u32 %v954, 4294901760
      %4166 = vmatpush.msra.mxu0 %v4165
      %v4167 = vand.u32 %v953, 4294901760
      %4168 = vmatpush.msra.mxu0 %v4167
      %v4169 = vand.u32 %v952, 4294901760
      %4170 = vmatpush.msra.mxu0 %v4169
      %v4171 = vand.u32 %v951, 4294901760
      %4172 = vmatpush.msra.mxu0 %v4171
      %v4173 = vand.u32 %v950, 4294901760
      %4174 = vmatpush.msra.mxu0 %v4173
      %v4175 = vand.u32 %v949, 4294901760
      %4176 = vmatpush.msra.mxu0 %v4175
      %v4177 = vand.u32 %v3801, 4294901760
      %v4178 = vsub.f32 %v3801, %v4177
      %v4179 = vand.u32 %v4178, 4294901760
      %v4180 = vsub.f32 %v4178, %v4179
      %v4181 = vand.u32 %v4180, 4294901760
      %4182 = vmatmul.f32.gmra.mxu0 %v4181
      %v4183 = vpop.f32.mrf.mxu0
      %v4184 = vadd.f32 %v4143, %v4183
      %4185 = vdwg.mxu0
      %v4186 = vand.u32 %v964, 4294901760
      %v4187 = vsub.f32 %v964, %v4186
      %v4188 = vand.u32 %v4187, 4294901760
      %v4189 = vsub.f32 %v4187, %v4188
      %v4190 = vand.u32 %v4189, 4294901760
      %4191 = vmatpush.msra.mxu0 %v4190
      %v4192 = vand.u32 %v963, 4294901760
      %v4193 = vsub.f32 %v963, %v4192
      %v4194 = vand.u32 %v4193, 4294901760
      %v4195 = vsub.f32 %v4193, %v4194
      %v4196 = vand.u32 %v4195, 4294901760
      %4197 = vmatpush.msra.mxu0 %v4196
      %v4198 = vand.u32 %v962, 4294901760
      %v4199 = vsub.f32 %v962, %v4198
      %v4200 = vand.u32 %v4199, 4294901760
      %v4201 = vsub.f32 %v4199, %v4200
      %v4202 = vand.u32 %v4201, 4294901760
      %4203 = vmatpush.msra.mxu0 %v4202
      %v4204 = vand.u32 %v961, 4294901760
      %v4205 = vsub.f32 %v961, %v4204
      %v4206 = vand.u32 %v4205, 4294901760
      %v4207 = vsub.f32 %v4205, %v4206
      %v4208 = vand.u32 %v4207, 4294901760
      %4209 = vmatpush.msra.mxu0 %v4208
      %v4210 = vand.u32 %v960, 4294901760
      %v4211 = vsub.f32 %v960, %v4210
      %v4212 = vand.u32 %v4211, 4294901760
      %v4213 = vsub.f32 %v4211, %v4212
      %v4214 = vand.u32 %v4213, 4294901760
      %4215 = vmatpush.msra.mxu0 %v4214
      %v4216 = vand.u32 %v959, 4294901760
      %v4217 = vsub.f32 %v959, %v4216
      %v4218 = vand.u32 %v4217, 4294901760
      %v4219 = vsub.f32 %v4217, %v4218
      %v4220 = vand.u32 %v4219, 4294901760
      %4221 = vmatpush.msra.mxu0 %v4220
      %v4222 = vand.u32 %v958, 4294901760
      %v4223 = vsub.f32 %v958, %v4222
      %v4224 = vand.u32 %v4223, 4294901760
      %v4225 = vsub.f32 %v4223, %v4224
      %v4226 = vand.u32 %v4225, 4294901760
      %4227 = vmatpush.msra.mxu0 %v4226
      %v4228 = vand.u32 %v957, 4294901760
      %v4229 = vsub.f32 %v957, %v4228
      %v4230 = vand.u32 %v4229, 4294901760
      %v4231 = vsub.f32 %v4229, %v4230
      %v4232 = vand.u32 %v4231, 4294901760
      %4233 = vmatpush.msra.mxu0 %v4232
      %v4234 = vand.u32 %v956, 4294901760
      %v4235 = vsub.f32 %v956, %v4234
      %v4236 = vand.u32 %v4235, 4294901760
      %v4237 = vsub.f32 %v4235, %v4236
      %v4238 = vand.u32 %v4237, 4294901760
      %4239 = vmatpush.msra.mxu0 %v4238
      %v4240 = vand.u32 %v955, 4294901760
      %v4241 = vsub.f32 %v955, %v4240
      %v4242 = vand.u32 %v4241, 4294901760
      %v4243 = vsub.f32 %v4241, %v4242
      %v4244 = vand.u32 %v4243, 4294901760
      %4245 = vmatpush.msra.mxu0 %v4244
      %v4246 = vand.u32 %v954, 4294901760
      %v4247 = vsub.f32 %v954, %v4246
      %v4248 = vand.u32 %v4247, 4294901760
      %v4249 = vsub.f32 %v4247, %v4248
      %v4250 = vand.u32 %v4249, 4294901760
      %4251 = vmatpush.msra.mxu0 %v4250
      %v4252 = vand.u32 %v953, 4294901760
      %v4253 = vsub.f32 %v953, %v4252
      %v4254 = vand.u32 %v4253, 4294901760
      %v4255 = vsub.f32 %v4253, %v4254
      %v4256 = vand.u32 %v4255, 4294901760
      %4257 = vmatpush.msra.mxu0 %v4256
      %v4258 = vand.u32 %v952, 4294901760
      %v4259 = vsub.f32 %v952, %v4258
      %v4260 = vand.u32 %v4259, 4294901760
      %v4261 = vsub.f32 %v4259, %v4260
      %v4262 = vand.u32 %v4261, 4294901760
      %4263 = vmatpush.msra.mxu0 %v4262
      %v4264 = vand.u32 %v951, 4294901760
      %v4265 = vsub.f32 %v951, %v4264
      %v4266 = vand.u32 %v4265, 4294901760
      %v4267 = vsub.f32 %v4265, %v4266
      %v4268 = vand.u32 %v4267, 4294901760
      %4269 = vmatpush.msra.mxu0 %v4268
      %v4270 = vand.u32 %v950, 4294901760
      %v4271 = vsub.f32 %v950, %v4270
      %v4272 = vand.u32 %v4271, 4294901760
      %v4273 = vsub.f32 %v4271, %v4272
      %v4274 = vand.u32 %v4273, 4294901760
      %4275 = vmatpush.msra.mxu0 %v4274
      %v4276 = vand.u32 %v949, 4294901760
      %v4277 = vsub.f32 %v949, %v4276
      %v4278 = vand.u32 %v4277, 4294901760
      %v4279 = vsub.f32 %v4277, %v4278
      %v4280 = vand.u32 %v4279, 4294901760
      %4281 = vmatpush.msra.mxu0 %v4280
      %v4282 = vand.u32 %v3801, 4294901760
      %4283 = vmatmul.f32.gmra.mxu0 %v4282
      %v4284 = vpop.f32.mrf.mxu0
      %v4285 = vadd.f32 %v4184, %v4284
      %4286 = vdwg.mxu0
      %v4287 = vand.u32 %v964, 4294901760
      %v4288 = vsub.f32 %v964, %v4287
      %4289 = vmatpush.msra.mxu0 %v4288
      %v4290 = vand.u32 %v963, 4294901760
      %v4291 = vsub.f32 %v963, %v4290
      %4292 = vmatpush.msra.mxu0 %v4291
      %v4293 = vand.u32 %v962, 4294901760
      %v4294 = vsub.f32 %v962, %v4293
      %4295 = vmatpush.msra.mxu0 %v4294
      %v4296 = vand.u32 %v961, 4294901760
      %v4297 = vsub.f32 %v961, %v4296
      %4298 = vmatpush.msra.mxu0 %v4297
      %v4299 = vand.u32 %v960, 4294901760
      %v4300 = vsub.f32 %v960, %v4299
      %4301 = vmatpush.msra.mxu0 %v4300
      %v4302 = vand.u32 %v959, 4294901760
      %v4303 = vsub.f32 %v959, %v4302
      %4304 = vmatpush.msra.mxu0 %v4303
      %v4305 = vand.u32 %v958, 4294901760
      %v4306 = vsub.f32 %v958, %v4305
      %4307 = vmatpush.msra.mxu0 %v4306
      %v4308 = vand.u32 %v957, 4294901760
      %v4309 = vsub.f32 %v957, %v4308
      %4310 = vmatpush.msra.mxu0 %v4309
      %v4311 = vand.u32 %v956, 4294901760
      %v4312 = vsub.f32 %v956, %v4311
      %4313 = vmatpush.msra.mxu0 %v4312
      %v4314 = vand.u32 %v955, 4294901760
      %v4315 = vsub.f32 %v955, %v4314
      %4316 = vmatpush.msra.mxu0 %v4315
      %v4317 = vand.u32 %v954, 4294901760
      %v4318 = vsub.f32 %v954, %v4317
      %4319 = vmatpush.msra.mxu0 %v4318
      %v4320 = vand.u32 %v953, 4294901760
      %v4321 = vsub.f32 %v953, %v4320
      %4322 = vmatpush.msra.mxu0 %v4321
      %v4323 = vand.u32 %v952, 4294901760
      %v4324 = vsub.f32 %v952, %v4323
      %4325 = vmatpush.msra.mxu0 %v4324
      %v4326 = vand.u32 %v951, 4294901760
      %v4327 = vsub.f32 %v951, %v4326
      %4328 = vmatpush.msra.mxu0 %v4327
      %v4329 = vand.u32 %v950, 4294901760
      %v4330 = vsub.f32 %v950, %v4329
      %4331 = vmatpush.msra.mxu0 %v4330
      %v4332 = vand.u32 %v949, 4294901760
      %v4333 = vsub.f32 %v949, %v4332
      %4334 = vmatpush.msra.mxu0 %v4333
      %v4335 = vand.u32 %v3801, 4294901760
      %v4336 = vsub.f32 %v3801, %v4335
      %4337 = vmatmul.f32.gmra.mxu0 %v4336
      %v4338 = vpop.f32.mrf.mxu0
      %v4339 = vadd.f32 %v4285, %v4338
      %4340 = vdwg.mxu0
      %v4341 = vand.u32 %v964, 4294901760
      %4342 = vmatpush.msra.mxu0 %v4341
      %v4343 = vand.u32 %v963, 4294901760
      %4344 = vmatpush.msra.mxu0 %v4343
      %v4345 = vand.u32 %v962, 4294901760
      %4346 = vmatpush.msra.mxu0 %v4345
      %v4347 = vand.u32 %v961, 4294901760
      %4348 = vmatpush.msra.mxu0 %v4347
      %v4349 = vand.u32 %v960, 4294901760
      %4350 = vmatpush.msra.mxu0 %v4349
      %v4351 = vand.u32 %v959, 4294901760
      %4352 = vmatpush.msra.mxu0 %v4351
      %v4353 = vand.u32 %v958, 4294901760
      %4354 = vmatpush.msra.mxu0 %v4353
      %v4355 = vand.u32 %v957, 4294901760
      %4356 = vmatpush.msra.mxu0 %v4355
      %v4357 = vand.u32 %v956, 4294901760
      %4358 = vmatpush.msra.mxu0 %v4357
      %v4359 = vand.u32 %v955, 4294901760
      %4360 = vmatpush.msra.mxu0 %v4359
      %v4361 = vand.u32 %v954, 4294901760
      %4362 = vmatpush.msra.mxu0 %v4361
      %v4363 = vand.u32 %v953, 4294901760
      %4364 = vmatpush.msra.mxu0 %v4363
      %v4365 = vand.u32 %v952, 4294901760
      %4366 = vmatpush.msra.mxu0 %v4365
      %v4367 = vand.u32 %v951, 4294901760
      %4368 = vmatpush.msra.mxu0 %v4367
      %v4369 = vand.u32 %v950, 4294901760
      %4370 = vmatpush.msra.mxu0 %v4369
      %v4371 = vand.u32 %v949, 4294901760
      %4372 = vmatpush.msra.mxu0 %v4371
      %v4373 = vand.u32 %v3801, 4294901760
      %v4374 = vsub.f32 %v3801, %v4373
      %v4375 = vand.u32 %v4374, 4294901760
      %4376 = vmatmul.f32.gmra.mxu0 %v4375
      %v4377 = vpop.f32.mrf.mxu0
      %v4378 = vadd.f32 %v4339, %v4377
      %4379 = vdwg.mxu0
      %v4380 = vand.u32 %v964, 4294901760
      %v4381 = vsub.f32 %v964, %v4380
      %v4382 = vand.u32 %v4381, 4294901760
      %4383 = vmatpush.msra.mxu0 %v4382
      %v4384 = vand.u32 %v963, 4294901760
      %v4385 = vsub.f32 %v963, %v4384
      %v4386 = vand.u32 %v4385, 4294901760
      %4387 = vmatpush.msra.mxu0 %v4386
      %v4388 = vand.u32 %v962, 4294901760
      %v4389 = vsub.f32 %v962, %v4388
      %v4390 = vand.u32 %v4389, 4294901760
      %4391 = vmatpush.msra.mxu0 %v4390
      %v4392 = vand.u32 %v961, 4294901760
      %v4393 = vsub.f32 %v961, %v4392
      %v4394 = vand.u32 %v4393, 4294901760
      %4395 = vmatpush.msra.mxu0 %v4394
      %v4396 = vand.u32 %v960, 4294901760
      %v4397 = vsub.f32 %v960, %v4396
      %v4398 = vand.u32 %v4397, 4294901760
      %4399 = vmatpush.msra.mxu0 %v4398
      %v4400 = vand.u32 %v959, 4294901760
      %v4401 = vsub.f32 %v959, %v4400
      %v4402 = vand.u32 %v4401, 4294901760
      %4403 = vmatpush.msra.mxu0 %v4402
      %v4404 = vand.u32 %v958, 4294901760
      %v4405 = vsub.f32 %v958, %v4404
      %v4406 = vand.u32 %v4405, 4294901760
      %4407 = vmatpush.msra.mxu0 %v4406
      %v4408 = vand.u32 %v957, 4294901760
      %v4409 = vsub.f32 %v957, %v4408
      %v4410 = vand.u32 %v4409, 4294901760
      %4411 = vmatpush.msra.mxu0 %v4410
      %v4412 = vand.u32 %v956, 4294901760
      %v4413 = vsub.f32 %v956, %v4412
      %v4414 = vand.u32 %v4413, 4294901760
      %4415 = vmatpush.msra.mxu0 %v4414
      %v4416 = vand.u32 %v955, 4294901760
      %v4417 = vsub.f32 %v955, %v4416
      %v4418 = vand.u32 %v4417, 4294901760
      %4419 = vmatpush.msra.mxu0 %v4418
      %v4420 = vand.u32 %v954, 4294901760
      %v4421 = vsub.f32 %v954, %v4420
      %v4422 = vand.u32 %v4421, 4294901760
      %4423 = vmatpush.msra.mxu0 %v4422
      %v4424 = vand.u32 %v953, 4294901760
      %v4425 = vsub.f32 %v953, %v4424
      %v4426 = vand.u32 %v4425, 4294901760
      %4427 = vmatpush.msra.mxu0 %v4426
      %v4428 = vand.u32 %v952, 4294901760
      %v4429 = vsub.f32 %v952, %v4428
      %v4430 = vand.u32 %v4429, 4294901760
      %4431 = vmatpush.msra.mxu0 %v4430
      %v4432 = vand.u32 %v951, 4294901760
      %v4433 = vsub.f32 %v951, %v4432
      %v4434 = vand.u32 %v4433, 4294901760
      %4435 = vmatpush.msra.mxu0 %v4434
      %v4436 = vand.u32 %v950, 4294901760
      %v4437 = vsub.f32 %v950, %v4436
      %v4438 = vand.u32 %v4437, 4294901760
      %4439 = vmatpush.msra.mxu0 %v4438
      %v4440 = vand.u32 %v949, 4294901760
      %v4441 = vsub.f32 %v949, %v4440
      %v4442 = vand.u32 %v4441, 4294901760
      %4443 = vmatpush.msra.mxu0 %v4442
      %v4444 = vand.u32 %v3801, 4294901760
      %4445 = vmatmul.f32.gmra.mxu0 %v4444
      %v4446 = vpop.f32.mrf.mxu0
      %v4447 = vadd.f32 %v4378, %v4446
      %4448 = vdwg.mxu0
      %v4449 = vand.u32 %v964, 4294901760
      %4450 = vmatpush.msra.mxu0 %v4449
      %v4451 = vand.u32 %v963, 4294901760
      %4452 = vmatpush.msra.mxu0 %v4451
      %v4453 = vand.u32 %v962, 4294901760
      %4454 = vmatpush.msra.mxu0 %v4453
      %v4455 = vand.u32 %v961, 4294901760
      %4456 = vmatpush.msra.mxu0 %v4455
      %v4457 = vand.u32 %v960, 4294901760
      %4458 = vmatpush.msra.mxu0 %v4457
      %v4459 = vand.u32 %v959, 4294901760
      %4460 = vmatpush.msra.mxu0 %v4459
      %v4461 = vand.u32 %v958, 4294901760
      %4462 = vmatpush.msra.mxu0 %v4461
      %v4463 = vand.u32 %v957, 4294901760
      %4464 = vmatpush.msra.mxu0 %v4463
      %v4465 = vand.u32 %v956, 4294901760
      %4466 = vmatpush.msra.mxu0 %v4465
      %v4467 = vand.u32 %v955, 4294901760
      %4468 = vmatpush.msra.mxu0 %v4467
      %v4469 = vand.u32 %v954, 4294901760
      %4470 = vmatpush.msra.mxu0 %v4469
      %v4471 = vand.u32 %v953, 4294901760
      %4472 = vmatpush.msra.mxu0 %v4471
      %v4473 = vand.u32 %v952, 4294901760
      %4474 = vmatpush.msra.mxu0 %v4473
      %v4475 = vand.u32 %v951, 4294901760
      %4476 = vmatpush.msra.mxu0 %v4475
      %v4477 = vand.u32 %v950, 4294901760
      %4478 = vmatpush.msra.mxu0 %v4477
      %v4479 = vand.u32 %v949, 4294901760
      %4480 = vmatpush.msra.mxu0 %v4479
      %v4481 = vand.u32 %v3801, 4294901760
      %4482 = vmatmul.f32.gmra.mxu0 %v4481
      %v4483 = vpop.f32.mrf.mxu0
      %v4484 = vadd.f32 %v4447, %v4483
      %4485 = vdwg.mxu0
      %v4486 = vadd.f32 %v3797, %v4484
      %4487 = vst.msk [vmem:[%s886] sm:$0xf] %vm1656, %v4486
      %v4488 = vld [vmem:[%s910] sm:$0xf]
      %v4489 = vmul.f32 %v3796, %v3796
      %4491 = vst [vmem:[#allocation1] ss:$2 sm:$0xff] %v4489
      %v4492 = vld.sshfl [vmem:[#allocation1] sm:$0xff pattern:$0x75316420]
      %v4493 = vld.sshfl [vmem:[#allocation1 + $0x8] sm:$0xff pattern:$0x75316420]
      %v4496 = vsel %vm1666, %v4492, 0.0
      %v4497 = vsel %vm1666, %v4493, 0.0
      %v4498 = vadd.f32 %v4496, %v4497
      %4499 = vadd.xlane.f32.xlu0 %v4498
      %v4500 = vpop.xlane.xlu0 %4499
      %v4501 = vadd.f32 %v4488, %v4500
      %4502 = vst.msk [vmem:[%s910] sm:$0xf] %vm1673, %v4501
      %v4503 = vld [vmem:[%s865] sm:$0xff]
      %v4504 = vld [vmem:[%s890] sm:$0xf]
      %4506 = vst [vmem:[#allocation1] ss:$2 sm:$0xff] %v4503
      %v4507 = vld.sshfl [vmem:[#allocation1] sm:$0xff pattern:$0x75316420]
      %v4508 = vld.sshfl [vmem:[#allocation1 + $0x8] sm:$0xff pattern:$0x75316420]
      %v4511 = vand.u32 %v948, 4294901760
      %4512 = vmatpush.msra.mxu0 %v4511
      %v4513 = vand.u32 %v947, 4294901760
      %4514 = vmatpush.msra.mxu0 %v4513
      %v4515 = vand.u32 %v946, 4294901760
      %4516 = vmatpush.msra.mxu0 %v4515
      %v4517 = vand.u32 %v945, 4294901760
      %4518 = vmatpush.msra.mxu0 %v4517
      %v4519 = vand.u32 %v944, 4294901760
      %4520 = vmatpush.msra.mxu0 %v4519
      %v4521 = vand.u32 %v943, 4294901760
      %4522 = vmatpush.msra.mxu0 %v4521
      %v4523 = vand.u32 %v942, 4294901760
      %4524 = vmatpush.msra.mxu0 %v4523
      %v4525 = vand.u32 %v941, 4294901760
      %4526 = vmatpush.msra.mxu0 %v4525
      %v4527 = vand.u32 %v940, 4294901760
      %4528 = vmatpush.msra.mxu0 %v4527
      %v4529 = vand.u32 %v939, 4294901760
      %4530 = vmatpush.msra.mxu0 %v4529
      %v4531 = vand.u32 %v938, 4294901760
      %4532 = vmatpush.msra.mxu0 %v4531
      %v4533 = vand.u32 %v937, 4294901760
      %4534 = vmatpush.msra.mxu0 %v4533
      %v4535 = vand.u32 %v936, 4294901760
      %4536 = vmatpush.msra.mxu0 %v4535
      %v4537 = vand.u32 %v935, 4294901760
      %4538 = vmatpush.msra.mxu0 %v4537
      %v4539 = vand.u32 %v934, 4294901760
      %4540 = vmatpush.msra.mxu0 %v4539
      %v4541 = vand.u32 %v933, 4294901760
      %4542 = vmatpush.msra.mxu0 %v4541
      %v4543 = vand.u32 %v4507, 4294901760
      %v4544 = vsub.f32 %v4507, %v4543
      %v4545 = vand.u32 %v4544, 4294901760
      %v4546 = vsub.f32 %v4544, %v4545
      %v4547 = vand.u32 %v4546, 4294901760
      %4548 = vmatmul.f32.gmra.mxu0 %v4547
      %v4549 = vpop.f32.mrf.mxu0
      %v4550 = vadd.f32 0.0, %v4549
      %4551 = vdwg.mxu0
      %v4552 = vand.u32 %v948, 4294901760
      %v4553 = vsub.f32 %v948, %v4552
      %v4554 = vand.u32 %v4553, 4294901760
      %v4555 = vsub.f32 %v4553, %v4554
      %v4556 = vand.u32 %v4555, 4294901760
      %4557 = vmatpush.msra.mxu0 %v4556
      %v4558 = vand.u32 %v947, 4294901760
      %v4559 = vsub.f32 %v947, %v4558
      %v4560 = vand.u32 %v4559, 4294901760
      %v4561 = vsub.f32 %v4559, %v4560
      %v4562 = vand.u32 %v4561, 4294901760
      %4563 = vmatpush.msra.mxu0 %v4562
      %v4564 = vand.u32 %v946, 4294901760
      %v4565 = vsub.f32 %v946, %v4564
      %v4566 = vand.u32 %v4565, 4294901760
      %v4567 = vsub.f32 %v4565, %v4566
      %v4568 = vand.u32 %v4567, 4294901760
      %4569 = vmatpush.msra.mxu0 %v4568
      %v4570 = vand.u32 %v945, 4294901760
      %v4571 = vsub.f32 %v945, %v4570
      %v4572 = vand.u32 %v4571, 4294901760
      %v4573 = vsub.f32 %v4571, %v4572
      %v4574 = vand.u32 %v4573, 4294901760
      %4575 = vmatpush.msra.mxu0 %v4574
      %v4576 = vand.u32 %v944, 4294901760
      %v4577 = vsub.f32 %v944, %v4576
      %v4578 = vand.u32 %v4577, 4294901760
      %v4579 = vsub.f32 %v4577, %v4578
      %v4580 = vand.u32 %v4579, 4294901760
      %4581 = vmatpush.msra.mxu0 %v4580
      %v4582 = vand.u32 %v943, 4294901760
      %v4583 = vsub.f32 %v943, %v4582
      %v4584 = vand.u32 %v4583, 4294901760
      %v4585 = vsub.f32 %v4583, %v4584
      %v4586 = vand.u32 %v4585, 4294901760
      %4587 = vmatpush.msra.mxu0 %v4586
      %v4588 = vand.u32 %v942, 4294901760
      %v4589 = vsub.f32 %v942, %v4588
      %v4590 = vand.u32 %v4589, 4294901760
      %v4591 = vsub.f32 %v4589, %v4590
      %v4592 = vand.u32 %v4591, 4294901760
      %4593 = vmatpush.msra.mxu0 %v4592
      %v4594 = vand.u32 %v941, 4294901760
      %v4595 = vsub.f32 %v941, %v4594
      %v4596 = vand.u32 %v4595, 4294901760
      %v4597 = vsub.f32 %v4595, %v4596
      %v4598 = vand.u32 %v4597, 4294901760
      %4599 = vmatpush.msra.mxu0 %v4598
      %v4600 = vand.u32 %v940, 4294901760
      %v4601 = vsub.f32 %v940, %v4600
      %v4602 = vand.u32 %v4601, 4294901760
      %v4603 = vsub.f32 %v4601, %v4602
      %v4604 = vand.u32 %v4603, 4294901760
      %4605 = vmatpush.msra.mxu0 %v4604
      %v4606 = vand.u32 %v939, 4294901760
      %v4607 = vsub.f32 %v939, %v4606
      %v4608 = vand.u32 %v4607, 4294901760
      %v4609 = vsub.f32 %v4607, %v4608
      %v4610 = vand.u32 %v4609, 4294901760
      %4611 = vmatpush.msra.mxu0 %v4610
      %v4612 = vand.u32 %v938, 4294901760
      %v4613 = vsub.f32 %v938, %v4612
      %v4614 = vand.u32 %v4613, 4294901760
      %v4615 = vsub.f32 %v4613, %v4614
      %v4616 = vand.u32 %v4615, 4294901760
      %4617 = vmatpush.msra.mxu0 %v4616
      %v4618 = vand.u32 %v937, 4294901760
      %v4619 = vsub.f32 %v937, %v4618
      %v4620 = vand.u32 %v4619, 4294901760
      %v4621 = vsub.f32 %v4619, %v4620
      %v4622 = vand.u32 %v4621, 4294901760
      %4623 = vmatpush.msra.mxu0 %v4622
      %v4624 = vand.u32 %v936, 4294901760
      %v4625 = vsub.f32 %v936, %v4624
      %v4626 = vand.u32 %v4625, 4294901760
      %v4627 = vsub.f32 %v4625, %v4626
      %v4628 = vand.u32 %v4627, 4294901760
      %4629 = vmatpush.msra.mxu0 %v4628
      %v4630 = vand.u32 %v935, 4294901760
      %v4631 = vsub.f32 %v935, %v4630
      %v4632 = vand.u32 %v4631, 4294901760
      %v4633 = vsub.f32 %v4631, %v4632
      %v4634 = vand.u32 %v4633, 4294901760
      %4635 = vmatpush.msra.mxu0 %v4634
      %v4636 = vand.u32 %v934, 4294901760
      %v4637 = vsub.f32 %v934, %v4636
      %v4638 = vand.u32 %v4637, 4294901760
      %v4639 = vsub.f32 %v4637, %v4638
      %v4640 = vand.u32 %v4639, 4294901760
      %4641 = vmatpush.msra.mxu0 %v4640
      %v4642 = vand.u32 %v933, 4294901760
      %v4643 = vsub.f32 %v933, %v4642
      %v4644 = vand.u32 %v4643, 4294901760
      %v4645 = vsub.f32 %v4643, %v4644
      %v4646 = vand.u32 %v4645, 4294901760
      %4647 = vmatpush.msra.mxu0 %v4646
      %v4648 = vand.u32 %v4507, 4294901760
      %4649 = vmatmul.f32.gmra.mxu0 %v4648
      %v4650 = vpop.f32.mrf.mxu0
      %v4651 = vadd.f32 %v4550, %v4650
      %4652 = vdwg.mxu0
      %v4653 = vand.u32 %v948, 4294901760
      %v4654 = vsub.f32 %v948, %v4653
      %4655 = vmatpush.msra.mxu0 %v4654
      %v4656 = vand.u32 %v947, 4294901760
      %v4657 = vsub.f32 %v947, %v4656
      %4658 = vmatpush.msra.mxu0 %v4657
      %v4659 = vand.u32 %v946, 4294901760
      %v4660 = vsub.f32 %v946, %v4659
      %4661 = vmatpush.msra.mxu0 %v4660
      %v4662 = vand.u32 %v945, 4294901760
      %v4663 = vsub.f32 %v945, %v4662
      %4664 = vmatpush.msra.mxu0 %v4663
      %v4665 = vand.u32 %v944, 4294901760
      %v4666 = vsub.f32 %v944, %v4665
      %4667 = vmatpush.msra.mxu0 %v4666
      %v4668 = vand.u32 %v943, 4294901760
      %v4669 = vsub.f32 %v943, %v4668
      %4670 = vmatpush.msra.mxu0 %v4669
      %v4671 = vand.u32 %v942, 4294901760
      %v4672 = vsub.f32 %v942, %v4671
      %4673 = vmatpush.msra.mxu0 %v4672
      %v4674 = vand.u32 %v941, 4294901760
      %v4675 = vsub.f32 %v941, %v4674
      %4676 = vmatpush.msra.mxu0 %v4675
      %v4677 = vand.u32 %v940, 4294901760
      %v4678 = vsub.f32 %v940, %v4677
      %4679 = vmatpush.msra.mxu0 %v4678
      %v4680 = vand.u32 %v939, 4294901760
      %v4681 = vsub.f32 %v939, %v4680
      %4682 = vmatpush.msra.mxu0 %v4681
      %v4683 = vand.u32 %v938, 4294901760
      %v4684 = vsub.f32 %v938, %v4683
      %4685 = vmatpush.msra.mxu0 %v4684
      %v4686 = vand.u32 %v937, 4294901760
      %v4687 = vsub.f32 %v937, %v4686
      %4688 = vmatpush.msra.mxu0 %v4687
      %v4689 = vand.u32 %v936, 4294901760
      %v4690 = vsub.f32 %v936, %v4689
      %4691 = vmatpush.msra.mxu0 %v4690
      %v4692 = vand.u32 %v935, 4294901760
      %v4693 = vsub.f32 %v935, %v4692
      %4694 = vmatpush.msra.mxu0 %v4693
      %v4695 = vand.u32 %v934, 4294901760
      %v4696 = vsub.f32 %v934, %v4695
      %4697 = vmatpush.msra.mxu0 %v4696
      %v4698 = vand.u32 %v933, 4294901760
      %v4699 = vsub.f32 %v933, %v4698
      %4700 = vmatpush.msra.mxu0 %v4699
      %v4701 = vand.u32 %v4507, 4294901760
      %v4702 = vsub.f32 %v4507, %v4701
      %4703 = vmatmul.f32.gmra.mxu0 %v4702
      %v4704 = vpop.f32.mrf.mxu0
      %v4705 = vadd.f32 %v4651, %v4704
      %4706 = vdwg.mxu0
      %v4707 = vand.u32 %v948, 4294901760
      %4708 = vmatpush.msra.mxu0 %v4707
      %v4709 = vand.u32 %v947, 4294901760
      %4710 = vmatpush.msra.mxu0 %v4709
      %v4711 = vand.u32 %v946, 4294901760
      %4712 = vmatpush.msra.mxu0 %v4711
      %v4713 = vand.u32 %v945, 4294901760
      %4714 = vmatpush.msra.mxu0 %v4713
      %v4715 = vand.u32 %v944, 4294901760
      %4716 = vmatpush.msra.mxu0 %v4715
      %v4717 = vand.u32 %v943, 4294901760
      %4718 = vmatpush.msra.mxu0 %v4717
      %v4719 = vand.u32 %v942, 4294901760
      %4720 = vmatpush.msra.mxu0 %v4719
      %v4721 = vand.u32 %v941, 4294901760
      %4722 = vmatpush.msra.mxu0 %v4721
      %v4723 = vand.u32 %v940, 4294901760
      %4724 = vmatpush.msra.mxu0 %v4723
      %v4725 = vand.u32 %v939, 4294901760
      %4726 = vmatpush.msra.mxu0 %v4725
      %v4727 = vand.u32 %v938, 4294901760
      %4728 = vmatpush.msra.mxu0 %v4727
      %v4729 = vand.u32 %v937, 4294901760
      %4730 = vmatpush.msra.mxu0 %v4729
      %v4731 = vand.u32 %v936, 4294901760
      %4732 = vmatpush.msra.mxu0 %v4731
      %v4733 = vand.u32 %v935, 4294901760
      %4734 = vmatpush.msra.mxu0 %v4733
      %v4735 = vand.u32 %v934, 4294901760
      %4736 = vmatpush.msra.mxu0 %v4735
      %v4737 = vand.u32 %v933, 4294901760
      %4738 = vmatpush.msra.mxu0 %v4737
      %v4739 = vand.u32 %v4507, 4294901760
      %v4740 = vsub.f32 %v4507, %v4739
      %v4741 = vand.u32 %v4740, 4294901760
      %4742 = vmatmul.f32.gmra.mxu0 %v4741
      %v4743 = vpop.f32.mrf.mxu0
      %v4744 = vadd.f32 %v4705, %v4743
      %4745 = vdwg.mxu0
      %v4746 = vand.u32 %v948, 4294901760
      %v4747 = vsub.f32 %v948, %v4746
      %v4748 = vand.u32 %v4747, 4294901760
      %4749 = vmatpush.msra.mxu0 %v4748
      %v4750 = vand.u32 %v947, 4294901760
      %v4751 = vsub.f32 %v947, %v4750
      %v4752 = vand.u32 %v4751, 4294901760
      %4753 = vmatpush.msra.mxu0 %v4752
      %v4754 = vand.u32 %v946, 4294901760
      %v4755 = vsub.f32 %v946, %v4754
      %v4756 = vand.u32 %v4755, 4294901760
      %4757 = vmatpush.msra.mxu0 %v4756
      %v4758 = vand.u32 %v945, 4294901760
      %v4759 = vsub.f32 %v945, %v4758
      %v4760 = vand.u32 %v4759, 4294901760
      %4761 = vmatpush.msra.mxu0 %v4760
      %v4762 = vand.u32 %v944, 4294901760
      %v4763 = vsub.f32 %v944, %v4762
      %v4764 = vand.u32 %v4763, 4294901760
      %4765 = vmatpush.msra.mxu0 %v4764
      %v4766 = vand.u32 %v943, 4294901760
      %v4767 = vsub.f32 %v943, %v4766
      %v4768 = vand.u32 %v4767, 4294901760
      %4769 = vmatpush.msra.mxu0 %v4768
      %v4770 = vand.u32 %v942, 4294901760
      %v4771 = vsub.f32 %v942, %v4770
      %v4772 = vand.u32 %v4771, 4294901760
      %4773 = vmatpush.msra.mxu0 %v4772
      %v4774 = vand.u32 %v941, 4294901760
      %v4775 = vsub.f32 %v941, %v4774
      %v4776 = vand.u32 %v4775, 4294901760
      %4777 = vmatpush.msra.mxu0 %v4776
      %v4778 = vand.u32 %v940, 4294901760
      %v4779 = vsub.f32 %v940, %v4778
      %v4780 = vand.u32 %v4779, 4294901760
      %4781 = vmatpush.msra.mxu0 %v4780
      %v4782 = vand.u32 %v939, 4294901760
      %v4783 = vsub.f32 %v939, %v4782
      %v4784 = vand.u32 %v4783, 4294901760
      %4785 = vmatpush.msra.mxu0 %v4784
      %v4786 = vand.u32 %v938, 4294901760
      %v4787 = vsub.f32 %v938, %v4786
      %v4788 = vand.u32 %v4787, 4294901760
      %4789 = vmatpush.msra.mxu0 %v4788
      %v4790 = vand.u32 %v937, 4294901760
      %v4791 = vsub.f32 %v937, %v4790
      %v4792 = vand.u32 %v4791, 4294901760
      %4793 = vmatpush.msra.mxu0 %v4792
      %v4794 = vand.u32 %v936, 4294901760
      %v4795 = vsub.f32 %v936, %v4794
      %v4796 = vand.u32 %v4795, 4294901760
      %4797 = vmatpush.msra.mxu0 %v4796
      %v4798 = vand.u32 %v935, 4294901760
      %v4799 = vsub.f32 %v935, %v4798
      %v4800 = vand.u32 %v4799, 4294901760
      %4801 = vmatpush.msra.mxu0 %v4800
      %v4802 = vand.u32 %v934, 4294901760
      %v4803 = vsub.f32 %v934, %v4802
      %v4804 = vand.u32 %v4803, 4294901760
      %4805 = vmatpush.msra.mxu0 %v4804
      %v4806 = vand.u32 %v933, 4294901760
      %v4807 = vsub.f32 %v933, %v4806
      %v4808 = vand.u32 %v4807, 4294901760
      %4809 = vmatpush.msra.mxu0 %v4808
      %v4810 = vand.u32 %v4507, 4294901760
      %4811 = vmatmul.f32.gmra.mxu0 %v4810
      %v4812 = vpop.f32.mrf.mxu0
      %v4813 = vadd.f32 %v4744, %v4812
      %4814 = vdwg.mxu0
      %v4815 = vand.u32 %v948, 4294901760
      %4816 = vmatpush.msra.mxu0 %v4815
      %v4817 = vand.u32 %v947, 4294901760
      %4818 = vmatpush.msra.mxu0 %v4817
      %v4819 = vand.u32 %v946, 4294901760
      %4820 = vmatpush.msra.mxu0 %v4819
      %v4821 = vand.u32 %v945, 4294901760
      %4822 = vmatpush.msra.mxu0 %v4821
      %v4823 = vand.u32 %v944, 4294901760
      %4824 = vmatpush.msra.mxu0 %v4823
      %v4825 = vand.u32 %v943, 4294901760
      %4826 = vmatpush.msra.mxu0 %v4825
      %v4827 = vand.u32 %v942, 4294901760
      %4828 = vmatpush.msra.mxu0 %v4827
      %v4829 = vand.u32 %v941, 4294901760
      %4830 = vmatpush.msra.mxu0 %v4829
      %v4831 = vand.u32 %v940, 4294901760
      %4832 = vmatpush.msra.mxu0 %v4831
      %v4833 = vand.u32 %v939, 4294901760
      %4834 = vmatpush.msra.mxu0 %v4833
      %v4835 = vand.u32 %v938, 4294901760
      %4836 = vmatpush.msra.mxu0 %v4835
      %v4837 = vand.u32 %v937, 4294901760
      %4838 = vmatpush.msra.mxu0 %v4837
      %v4839 = vand.u32 %v936, 4294901760
      %4840 = vmatpush.msra.mxu0 %v4839
      %v4841 = vand.u32 %v935, 4294901760
      %4842 = vmatpush.msra.mxu0 %v4841
      %v4843 = vand.u32 %v934, 4294901760
      %4844 = vmatpush.msra.mxu0 %v4843
      %v4845 = vand.u32 %v933, 4294901760
      %4846 = vmatpush.msra.mxu0 %v4845
      %v4847 = vand.u32 %v4507, 4294901760
      %4848 = vmatmul.f32.gmra.mxu0 %v4847
      %v4849 = vpop.f32.mrf.mxu0
      %v4850 = vadd.f32 %v4813, %v4849
      %4851 = vdwg.mxu0
      %v4852 = vand.u32 %v964, 4294901760
      %4853 = vmatpush.msra.mxu0 %v4852
      %v4854 = vand.u32 %v963, 4294901760
      %4855 = vmatpush.msra.mxu0 %v4854
      %v4856 = vand.u32 %v962, 4294901760
      %4857 = vmatpush.msra.mxu0 %v4856
      %v4858 = vand.u32 %v961, 4294901760
      %4859 = vmatpush.msra.mxu0 %v4858
      %v4860 = vand.u32 %v960, 4294901760
      %4861 = vmatpush.msra.mxu0 %v4860
      %v4862 = vand.u32 %v959, 4294901760
      %4863 = vmatpush.msra.mxu0 %v4862
      %v4864 = vand.u32 %v958, 4294901760
      %4865 = vmatpush.msra.mxu0 %v4864
      %v4866 = vand.u32 %v957, 4294901760
      %4867 = vmatpush.msra.mxu0 %v4866
      %v4868 = vand.u32 %v956, 4294901760
      %4869 = vmatpush.msra.mxu0 %v4868
      %v4870 = vand.u32 %v955, 4294901760
      %4871 = vmatpush.msra.mxu0 %v4870
      %v4872 = vand.u32 %v954, 4294901760
      %4873 = vmatpush.msra.mxu0 %v4872
      %v4874 = vand.u32 %v953, 4294901760
      %4875 = vmatpush.msra.mxu0 %v4874
      %v4876 = vand.u32 %v952, 4294901760
      %4877 = vmatpush.msra.mxu0 %v4876
      %v4878 = vand.u32 %v951, 4294901760
      %4879 = vmatpush.msra.mxu0 %v4878
      %v4880 = vand.u32 %v950, 4294901760
      %4881 = vmatpush.msra.mxu0 %v4880
      %v4882 = vand.u32 %v949, 4294901760
      %4883 = vmatpush.msra.mxu0 %v4882
      %v4884 = vand.u32 %v4508, 4294901760
      %v4885 = vsub.f32 %v4508, %v4884
      %v4886 = vand.u32 %v4885, 4294901760
      %v4887 = vsub.f32 %v4885, %v4886
      %v4888 = vand.u32 %v4887, 4294901760
      %4889 = vmatmul.f32.gmra.mxu0 %v4888
      %v4890 = vpop.f32.mrf.mxu0
      %v4891 = vadd.f32 %v4850, %v4890
      %4892 = vdwg.mxu0
      %v4893 = vand.u32 %v964, 4294901760
      %v4894 = vsub.f32 %v964, %v4893
      %v4895 = vand.u32 %v4894, 4294901760
      %v4896 = vsub.f32 %v4894, %v4895
      %v4897 = vand.u32 %v4896, 4294901760
      %4898 = vmatpush.msra.mxu0 %v4897
      %v4899 = vand.u32 %v963, 4294901760
      %v4900 = vsub.f32 %v963, %v4899
      %v4901 = vand.u32 %v4900, 4294901760
      %v4902 = vsub.f32 %v4900, %v4901
      %v4903 = vand.u32 %v4902, 4294901760
      %4904 = vmatpush.msra.mxu0 %v4903
      %v4905 = vand.u32 %v962, 4294901760
      %v4906 = vsub.f32 %v962, %v4905
      %v4907 = vand.u32 %v4906, 4294901760
      %v4908 = vsub.f32 %v4906, %v4907
      %v4909 = vand.u32 %v4908, 4294901760
      %4910 = vmatpush.msra.mxu0 %v4909
      %v4911 = vand.u32 %v961, 4294901760
      %v4912 = vsub.f32 %v961, %v4911
      %v4913 = vand.u32 %v4912, 4294901760
      %v4914 = vsub.f32 %v4912, %v4913
      %v4915 = vand.u32 %v4914, 4294901760
      %4916 = vmatpush.msra.mxu0 %v4915
      %v4917 = vand.u32 %v960, 4294901760
      %v4918 = vsub.f32 %v960, %v4917
      %v4919 = vand.u32 %v4918, 4294901760
      %v4920 = vsub.f32 %v4918, %v4919
      %v4921 = vand.u32 %v4920, 4294901760
      %4922 = vmatpush.msra.mxu0 %v4921
      %v4923 = vand.u32 %v959, 4294901760
      %v4924 = vsub.f32 %v959, %v4923
      %v4925 = vand.u32 %v4924, 4294901760
      %v4926 = vsub.f32 %v4924, %v4925
      %v4927 = vand.u32 %v4926, 4294901760
      %4928 = vmatpush.msra.mxu0 %v4927
      %v4929 = vand.u32 %v958, 4294901760
      %v4930 = vsub.f32 %v958, %v4929
      %v4931 = vand.u32 %v4930, 4294901760
      %v4932 = vsub.f32 %v4930, %v4931
      %v4933 = vand.u32 %v4932, 4294901760
      %4934 = vmatpush.msra.mxu0 %v4933
      %v4935 = vand.u32 %v957, 4294901760
      %v4936 = vsub.f32 %v957, %v4935
      %v4937 = vand.u32 %v4936, 4294901760
      %v4938 = vsub.f32 %v4936, %v4937
      %v4939 = vand.u32 %v4938, 4294901760
      %4940 = vmatpush.msra.mxu0 %v4939
      %v4941 = vand.u32 %v956, 4294901760
      %v4942 = vsub.f32 %v956, %v4941
      %v4943 = vand.u32 %v4942, 4294901760
      %v4944 = vsub.f32 %v4942, %v4943
      %v4945 = vand.u32 %v4944, 4294901760
      %4946 = vmatpush.msra.mxu0 %v4945
      %v4947 = vand.u32 %v955, 4294901760
      %v4948 = vsub.f32 %v955, %v4947
      %v4949 = vand.u32 %v4948, 4294901760
      %v4950 = vsub.f32 %v4948, %v4949
      %v4951 = vand.u32 %v4950, 4294901760
      %4952 = vmatpush.msra.mxu0 %v4951
      %v4953 = vand.u32 %v954, 4294901760
      %v4954 = vsub.f32 %v954, %v4953
      %v4955 = vand.u32 %v4954, 4294901760
      %v4956 = vsub.f32 %v4954, %v4955
      %v4957 = vand.u32 %v4956, 4294901760
      %4958 = vmatpush.msra.mxu0 %v4957
      %v4959 = vand.u32 %v953, 4294901760
      %v4960 = vsub.f32 %v953, %v4959
      %v4961 = vand.u32 %v4960, 4294901760
      %v4962 = vsub.f32 %v4960, %v4961
      %v4963 = vand.u32 %v4962, 4294901760
      %4964 = vmatpush.msra.mxu0 %v4963
      %v4965 = vand.u32 %v952, 4294901760
      %v4966 = vsub.f32 %v952, %v4965
      %v4967 = vand.u32 %v4966, 4294901760
      %v4968 = vsub.f32 %v4966, %v4967
      %v4969 = vand.u32 %v4968, 4294901760
      %4970 = vmatpush.msra.mxu0 %v4969
      %v4971 = vand.u32 %v951, 4294901760
      %v4972 = vsub.f32 %v951, %v4971
      %v4973 = vand.u32 %v4972, 4294901760
      %v4974 = vsub.f32 %v4972, %v4973
      %v4975 = vand.u32 %v4974, 4294901760
      %4976 = vmatpush.msra.mxu0 %v4975
      %v4977 = vand.u32 %v950, 4294901760
      %v4978 = vsub.f32 %v950, %v4977
      %v4979 = vand.u32 %v4978, 4294901760
      %v4980 = vsub.f32 %v4978, %v4979
      %v4981 = vand.u32 %v4980, 4294901760
      %4982 = vmatpush.msra.mxu0 %v4981
      %v4983 = vand.u32 %v949, 4294901760
      %v4984 = vsub.f32 %v949, %v4983
      %v4985 = vand.u32 %v4984, 4294901760
      %v4986 = vsub.f32 %v4984, %v4985
      %v4987 = vand.u32 %v4986, 4294901760
      %4988 = vmatpush.msra.mxu0 %v4987
      %v4989 = vand.u32 %v4508, 4294901760
      %4990 = vmatmul.f32.gmra.mxu0 %v4989
      %v4991 = vpop.f32.mrf.mxu0
      %v4992 = vadd.f32 %v4891, %v4991
      %4993 = vdwg.mxu0
      %v4994 = vand.u32 %v964, 4294901760
      %v4995 = vsub.f32 %v964, %v4994
      %4996 = vmatpush.msra.mxu0 %v4995
      %v4997 = vand.u32 %v963, 4294901760
      %v4998 = vsub.f32 %v963, %v4997
      %4999 = vmatpush.msra.mxu0 %v4998
      %v5000 = vand.u32 %v962, 4294901760
      %v5001 = vsub.f32 %v962, %v5000
      %5002 = vmatpush.msra.mxu0 %v5001
      %v5003 = vand.u32 %v961, 4294901760
      %v5004 = vsub.f32 %v961, %v5003
      %5005 = vmatpush.msra.mxu0 %v5004
      %v5006 = vand.u32 %v960, 4294901760
      %v5007 = vsub.f32 %v960, %v5006
      %5008 = vmatpush.msra.mxu0 %v5007
      %v5009 = vand.u32 %v959, 4294901760
      %v5010 = vsub.f32 %v959, %v5009
      %5011 = vmatpush.msra.mxu0 %v5010
      %v5012 = vand.u32 %v958, 4294901760
      %v5013 = vsub.f32 %v958, %v5012
      %5014 = vmatpush.msra.mxu0 %v5013
      %v5015 = vand.u32 %v957, 4294901760
      %v5016 = vsub.f32 %v957, %v5015
      %5017 = vmatpush.msra.mxu0 %v5016
      %v5018 = vand.u32 %v956, 4294901760
      %v5019 = vsub.f32 %v956, %v5018
      %5020 = vmatpush.msra.mxu0 %v5019
      %v5021 = vand.u32 %v955, 4294901760
      %v5022 = vsub.f32 %v955, %v5021
      %5023 = vmatpush.msra.mxu0 %v5022
      %v5024 = vand.u32 %v954, 4294901760
      %v5025 = vsub.f32 %v954, %v5024
      %5026 = vmatpush.msra.mxu0 %v5025
      %v5027 = vand.u32 %v953, 4294901760
      %v5028 = vsub.f32 %v953, %v5027
      %5029 = vmatpush.msra.mxu0 %v5028
      %v5030 = vand.u32 %v952, 4294901760
      %v5031 = vsub.f32 %v952, %v5030
      %5032 = vmatpush.msra.mxu0 %v5031
      %v5033 = vand.u32 %v951, 4294901760
      %v5034 = vsub.f32 %v951, %v5033
      %5035 = vmatpush.msra.mxu0 %v5034
      %v5036 = vand.u32 %v950, 4294901760
      %v5037 = vsub.f32 %v950, %v5036
      %5038 = vmatpush.msra.mxu0 %v5037
      %v5039 = vand.u32 %v949, 4294901760
      %v5040 = vsub.f32 %v949, %v5039
      %5041 = vmatpush.msra.mxu0 %v5040
      %v5042 = vand.u32 %v4508, 4294901760
      %v5043 = vsub.f32 %v4508, %v5042
      %5044 = vmatmul.f32.gmra.mxu0 %v5043
      %v5045 = vpop.f32.mrf.mxu0
      %v5046 = vadd.f32 %v4992, %v5045
      %5047 = vdwg.mxu0
      %v5048 = vand.u32 %v964, 4294901760
      %5049 = vmatpush.msra.mxu0 %v5048
      %v5050 = vand.u32 %v963, 4294901760
      %5051 = vmatpush.msra.mxu0 %v5050
      %v5052 = vand.u32 %v962, 4294901760
      %5053 = vmatpush.msra.mxu0 %v5052
      %v5054 = vand.u32 %v961, 4294901760
      %5055 = vmatpush.msra.mxu0 %v5054
      %v5056 = vand.u32 %v960, 4294901760
      %5057 = vmatpush.msra.mxu0 %v5056
      %v5058 = vand.u32 %v959, 4294901760
      %5059 = vmatpush.msra.mxu0 %v5058
      %v5060 = vand.u32 %v958, 4294901760
      %5061 = vmatpush.msra.mxu0 %v5060
      %v5062 = vand.u32 %v957, 4294901760
      %5063 = vmatpush.msra.mxu0 %v5062
      %v5064 = vand.u32 %v956, 4294901760
      %5065 = vmatpush.msra.mxu0 %v5064
      %v5066 = vand.u32 %v955, 4294901760
      %5067 = vmatpush.msra.mxu0 %v5066
      %v5068 = vand.u32 %v954, 4294901760
      %5069 = vmatpush.msra.mxu0 %v5068
      %v5070 = vand.u32 %v953, 4294901760
      %5071 = vmatpush.msra.mxu0 %v5070
      %v5072 = vand.u32 %v952, 4294901760
      %5073 = vmatpush.msra.mxu0 %v5072
      %v5074 = vand.u32 %v951, 4294901760
      %5075 = vmatpush.msra.mxu0 %v5074
      %v5076 = vand.u32 %v950, 4294901760
      %5077 = vmatpush.msra.mxu0 %v5076
      %v5078 = vand.u32 %v949, 4294901760
      %5079 = vmatpush.msra.mxu0 %v5078
      %v5080 = vand.u32 %v4508, 4294901760
      %v5081 = vsub.f32 %v4508, %v5080
      %v5082 = vand.u32 %v5081, 4294901760
      %5083 = vmatmul.f32.gmra.mxu0 %v5082
      %v5084 = vpop.f32.mrf.mxu0
      %v5085 = vadd.f32 %v5046, %v5084
      %5086 = vdwg.mxu0
      %v5087 = vand.u32 %v964, 4294901760
      %v5088 = vsub.f32 %v964, %v5087
      %v5089 = vand.u32 %v5088, 4294901760
      %5090 = vmatpush.msra.mxu0 %v5089
      %v5091 = vand.u32 %v963, 4294901760
      %v5092 = vsub.f32 %v963, %v5091
      %v5093 = vand.u32 %v5092, 4294901760
      %5094 = vmatpush.msra.mxu0 %v5093
      %v5095 = vand.u32 %v962, 4294901760
      %v5096 = vsub.f32 %v962, %v5095
      %v5097 = vand.u32 %v5096, 4294901760
      %5098 = vmatpush.msra.mxu0 %v5097
      %v5099 = vand.u32 %v961, 4294901760
      %v5100 = vsub.f32 %v961, %v5099
      %v5101 = vand.u32 %v5100, 4294901760
      %5102 = vmatpush.msra.mxu0 %v5101
      %v5103 = vand.u32 %v960, 4294901760
      %v5104 = vsub.f32 %v960, %v5103
      %v5105 = vand.u32 %v5104, 4294901760
      %5106 = vmatpush.msra.mxu0 %v5105
      %v5107 = vand.u32 %v959, 4294901760
      %v5108 = vsub.f32 %v959, %v5107
      %v5109 = vand.u32 %v5108, 4294901760
      %5110 = vmatpush.msra.mxu0 %v5109
      %v5111 = vand.u32 %v958, 4294901760
      %v5112 = vsub.f32 %v958, %v5111
      %v5113 = vand.u32 %v5112, 4294901760
      %5114 = vmatpush.msra.mxu0 %v5113
      %v5115 = vand.u32 %v957, 4294901760
      %v5116 = vsub.f32 %v957, %v5115
      %v5117 = vand.u32 %v5116, 4294901760
      %5118 = vmatpush.msra.mxu0 %v5117
      %v5119 = vand.u32 %v956, 4294901760
      %v5120 = vsub.f32 %v956, %v5119
      %v5121 = vand.u32 %v5120, 4294901760
      %5122 = vmatpush.msra.mxu0 %v5121
      %v5123 = vand.u32 %v955, 4294901760
      %v5124 = vsub.f32 %v955, %v5123
      %v5125 = vand.u32 %v5124, 4294901760
      %5126 = vmatpush.msra.mxu0 %v5125
      %v5127 = vand.u32 %v954, 4294901760
      %v5128 = vsub.f32 %v954, %v5127
      %v5129 = vand.u32 %v5128, 4294901760
      %5130 = vmatpush.msra.mxu0 %v5129
      %v5131 = vand.u32 %v953, 4294901760
      %v5132 = vsub.f32 %v953, %v5131
      %v5133 = vand.u32 %v5132, 4294901760
      %5134 = vmatpush.msra.mxu0 %v5133
      %v5135 = vand.u32 %v952, 4294901760
      %v5136 = vsub.f32 %v952, %v5135
      %v5137 = vand.u32 %v5136, 4294901760
      %5138 = vmatpush.msra.mxu0 %v5137
      %v5139 = vand.u32 %v951, 4294901760
      %v5140 = vsub.f32 %v951, %v5139
      %v5141 = vand.u32 %v5140, 4294901760
      %5142 = vmatpush.msra.mxu0 %v5141
      %v5143 = vand.u32 %v950, 4294901760
      %v5144 = vsub.f32 %v950, %v5143
      %v5145 = vand.u32 %v5144, 4294901760
      %5146 = vmatpush.msra.mxu0 %v5145
      %v5147 = vand.u32 %v949, 4294901760
      %v5148 = vsub.f32 %v949, %v5147
      %v5149 = vand.u32 %v5148, 4294901760
      %5150 = vmatpush.msra.mxu0 %v5149
      %v5151 = vand.u32 %v4508, 4294901760
      %5152 = vmatmul.f32.gmra.mxu0 %v5151
      %v5153 = vpop.f32.mrf.mxu0
      %v5154 = vadd.f32 %v5085, %v5153
      %5155 = vdwg.mxu0
      %v5156 = vand.u32 %v964, 4294901760
      %5157 = vmatpush.msra.mxu0 %v5156
      %v5158 = vand.u32 %v963, 4294901760
      %5159 = vmatpush.msra.mxu0 %v5158
      %v5160 = vand.u32 %v962, 4294901760
      %5161 = vmatpush.msra.mxu0 %v5160
      %v5162 = vand.u32 %v961, 4294901760
      %5163 = vmatpush.msra.mxu0 %v5162
      %v5164 = vand.u32 %v960, 4294901760
      %5165 = vmatpush.msra.mxu0 %v5164
      %v5166 = vand.u32 %v959, 4294901760
      %5167 = vmatpush.msra.mxu0 %v5166
      %v5168 = vand.u32 %v958, 4294901760
      %5169 = vmatpush.msra.mxu0 %v5168
      %v5170 = vand.u32 %v957, 4294901760
      %5171 = vmatpush.msra.mxu0 %v5170
      %v5172 = vand.u32 %v956, 4294901760
      %5173 = vmatpush.msra.mxu0 %v5172
      %v5174 = vand.u32 %v955, 4294901760
      %5175 = vmatpush.msra.mxu0 %v5174
      %v5176 = vand.u32 %v954, 4294901760
      %5177 = vmatpush.msra.mxu0 %v5176
      %v5178 = vand.u32 %v953, 4294901760
      %5179 = vmatpush.msra.mxu0 %v5178
      %v5180 = vand.u32 %v952, 4294901760
      %5181 = vmatpush.msra.mxu0 %v5180
      %v5182 = vand.u32 %v951, 4294901760
      %5183 = vmatpush.msra.mxu0 %v5182
      %v5184 = vand.u32 %v950, 4294901760
      %5185 = vmatpush.msra.mxu0 %v5184
      %v5186 = vand.u32 %v949, 4294901760
      %5187 = vmatpush.msra.mxu0 %v5186
      %v5188 = vand.u32 %v4508, 4294901760
      %5189 = vmatmul.f32.gmra.mxu0 %v5188
      %v5190 = vpop.f32.mrf.mxu0
      %v5191 = vadd.f32 %v5154, %v5190
      %5192 = vdwg.mxu0
      %v5193 = vadd.f32 %v4504, %v5191
      %5194 = vst.msk [vmem:[%s890] sm:$0xf] %vm1656, %v5193
      %v5195 = vld [vmem:[%s914] sm:$0xf]
      %v5196 = vmul.f32 %v4503, %v4503
      %5198 = vst [vmem:[#allocation1] ss:$2 sm:$0xff] %v5196
      %v5199 = vld.sshfl [vmem:[#allocation1] sm:$0xff pattern:$0x75316420]
      %v5200 = vld.sshfl [vmem:[#allocation1 + $0x8] sm:$0xff pattern:$0x75316420]
      %v5203 = vsel %vm1666, %v5199, 0.0
      %v5204 = vsel %vm1666, %v5200, 0.0
      %v5205 = vadd.f32 %v5203, %v5204
      %5206 = vadd.xlane.f32.xlu0 %v5205
      %v5207 = vpop.xlane.xlu0 %5206
      %v5208 = vadd.f32 %v5195, %v5207
      %5209 = vst.msk [vmem:[%s914] sm:$0xf] %vm1673, %v5208
      %p5210 = scmp.lt.s32.totalorder %s34, 1
      %s5211 = scalar_select %p5210, %s34, 1
      %s5212 = smul.addr %s5211, 4
      %s5213 = scalar_lea.vmem %s7, %s5212
      %p5214 = scmp.lt.s32.totalorder %s34, 1
      %s5215 = scalar_select %p5214, %s34, 1
      %s5216 = smul.addr %s5215, 4
      %s5217 = scalar_lea.vmem %s8, %s5216
      %p5218 = scmp.lt.s32.totalorder %s34, 1
      %s5219 = scalar_select %p5218, %s34, 1
      %s5220 = smul.addr %s5219, 4
      %s5221 = scalar_lea.vmem %s9, %s5220
      %p5222 = scmp.lt.s32.totalorder %s34, 1
      %s5223 = scalar_select %p5222, %s34, 1
      %s5224 = smul.addr %s5223, 4
      %s5225 = scalar_lea.vmem %s10, %s5224
      %p5226 = scmp.lt.s32.totalorder %s34, 1
      %s5227 = scalar_select %p5226, %s34, 1
      %s5228 = smul.addr %s5227, 4
      %s5229 = scalar_lea.vmem %s11, %s5228
      %p5230 = scmp.lt.s32.totalorder %s34, 1
      %s5231 = scalar_select %p5230, %s34, 1
      %s5232 = smul.addr %s5231, 4
      %s5233 = scalar_lea.vmem %s12, %s5232
      %p5234 = scmp.lt.s32.totalorder %s34, 1
      %s5235 = scalar_select %p5234, %s34, 1
      %s5236 = smul.addr %s5235, 4
      %s5237 = scalar_lea.vmem %s13, %s5236
      %p5238 = scmp.lt.s32.totalorder %s34, 1
      %s5239 = scalar_select %p5238, %s34, 1
      %s5240 = smul.addr %s5239, 4
      %s5241 = scalar_lea.vmem %s14, %s5240
      %p5242 = scmp.lt.s32.totalorder %s34, 1
      %s5243 = scalar_select %p5242, %s34, 1
      %s5244 = smul.addr %s5243, 4
      %s5245 = scalar_lea.vmem %s15, %s5244
      %p5246 = scmp.lt.s32.totalorder %s34, 1
      %s5247 = scalar_select %p5246, %s34, 1
      %s5248 = smul.addr %s5247, 4
      %s5249 = scalar_lea.vmem %s16, %s5248
      %p5250 = scmp.lt.s32.totalorder %s34, 1
      %s5251 = scalar_select %p5250, %s34, 1
      %s5252 = smul.addr %s5251, 4
      %s5253 = scalar_lea.vmem %s17, %s5252
      %p5254 = scmp.lt.s32.totalorder %s34, 1
      %s5255 = scalar_select %p5254, %s34, 1
      %s5256 = smul.addr %s5255, 4
      %s5257 = scalar_lea.vmem %s18, %s5256
      // Predicated region
      $region53: #{ffm_b2.2} parent=47 // pred_check
        %p5258 = pneg %p254
      $region54: #{ffm_b2.2} parent=47 // pred_check_branch
        %5260 = sbr.rel (%p5258) target = $region56
      $region55: #{ffm_b2.2} parent=47 // pred_region
        _
      $region56: #{ffm_b2.2} parent=47 // pred_fallthru
        _
      // Predicated region
      $region57: #{ffm_b2.2} parent=47 // pred_check
        %p5261 = pneg %p280
      $region58: #{ffm_b2.2} parent=47 // pred_check_branch
        %5263 = sbr.rel (%p5261) target = $region60
      $region59: #{ffm_b2.2} parent=47 // pred_region
        _
      $region60: #{ffm_b2.2} parent=47 // pred_fallthru
        _
      // Predicated region
      $region61: #{ffm_b2.2} parent=47 // pred_check
        %p5264 = pneg %p306
      $region62: #{ffm_b2.2} parent=47 // pred_check_branch
        %5266 = sbr.rel (%p5264) target = $region64
      $region63: #{ffm_b2.2} parent=47 // pred_region
        _
      $region64: #{ffm_b2.2} parent=47 // pred_fallthru
        _
      // Predicated region
      $region65: #{ffm_b2.2} parent=47 // pred_check
        %p5267 = pneg %p332
      $region66: #{ffm_b2.2} parent=47 // pred_check_branch
        %5269 = sbr.rel (%p5267) target = $region68
      $region67: #{ffm_b2.2} parent=47 // pred_region
        _
      $region68: #{ffm_b2.2} parent=47 // pred_fallthru
        _
      // Predicated region
      $region69: #{ffm_b2.2} parent=47 // pred_check
        %p5270 = pneg %p358
      $region70: #{ffm_b2.2} parent=47 // pred_check_branch
        %5272 = sbr.rel (%p5270) target = $region72
      $region71: #{ffm_b2.2} parent=47 // pred_region
        _
      $region72: #{ffm_b2.2} parent=47 // pred_fallthru
        _
      // Predicated region
      $region73: #{ffm_b2.2} parent=47 // pred_check
        %p5273 = pneg %p384
      $region74: #{ffm_b2.2} parent=47 // pred_check_branch
        %5275 = sbr.rel (%p5273) target = $region76
      $region75: #{ffm_b2.2} parent=47 // pred_region
        _
      $region76: #{ffm_b2.2} parent=47 // pred_fallthru
        _
      // Predicated region
      $region77: #{ffm_b2.2} parent=47 // pred_check
        %p5276 = pneg %p410
      $region78: #{ffm_b2.2} parent=47 // pred_check_branch
        %5278 = sbr.rel (%p5276) target = $region80
      $region79: #{ffm_b2.2} parent=47 // pred_region
        _
      $region80: #{ffm_b2.2} parent=47 // pred_fallthru
        _
      // Predicated region
      $region81: #{ffm_b2.2} parent=47 // pred_check
        %p5279 = pneg %p436
      $region82: #{ffm_b2.2} parent=47 // pred_check_branch
        %5281 = sbr.rel (%p5279) target = $region84
      $region83: #{ffm_b2.2} parent=47 // pred_region
        _
      $region84: #{ffm_b2.2} parent=47 // pred_fallthru
        _
      // Predicated region
      $region85: #{ffm_b2.2} parent=47 // pred_check
        %p5282 = pneg %p462
      $region86: #{ffm_b2.2} parent=47 // pred_check_branch
        %5284 = sbr.rel (%p5282) target = $region88
      $region87: #{ffm_b2.2} parent=47 // pred_region
        _
      $region88: #{ffm_b2.2} parent=47 // pred_fallthru
        _
      // Predicated region
      $region89: #{ffm_b2.2} parent=47 // pred_check
        %p5285 = pneg %p488
      $region90: #{ffm_b2.2} parent=47 // pred_check_branch
        %5287 = sbr.rel (%p5285) target = $region92
      $region91: #{ffm_b2.2} parent=47 // pred_region
        _
      $region92: #{ffm_b2.2} parent=47 // pred_fallthru
        _
      // Predicated region
      $region93: #{ffm_b2.2} parent=47 // pred_check
        %p5288 = pneg %p514
      $region94: #{ffm_b2.2} parent=47 // pred_check_branch
        %5290 = sbr.rel (%p5288) target = $region96
      $region95: #{ffm_b2.2} parent=47 // pred_region
        _
      $region96: #{ffm_b2.2} parent=47 // pred_fallthru
        _
      // Predicated region
      $region97: #{ffm_b2.2} parent=47 // pred_check
        %p5291 = pneg %p540
      $region98: #{ffm_b2.2} parent=47 // pred_check_branch
        %5293 = sbr.rel (%p5291) target = $region100
      $region99: #{ffm_b2.2} parent=47 // pred_region
        _
      $region100: #{ffm_b2.2} parent=47 // pred_fallthru
        _
    $region48: #{ffm_b2.2} parent=5 // pred_fallthru
      _
    %p5294 = scmp.le.s32.totalorder 2, %s25
    // Predicated region
    $region101: #{ffm_b2.2} parent=5 // pred_check
      %p5295 = pneg %p5294
    $region102: #{ffm_b2.2} parent=5 // pred_check_branch
      %5297 = sbr.rel (%p5295) target = $region104
    $region103: #{ffm_b2.2} parent=5 // pred_region
      %s5298 = ssub.s32 %s25, 2
      // Predicated region
      $region105: #{ffm_b2.2} parent=103 // pred_check
        %p5299 = pneg %p260
      $region106: #{ffm_b2.2} parent=103 // pred_check_branch
        %5301 = sbr.rel (%p5299) target = $region108
      $region107: #{ffm_b2.2} parent=103 // pred_region
        %p5302 = scmp.lt.s32.totalorder %s36, 1
        %s5303 = scalar_select %p5302, %s36, 1
        %s5304 = smul.addr %s5303, 4
        %s5305 = scalar_lea.vmem %s7, %s5304
      $region108: #{ffm_b2.2} parent=103 // pred_fallthru
        _
      // Predicated region
      $region109: #{ffm_b2.2} parent=103 // pred_check
        %p5306 = pneg %p286
      $region110: #{ffm_b2.2} parent=103 // pred_check_branch
        %5308 = sbr.rel (%p5306) target = $region112
      $region111: #{ffm_b2.2} parent=103 // pred_region
        %p5309 = scmp.lt.s32.totalorder %s36, 1
        %s5310 = scalar_select %p5309, %s36, 1
        %s5311 = smul.addr %s5310, 4
        %s5312 = scalar_lea.vmem %s8, %s5311
      $region112: #{ffm_b2.2} parent=103 // pred_fallthru
        _
      // Predicated region
      $region113: #{ffm_b2.2} parent=103 // pred_check
        %p5313 = pneg %p312
      $region114: #{ffm_b2.2} parent=103 // pred_check_branch
        %5315 = sbr.rel (%p5313) target = $region116
      $region115: #{ffm_b2.2} parent=103 // pred_region
        %p5316 = scmp.lt.s32.totalorder %s36, 1
        %s5317 = scalar_select %p5316, %s36, 1
        %s5318 = smul.addr %s5317, 4
        %s5319 = scalar_lea.vmem %s9, %s5318
      $region116: #{ffm_b2.2} parent=103 // pred_fallthru
        _
      // Predicated region
      $region117: #{ffm_b2.2} parent=103 // pred_check
        %p5320 = pneg %p338
      $region118: #{ffm_b2.2} parent=103 // pred_check_branch
        %5322 = sbr.rel (%p5320) target = $region120
      $region119: #{ffm_b2.2} parent=103 // pred_region
        %p5323 = scmp.lt.s32.totalorder %s36, 1
        %s5324 = scalar_select %p5323, %s36, 1
        %s5325 = smul.addr %s5324, 4
        %s5326 = scalar_lea.vmem %s10, %s5325
      $region120: #{ffm_b2.2} parent=103 // pred_fallthru
        _
      // Predicated region
      $region121: #{ffm_b2.2} parent=103 // pred_check
        %p5327 = pneg %p364
      $region122: #{ffm_b2.2} parent=103 // pred_check_branch
        %5329 = sbr.rel (%p5327) target = $region124
      $region123: #{ffm_b2.2} parent=103 // pred_region
        %p5330 = scmp.lt.s32.totalorder %s36, 1
        %s5331 = scalar_select %p5330, %s36, 1
        %s5332 = smul.addr %s5331, 4
        %s5333 = scalar_lea.vmem %s11, %s5332
      $region124: #{ffm_b2.2} parent=103 // pred_fallthru
        _
      // Predicated region
      $region125: #{ffm_b2.2} parent=103 // pred_check
        %p5334 = pneg %p390
      $region126: #{ffm_b2.2} parent=103 // pred_check_branch
        %5336 = sbr.rel (%p5334) target = $region128
      $region127: #{ffm_b2.2} parent=103 // pred_region
        %p5337 = scmp.lt.s32.totalorder %s36, 1
        %s5338 = scalar_select %p5337, %s36, 1
        %s5339 = smul.addr %s5338, 4
        %s5340 = scalar_lea.vmem %s12, %s5339
      $region128: #{ffm_b2.2} parent=103 // pred_fallthru
        _
      // Predicated region
      $region129: #{ffm_b2.2} parent=103 // pred_check
        %p5341 = pneg %p416
      $region130: #{ffm_b2.2} parent=103 // pred_check_branch
        %5343 = sbr.rel (%p5341) target = $region132
      $region131: #{ffm_b2.2} parent=103 // pred_region
        %p5344 = scmp.lt.s32.totalorder %s36, 1
        %s5345 = scalar_select %p5344, %s36, 1
        %s5346 = smul.addr %s5345, 4
        %s5347 = scalar_lea.vmem %s13, %s5346
      $region132: #{ffm_b2.2} parent=103 // pred_fallthru
        _
      // Predicated region
      $region133: #{ffm_b2.2} parent=103 // pred_check
        %p5348 = pneg %p442
      $region134: #{ffm_b2.2} parent=103 // pred_check_branch
        %5350 = sbr.rel (%p5348) target = $region136
      $region135: #{ffm_b2.2} parent=103 // pred_region
        %p5351 = scmp.lt.s32.totalorder %s36, 1
        %s5352 = scalar_select %p5351, %s36, 1
        %s5353 = smul.addr %s5352, 4
        %s5354 = scalar_lea.vmem %s14, %s5353
      $region136: #{ffm_b2.2} parent=103 // pred_fallthru
        _
      // Predicated region
      $region137: #{ffm_b2.2} parent=103 // pred_check
        %p5355 = pneg %p468
      $region138: #{ffm_b2.2} parent=103 // pred_check_branch
        %5357 = sbr.rel (%p5355) target = $region140
      $region139: #{ffm_b2.2} parent=103 // pred_region
        %p5358 = scmp.lt.s32.totalorder %s36, 1
        %s5359 = scalar_select %p5358, %s36, 1
        %s5360 = smul.addr %s5359, 4
        %s5361 = scalar_lea.vmem %s15, %s5360
      $region140: #{ffm_b2.2} parent=103 // pred_fallthru
        _
      // Predicated region
      $region141: #{ffm_b2.2} parent=103 // pred_check
        %p5362 = pneg %p494
      $region142: #{ffm_b2.2} parent=103 // pred_check_branch
        %5364 = sbr.rel (%p5362) target = $region144
      $region143: #{ffm_b2.2} parent=103 // pred_region
        %p5365 = scmp.lt.s32.totalorder %s36, 1
        %s5366 = scalar_select %p5365, %s36, 1
        %s5367 = smul.addr %s5366, 4
        %s5368 = scalar_lea.vmem %s16, %s5367
      $region144: #{ffm_b2.2} parent=103 // pred_fallthru
        _
      // Predicated region
      $region145: #{ffm_b2.2} parent=103 // pred_check
        %p5369 = pneg %p520
      $region146: #{ffm_b2.2} parent=103 // pred_check_branch
        %5371 = sbr.rel (%p5369) target = $region148
      $region147: #{ffm_b2.2} parent=103 // pred_region
        %p5372 = scmp.lt.s32.totalorder %s36, 1
        %s5373 = scalar_select %p5372, %s36, 1
        %s5374 = smul.addr %s5373, 4
        %s5375 = scalar_lea.vmem %s17, %s5374
      $region148: #{ffm_b2.2} parent=103 // pred_fallthru
        _
      // Predicated region
      $region149: #{ffm_b2.2} parent=103 // pred_check
        %p5376 = pneg %p546
      $region150: #{ffm_b2.2} parent=103 // pred_check_branch
        %5378 = sbr.rel (%p5376) target = $region152
      $region151: #{ffm_b2.2} parent=103 // pred_region
        %p5379 = scmp.lt.s32.totalorder %s36, 1
        %s5380 = scalar_select %p5379, %s36, 1
        %s5381 = smul.addr %s5380, 4
        %s5382 = scalar_lea.vmem %s18, %s5381
      $region152: #{ffm_b2.2} parent=103 // pred_fallthru
        _
    $region104: #{ffm_b2.2} parent=5 // pred_fallthru
      _
  $region6: #{ffm_b2.2} parent=0 // loop_footer
    %s29 = sadd.s32 1, %s25
  $region7: #{ffm_b2.2} parent=0 // loop_footer_branch
    %24 = sbr.rel target = $region3
  $region8: #{ffm_b2.2} parent=0 // loop_exit
    _

// kernel: ffm_b2.3
$region0: #{ffm_b2.3}
  #allocation0 [shape = 'u32[]', space=smem, size = 0x4, offset = 0x4, fixed_abs, tag = 'smem constant byte address 0x4 - core index']
  #allocation1 [shape = 'u32[72,128]{1,0:T(1,128)}', space=vmem, size = 0x9000, scoped, tag = 'internal scratch']
  %s0 = inlined_call_operand.vmem [shape: f32[2,4,256], index: 0, kind: input, shape index: {}]
  %s1 = inlined_call_operand.vmem [shape: f32[2,4,256], index: 1, kind: input, shape index: {}]
  %s2 = inlined_call_operand.vmem [shape: f32[2,4,256], index: 2, kind: input, shape index: {}]
  %s3 = inlined_call_operand.vmem [shape: f32[2,4,256], index: 3, kind: input, shape index: {}]
  %s4 = inlined_call_operand.vmem [shape: f32[2,4,256], index: 4, kind: input, shape index: {}]
  %s5 = inlined_call_operand.vmem [shape: f32[2,4,256], index: 5, kind: input, shape index: {}]
  %s6 = inlined_call_operand.vmem [shape: f32[2,4,3], index: 6, kind: input, shape index: {}]
  %s7 = inlined_call_operand.vmem [shape: f32[2,4,3], index: 7, kind: input, shape index: {}]
  %s8 = inlined_call_operand.vmem [shape: f32[2,4,3], index: 8, kind: input, shape index: {}]
  %s9 = inlined_call_operand.vmem [shape: f32[2,4,3], index: 9, kind: input, shape index: {}]
  %s10 = inlined_call_operand.vmem [shape: f32[2,4,3], index: 10, kind: input, shape index: {}]
  %s11 = inlined_call_operand.vmem [shape: f32[2,4,3], index: 11, kind: input, shape index: {}]
  %s12 = inlined_call_operand.vmem [shape: f32[32,4], index: 12, kind: input, shape index: {}]
  %s13 = inlined_call_operand.vmem [shape: f32[32,4], index: 13, kind: input, shape index: {}]
  %s14 = inlined_call_operand.vmem [shape: f32[32,4], index: 14, kind: input, shape index: {}]
  %s15 = inlined_call_operand.vmem [shape: f32[32,4], index: 15, kind: input, shape index: {}]
  %s16 = inlined_call_operand.vmem [shape: f32[32,4], index: 16, kind: input, shape index: {}]
  %s17 = inlined_call_operand.vmem [shape: f32[32,4], index: 17, kind: input, shape index: {}]
  %s18 = inlined_call_operand.vmem [shape: f32[2,32,256], index: 18, kind: output, shape index: {}]
  %s19 = sld [smem:[#allocation0]]
  $region105: #{ffm_b2.3} parent=0
    _
  %s21 = ssub.s32 1, %s19
  %s22 = scalar_select 0, %s21, %s19
  loop: start=0, step=1, limit=4
  $region2: #{ffm_b2.3} parent=0 // loop_pre_header
    _
  $region3: #{ffm_b2.3} parent=0 // loop_header
    %s24 = sphi 0, %s28
    %p25 = scmp.ge.s32.totalorder %s24, 4
    %s31 = sphi 0, %s43
    %s32 = sphi 0, %s39
    %s33 = sphi 0, %s31
    %s34 = sphi 0, %s32
    %s35 = sphi 0, %s33
    %s36 = sphi 0, %s34
    %s48 = sphi 0, %s50
    %s51 = sphi 0, %s48
    %s52 = sphi 0, %s51
    %s68 = sphi 0, %s52
    %s76 = sphi 0, %s78
    %s79 = sphi 0, %s76
    %s80 = sphi 0, %s79
    %s96 = sphi 0, %s80
    %s104 = sphi 0, %s106
    %s107 = sphi 0, %s104
    %s108 = sphi 0, %s107
    %s124 = sphi 0, %s108
    %s132 = sphi 0, %s134
    %s135 = sphi 0, %s132
    %s136 = sphi 0, %s135
    %s152 = sphi 0, %s136
    %s160 = sphi 0, %s162
    %s163 = sphi 0, %s160
    %s164 = sphi 0, %s163
    %s180 = sphi 0, %s164
    %s188 = sphi 0, %s190
    %s191 = sphi 0, %s188
    %s192 = sphi 0, %s191
    %s208 = sphi 0, %s192
    %s214 = sphi 0, %s216
    %s217 = sphi 0, %s214
    %s218 = sphi 0, %s217
    %s234 = sphi 0, %s218
    %s240 = sphi 0, %s242
    %s243 = sphi 0, %s240
    %s244 = sphi 0, %s243
    %s260 = sphi 0, %s244
    %s266 = sphi 0, %s268
    %s269 = sphi 0, %s266
    %s270 = sphi 0, %s269
    %s286 = sphi 0, %s270
    %s292 = sphi 0, %s294
    %s295 = sphi 0, %s292
    %s296 = sphi 0, %s295
    %s312 = sphi 0, %s296
    %s318 = sphi 0, %s320
    %s321 = sphi 0, %s318
    %s322 = sphi 0, %s321
    %s338 = sphi 0, %s322
    %s344 = sphi 0, %s346
    %s347 = sphi 0, %s344
    %s348 = sphi 0, %s347
    %s364 = sphi 0, %s348
    %s368 = sphi 0, %s368
    %s370 = sphi 0, %s368
    %s371 = sphi 0, %s370
    %s385 = sphi 0, %s371
    %s389 = sphi 0, %s389
    %s391 = sphi 0, %s389
    %s392 = sphi 0, %s391
    %s406 = sphi 0, %s392
    %s410 = sphi 0, %s410
    %s412 = sphi 0, %s410
    %s413 = sphi 0, %s412
    %s427 = sphi 0, %s413
    %s431 = sphi 0, %s431
    %s433 = sphi 0, %s431
    %s434 = sphi 0, %s433
    %s448 = sphi 0, %s434
    %s452 = sphi 0, %s452
    %s454 = sphi 0, %s452
    %s455 = sphi 0, %s454
    %s469 = sphi 0, %s455
    %s473 = sphi 0, %s473
    %s475 = sphi 0, %s473
    %s476 = sphi 0, %s475
    %s490 = sphi 0, %s476
    %s498 = sphi 0, %s500
    %s501 = sphi 0, %s498
    %s502 = sphi 0, %s501
    %s518 = sphi 0, %s502
  $region4: #{ffm_b2.3} parent=0 // loop_header_branch
    %27 = sbr.rel (%p25) target = $region8
  $region5: #{ffm_b2.3} parent=0 // loop_body
    %s29 = ssub.s32 %s24, 1
    %s30 = ssub.s32 %s24, 2
    %s37 = sadd.s32 1, %s32
    %p38 = scmp.ge.s32.totalorder %s37, 1
    %s39 = scalar_select %p38, 0, %s37
    %s40 = sadd.s32 1, %s31
    %s41 = scalar_select %p38, %s40, %s31
    %p42 = scmp.ge.s32.totalorder %s41, 2
    %s43 = scalar_select %p42, 0, %s41
    %s44 = ssub.s32 %s31, %s43
    %s45 = ssub.s32 %s32, %s39
    %s46 = sor.u32 %s44, %s45
    %p47 = scmp.eq.s32.totalorder %s46, 0
    %s49 = sadd.s32 %s48, 1
    %s50 = scalar_select %p47, %s48, %s49
    %p53 = pneg %p47
    %p54 = scmp.eq.s32.totalorder %s24, 1
    %p55 = por %p53, %p54
    %p56 = scmp.ne.s32.totalorder %s48, %s51
    %p57 = scmp.eq.s32.totalorder %s24, 0
    %p58 = por %p56, %p57
    %p59 = scmp.ne.s32.totalorder %s48, %s51
    %p60 = scmp.eq.s32.totalorder %s29, 1
    %p61 = por %p59, %p60
    %p62 = scmp.ne.s32.totalorder %s51, %s52
    %p63 = scmp.eq.s32.totalorder %s29, 0
    %p64 = por %p62, %p63
    %p65 = scmp.ne.s32.totalorder %s51, %s52
    %p66 = scmp.eq.s32.totalorder %s30, 1
    %p67 = por %p65, %p66
    %p69 = scmp.ne.s32.totalorder %s52, %s68
    %p70 = scmp.eq.s32.totalorder %s30, 0
    %p71 = por %p69, %p70
    %s72 = ssub.s32 %s31, %s43
    %s73 = ssub.s32 %s32, %s39
    %s74 = sor.u32 %s72, %s73
    %p75 = scmp.eq.s32.totalorder %s74, 0
    %s77 = sadd.s32 %s76, 1
    %s78 = scalar_select %p75, %s76, %s77
    %p81 = pneg %p75
    %p82 = scmp.eq.s32.totalorder %s24, 1
    %p83 = por %p81, %p82
    %p84 = scmp.ne.s32.totalorder %s76, %s79
    %p85 = scmp.eq.s32.totalorder %s24, 0
    %p86 = por %p84, %p85
    %p87 = scmp.ne.s32.totalorder %s76, %s79
    %p88 = scmp.eq.s32.totalorder %s29, 1
    %p89 = por %p87, %p88
    %p90 = scmp.ne.s32.totalorder %s79, %s80
    %p91 = scmp.eq.s32.totalorder %s29, 0
    %p92 = por %p90, %p91
    %p93 = scmp.ne.s32.totalorder %s79, %s80
    %p94 = scmp.eq.s32.totalorder %s30, 1
    %p95 = por %p93, %p94
    %p97 = scmp.ne.s32.totalorder %s80, %s96
    %p98 = scmp.eq.s32.totalorder %s30, 0
    %p99 = por %p97, %p98
    %s100 = ssub.s32 %s31, %s43
    %s101 = ssub.s32 %s32, %s39
    %s102 = sor.u32 %s100, %s101
    %p103 = scmp.eq.s32.totalorder %s102, 0
    %s105 = sadd.s32 %s104, 1
    %s106 = scalar_select %p103, %s104, %s105
    %p109 = pneg %p103
    %p110 = scmp.eq.s32.totalorder %s24, 1
    %p111 = por %p109, %p110
    %p112 = scmp.ne.s32.totalorder %s104, %s107
    %p113 = scmp.eq.s32.totalorder %s24, 0
    %p114 = por %p112, %p113
    %p115 = scmp.ne.s32.totalorder %s104, %s107
    %p116 = scmp.eq.s32.totalorder %s29, 1
    %p117 = por %p115, %p116
    %p118 = scmp.ne.s32.totalorder %s107, %s108
    %p119 = scmp.eq.s32.totalorder %s29, 0
    %p120 = por %p118, %p119
    %p121 = scmp.ne.s32.totalorder %s107, %s108
    %p122 = scmp.eq.s32.totalorder %s30, 1
    %p123 = por %p121, %p122
    %p125 = scmp.ne.s32.totalorder %s108, %s124
    %p126 = scmp.eq.s32.totalorder %s30, 0
    %p127 = por %p125, %p126
    %s128 = ssub.s32 %s31, %s43
    %s129 = ssub.s32 %s32, %s39
    %s130 = sor.u32 %s128, %s129
    %p131 = scmp.eq.s32.totalorder %s130, 0
    %s133 = sadd.s32 %s132, 1
    %s134 = scalar_select %p131, %s132, %s133
    %p137 = pneg %p131
    %p138 = scmp.eq.s32.totalorder %s24, 1
    %p139 = por %p137, %p138
    %p140 = scmp.ne.s32.totalorder %s132, %s135
    %p141 = scmp.eq.s32.totalorder %s24, 0
    %p142 = por %p140, %p141
    %p143 = scmp.ne.s32.totalorder %s132, %s135
    %p144 = scmp.eq.s32.totalorder %s29, 1
    %p145 = por %p143, %p144
    %p146 = scmp.ne.s32.totalorder %s135, %s136
    %p147 = scmp.eq.s32.totalorder %s29, 0
    %p148 = por %p146, %p147
    %p149 = scmp.ne.s32.totalorder %s135, %s136
    %p150 = scmp.eq.s32.totalorder %s30, 1
    %p151 = por %p149, %p150
    %p153 = scmp.ne.s32.totalorder %s136, %s152
    %p154 = scmp.eq.s32.totalorder %s30, 0
    %p155 = por %p153, %p154
    %s156 = ssub.s32 %s31, %s43
    %s157 = ssub.s32 %s32, %s39
    %s158 = sor.u32 %s156, %s157
    %p159 = scmp.eq.s32.totalorder %s158, 0
    %s161 = sadd.s32 %s160, 1
    %s162 = scalar_select %p159, %s160, %s161
    %p165 = pneg %p159
    %p166 = scmp.eq.s32.totalorder %s24, 1
    %p167 = por %p165, %p166
    %p168 = scmp.ne.s32.totalorder %s160, %s163
    %p169 = scmp.eq.s32.totalorder %s24, 0
    %p170 = por %p168, %p169
    %p171 = scmp.ne.s32.totalorder %s160, %s163
    %p172 = scmp.eq.s32.totalorder %s29, 1
    %p173 = por %p171, %p172
    %p174 = scmp.ne.s32.totalorder %s163, %s164
    %p175 = scmp.eq.s32.totalorder %s29, 0
    %p176 = por %p174, %p175
    %p177 = scmp.ne.s32.totalorder %s163, %s164
    %p178 = scmp.eq.s32.totalorder %s30, 1
    %p179 = por %p177, %p178
    %p181 = scmp.ne.s32.totalorder %s164, %s180
    %p182 = scmp.eq.s32.totalorder %s30, 0
    %p183 = por %p181, %p182
    %s184 = ssub.s32 %s31, %s43
    %s185 = ssub.s32 %s32, %s39
    %s186 = sor.u32 %s184, %s185
    %p187 = scmp.eq.s32.totalorder %s186, 0
    %s189 = sadd.s32 %s188, 1
    %s190 = scalar_select %p187, %s188, %s189
    %p193 = pneg %p187
    %p194 = scmp.eq.s32.totalorder %s24, 1
    %p195 = por %p193, %p194
    %p196 = scmp.ne.s32.totalorder %s188, %s191
    %p197 = scmp.eq.s32.totalorder %s24, 0
    %p198 = por %p196, %p197
    %p199 = scmp.ne.s32.totalorder %s188, %s191
    %p200 = scmp.eq.s32.totalorder %s29, 1
    %p201 = por %p199, %p200
    %p202 = scmp.ne.s32.totalorder %s191, %s192
    %p203 = scmp.eq.s32.totalorder %s29, 0
    %p204 = por %p202, %p203
    %p205 = scmp.ne.s32.totalorder %s191, %s192
    %p206 = scmp.eq.s32.totalorder %s30, 1
    %p207 = por %p205, %p206
    %p209 = scmp.ne.s32.totalorder %s192, %s208
    %p210 = scmp.eq.s32.totalorder %s30, 0
    %p211 = por %p209, %p210
    %s212 = ssub.s32 %s31, %s43
    %p213 = scmp.eq.s32.totalorder %s212, 0
    %s215 = sadd.s32 %s214, 1
    %s216 = scalar_select %p213, %s214, %s215
    %p219 = pneg %p213
    %p220 = scmp.eq.s32.totalorder %s24, 1
    %p221 = por %p219, %p220
    %p222 = scmp.ne.s32.totalorder %s214, %s217
    %p223 = scmp.eq.s32.totalorder %s24, 0
    %p224 = por %p222, %p223
    %p225 = scmp.ne.s32.totalorder %s214, %s217
    %p226 = scmp.eq.s32.totalorder %s29, 1
    %p227 = por %p225, %p226
    %p228 = scmp.ne.s32.totalorder %s217, %s218
    %p229 = scmp.eq.s32.totalorder %s29, 0
    %p230 = por %p228, %p229
    %p231 = scmp.ne.s32.totalorder %s217, %s218
    %p232 = scmp.eq.s32.totalorder %s30, 1
    %p233 = por %p231, %p232
    %p235 = scmp.ne.s32.totalorder %s218, %s234
    %p236 = scmp.eq.s32.totalorder %s30, 0
    %p237 = por %p235, %p236
    %s238 = ssub.s32 %s31, %s43
    %p239 = scmp.eq.s32.totalorder %s238, 0
    %s241 = sadd.s32 %s240, 1
    %s242 = scalar_select %p239, %s240, %s241
    %p245 = pneg %p239
    %p246 = scmp.eq.s32.totalorder %s24, 1
    %p247 = por %p245, %p246
    %p248 = scmp.ne.s32.totalorder %s240, %s243
    %p249 = scmp.eq.s32.totalorder %s24, 0
    %p250 = por %p248, %p249
    %p251 = scmp.ne.s32.totalorder %s240, %s243
    %p252 = scmp.eq.s32.totalorder %s29, 1
    %p253 = por %p251, %p252
    %p254 = scmp.ne.s32.totalorder %s243, %s244
    %p255 = scmp.eq.s32.totalorder %s29, 0
    %p256 = por %p254, %p255
    %p257 = scmp.ne.s32.totalorder %s243, %s244
    %p258 = scmp.eq.s32.totalorder %s30, 1
    %p259 = por %p257, %p258
    %p261 = scmp.ne.s32.totalorder %s244, %s260
    %p262 = scmp.eq.s32.totalorder %s30, 0
    %p263 = por %p261, %p262
    %s264 = ssub.s32 %s31, %s43
    %p265 = scmp.eq.s32.totalorder %s264, 0
    %s267 = sadd.s32 %s266, 1
    %s268 = scalar_select %p265, %s266, %s267
    %p271 = pneg %p265
    %p272 = scmp.eq.s32.totalorder %s24, 1
    %p273 = por %p271, %p272
    %p274 = scmp.ne.s32.totalorder %s266, %s269
    %p275 = scmp.eq.s32.totalorder %s24, 0
    %p276 = por %p274, %p275
    %p277 = scmp.ne.s32.totalorder %s266, %s269
    %p278 = scmp.eq.s32.totalorder %s29, 1
    %p279 = por %p277, %p278
    %p280 = scmp.ne.s32.totalorder %s269, %s270
    %p281 = scmp.eq.s32.totalorder %s29, 0
    %p282 = por %p280, %p281
    %p283 = scmp.ne.s32.totalorder %s269, %s270
    %p284 = scmp.eq.s32.totalorder %s30, 1
    %p285 = por %p283, %p284
    %p287 = scmp.ne.s32.totalorder %s270, %s286
    %p288 = scmp.eq.s32.totalorder %s30, 0
    %p289 = por %p287, %p288
    %s290 = ssub.s32 %s31, %s43
    %p291 = scmp.eq.s32.totalorder %s290, 0
    %s293 = sadd.s32 %s292, 1
    %s294 = scalar_select %p291, %s292, %s293
    %p297 = pneg %p291
    %p298 = scmp.eq.s32.totalorder %s24, 1
    %p299 = por %p297, %p298
    %p300 = scmp.ne.s32.totalorder %s292, %s295
    %p301 = scmp.eq.s32.totalorder %s24, 0
    %p302 = por %p300, %p301
    %p303 = scmp.ne.s32.totalorder %s292, %s295
    %p304 = scmp.eq.s32.totalorder %s29, 1
    %p305 = por %p303, %p304
    %p306 = scmp.ne.s32.totalorder %s295, %s296
    %p307 = scmp.eq.s32.totalorder %s29, 0
    %p308 = por %p306, %p307
    %p309 = scmp.ne.s32.totalorder %s295, %s296
    %p310 = scmp.eq.s32.totalorder %s30, 1
    %p311 = por %p309, %p310
    %p313 = scmp.ne.s32.totalorder %s296, %s312
    %p314 = scmp.eq.s32.totalorder %s30, 0
    %p315 = por %p313, %p314
    %s316 = ssub.s32 %s31, %s43
    %p317 = scmp.eq.s32.totalorder %s316, 0
    %s319 = sadd.s32 %s318, 1
    %s320 = scalar_select %p317, %s318, %s319
    %p323 = pneg %p317
    %p324 = scmp.eq.s32.totalorder %s24, 1
    %p325 = por %p323, %p324
    %p326 = scmp.ne.s32.totalorder %s318, %s321
    %p327 = scmp.eq.s32.totalorder %s24, 0
    %p328 = por %p326, %p327
    %p329 = scmp.ne.s32.totalorder %s318, %s321
    %p330 = scmp.eq.s32.totalorder %s29, 1
    %p331 = por %p329, %p330
    %p332 = scmp.ne.s32.totalorder %s321, %s322
    %p333 = scmp.eq.s32.totalorder %s29, 0
    %p334 = por %p332, %p333
    %p335 = scmp.ne.s32.totalorder %s321, %s322
    %p336 = scmp.eq.s32.totalorder %s30, 1
    %p337 = por %p335, %p336
    %p339 = scmp.ne.s32.totalorder %s322, %s338
    %p340 = scmp.eq.s32.totalorder %s30, 0
    %p341 = por %p339, %p340
    %s342 = ssub.s32 %s31, %s43
    %p343 = scmp.eq.s32.totalorder %s342, 0
    %s345 = sadd.s32 %s344, 1
    %s346 = scalar_select %p343, %s344, %s345
    %p349 = pneg %p343
    %p350 = scmp.eq.s32.totalorder %s24, 1
    %p351 = por %p349, %p350
    %p352 = scmp.ne.s32.totalorder %s344, %s347
    %p353 = scmp.eq.s32.totalorder %s24, 0
    %p354 = por %p352, %p353
    %p355 = scmp.ne.s32.totalorder %s344, %s347
    %p356 = scmp.eq.s32.totalorder %s29, 1
    %p357 = por %p355, %p356
    %p358 = scmp.ne.s32.totalorder %s347, %s348
    %p359 = scmp.eq.s32.totalorder %s29, 0
    %p360 = por %p358, %p359
    %p361 = scmp.ne.s32.totalorder %s347, %s348
    %p362 = scmp.eq.s32.totalorder %s30, 1
    %p363 = por %p361, %p362
    %p365 = scmp.ne.s32.totalorder %s348, %s364
    %p366 = scmp.eq.s32.totalorder %s30, 0
    %p367 = por %p365, %p366
    %s369 = sadd.s32 %s368, 1
    %p372 = scmp.eq.s32.totalorder %s24, 1
    %p373 = scmp.ne.s32.totalorder %s368, %s370
    %p374 = scmp.eq.s32.totalorder %s24, 0
    %p375 = por %p373, %p374
    %p376 = scmp.ne.s32.totalorder %s368, %s370
    %p377 = scmp.eq.s32.totalorder %s29, 1
    %p378 = por %p376, %p377
    %p379 = scmp.ne.s32.totalorder %s370, %s371
    %p380 = scmp.eq.s32.totalorder %s29, 0
    %p381 = por %p379, %p380
    %p382 = scmp.ne.s32.totalorder %s370, %s371
    %p383 = scmp.eq.s32.totalorder %s30, 1
    %p384 = por %p382, %p383
    %p386 = scmp.ne.s32.totalorder %s371, %s385
    %p387 = scmp.eq.s32.totalorder %s30, 0
    %p388 = por %p386, %p387
    %s390 = sadd.s32 %s389, 1
    %p393 = scmp.eq.s32.totalorder %s24, 1
    %p394 = scmp.ne.s32.totalorder %s389, %s391
    %p395 = scmp.eq.s32.totalorder %s24, 0
    %p396 = por %p394, %p395
    %p397 = scmp.ne.s32.totalorder %s389, %s391
    %p398 = scmp.eq.s32.totalorder %s29, 1
    %p399 = por %p397, %p398
    %p400 = scmp.ne.s32.totalorder %s391, %s392
    %p401 = scmp.eq.s32.totalorder %s29, 0
    %p402 = por %p400, %p401
    %p403 = scmp.ne.s32.totalorder %s391, %s392
    %p404 = scmp.eq.s32.totalorder %s30, 1
    %p405 = por %p403, %p404
    %p407 = scmp.ne.s32.totalorder %s392, %s406
    %p408 = scmp.eq.s32.totalorder %s30, 0
    %p409 = por %p407, %p408
    %s411 = sadd.s32 %s410, 1
    %p414 = scmp.eq.s32.totalorder %s24, 1
    %p415 = scmp.ne.s32.totalorder %s410, %s412
    %p416 = scmp.eq.s32.totalorder %s24, 0
    %p417 = por %p415, %p416
    %p418 = scmp.ne.s32.totalorder %s410, %s412
    %p419 = scmp.eq.s32.totalorder %s29, 1
    %p420 = por %p418, %p419
    %p421 = scmp.ne.s32.totalorder %s412, %s413
    %p422 = scmp.eq.s32.totalorder %s29, 0
    %p423 = por %p421, %p422
    %p424 = scmp.ne.s32.totalorder %s412, %s413
    %p425 = scmp.eq.s32.totalorder %s30, 1
    %p426 = por %p424, %p425
    %p428 = scmp.ne.s32.totalorder %s413, %s427
    %p429 = scmp.eq.s32.totalorder %s30, 0
    %p430 = por %p428, %p429
    %s432 = sadd.s32 %s431, 1
    %p435 = scmp.eq.s32.totalorder %s24, 1
    %p436 = scmp.ne.s32.totalorder %s431, %s433
    %p437 = scmp.eq.s32.totalorder %s24, 0
    %p438 = por %p436, %p437
    %p439 = scmp.ne.s32.totalorder %s431, %s433
    %p440 = scmp.eq.s32.totalorder %s29, 1
    %p441 = por %p439, %p440
    %p442 = scmp.ne.s32.totalorder %s433, %s434
    %p443 = scmp.eq.s32.totalorder %s29, 0
    %p444 = por %p442, %p443
    %p445 = scmp.ne.s32.totalorder %s433, %s434
    %p446 = scmp.eq.s32.totalorder %s30, 1
    %p447 = por %p445, %p446
    %p449 = scmp.ne.s32.totalorder %s434, %s448
    %p450 = scmp.eq.s32.totalorder %s30, 0
    %p451 = por %p449, %p450
    %s453 = sadd.s32 %s452, 1
    %p456 = scmp.eq.s32.totalorder %s24, 1
    %p457 = scmp.ne.s32.totalorder %s452, %s454
    %p458 = scmp.eq.s32.totalorder %s24, 0
    %p459 = por %p457, %p458
    %p460 = scmp.ne.s32.totalorder %s452, %s454
    %p461 = scmp.eq.s32.totalorder %s29, 1
    %p462 = por %p460, %p461
    %p463 = scmp.ne.s32.totalorder %s454, %s455
    %p464 = scmp.eq.s32.totalorder %s29, 0
    %p465 = por %p463, %p464
    %p466 = scmp.ne.s32.totalorder %s454, %s455
    %p467 = scmp.eq.s32.totalorder %s30, 1
    %p468 = por %p466, %p467
    %p470 = scmp.ne.s32.totalorder %s455, %s469
    %p471 = scmp.eq.s32.totalorder %s30, 0
    %p472 = por %p470, %p471
    %s474 = sadd.s32 %s473, 1
    %p477 = scmp.eq.s32.totalorder %s24, 1
    %p478 = scmp.ne.s32.totalorder %s473, %s475
    %p479 = scmp.eq.s32.totalorder %s24, 0
    %p480 = por %p478, %p479
    %p481 = scmp.ne.s32.totalorder %s473, %s475
    %p482 = scmp.eq.s32.totalorder %s29, 1
    %p483 = por %p481, %p482
    %p484 = scmp.ne.s32.totalorder %s475, %s476
    %p485 = scmp.eq.s32.totalorder %s29, 0
    %p486 = por %p484, %p485
    %p487 = scmp.ne.s32.totalorder %s475, %s476
    %p488 = scmp.eq.s32.totalorder %s30, 1
    %p489 = por %p487, %p488
    %p491 = scmp.ne.s32.totalorder %s476, %s490
    %p492 = scmp.eq.s32.totalorder %s30, 0
    %p493 = por %p491, %p492
    %s494 = ssub.s32 %s31, %s43
    %s495 = ssub.s32 %s32, %s39
    %s496 = sor.u32 %s494, %s495
    %p497 = scmp.eq.s32.totalorder %s496, 0
    %s499 = sadd.s32 %s498, 1
    %s500 = scalar_select %p497, %s498, %s499
    %p503 = pneg %p497
    %p504 = scmp.eq.s32.totalorder %s24, 1
    %p505 = por %p503, %p504
    %p506 = scmp.ne.s32.totalorder %s498, %s501
    %p507 = scmp.eq.s32.totalorder %s24, 0
    %p508 = por %p506, %p507
    %p509 = scmp.ne.s32.totalorder %s498, %s501
    %p510 = scmp.eq.s32.totalorder %s29, 1
    %p511 = por %p509, %p510
    %p512 = scmp.ne.s32.totalorder %s501, %s502
    %p513 = scmp.eq.s32.totalorder %s29, 0
    %p514 = por %p512, %p513
    %p515 = scmp.ne.s32.totalorder %s501, %s502
    %p516 = scmp.eq.s32.totalorder %s30, 1
    %p517 = por %p515, %p516
    %p519 = scmp.ne.s32.totalorder %s502, %s518
    %p520 = scmp.eq.s32.totalorder %s30, 0
    %p521 = por %p519, %p520
    %p522 = scmp.le.s32.totalorder 1, %s24
    %p523 = scmp.lt.s32.totalorder %s24, 3
    %p524 = pnand %p522, %p523
    %p525 = pneg %p524
    // Predicated region
    $region9: #{ffm_b2.3} parent=5 // pred_check
      _
    $region10: #{ffm_b2.3} parent=5 // pred_check_branch
      %527 = sbr.rel (%p524) target = $region12
    $region11: #{ffm_b2.3} parent=5 // pred_region
      %s528 = ssub.s32 %s24, 1
      // Predicated region
      $region13: #{ffm_b2.3} parent=11 // pred_check
        %p529 = pneg %p381
      $region14: #{ffm_b2.3} parent=11 // pred_check_branch
        %531 = sbr.rel (%p529) target = $region16
      $region15: #{ffm_b2.3} parent=11 // pred_region
        _
      $region16: #{ffm_b2.3} parent=11 // pred_fallthru
        _
      // Predicated region
      $region17: #{ffm_b2.3} parent=11 // pred_check
        %p532 = pneg %p402
      $region18: #{ffm_b2.3} parent=11 // pred_check_branch
        %534 = sbr.rel (%p532) target = $region20
      $region19: #{ffm_b2.3} parent=11 // pred_region
        _
      $region20: #{ffm_b2.3} parent=11 // pred_fallthru
        _
      // Predicated region
      $region21: #{ffm_b2.3} parent=11 // pred_check
        %p535 = pneg %p423
      $region22: #{ffm_b2.3} parent=11 // pred_check_branch
        %537 = sbr.rel (%p535) target = $region24
      $region23: #{ffm_b2.3} parent=11 // pred_region
        _
      $region24: #{ffm_b2.3} parent=11 // pred_fallthru
        _
      // Predicated region
      $region25: #{ffm_b2.3} parent=11 // pred_check
        %p538 = pneg %p444
      $region26: #{ffm_b2.3} parent=11 // pred_check_branch
        %540 = sbr.rel (%p538) target = $region28
      $region27: #{ffm_b2.3} parent=11 // pred_region
        _
      $region28: #{ffm_b2.3} parent=11 // pred_fallthru
        _
      // Predicated region
      $region29: #{ffm_b2.3} parent=11 // pred_check
        %p541 = pneg %p465
      $region30: #{ffm_b2.3} parent=11 // pred_check_branch
        %543 = sbr.rel (%p541) target = $region32
      $region31: #{ffm_b2.3} parent=11 // pred_region
        _
      $region32: #{ffm_b2.3} parent=11 // pred_fallthru
        _
      // Predicated region
      $region33: #{ffm_b2.3} parent=11 // pred_check
        %p544 = pneg %p486
      $region34: #{ffm_b2.3} parent=11 // pred_check_branch
        %546 = sbr.rel (%p544) target = $region36
      $region35: #{ffm_b2.3} parent=11 // pred_region
        _
      $region36: #{ffm_b2.3} parent=11 // pred_fallthru
        _
    $region12: #{ffm_b2.3} parent=5 // pred_fallthru
      _
    %p547 = scmp.lt.s32.totalorder %s24, 2
    // Predicated region
    $region37: #{ffm_b2.3} parent=5 // pred_check
      %p548 = pneg %p547
    $region38: #{ffm_b2.3} parent=5 // pred_check_branch
      %550 = sbr.rel (%p548) target = $region40
    $region39: #{ffm_b2.3} parent=5 // pred_region
      // Predicated region
      $region41: #{ffm_b2.3} parent=39 // pred_check
        %p551 = pneg %p58
      $region42: #{ffm_b2.3} parent=39 // pred_check_branch
        %553 = sbr.rel (%p551) target = $region44
      $region43: #{ffm_b2.3} parent=39 // pred_region
        %s554 = smul.u32 2, %s32
        %p555 = scmp.lt.s32.totalorder %s31, 1
        %s556 = scalar_select %p555, %s31, 1
        %p557 = scmp.lt.s32.totalorder %s554, 1
        %s558 = scalar_select %p557, %s554, 1
        %s559 = smul.addr %s556, 2
        %s560 = sadd.s32 %s558, %s559
        %s561 = smul.addr %s560, 4
        %s562 = scalar_lea.vmem %s0, %s561
        %s563 = smul.u32 2, %s32
      $region44: #{ffm_b2.3} parent=39 // pred_fallthru
        _
      // Predicated region
      $region45: #{ffm_b2.3} parent=39 // pred_check
        %p564 = pneg %p86
      $region46: #{ffm_b2.3} parent=39 // pred_check_branch
        %566 = sbr.rel (%p564) target = $region48
      $region47: #{ffm_b2.3} parent=39 // pred_region
        %s567 = smul.u32 2, %s32
        %p568 = scmp.lt.s32.totalorder %s31, 1
        %s569 = scalar_select %p568, %s31, 1
        %p570 = scmp.lt.s32.totalorder %s567, 1
        %s571 = scalar_select %p570, %s567, 1
        %s572 = smul.addr %s569, 2
        %s573 = sadd.s32 %s571, %s572
        %s574 = smul.addr %s573, 4
        %s575 = scalar_lea.vmem %s1, %s574
        %s576 = smul.u32 2, %s32
      $region48: #{ffm_b2.3} parent=39 // pred_fallthru
        _
      // Predicated region
      $region49: #{ffm_b2.3} parent=39 // pred_check
        %p577 = pneg %p114
      $region50: #{ffm_b2.3} parent=39 // pred_check_branch
        %579 = sbr.rel (%p577) target = $region52
      $region51: #{ffm_b2.3} parent=39 // pred_region
        %s580 = smul.u32 2, %s32
        %p581 = scmp.lt.s32.totalorder %s31, 1
        %s582 = scalar_select %p581, %s31, 1
        %p583 = scmp.lt.s32.totalorder %s580, 1
        %s584 = scalar_select %p583, %s580, 1
        %s585 = smul.addr %s582, 2
        %s586 = sadd.s32 %s584, %s585
        %s587 = smul.addr %s586, 4
        %s588 = scalar_lea.vmem %s2, %s587
        %s589 = smul.u32 2, %s32
      $region52: #{ffm_b2.3} parent=39 // pred_fallthru
        _
      // Predicated region
      $region53: #{ffm_b2.3} parent=39 // pred_check
        %p590 = pneg %p142
      $region54: #{ffm_b2.3} parent=39 // pred_check_branch
        %592 = sbr.rel (%p590) target = $region56
      $region55: #{ffm_b2.3} parent=39 // pred_region
        %s593 = smul.u32 2, %s32
        %p594 = scmp.lt.s32.totalorder %s31, 1
        %s595 = scalar_select %p594, %s31, 1
        %p596 = scmp.lt.s32.totalorder %s593, 1
        %s597 = scalar_select %p596, %s593, 1
        %s598 = smul.addr %s595, 2
        %s599 = sadd.s32 %s597, %s598
        %s600 = smul.addr %s599, 4
        %s601 = scalar_lea.vmem %s3, %s600
        %s602 = smul.u32 2, %s32
      $region56: #{ffm_b2.3} parent=39 // pred_fallthru
        _
      // Predicated region
      $region57: #{ffm_b2.3} parent=39 // pred_check
        %p603 = pneg %p170
      $region58: #{ffm_b2.3} parent=39 // pred_check_branch
        %605 = sbr.rel (%p603) target = $region60
      $region59: #{ffm_b2.3} parent=39 // pred_region
        %s606 = smul.u32 2, %s32
        %p607 = scmp.lt.s32.totalorder %s31, 1
        %s608 = scalar_select %p607, %s31, 1
        %p609 = scmp.lt.s32.totalorder %s606, 1
        %s610 = scalar_select %p609, %s606, 1
        %s611 = smul.addr %s608, 2
        %s612 = sadd.s32 %s610, %s611
        %s613 = smul.addr %s612, 4
        %s614 = scalar_lea.vmem %s4, %s613
        %s615 = smul.u32 2, %s32
      $region60: #{ffm_b2.3} parent=39 // pred_fallthru
        _
      // Predicated region
      $region61: #{ffm_b2.3} parent=39 // pred_check
        %p616 = pneg %p198
      $region62: #{ffm_b2.3} parent=39 // pred_check_branch
        %618 = sbr.rel (%p616) target = $region64
      $region63: #{ffm_b2.3} parent=39 // pred_region
        %s619 = smul.u32 2, %s32
        %p620 = scmp.lt.s32.totalorder %s31, 1
        %s621 = scalar_select %p620, %s31, 1
        %p622 = scmp.lt.s32.totalorder %s619, 1
        %s623 = scalar_select %p622, %s619, 1
        %s624 = smul.addr %s621, 2
        %s625 = sadd.s32 %s623, %s624
        %s626 = smul.addr %s625, 4
        %s627 = scalar_lea.vmem %s5, %s626
        %s628 = smul.u32 2, %s32
      $region64: #{ffm_b2.3} parent=39 // pred_fallthru
        _
      // Predicated region
      $region65: #{ffm_b2.3} parent=39 // pred_check
        %p629 = pneg %p224
      $region66: #{ffm_b2.3} parent=39 // pred_check_branch
        %631 = sbr.rel (%p629) target = $region68
      $region67: #{ffm_b2.3} parent=39 // pred_region
        %p632 = scmp.lt.s32.totalorder %s31, 1
        %s633 = scalar_select %p632, %s31, 1
        %s634 = smul.addr %s633, 4
        %s635 = scalar_lea.vmem %s6, %s634
      $region68: #{ffm_b2.3} parent=39 // pred_fallthru
        _
      // Predicated region
      $region69: #{ffm_b2.3} parent=39 // pred_check
        %p636 = pneg %p250
      $region70: #{ffm_b2.3} parent=39 // pred_check_branch
        %638 = sbr.rel (%p636) target = $region72
      $region71: #{ffm_b2.3} parent=39 // pred_region
        %p639 = scmp.lt.s32.totalorder %s31, 1
        %s640 = scalar_select %p639, %s31, 1
        %s641 = smul.addr %s640, 4
        %s642 = scalar_lea.vmem %s7, %s641
      $region72: #{ffm_b2.3} parent=39 // pred_fallthru
        _
      // Predicated region
      $region73: #{ffm_b2.3} parent=39 // pred_check
        %p643 = pneg %p276
      $region74: #{ffm_b2.3} parent=39 // pred_check_branch
        %645 = sbr.rel (%p643) target = $region76
      $region75: #{ffm_b2.3} parent=39 // pred_region
        %p646 = scmp.lt.s32.totalorder %s31, 1
        %s647 = scalar_select %p646, %s31, 1
        %s648 = smul.addr %s647, 4
        %s649 = scalar_lea.vmem %s8, %s648
      $region76: #{ffm_b2.3} parent=39 // pred_fallthru
        _
      // Predicated region
      $region77: #{ffm_b2.3} parent=39 // pred_check
        %p650 = pneg %p302
      $region78: #{ffm_b2.3} parent=39 // pred_check_branch
        %652 = sbr.rel (%p650) target = $region80
      $region79: #{ffm_b2.3} parent=39 // pred_region
        %p653 = scmp.lt.s32.totalorder %s31, 1
        %s654 = scalar_select %p653, %s31, 1
        %s655 = smul.addr %s654, 4
        %s656 = scalar_lea.vmem %s9, %s655
      $region80: #{ffm_b2.3} parent=39 // pred_fallthru
        _
      // Predicated region
      $region81: #{ffm_b2.3} parent=39 // pred_check
        %p657 = pneg %p328
      $region82: #{ffm_b2.3} parent=39 // pred_check_branch
        %659 = sbr.rel (%p657) target = $region84
      $region83: #{ffm_b2.3} parent=39 // pred_region
        %p660 = scmp.lt.s32.totalorder %s31, 1
        %s661 = scalar_select %p660, %s31, 1
        %s662 = smul.addr %s661, 4
        %s663 = scalar_lea.vmem %s10, %s662
      $region84: #{ffm_b2.3} parent=39 // pred_fallthru
        _
      // Predicated region
      $region85: #{ffm_b2.3} parent=39 // pred_check
        %p664 = pneg %p354
      $region86: #{ffm_b2.3} parent=39 // pred_check_branch
        %666 = sbr.rel (%p664) target = $region88
      $region87: #{ffm_b2.3} parent=39 // pred_region
        %p667 = scmp.lt.s32.totalorder %s31, 1
        %s668 = scalar_select %p667, %s31, 1
        %s669 = smul.addr %s668, 4
        %s670 = scalar_lea.vmem %s11, %s669
      $region88: #{ffm_b2.3} parent=39 // pred_fallthru
        _
    $region40: #{ffm_b2.3} parent=5 // pred_fallthru
      _
    %p671 = scmp.le.s32.totalorder 1, %s24
    %p672 = scmp.lt.s32.totalorder %s24, 3
    %p673 = pnand %p671, %p672
    %p674 = pneg %p673
    // Predicated region
    $region89: #{ffm_b2.3} parent=5 // pred_check
      _
    $region90: #{ffm_b2.3} parent=5 // pred_check_branch
      %676 = sbr.rel (%p673) target = $region92
    $region91: #{ffm_b2.3} parent=5 // pred_region
      %s677 = ssub.s32 %s24, 1
      %s678 = smul.u32 2, %s34
      %p679 = scmp.lt.s32.totalorder %s33, 1
      %s680 = scalar_select %p679, %s33, 1
      %p681 = scmp.lt.s32.totalorder %s678, 1
      %s682 = scalar_select %p681, %s678, 1
      %s683 = smul.addr %s680, 2
      %s684 = sadd.s32 %s682, %s683
      %s685 = smul.addr %s684, 4
      %s686 = scalar_lea.vmem %s0, %s685
      %p687 = pneg %p64
      %p688 = pneg %p61
      %s689 = smul.u32 2, %s34
      %p690 = scmp.lt.s32.totalorder %s33, 1
      %s691 = scalar_select %p690, %s33, 1
      %p692 = scmp.lt.s32.totalorder %s689, 1
      %s693 = scalar_select %p692, %s689, 1
      %s694 = smul.addr %s691, 2
      %s695 = sadd.s32 %s693, %s694
      %s696 = smul.addr %s695, 4
      %s697 = scalar_lea.vmem %s1, %s696
      %p698 = pneg %p92
      %p699 = pneg %p89
      %s700 = smul.u32 2, %s34
      %p701 = scmp.lt.s32.totalorder %s33, 1
      %s702 = scalar_select %p701, %s33, 1
      %p703 = scmp.lt.s32.totalorder %s700, 1
      %s704 = scalar_select %p703, %s700, 1
      %s705 = smul.addr %s702, 2
      %s706 = sadd.s32 %s704, %s705
      %s707 = smul.addr %s706, 4
      %s708 = scalar_lea.vmem %s2, %s707
      %p709 = pneg %p120
      %p710 = pneg %p117
      %s711 = smul.u32 2, %s34
      %p712 = scmp.lt.s32.totalorder %s33, 1
      %s713 = scalar_select %p712, %s33, 1
      %p714 = scmp.lt.s32.totalorder %s711, 1
      %s715 = scalar_select %p714, %s711, 1
      %s716 = smul.addr %s713, 2
      %s717 = sadd.s32 %s715, %s716
      %s718 = smul.addr %s717, 4
      %s719 = scalar_lea.vmem %s3, %s718
      %p720 = pneg %p148
      %p721 = pneg %p145
      %s722 = smul.u32 2, %s34
      %p723 = scmp.lt.s32.totalorder %s33, 1
      %s724 = scalar_select %p723, %s33, 1
      %p725 = scmp.lt.s32.totalorder %s722, 1
      %s726 = scalar_select %p725, %s722, 1
      %s727 = smul.addr %s724, 2
      %s728 = sadd.s32 %s726, %s727
      %s729 = smul.addr %s728, 4
      %s730 = scalar_lea.vmem %s4, %s729
      %p731 = pneg %p176
      %p732 = pneg %p173
      %s733 = smul.u32 2, %s34
      %p734 = scmp.lt.s32.totalorder %s33, 1
      %s735 = scalar_select %p734, %s33, 1
      %p736 = scmp.lt.s32.totalorder %s733, 1
      %s737 = scalar_select %p736, %s733, 1
      %s738 = smul.addr %s735, 2
      %s739 = sadd.s32 %s737, %s738
      %s740 = smul.addr %s739, 4
      %s741 = scalar_lea.vmem %s5, %s740
      %p742 = pneg %p204
      %p743 = pneg %p201
      %p744 = scmp.lt.s32.totalorder %s33, 1
      %s745 = scalar_select %p744, %s33, 1
      %s746 = smul.addr %s745, 4
      %s747 = scalar_lea.vmem %s6, %s746
      %p748 = pneg %p230
      %p749 = pneg %p227
      %p750 = scmp.lt.s32.totalorder %s33, 1
      %s751 = scalar_select %p750, %s33, 1
      %s752 = smul.addr %s751, 4
      %s753 = scalar_lea.vmem %s7, %s752
      %p754 = pneg %p256
      %p755 = pneg %p253
      %p756 = scmp.lt.s32.totalorder %s33, 1
      %s757 = scalar_select %p756, %s33, 1
      %s758 = smul.addr %s757, 4
      %s759 = scalar_lea.vmem %s8, %s758
      %p760 = pneg %p282
      %p761 = pneg %p279
      %p762 = scmp.lt.s32.totalorder %s33, 1
      %s763 = scalar_select %p762, %s33, 1
      %s764 = smul.addr %s763, 4
      %s765 = scalar_lea.vmem %s9, %s764
      %p766 = pneg %p308
      %p767 = pneg %p305
      %p768 = scmp.lt.s32.totalorder %s33, 1
      %s769 = scalar_select %p768, %s33, 1
      %s770 = smul.addr %s769, 4
      %s771 = scalar_lea.vmem %s10, %s770
      %p772 = pneg %p334
      %p773 = pneg %p331
      %p774 = scmp.lt.s32.totalorder %s33, 1
      %s775 = scalar_select %p774, %s33, 1
      %s776 = smul.addr %s775, 4
      %s777 = scalar_lea.vmem %s11, %s776
      %p778 = pneg %p360
      %p779 = pneg %p357
      %p780 = pneg %p381
      %p781 = pneg %p378
      %p782 = pneg %p402
      %p783 = pneg %p399
      %p784 = pneg %p423
      %p785 = pneg %p420
      %p786 = pneg %p444
      %p787 = pneg %p441
      %p788 = pneg %p465
      %p789 = pneg %p462
      %p790 = pneg %p486
      %p791 = pneg %p483
      %p792 = pneg %p514
      %p793 = pneg %p511
      %s794 = smul.u32 2, %s34
      %p795 = scmp.lt.s32.totalorder %s33, 1
      %s796 = scalar_select %p795, %s33, 1
      %p797 = scmp.lt.s32.totalorder %s794, 1
      %s798 = scalar_select %p797, %s794, 1
      %s799 = smul.addr %s796, 8
      %s800 = sadd.s32 %s798, %s799
      %s801 = smul.addr %s800, 8
      %s802 = scalar_lea.vmem %s18, %s801
      %s803 = smul.u32 2, %s34
      %p804 = scmp.lt.s32.totalorder %s33, 1
      %s805 = scalar_select %p804, %s33, 1
      %p806 = scmp.lt.s32.totalorder %s803, 1
      %s807 = scalar_select %p806, %s803, 1
      %s808 = smul.addr %s805, 2
      %s809 = sadd.s32 %s807, %s808
      %s810 = smul.addr %s809, 4
      %s811 = scalar_lea.vmem %s0, %s810
      %s812 = smul.u32 2, %s34
      %s813 = smul.u32 2, %s34
      %p814 = scmp.lt.s32.totalorder %s33, 1
      %s815 = scalar_select %p814, %s33, 1
      %p816 = scmp.lt.s32.totalorder %s813, 1
      %s817 = scalar_select %p816, %s813, 1
      %s818 = smul.addr %s815, 2
      %s819 = sadd.s32 %s817, %s818
      %s820 = smul.addr %s819, 4
      %s821 = scalar_lea.vmem %s1, %s820
      %s822 = smul.u32 2, %s34
      %s823 = smul.u32 2, %s34
      %p824 = scmp.lt.s32.totalorder %s33, 1
      %s825 = scalar_select %p824, %s33, 1
      %p826 = scmp.lt.s32.totalorder %s823, 1
      %s827 = scalar_select %p826, %s823, 1
      %s828 = smul.addr %s825, 2
      %s829 = sadd.s32 %s827, %s828
      %s830 = smul.addr %s829, 4
      %s831 = scalar_lea.vmem %s2, %s830
      %s832 = smul.u32 2, %s34
      %s833 = smul.u32 2, %s34
      %p834 = scmp.lt.s32.totalorder %s33, 1
      %s835 = scalar_select %p834, %s33, 1
      %p836 = scmp.lt.s32.totalorder %s833, 1
      %s837 = scalar_select %p836, %s833, 1
      %s838 = smul.addr %s835, 2
      %s839 = sadd.s32 %s837, %s838
      %s840 = smul.addr %s839, 4
      %s841 = scalar_lea.vmem %s3, %s840
      %s842 = smul.u32 2, %s34
      %s843 = smul.u32 2, %s34
      %p844 = scmp.lt.s32.totalorder %s33, 1
      %s845 = scalar_select %p844, %s33, 1
      %p846 = scmp.lt.s32.totalorder %s843, 1
      %s847 = scalar_select %p846, %s843, 1
      %s848 = smul.addr %s845, 2
      %s849 = sadd.s32 %s847, %s848
      %s850 = smul.addr %s849, 4
      %s851 = scalar_lea.vmem %s4, %s850
      %s852 = smul.u32 2, %s34
      %s853 = smul.u32 2, %s34
      %p854 = scmp.lt.s32.totalorder %s33, 1
      %s855 = scalar_select %p854, %s33, 1
      %p856 = scmp.lt.s32.totalorder %s853, 1
      %s857 = scalar_select %p856, %s853, 1
      %s858 = smul.addr %s855, 2
      %s859 = sadd.s32 %s857, %s858
      %s860 = smul.addr %s859, 4
      %s861 = scalar_lea.vmem %s5, %s860
      %s862 = smul.u32 2, %s34
      %p863 = scmp.lt.s32.totalorder %s33, 1
      %s864 = scalar_select %p863, %s33, 1
      %s865 = smul.addr %s864, 4
      %s866 = scalar_lea.vmem %s6, %s865
      %p867 = scmp.lt.s32.totalorder %s33, 1
      %s868 = scalar_select %p867, %s33, 1
      %s869 = smul.addr %s868, 4
      %s870 = scalar_lea.vmem %s7, %s869
      %p871 = scmp.lt.s32.totalorder %s33, 1
      %s872 = scalar_select %p871, %s33, 1
      %s873 = smul.addr %s872, 4
      %s874 = scalar_lea.vmem %s8, %s873
      %p875 = scmp.lt.s32.totalorder %s33, 1
      %s876 = scalar_select %p875, %s33, 1
      %s877 = smul.addr %s876, 4
      %s878 = scalar_lea.vmem %s9, %s877
      %p879 = scmp.lt.s32.totalorder %s33, 1
      %s880 = scalar_select %p879, %s33, 1
      %s881 = smul.addr %s880, 4
      %s882 = scalar_lea.vmem %s10, %s881
      %p883 = scmp.lt.s32.totalorder %s33, 1
      %s884 = scalar_select %p883, %s33, 1
      %s885 = smul.addr %s884, 4
      %s886 = scalar_lea.vmem %s11, %s885
      %s887 = smul.u32 2, %s34
      %p888 = scmp.lt.s32.totalorder %s33, 1
      %s889 = scalar_select %p888, %s33, 1
      %p890 = scmp.lt.s32.totalorder %s887, 1
      %s891 = scalar_select %p890, %s887, 1
      %s892 = smul.addr %s889, 8
      %s893 = sadd.s32 %s891, %s892
      %s894 = smul.addr %s893, 8
      %s895 = scalar_lea.vmem %s18, %s894
      %s896 = smul.u32 2, %s34
      %v897 = vld [vmem:[%s811] sm:$0xff]
      %v898 = vld [vmem:[%s866] sm:$0xf]
      %900 = vset.pattern.permute.xlu0 0
      %901 = vperm.xlu0 %900, %v898
      %v902 = vpop.permute.xlu0 %901
      %v904 = vunpack.c.l.s4 839922192
      %v905 = vunpack.c.0.s8 %v904
      %v906 = vperm.slane %v902, %v905
      %v908 = vmul.f32 %v897, %v906
      %909 = vset.pattern.permute.xlu0 1
      %910 = vperm.xlu0 %909, %v898
      %v911 = vpop.permute.xlu0 %910
      %v913 = vunpack.c.l.s4 839922192
      %v914 = vunpack.c.0.s8 %v913
      %v915 = vperm.slane %v911, %v914
      %v917 = vadd.f32 %v908, %v915
      %vm918 = vcmp.ge.f32.partialorder %v917, 0.0
      %919 = vset.pattern.permute.xlu0 2
      %920 = vperm.xlu0 %919, %v898
      %v921 = vpop.permute.xlu0 %920
      %924 = vst [vmem:[#allocation1] ss:$2 sm:$0xff] %v917
      %v925 = vld.sshfl [vmem:[#allocation1] sm:$0xff pattern:$0x75316420]
      %v926 = vld.sshfl [vmem:[#allocation1 + $0x8] sm:$0xff pattern:$0x75316420]
      %v929 = vmul.f32 %v921, %v925
      %v930 = vmul.f32 %v921, %v926
      %v933 = vrot.slane %v930, 4
      %vm934 = vcmask 1043456
      %v935 = vsel %vm934, %v929, %v933
      %v937 = vsel %vm918, %v917, %v935
      %v938 = vld [vmem:[%s12] sm:$0xff]
      %v939 = vld [vmem:[%s12 + $0x8] sm:$0xff]
      %v940 = vld [vmem:[%s12 + $0x10] sm:$0xff]
      %v941 = vld [vmem:[%s12 + $0x18] sm:$0xff]
      %v942 = vld [vmem:[%s821] sm:$0xff]
      %v943 = vld [vmem:[%s870] sm:$0xf]
      %945 = vset.pattern.permute.xlu0 0
      %946 = vperm.xlu0 %945, %v943
      %v947 = vpop.permute.xlu0 %946
      %v949 = vunpack.c.l.s4 839922192
      %v950 = vunpack.c.0.s8 %v949
      %v951 = vperm.slane %v947, %v950
      %v953 = vmul.f32 %v942, %v951
      %954 = vset.pattern.permute.xlu0 1
      %955 = vperm.xlu0 %954, %v943
      %v956 = vpop.permute.xlu0 %955
      %v958 = vunpack.c.l.s4 839922192
      %v959 = vunpack.c.0.s8 %v958
      %v960 = vperm.slane %v956, %v959
      %v962 = vadd.f32 %v953, %v960
      %vm963 = vcmp.ge.f32.partialorder %v962, 0.0
      %964 = vset.pattern.permute.xlu0 2
      %965 = vperm.xlu0 %964, %v943
      %v966 = vpop.permute.xlu0 %965
      %969 = vst [vmem:[#allocation1] ss:$2 sm:$0xff] %v962
      %v970 = vld.sshfl [vmem:[#allocation1] sm:$0xff pattern:$0x75316420]
      %v971 = vld.sshfl [vmem:[#allocation1 + $0x8] sm:$0xff pattern:$0x75316420]
      %v974 = vmul.f32 %v966, %v970
      %v975 = vmul.f32 %v966, %v971
      %v978 = vrot.slane %v975, 4
      %v979 = vsel %vm934, %v974, %v978
      %v981 = vsel %vm963, %v962, %v979
      %v982 = vld [vmem:[%s13] sm:$0xff]
      %v983 = vld [vmem:[%s13 + $0x8] sm:$0xff]
      %v984 = vld [vmem:[%s13 + $0x10] sm:$0xff]
      %v985 = vld [vmem:[%s13 + $0x18] sm:$0xff]
      %987 = vst [vmem:[#allocation1] ss:$2 sm:$0xff] %v981
      %v988 = vld.sshfl [vmem:[#allocation1] sm:$0xff pattern:$0x75316420]
      %v989 = vld.sshfl [vmem:[#allocation1 + $0x8] sm:$0xff pattern:$0x75316420]
      %vm990 = vcmask 31744
      %v992 = vsel %vm990, %v982, 0
      %v995 = vsel %vm990, %v983, 0
      %v998 = vsel %vm990, %v984, 0
      %v1001 = vsel %vm990, %v985, 0
      %v1003 = vsel %vm934, %v988, 0
      %v1005 = vsel %vm934, %v989, 0
      %1007 = vmatpush.msra.mxu0 0.0
      %1008 = vmatpush.msra.mxu0 0.0
      %1009 = vmatpush.msra.mxu0 0.0
      %1010 = vmatpush.msra.mxu0 0.0
      %1011 = vmatpush.msra.mxu0 0.0
      %1012 = vmatpush.msra.mxu0 0.0
      %1013 = vmatpush.msra.mxu0 0.0
      %1014 = vmatpush.msra.mxu0 0.0
      %1015 = vmatpush.msra.mxu0 0.0
      %1016 = vmatpush.msra.mxu0 0.0
      %1017 = vmatpush.msra.mxu0 0.0
      %1018 = vmatpush.msra.mxu0 0.0
      %1019 = vmatpush.msra.mxu0 0.0
      %1020 = vmatpush.msra.mxu0 0.0
      %1021 = vmatpush.msra.mxu0 0.0
      %v1022 = vand.u32 %v1003, 4294901760
      %1023 = vmatpush.msra.mxu0 %v1022
      %v1024 = vand.u32 %v992, 4294901760
      %v1025 = vsub.f32 %v992, %v1024
      %v1026 = vand.u32 %v1025, 4294901760
      %v1027 = vsub.f32 %v1025, %v1026
      %v1028 = vand.u32 %v1027, 4294901760
      %1029 = vmatmul.f32.gmra.mxu0 %v1028
      %v1030 = vpop.f32.mrf.mxu0
      %v1031 = vadd.f32 0.0, %v1030
      %v1032 = vand.u32 %v995, 4294901760
      %v1033 = vsub.f32 %v995, %v1032
      %v1034 = vand.u32 %v1033, 4294901760
      %v1035 = vsub.f32 %v1033, %v1034
      %v1036 = vand.u32 %v1035, 4294901760
      %1037 = vmatmul.f32.gmra.mxu0 %v1036
      %v1038 = vpop.f32.mrf.mxu0
      %v1039 = vadd.f32 0.0, %v1038
      %v1040 = vand.u32 %v998, 4294901760
      %v1041 = vsub.f32 %v998, %v1040
      %v1042 = vand.u32 %v1041, 4294901760
      %v1043 = vsub.f32 %v1041, %v1042
      %v1044 = vand.u32 %v1043, 4294901760
      %1045 = vmatmul.f32.gmra.mxu0 %v1044
      %v1046 = vpop.f32.mrf.mxu0
      %v1047 = vadd.f32 0.0, %v1046
      %v1048 = vand.u32 %v1001, 4294901760
      %v1049 = vsub.f32 %v1001, %v1048
      %v1050 = vand.u32 %v1049, 4294901760
      %v1051 = vsub.f32 %v1049, %v1050
      %v1052 = vand.u32 %v1051, 4294901760
      %1053 = vmatmul.f32.gmra.mxu0 %v1052
      %v1054 = vpop.f32.mrf.mxu0
      %v1055 = vadd.f32 0.0, %v1054
      %1056 = vdwg.mxu0
      %1057 = vmatpush.msra.mxu0 0.0
      %1058 = vmatpush.msra.mxu0 0.0
      %1059 = vmatpush.msra.mxu0 0.0
      %1060 = vmatpush.msra.mxu0 0.0
      %1061 = vmatpush.msra.mxu0 0.0
      %1062 = vmatpush.msra.mxu0 0.0
      %1063 = vmatpush.msra.mxu0 0.0
      %1064 = vmatpush.msra.mxu0 0.0
      %1065 = vmatpush.msra.mxu0 0.0
      %1066 = vmatpush.msra.mxu0 0.0
      %1067 = vmatpush.msra.mxu0 0.0
      %1068 = vmatpush.msra.mxu0 0.0
      %1069 = vmatpush.msra.mxu0 0.0
      %1070 = vmatpush.msra.mxu0 0.0
      %1071 = vmatpush.msra.mxu0 0.0
      %v1072 = vand.u32 %v1003, 4294901760
      %v1073 = vsub.f32 %v1003, %v1072
      %v1074 = vand.u32 %v1073, 4294901760
      %v1075 = vsub.f32 %v1073, %v1074
      %v1076 = vand.u32 %v1075, 4294901760
      %1077 = vmatpush.msra.mxu0 %v1076
      %v1078 = vand.u32 %v992, 4294901760
      %1079 = vmatmul.f32.gmra.mxu0 %v1078
      %v1080 = vpop.f32.mrf.mxu0
      %v1081 = vadd.f32 %v1031, %v1080
      %v1082 = vand.u32 %v995, 4294901760
      %1083 = vmatmul.f32.gmra.mxu0 %v1082
      %v1084 = vpop.f32.mrf.mxu0
      %v1085 = vadd.f32 %v1039, %v1084
      %v1086 = vand.u32 %v998, 4294901760
      %1087 = vmatmul.f32.gmra.mxu0 %v1086
      %v1088 = vpop.f32.mrf.mxu0
      %v1089 = vadd.f32 %v1047, %v1088
      %v1090 = vand.u32 %v1001, 4294901760
      %1091 = vmatmul.f32.gmra.mxu0 %v1090
      %v1092 = vpop.f32.mrf.mxu0
      %v1093 = vadd.f32 %v1055, %v1092
      %1094 = vdwg.mxu0
      %1095 = vmatpush.msra.mxu0 0.0
      %1096 = vmatpush.msra.mxu0 0.0
      %1097 = vmatpush.msra.mxu0 0.0
      %1098 = vmatpush.msra.mxu0 0.0
      %1099 = vmatpush.msra.mxu0 0.0
      %1100 = vmatpush.msra.mxu0 0.0
      %1101 = vmatpush.msra.mxu0 0.0
      %1102 = vmatpush.msra.mxu0 0.0
      %1103 = vmatpush.msra.mxu0 0.0
      %1104 = vmatpush.msra.mxu0 0.0
      %1105 = vmatpush.msra.mxu0 0.0
      %1106 = vmatpush.msra.mxu0 0.0
      %1107 = vmatpush.msra.mxu0 0.0
      %1108 = vmatpush.msra.mxu0 0.0
      %1109 = vmatpush.msra.mxu0 0.0
      %v1110 = vand.u32 %v1003, 4294901760
      %v1111 = vsub.f32 %v1003, %v1110
      %1112 = vmatpush.msra.mxu0 %v1111
      %v1113 = vand.u32 %v992, 4294901760
      %v1114 = vsub.f32 %v992, %v1113
      %1115 = vmatmul.f32.gmra.mxu0 %v1114
      %v1116 = vpop.f32.mrf.mxu0
      %v1117 = vadd.f32 %v1081, %v1116
      %v1118 = vand.u32 %v995, 4294901760
      %v1119 = vsub.f32 %v995, %v1118
      %1120 = vmatmul.f32.gmra.mxu0 %v1119
      %v1121 = vpop.f32.mrf.mxu0
      %v1122 = vadd.f32 %v1085, %v1121
      %v1123 = vand.u32 %v998, 4294901760
      %v1124 = vsub.f32 %v998, %v1123
      %1125 = vmatmul.f32.gmra.mxu0 %v1124
      %v1126 = vpop.f32.mrf.mxu0
      %v1127 = vadd.f32 %v1089, %v1126
      %v1128 = vand.u32 %v1001, 4294901760
      %v1129 = vsub.f32 %v1001, %v1128
      %1130 = vmatmul.f32.gmra.mxu0 %v1129
      %v1131 = vpop.f32.mrf.mxu0
      %v1132 = vadd.f32 %v1093, %v1131
      %1133 = vdwg.mxu0
      %1134 = vmatpush.msra.mxu0 0.0
      %1135 = vmatpush.msra.mxu0 0.0
      %1136 = vmatpush.msra.mxu0 0.0
      %1137 = vmatpush.msra.mxu0 0.0
      %1138 = vmatpush.msra.mxu0 0.0
      %1139 = vmatpush.msra.mxu0 0.0
      %1140 = vmatpush.msra.mxu0 0.0
      %1141 = vmatpush.msra.mxu0 0.0
      %1142 = vmatpush.msra.mxu0 0.0
      %1143 = vmatpush.msra.mxu0 0.0
      %1144 = vmatpush.msra.mxu0 0.0
      %1145 = vmatpush.msra.mxu0 0.0
      %1146 = vmatpush.msra.mxu0 0.0
      %1147 = vmatpush.msra.mxu0 0.0
      %1148 = vmatpush.msra.mxu0 0.0
      %v1149 = vand.u32 %v1003, 4294901760
      %1150 = vmatpush.msra.mxu0 %v1149
      %v1151 = vand.u32 %v992, 4294901760
      %v1152 = vsub.f32 %v992, %v1151
      %v1153 = vand.u32 %v1152, 4294901760
      %1154 = vmatmul.f32.gmra.mxu0 %v1153
      %v1155 = vpop.f32.mrf.mxu0
      %v1156 = vadd.f32 %v1117, %v1155
      %v1157 = vand.u32 %v995, 4294901760
      %v1158 = vsub.f32 %v995, %v1157
      %v1159 = vand.u32 %v1158, 4294901760
      %1160 = vmatmul.f32.gmra.mxu0 %v1159
      %v1161 = vpop.f32.mrf.mxu0
      %v1162 = vadd.f32 %v1122, %v1161
      %v1163 = vand.u32 %v998, 4294901760
      %v1164 = vsub.f32 %v998, %v1163
      %v1165 = vand.u32 %v1164, 4294901760
      %1166 = vmatmul.f32.gmra.mxu0 %v1165
      %v1167 = vpop.f32.mrf.mxu0
      %v1168 = vadd.f32 %v1127, %v1167
      %v1169 = vand.u32 %v1001, 4294901760
      %v1170 = vsub.f32 %v1001, %v1169
      %v1171 = vand.u32 %v1170, 4294901760
      %1172 = vmatmul.f32.gmra.mxu0 %v1171
      %v1173 = vpop.f32.mrf.mxu0
      %v1174 = vadd.f32 %v1132, %v1173
      %1175 = vdwg.mxu0
      %1176 = vmatpush.msra.mxu0 0.0
      %1177 = vmatpush.msra.mxu0 0.0
      %1178 = vmatpush.msra.mxu0 0.0
      %1179 = vmatpush.msra.mxu0 0.0
      %1180 = vmatpush.msra.mxu0 0.0
      %1181 = vmatpush.msra.mxu0 0.0
      %1182 = vmatpush.msra.mxu0 0.0
      %1183 = vmatpush.msra.mxu0 0.0
      %1184 = vmatpush.msra.mxu0 0.0
      %1185 = vmatpush.msra.mxu0 0.0
      %1186 = vmatpush.msra.mxu0 0.0
      %1187 = vmatpush.msra.mxu0 0.0
      %1188 = vmatpush.msra.mxu0 0.0
      %1189 = vmatpush.msra.mxu0 0.0
      %1190 = vmatpush.msra.mxu0 0.0
      %v1191 = vand.u32 %v1003, 4294901760
      %v1192 = vsub.f32 %v1003, %v1191
      %v1193 = vand.u32 %v1192, 4294901760
      %1194 = vmatpush.msra.mxu0 %v1193
      %v1195 = vand.u32 %v992, 4294901760
      %1196 = vmatmul.f32.gmra.mxu0 %v1195
      %v1197 = vpop.f32.mrf.mxu0
      %v1198 = vadd.f32 %v1156, %v1197
      %v1199 = vand.u32 %v995, 4294901760
      %1200 = vmatmul.f32.gmra.mxu0 %v1199
      %v1201 = vpop.f32.mrf.mxu0
      %v1202 = vadd.f32 %v1162, %v1201
      %v1203 = vand.u32 %v998, 4294901760
      %1204 = vmatmul.f32.gmra.mxu0 %v1203
      %v1205 = vpop.f32.mrf.mxu0
      %v1206 = vadd.f32 %v1168, %v1205
      %v1207 = vand.u32 %v1001, 4294901760
      %1208 = vmatmul.f32.gmra.mxu0 %v1207
      %v1209 = vpop.f32.mrf.mxu0
      %v1210 = vadd.f32 %v1174, %v1209
      %1211 = vdwg.mxu0
      %1212 = vmatpush.msra.mxu0 0.0
      %1213 = vmatpush.msra.mxu0 0.0
      %1214 = vmatpush.msra.mxu0 0.0
      %1215 = vmatpush.msra.mxu0 0.0
      %1216 = vmatpush.msra.mxu0 0.0
      %1217 = vmatpush.msra.mxu0 0.0
      %1218 = vmatpush.msra.mxu0 0.0
      %1219 = vmatpush.msra.mxu0 0.0
      %1220 = vmatpush.msra.mxu0 0.0
      %1221 = vmatpush.msra.mxu0 0.0
      %1222 = vmatpush.msra.mxu0 0.0
      %1223 = vmatpush.msra.mxu0 0.0
      %1224 = vmatpush.msra.mxu0 0.0
      %1225 = vmatpush.msra.mxu0 0.0
      %1226 = vmatpush.msra.mxu0 0.0
      %v1227 = vand.u32 %v1003, 4294901760
      %1228 = vmatpush.msra.mxu0 %v1227
      %v1229 = vand.u32 %v992, 4294901760
      %1230 = vmatmul.f32.gmra.mxu0 %v1229
      %v1231 = vpop.f32.mrf.mxu0
      %v1232 = vadd.f32 %v1198, %v1231
      %v1233 = vand.u32 %v995, 4294901760
      %1234 = vmatmul.f32.gmra.mxu0 %v1233
      %v1235 = vpop.f32.mrf.mxu0
      %v1236 = vadd.f32 %v1202, %v1235
      %v1237 = vand.u32 %v998, 4294901760
      %1238 = vmatmul.f32.gmra.mxu0 %v1237
      %v1239 = vpop.f32.mrf.mxu0
      %v1240 = vadd.f32 %v1206, %v1239
      %v1241 = vand.u32 %v1001, 4294901760
      %1242 = vmatmul.f32.gmra.mxu0 %v1241
      %v1243 = vpop.f32.mrf.mxu0
      %v1244 = vadd.f32 %v1210, %v1243
      %1245 = vdwg.mxu0
      %1246 = vmatpush.msra.mxu0 0.0
      %1247 = vmatpush.msra.mxu0 0.0
      %1248 = vmatpush.msra.mxu0 0.0
      %1249 = vmatpush.msra.mxu0 0.0
      %1250 = vmatpush.msra.mxu0 0.0
      %1251 = vmatpush.msra.mxu0 0.0
      %1252 = vmatpush.msra.mxu0 0.0
      %1253 = vmatpush.msra.mxu0 0.0
      %1254 = vmatpush.msra.mxu0 0.0
      %1255 = vmatpush.msra.mxu0 0.0
      %1256 = vmatpush.msra.mxu0 0.0
      %1257 = vmatpush.msra.mxu0 0.0
      %1258 = vmatpush.msra.mxu0 0.0
      %1259 = vmatpush.msra.mxu0 0.0
      %1260 = vmatpush.msra.mxu0 0.0
      %v1261 = vand.u32 %v1005, 4294901760
      %1262 = vmatpush.msra.mxu0 %v1261
      %v1263 = vand.u32 %v992, 4294901760
      %v1264 = vsub.f32 %v992, %v1263
      %v1265 = vand.u32 %v1264, 4294901760
      %v1266 = vsub.f32 %v1264, %v1265
      %v1267 = vand.u32 %v1266, 4294901760
      %1268 = vmatmul.f32.gmra.mxu0 %v1267
      %v1269 = vpop.f32.mrf.mxu0
      %v1270 = vadd.f32 0.0, %v1269
      %v1271 = vand.u32 %v995, 4294901760
      %v1272 = vsub.f32 %v995, %v1271
      %v1273 = vand.u32 %v1272, 4294901760
      %v1274 = vsub.f32 %v1272, %v1273
      %v1275 = vand.u32 %v1274, 4294901760
      %1276 = vmatmul.f32.gmra.mxu0 %v1275
      %v1277 = vpop.f32.mrf.mxu0
      %v1278 = vadd.f32 0.0, %v1277
      %v1279 = vand.u32 %v998, 4294901760
      %v1280 = vsub.f32 %v998, %v1279
      %v1281 = vand.u32 %v1280, 4294901760
      %v1282 = vsub.f32 %v1280, %v1281
      %v1283 = vand.u32 %v1282, 4294901760
      %1284 = vmatmul.f32.gmra.mxu0 %v1283
      %v1285 = vpop.f32.mrf.mxu0
      %v1286 = vadd.f32 0.0, %v1285
      %v1287 = vand.u32 %v1001, 4294901760
      %v1288 = vsub.f32 %v1001, %v1287
      %v1289 = vand.u32 %v1288, 4294901760
      %v1290 = vsub.f32 %v1288, %v1289
      %v1291 = vand.u32 %v1290, 4294901760
      %1292 = vmatmul.f32.gmra.mxu0 %v1291
      %v1293 = vpop.f32.mrf.mxu0
      %v1294 = vadd.f32 0.0, %v1293
      %1295 = vdwg.mxu0
      %1296 = vmatpush.msra.mxu0 0.0
      %1297 = vmatpush.msra.mxu0 0.0
      %1298 = vmatpush.msra.mxu0 0.0
      %1299 = vmatpush.msra.mxu0 0.0
      %1300 = vmatpush.msra.mxu0 0.0
      %1301 = vmatpush.msra.mxu0 0.0
      %1302 = vmatpush.msra.mxu0 0.0
      %1303 = vmatpush.msra.mxu0 0.0
      %1304 = vmatpush.msra.mxu0 0.0
      %1305 = vmatpush.msra.mxu0 0.0
      %1306 = vmatpush.msra.mxu0 0.0
      %1307 = vmatpush.msra.mxu0 0.0
      %1308 = vmatpush.msra.mxu0 0.0
      %1309 = vmatpush.msra.mxu0 0.0
      %1310 = vmatpush.msra.mxu0 0.0
      %v1311 = vand.u32 %v1005, 4294901760
      %v1312 = vsub.f32 %v1005, %v1311
      %v1313 = vand.u32 %v1312, 4294901760
      %v1314 = vsub.f32 %v1312, %v1313
      %v1315 = vand.u32 %v1314, 4294901760
      %1316 = vmatpush.msra.mxu0 %v1315
      %v1317 = vand.u32 %v992, 4294901760
      %1318 = vmatmul.f32.gmra.mxu0 %v1317
      %v1319 = vpop.f32.mrf.mxu0
      %v1320 = vadd.f32 %v1270, %v1319
      %v1321 = vand.u32 %v995, 4294901760
      %1322 = vmatmul.f32.gmra.mxu0 %v1321
      %v1323 = vpop.f32.mrf.mxu0
      %v1324 = vadd.f32 %v1278, %v1323
      %v1325 = vand.u32 %v998, 4294901760
      %1326 = vmatmul.f32.gmra.mxu0 %v1325
      %v1327 = vpop.f32.mrf.mxu0
      %v1328 = vadd.f32 %v1286, %v1327
      %v1329 = vand.u32 %v1001, 4294901760
      %1330 = vmatmul.f32.gmra.mxu0 %v1329
      %v1331 = vpop.f32.mrf.mxu0
      %v1332 = vadd.f32 %v1294, %v1331
      %1333 = vdwg.mxu0
      %1334 = vmatpush.msra.mxu0 0.0
      %1335 = vmatpush.msra.mxu0 0.0
      %1336 = vmatpush.msra.mxu0 0.0
      %1337 = vmatpush.msra.mxu0 0.0
      %1338 = vmatpush.msra.mxu0 0.0
      %1339 = vmatpush.msra.mxu0 0.0
      %1340 = vmatpush.msra.mxu0 0.0
      %1341 = vmatpush.msra.mxu0 0.0
      %1342 = vmatpush.msra.mxu0 0.0
      %1343 = vmatpush.msra.mxu0 0.0
      %1344 = vmatpush.msra.mxu0 0.0
      %1345 = vmatpush.msra.mxu0 0.0
      %1346 = vmatpush.msra.mxu0 0.0
      %1347 = vmatpush.msra.mxu0 0.0
      %1348 = vmatpush.msra.mxu0 0.0
      %v1349 = vand.u32 %v1005, 4294901760
      %v1350 = vsub.f32 %v1005, %v1349
      %1351 = vmatpush.msra.mxu0 %v1350
      %v1352 = vand.u32 %v992, 4294901760
      %v1353 = vsub.f32 %v992, %v1352
      %1354 = vmatmul.f32.gmra.mxu0 %v1353
      %v1355 = vpop.f32.mrf.mxu0
      %v1356 = vadd.f32 %v1320, %v1355
      %v1357 = vand.u32 %v995, 4294901760
      %v1358 = vsub.f32 %v995, %v1357
      %1359 = vmatmul.f32.gmra.mxu0 %v1358
      %v1360 = vpop.f32.mrf.mxu0
      %v1361 = vadd.f32 %v1324, %v1360
      %v1362 = vand.u32 %v998, 4294901760
      %v1363 = vsub.f32 %v998, %v1362
      %1364 = vmatmul.f32.gmra.mxu0 %v1363
      %v1365 = vpop.f32.mrf.mxu0
      %v1366 = vadd.f32 %v1328, %v1365
      %v1367 = vand.u32 %v1001, 4294901760
      %v1368 = vsub.f32 %v1001, %v1367
      %1369 = vmatmul.f32.gmra.mxu0 %v1368
      %v1370 = vpop.f32.mrf.mxu0
      %v1371 = vadd.f32 %v1332, %v1370
      %1372 = vdwg.mxu0
      %1373 = vmatpush.msra.mxu0 0.0
      %1374 = vmatpush.msra.mxu0 0.0
      %1375 = vmatpush.msra.mxu0 0.0
      %1376 = vmatpush.msra.mxu0 0.0
      %1377 = vmatpush.msra.mxu0 0.0
      %1378 = vmatpush.msra.mxu0 0.0
      %1379 = vmatpush.msra.mxu0 0.0
      %1380 = vmatpush.msra.mxu0 0.0
      %1381 = vmatpush.msra.mxu0 0.0
      %1382 = vmatpush.msra.mxu0 0.0
      %1383 = vmatpush.msra.mxu0 0.0
      %1384 = vmatpush.msra.mxu0 0.0
      %1385 = vmatpush.msra.mxu0 0.0
      %1386 = vmatpush.msra.mxu0 0.0
      %1387 = vmatpush.msra.mxu0 0.0
      %v1388 = vand.u32 %v1005, 4294901760
      %1389 = vmatpush.msra.mxu0 %v1388
      %v1390 = vand.u32 %v992, 4294901760
      %v1391 = vsub.f32 %v992, %v1390
      %v1392 = vand.u32 %v1391, 4294901760
      %1393 = vmatmul.f32.gmra.mxu0 %v1392
      %v1394 = vpop.f32.mrf.mxu0
      %v1395 = vadd.f32 %v1356, %v1394
      %v1396 = vand.u32 %v995, 4294901760
      %v1397 = vsub.f32 %v995, %v1396
      %v1398 = vand.u32 %v1397, 4294901760
      %1399 = vmatmul.f32.gmra.mxu0 %v1398
      %v1400 = vpop.f32.mrf.mxu0
      %v1401 = vadd.f32 %v1361, %v1400
      %v1402 = vand.u32 %v998, 4294901760
      %v1403 = vsub.f32 %v998, %v1402
      %v1404 = vand.u32 %v1403, 4294901760
      %1405 = vmatmul.f32.gmra.mxu0 %v1404
      %v1406 = vpop.f32.mrf.mxu0
      %v1407 = vadd.f32 %v1366, %v1406
      %v1408 = vand.u32 %v1001, 4294901760
      %v1409 = vsub.f32 %v1001, %v1408
      %v1410 = vand.u32 %v1409, 4294901760
      %1411 = vmatmul.f32.gmra.mxu0 %v1410
      %v1412 = vpop.f32.mrf.mxu0
      %v1413 = vadd.f32 %v1371, %v1412
      %1414 = vdwg.mxu0
      %1415 = vmatpush.msra.mxu0 0.0
      %1416 = vmatpush.msra.mxu0 0.0
      %1417 = vmatpush.msra.mxu0 0.0
      %1418 = vmatpush.msra.mxu0 0.0
      %1419 = vmatpush.msra.mxu0 0.0
      %1420 = vmatpush.msra.mxu0 0.0
      %1421 = vmatpush.msra.mxu0 0.0
      %1422 = vmatpush.msra.mxu0 0.0
      %1423 = vmatpush.msra.mxu0 0.0
      %1424 = vmatpush.msra.mxu0 0.0
      %1425 = vmatpush.msra.mxu0 0.0
      %1426 = vmatpush.msra.mxu0 0.0
      %1427 = vmatpush.msra.mxu0 0.0
      %1428 = vmatpush.msra.mxu0 0.0
      %1429 = vmatpush.msra.mxu0 0.0
      %v1430 = vand.u32 %v1005, 4294901760
      %v1431 = vsub.f32 %v1005, %v1430
      %v1432 = vand.u32 %v1431, 4294901760
      %1433 = vmatpush.msra.mxu0 %v1432
      %v1434 = vand.u32 %v992, 4294901760
      %1435 = vmatmul.f32.gmra.mxu0 %v1434
      %v1436 = vpop.f32.mrf.mxu0
      %v1437 = vadd.f32 %v1395, %v1436
      %v1438 = vand.u32 %v995, 4294901760
      %1439 = vmatmul.f32.gmra.mxu0 %v1438
      %v1440 = vpop.f32.mrf.mxu0
      %v1441 = vadd.f32 %v1401, %v1440
      %v1442 = vand.u32 %v998, 4294901760
      %1443 = vmatmul.f32.gmra.mxu0 %v1442
      %v1444 = vpop.f32.mrf.mxu0
      %v1445 = vadd.f32 %v1407, %v1444
      %v1446 = vand.u32 %v1001, 4294901760
      %1447 = vmatmul.f32.gmra.mxu0 %v1446
      %v1448 = vpop.f32.mrf.mxu0
      %v1449 = vadd.f32 %v1413, %v1448
      %1450 = vdwg.mxu0
      %1451 = vmatpush.msra.mxu0 0.0
      %1452 = vmatpush.msra.mxu0 0.0
      %1453 = vmatpush.msra.mxu0 0.0
      %1454 = vmatpush.msra.mxu0 0.0
      %1455 = vmatpush.msra.mxu0 0.0
      %1456 = vmatpush.msra.mxu0 0.0
      %1457 = vmatpush.msra.mxu0 0.0
      %1458 = vmatpush.msra.mxu0 0.0
      %1459 = vmatpush.msra.mxu0 0.0
      %1460 = vmatpush.msra.mxu0 0.0
      %1461 = vmatpush.msra.mxu0 0.0
      %1462 = vmatpush.msra.mxu0 0.0
      %1463 = vmatpush.msra.mxu0 0.0
      %1464 = vmatpush.msra.mxu0 0.0
      %1465 = vmatpush.msra.mxu0 0.0
      %v1466 = vand.u32 %v1005, 4294901760
      %1467 = vmatpush.msra.mxu0 %v1466
      %v1468 = vand.u32 %v992, 4294901760
      %1469 = vmatmul.f32.gmra.mxu0 %v1468
      %v1470 = vpop.f32.mrf.mxu0
      %v1471 = vadd.f32 %v1437, %v1470
      %v1472 = vand.u32 %v995, 4294901760
      %1473 = vmatmul.f32.gmra.mxu0 %v1472
      %v1474 = vpop.f32.mrf.mxu0
      %v1475 = vadd.f32 %v1441, %v1474
      %v1476 = vand.u32 %v998, 4294901760
      %1477 = vmatmul.f32.gmra.mxu0 %v1476
      %v1478 = vpop.f32.mrf.mxu0
      %v1479 = vadd.f32 %v1445, %v1478
      %v1480 = vand.u32 %v1001, 4294901760
      %1481 = vmatmul.f32.gmra.mxu0 %v1480
      %v1482 = vpop.f32.mrf.mxu0
      %v1483 = vadd.f32 %v1449, %v1482
      %1484 = vdwg.mxu0
      %1486 = vst [vmem:[#allocation1] ss:$2 sm:$0xff] %v937
      %v1487 = vld.sshfl [vmem:[#allocation1] sm:$0xff pattern:$0x75316420]
      %v1488 = vld.sshfl [vmem:[#allocation1 + $0x8] sm:$0xff pattern:$0x75316420]
      %v1490 = vsel %vm990, %v938, 0
      %v1493 = vsel %vm990, %v939, 0
      %v1496 = vsel %vm990, %v940, 0
      %v1499 = vsel %vm990, %v941, 0
      %v1501 = vsel %vm934, %v1487, 0
      %v1503 = vsel %vm934, %v1488, 0
      %1505 = vmatpush.msra.mxu0 0.0
      %1506 = vmatpush.msra.mxu0 0.0
      %1507 = vmatpush.msra.mxu0 0.0
      %1508 = vmatpush.msra.mxu0 0.0
      %1509 = vmatpush.msra.mxu0 0.0
      %1510 = vmatpush.msra.mxu0 0.0
      %1511 = vmatpush.msra.mxu0 0.0
      %1512 = vmatpush.msra.mxu0 0.0
      %1513 = vmatpush.msra.mxu0 0.0
      %1514 = vmatpush.msra.mxu0 0.0
      %1515 = vmatpush.msra.mxu0 0.0
      %1516 = vmatpush.msra.mxu0 0.0
      %1517 = vmatpush.msra.mxu0 0.0
      %1518 = vmatpush.msra.mxu0 0.0
      %1519 = vmatpush.msra.mxu0 0.0
      %v1520 = vand.u32 %v1501, 4294901760
      %1521 = vmatpush.msra.mxu0 %v1520
      %v1522 = vand.u32 %v1490, 4294901760
      %v1523 = vsub.f32 %v1490, %v1522
      %v1524 = vand.u32 %v1523, 4294901760
      %v1525 = vsub.f32 %v1523, %v1524
      %v1526 = vand.u32 %v1525, 4294901760
      %1527 = vmatmul.f32.gmra.mxu0 %v1526
      %v1528 = vpop.f32.mrf.mxu0
      %v1529 = vadd.f32 %v1232, %v1528
      %v1530 = vand.u32 %v1493, 4294901760
      %v1531 = vsub.f32 %v1493, %v1530
      %v1532 = vand.u32 %v1531, 4294901760
      %v1533 = vsub.f32 %v1531, %v1532
      %v1534 = vand.u32 %v1533, 4294901760
      %1535 = vmatmul.f32.gmra.mxu0 %v1534
      %v1536 = vpop.f32.mrf.mxu0
      %v1537 = vadd.f32 %v1236, %v1536
      %v1538 = vand.u32 %v1496, 4294901760
      %v1539 = vsub.f32 %v1496, %v1538
      %v1540 = vand.u32 %v1539, 4294901760
      %v1541 = vsub.f32 %v1539, %v1540
      %v1542 = vand.u32 %v1541, 4294901760
      %1543 = vmatmul.f32.gmra.mxu0 %v1542
      %v1544 = vpop.f32.mrf.mxu0
      %v1545 = vadd.f32 %v1240, %v1544
      %v1546 = vand.u32 %v1499, 4294901760
      %v1547 = vsub.f32 %v1499, %v1546
      %v1548 = vand.u32 %v1547, 4294901760
      %v1549 = vsub.f32 %v1547, %v1548
      %v1550 = vand.u32 %v1549, 4294901760
      %1551 = vmatmul.f32.gmra.mxu0 %v1550
      %v1552 = vpop.f32.mrf.mxu0
      %v1553 = vadd.f32 %v1244, %v1552
      %1554 = vdwg.mxu0
      %1555 = vmatpush.msra.mxu0 0.0
      %1556 = vmatpush.msra.mxu0 0.0
      %1557 = vmatpush.msra.mxu0 0.0
      %1558 = vmatpush.msra.mxu0 0.0
      %1559 = vmatpush.msra.mxu0 0.0
      %1560 = vmatpush.msra.mxu0 0.0
      %1561 = vmatpush.msra.mxu0 0.0
      %1562 = vmatpush.msra.mxu0 0.0
      %1563 = vmatpush.msra.mxu0 0.0
      %1564 = vmatpush.msra.mxu0 0.0
      %1565 = vmatpush.msra.mxu0 0.0
      %1566 = vmatpush.msra.mxu0 0.0
      %1567 = vmatpush.msra.mxu0 0.0
      %1568 = vmatpush.msra.mxu0 0.0
      %1569 = vmatpush.msra.mxu0 0.0
      %v1570 = vand.u32 %v1501, 4294901760
      %v1571 = vsub.f32 %v1501, %v1570
      %v1572 = vand.u32 %v1571, 4294901760
      %v1573 = vsub.f32 %v1571, %v1572
      %v1574 = vand.u32 %v1573, 4294901760
      %1575 = vmatpush.msra.mxu0 %v1574
      %v1576 = vand.u32 %v1490, 4294901760
      %1577 = vmatmul.f32.gmra.mxu0 %v1576
      %v1578 = vpop.f32.mrf.mxu0
      %v1579 = vadd.f32 %v1529, %v1578
      %v1580 = vand.u32 %v1493, 4294901760
      %1581 = vmatmul.f32.gmra.mxu0 %v1580
      %v1582 = vpop.f32.mrf.mxu0
      %v1583 = vadd.f32 %v1537, %v1582
      %v1584 = vand.u32 %v1496, 4294901760
      %1585 = vmatmul.f32.gmra.mxu0 %v1584
      %v1586 = vpop.f32.mrf.mxu0
      %v1587 = vadd.f32 %v1545, %v1586
      %v1588 = vand.u32 %v1499, 4294901760
      %1589 = vmatmul.f32.gmra.mxu0 %v1588
      %v1590 = vpop.f32.mrf.mxu0
      %v1591 = vadd.f32 %v1553, %v1590
      %1592 = vdwg.mxu0
      %1593 = vmatpush.msra.mxu0 0.0
      %1594 = vmatpush.msra.mxu0 0.0
      %1595 = vmatpush.msra.mxu0 0.0
      %1596 = vmatpush.msra.mxu0 0.0
      %1597 = vmatpush.msra.mxu0 0.0
      %1598 = vmatpush.msra.mxu0 0.0
      %1599 = vmatpush.msra.mxu0 0.0
      %1600 = vmatpush.msra.mxu0 0.0
      %1601 = vmatpush.msra.mxu0 0.0
      %1602 = vmatpush.msra.mxu0 0.0
      %1603 = vmatpush.msra.mxu0 0.0
      %1604 = vmatpush.msra.mxu0 0.0
      %1605 = vmatpush.msra.mxu0 0.0
      %1606 = vmatpush.msra.mxu0 0.0
      %1607 = vmatpush.msra.mxu0 0.0
      %v1608 = vand.u32 %v1501, 4294901760
      %v1609 = vsub.f32 %v1501, %v1608
      %1610 = vmatpush.msra.mxu0 %v1609
      %v1611 = vand.u32 %v1490, 4294901760
      %v1612 = vsub.f32 %v1490, %v1611
      %1613 = vmatmul.f32.gmra.mxu0 %v1612
      %v1614 = vpop.f32.mrf.mxu0
      %v1615 = vadd.f32 %v1579, %v1614
      %v1616 = vand.u32 %v1493, 4294901760
      %v1617 = vsub.f32 %v1493, %v1616
      %1618 = vmatmul.f32.gmra.mxu0 %v1617
      %v1619 = vpop.f32.mrf.mxu0
      %v1620 = vadd.f32 %v1583, %v1619
      %v1621 = vand.u32 %v1496, 4294901760
      %v1622 = vsub.f32 %v1496, %v1621
      %1623 = vmatmul.f32.gmra.mxu0 %v1622
      %v1624 = vpop.f32.mrf.mxu0
      %v1625 = vadd.f32 %v1587, %v1624
      %v1626 = vand.u32 %v1499, 4294901760
      %v1627 = vsub.f32 %v1499, %v1626
      %1628 = vmatmul.f32.gmra.mxu0 %v1627
      %v1629 = vpop.f32.mrf.mxu0
      %v1630 = vadd.f32 %v1591, %v1629
      %1631 = vdwg.mxu0
      %1632 = vmatpush.msra.mxu0 0.0
      %1633 = vmatpush.msra.mxu0 0.0
      %1634 = vmatpush.msra.mxu0 0.0
      %1635 = vmatpush.msra.mxu0 0.0
      %1636 = vmatpush.msra.mxu0 0.0
      %1637 = vmatpush.msra.mxu0 0.0
      %1638 = vmatpush.msra.mxu0 0.0
      %1639 = vmatpush.msra.mxu0 0.0
      %1640 = vmatpush.msra.mxu0 0.0
      %1641 = vmatpush.msra.mxu0 0.0
      %1642 = vmatpush.msra.mxu0 0.0
      %1643 = vmatpush.msra.mxu0 0.0
      %1644 = vmatpush.msra.mxu0 0.0
      %1645 = vmatpush.msra.mxu0 0.0
      %1646 = vmatpush.msra.mxu0 0.0
      %v1647 = vand.u32 %v1501, 4294901760
      %1648 = vmatpush.msra.mxu0 %v1647
      %v1649 = vand.u32 %v1490, 4294901760
      %v1650 = vsub.f32 %v1490, %v1649
      %v1651 = vand.u32 %v1650, 4294901760
      %1652 = vmatmul.f32.gmra.mxu0 %v1651
      %v1653 = vpop.f32.mrf.mxu0
      %v1654 = vadd.f32 %v1615, %v1653
      %v1655 = vand.u32 %v1493, 4294901760
      %v1656 = vsub.f32 %v1493, %v1655
      %v1657 = vand.u32 %v1656, 4294901760
      %1658 = vmatmul.f32.gmra.mxu0 %v1657
      %v1659 = vpop.f32.mrf.mxu0
      %v1660 = vadd.f32 %v1620, %v1659
      %v1661 = vand.u32 %v1496, 4294901760
      %v1662 = vsub.f32 %v1496, %v1661
      %v1663 = vand.u32 %v1662, 4294901760
      %1664 = vmatmul.f32.gmra.mxu0 %v1663
      %v1665 = vpop.f32.mrf.mxu0
      %v1666 = vadd.f32 %v1625, %v1665
      %v1667 = vand.u32 %v1499, 4294901760
      %v1668 = vsub.f32 %v1499, %v1667
      %v1669 = vand.u32 %v1668, 4294901760
      %1670 = vmatmul.f32.gmra.mxu0 %v1669
      %v1671 = vpop.f32.mrf.mxu0
      %v1672 = vadd.f32 %v1630, %v1671
      %1673 = vdwg.mxu0
      %1674 = vmatpush.msra.mxu0 0.0
      %1675 = vmatpush.msra.mxu0 0.0
      %1676 = vmatpush.msra.mxu0 0.0
      %1677 = vmatpush.msra.mxu0 0.0
      %1678 = vmatpush.msra.mxu0 0.0
      %1679 = vmatpush.msra.mxu0 0.0
      %1680 = vmatpush.msra.mxu0 0.0
      %1681 = vmatpush.msra.mxu0 0.0
      %1682 = vmatpush.msra.mxu0 0.0
      %1683 = vmatpush.msra.mxu0 0.0
      %1684 = vmatpush.msra.mxu0 0.0
      %1685 = vmatpush.msra.mxu0 0.0
      %1686 = vmatpush.msra.mxu0 0.0
      %1687 = vmatpush.msra.mxu0 0.0
      %1688 = vmatpush.msra.mxu0 0.0
      %v1689 = vand.u32 %v1501, 4294901760
      %v1690 = vsub.f32 %v1501, %v1689
      %v1691 = vand.u32 %v1690, 4294901760
      %1692 = vmatpush.msra.mxu0 %v1691
      %v1693 = vand.u32 %v1490, 4294901760
      %1694 = vmatmul.f32.gmra.mxu0 %v1693
      %v1695 = vpop.f32.mrf.mxu0
      %v1696 = vadd.f32 %v1654, %v1695
      %v1697 = vand.u32 %v1493, 4294901760
      %1698 = vmatmul.f32.gmra.mxu0 %v1697
      %v1699 = vpop.f32.mrf.mxu0
      %v1700 = vadd.f32 %v1660, %v1699
      %v1701 = vand.u32 %v1496, 4294901760
      %1702 = vmatmul.f32.gmra.mxu0 %v1701
      %v1703 = vpop.f32.mrf.mxu0
      %v1704 = vadd.f32 %v1666, %v1703
      %v1705 = vand.u32 %v1499, 4294901760
      %1706 = vmatmul.f32.gmra.mxu0 %v1705
      %v1707 = vpop.f32.mrf.mxu0
      %v1708 = vadd.f32 %v1672, %v1707
      %1709 = vdwg.mxu0
      %1710 = vmatpush.msra.mxu0 0.0
      %1711 = vmatpush.msra.mxu0 0.0
      %1712 = vmatpush.msra.mxu0 0.0
      %1713 = vmatpush.msra.mxu0 0.0
      %1714 = vmatpush.msra.mxu0 0.0
      %1715 = vmatpush.msra.mxu0 0.0
      %1716 = vmatpush.msra.mxu0 0.0
      %1717 = vmatpush.msra.mxu0 0.0
      %1718 = vmatpush.msra.mxu0 0.0
      %1719 = vmatpush.msra.mxu0 0.0
      %1720 = vmatpush.msra.mxu0 0.0
      %1721 = vmatpush.msra.mxu0 0.0
      %1722 = vmatpush.msra.mxu0 0.0
      %1723 = vmatpush.msra.mxu0 0.0
      %1724 = vmatpush.msra.mxu0 0.0
      %v1725 = vand.u32 %v1501, 4294901760
      %1726 = vmatpush.msra.mxu0 %v1725
      %v1727 = vand.u32 %v1490, 4294901760
      %1728 = vmatmul.f32.gmra.mxu0 %v1727
      %v1729 = vpop.f32.mrf.mxu0
      %v1730 = vadd.f32 %v1696, %v1729
      %v1731 = vand.u32 %v1493, 4294901760
      %1732 = vmatmul.f32.gmra.mxu0 %v1731
      %v1733 = vpop.f32.mrf.mxu0
      %v1734 = vadd.f32 %v1700, %v1733
      %v1735 = vand.u32 %v1496, 4294901760
      %1736 = vmatmul.f32.gmra.mxu0 %v1735
      %v1737 = vpop.f32.mrf.mxu0
      %v1738 = vadd.f32 %v1704, %v1737
      %v1739 = vand.u32 %v1499, 4294901760
      %1740 = vmatmul.f32.gmra.mxu0 %v1739
      %v1741 = vpop.f32.mrf.mxu0
      %v1742 = vadd.f32 %v1708, %v1741
      %1743 = vdwg.mxu0
      %1744 = vmatpush.msra.mxu0 0.0
      %1745 = vmatpush.msra.mxu0 0.0
      %1746 = vmatpush.msra.mxu0 0.0
      %1747 = vmatpush.msra.mxu0 0.0
      %1748 = vmatpush.msra.mxu0 0.0
      %1749 = vmatpush.msra.mxu0 0.0
      %1750 = vmatpush.msra.mxu0 0.0
      %1751 = vmatpush.msra.mxu0 0.0
      %1752 = vmatpush.msra.mxu0 0.0
      %1753 = vmatpush.msra.mxu0 0.0
      %1754 = vmatpush.msra.mxu0 0.0
      %1755 = vmatpush.msra.mxu0 0.0
      %1756 = vmatpush.msra.mxu0 0.0
      %1757 = vmatpush.msra.mxu0 0.0
      %1758 = vmatpush.msra.mxu0 0.0
      %v1759 = vand.u32 %v1503, 4294901760
      %1760 = vmatpush.msra.mxu0 %v1759
      %v1761 = vand.u32 %v1490, 4294901760
      %v1762 = vsub.f32 %v1490, %v1761
      %v1763 = vand.u32 %v1762, 4294901760
      %v1764 = vsub.f32 %v1762, %v1763
      %v1765 = vand.u32 %v1764, 4294901760
      %1766 = vmatmul.f32.gmra.mxu0 %v1765
      %v1767 = vpop.f32.mrf.mxu0
      %v1768 = vadd.f32 %v1471, %v1767
      %v1769 = vand.u32 %v1493, 4294901760
      %v1770 = vsub.f32 %v1493, %v1769
      %v1771 = vand.u32 %v1770, 4294901760
      %v1772 = vsub.f32 %v1770, %v1771
      %v1773 = vand.u32 %v1772, 4294901760
      %1774 = vmatmul.f32.gmra.mxu0 %v1773
      %v1775 = vpop.f32.mrf.mxu0
      %v1776 = vadd.f32 %v1475, %v1775
      %v1777 = vand.u32 %v1496, 4294901760
      %v1778 = vsub.f32 %v1496, %v1777
      %v1779 = vand.u32 %v1778, 4294901760
      %v1780 = vsub.f32 %v1778, %v1779
      %v1781 = vand.u32 %v1780, 4294901760
      %1782 = vmatmul.f32.gmra.mxu0 %v1781
      %v1783 = vpop.f32.mrf.mxu0
      %v1784 = vadd.f32 %v1479, %v1783
      %v1785 = vand.u32 %v1499, 4294901760
      %v1786 = vsub.f32 %v1499, %v1785
      %v1787 = vand.u32 %v1786, 4294901760
      %v1788 = vsub.f32 %v1786, %v1787
      %v1789 = vand.u32 %v1788, 4294901760
      %1790 = vmatmul.f32.gmra.mxu0 %v1789
      %v1791 = vpop.f32.mrf.mxu0
      %v1792 = vadd.f32 %v1483, %v1791
      %1793 = vdwg.mxu0
      %1794 = vmatpush.msra.mxu0 0.0
      %1795 = vmatpush.msra.mxu0 0.0
      %1796 = vmatpush.msra.mxu0 0.0
      %1797 = vmatpush.msra.mxu0 0.0
      %1798 = vmatpush.msra.mxu0 0.0
      %1799 = vmatpush.msra.mxu0 0.0
      %1800 = vmatpush.msra.mxu0 0.0
      %1801 = vmatpush.msra.mxu0 0.0
      %1802 = vmatpush.msra.mxu0 0.0
      %1803 = vmatpush.msra.mxu0 0.0
      %1804 = vmatpush.msra.mxu0 0.0
      %1805 = vmatpush.msra.mxu0 0.0
      %1806 = vmatpush.msra.mxu0 0.0
      %1807 = vmatpush.msra.mxu0 0.0
      %1808 = vmatpush.msra.mxu0 0.0
      %v1809 = vand.u32 %v1503, 4294901760
      %v1810 = vsub.f32 %v1503, %v1809
      %v1811 = vand.u32 %v1810, 4294901760
      %v1812 = vsub.f32 %v1810, %v1811
      %v1813 = vand.u32 %v1812, 4294901760
      %1814 = vmatpush.msra.mxu0 %v1813
      %v1815 = vand.u32 %v1490, 4294901760
      %1816 = vmatmul.f32.gmra.mxu0 %v1815
      %v1817 = vpop.f32.mrf.mxu0
      %v1818 = vadd.f32 %v1768, %v1817
      %v1819 = vand.u32 %v1493, 4294901760
      %1820 = vmatmul.f32.gmra.mxu0 %v1819
      %v1821 = vpop.f32.mrf.mxu0
      %v1822 = vadd.f32 %v1776, %v1821
      %v1823 = vand.u32 %v1496, 4294901760
      %1824 = vmatmul.f32.gmra.mxu0 %v1823
      %v1825 = vpop.f32.mrf.mxu0
      %v1826 = vadd.f32 %v1784, %v1825
      %v1827 = vand.u32 %v1499, 4294901760
      %1828 = vmatmul.f32.gmra.mxu0 %v1827
      %v1829 = vpop.f32.mrf.mxu0
      %v1830 = vadd.f32 %v1792, %v1829
      %1831 = vdwg.mxu0
      %1832 = vmatpush.msra.mxu0 0.0
      %1833 = vmatpush.msra.mxu0 0.0
      %1834 = vmatpush.msra.mxu0 0.0
      %1835 = vmatpush.msra.mxu0 0.0
      %1836 = vmatpush.msra.mxu0 0.0
      %1837 = vmatpush.msra.mxu0 0.0
      %1838 = vmatpush.msra.mxu0 0.0
      %1839 = vmatpush.msra.mxu0 0.0
      %1840 = vmatpush.msra.mxu0 0.0
      %1841 = vmatpush.msra.mxu0 0.0
      %1842 = vmatpush.msra.mxu0 0.0
      %1843 = vmatpush.msra.mxu0 0.0
      %1844 = vmatpush.msra.mxu0 0.0
      %1845 = vmatpush.msra.mxu0 0.0
      %1846 = vmatpush.msra.mxu0 0.0
      %v1847 = vand.u32 %v1503, 4294901760
      %v1848 = vsub.f32 %v1503, %v1847
      %1849 = vmatpush.msra.mxu0 %v1848
      %v1850 = vand.u32 %v1490, 4294901760
      %v1851 = vsub.f32 %v1490, %v1850
      %1852 = vmatmul.f32.gmra.mxu0 %v1851
      %v1853 = vpop.f32.mrf.mxu0
      %v1854 = vadd.f32 %v1818, %v1853
      %v1855 = vand.u32 %v1493, 4294901760
      %v1856 = vsub.f32 %v1493, %v1855
      %1857 = vmatmul.f32.gmra.mxu0 %v1856
      %v1858 = vpop.f32.mrf.mxu0
      %v1859 = vadd.f32 %v1822, %v1858
      %v1860 = vand.u32 %v1496, 4294901760
      %v1861 = vsub.f32 %v1496, %v1860
      %1862 = vmatmul.f32.gmra.mxu0 %v1861
      %v1863 = vpop.f32.mrf.mxu0
      %v1864 = vadd.f32 %v1826, %v1863
      %v1865 = vand.u32 %v1499, 4294901760
      %v1866 = vsub.f32 %v1499, %v1865
      %1867 = vmatmul.f32.gmra.mxu0 %v1866
      %v1868 = vpop.f32.mrf.mxu0
      %v1869 = vadd.f32 %v1830, %v1868
      %1870 = vdwg.mxu0
      %1871 = vmatpush.msra.mxu0 0.0
      %1872 = vmatpush.msra.mxu0 0.0
      %1873 = vmatpush.msra.mxu0 0.0
      %1874 = vmatpush.msra.mxu0 0.0
      %1875 = vmatpush.msra.mxu0 0.0
      %1876 = vmatpush.msra.mxu0 0.0
      %1877 = vmatpush.msra.mxu0 0.0
      %1878 = vmatpush.msra.mxu0 0.0
      %1879 = vmatpush.msra.mxu0 0.0
      %1880 = vmatpush.msra.mxu0 0.0
      %1881 = vmatpush.msra.mxu0 0.0
      %1882 = vmatpush.msra.mxu0 0.0
      %1883 = vmatpush.msra.mxu0 0.0
      %1884 = vmatpush.msra.mxu0 0.0
      %1885 = vmatpush.msra.mxu0 0.0
      %v1886 = vand.u32 %v1503, 4294901760
      %1887 = vmatpush.msra.mxu0 %v1886
      %v1888 = vand.u32 %v1490, 4294901760
      %v1889 = vsub.f32 %v1490, %v1888
      %v1890 = vand.u32 %v1889, 4294901760
      %1891 = vmatmul.f32.gmra.mxu0 %v1890
      %v1892 = vpop.f32.mrf.mxu0
      %v1893 = vadd.f32 %v1854, %v1892
      %v1894 = vand.u32 %v1493, 4294901760
      %v1895 = vsub.f32 %v1493, %v1894
      %v1896 = vand.u32 %v1895, 4294901760
      %1897 = vmatmul.f32.gmra.mxu0 %v1896
      %v1898 = vpop.f32.mrf.mxu0
      %v1899 = vadd.f32 %v1859, %v1898
      %v1900 = vand.u32 %v1496, 4294901760
      %v1901 = vsub.f32 %v1496, %v1900
      %v1902 = vand.u32 %v1901, 4294901760
      %1903 = vmatmul.f32.gmra.mxu0 %v1902
      %v1904 = vpop.f32.mrf.mxu0
      %v1905 = vadd.f32 %v1864, %v1904
      %v1906 = vand.u32 %v1499, 4294901760
      %v1907 = vsub.f32 %v1499, %v1906
      %v1908 = vand.u32 %v1907, 4294901760
      %1909 = vmatmul.f32.gmra.mxu0 %v1908
      %v1910 = vpop.f32.mrf.mxu0
      %v1911 = vadd.f32 %v1869, %v1910
      %1912 = vdwg.mxu0
      %1913 = vmatpush.msra.mxu0 0.0
      %1914 = vmatpush.msra.mxu0 0.0
      %1915 = vmatpush.msra.mxu0 0.0
      %1916 = vmatpush.msra.mxu0 0.0
      %1917 = vmatpush.msra.mxu0 0.0
      %1918 = vmatpush.msra.mxu0 0.0
      %1919 = vmatpush.msra.mxu0 0.0
      %1920 = vmatpush.msra.mxu0 0.0
      %1921 = vmatpush.msra.mxu0 0.0
      %1922 = vmatpush.msra.mxu0 0.0
      %1923 = vmatpush.msra.mxu0 0.0
      %1924 = vmatpush.msra.mxu0 0.0
      %1925 = vmatpush.msra.mxu0 0.0
      %1926 = vmatpush.msra.mxu0 0.0
      %1927 = vmatpush.msra.mxu0 0.0
      %v1928 = vand.u32 %v1503, 4294901760
      %v1929 = vsub.f32 %v1503, %v1928
      %v1930 = vand.u32 %v1929, 4294901760
      %1931 = vmatpush.msra.mxu0 %v1930
      %v1932 = vand.u32 %v1490, 4294901760
      %1933 = vmatmul.f32.gmra.mxu0 %v1932
      %v1934 = vpop.f32.mrf.mxu0
      %v1935 = vadd.f32 %v1893, %v1934
      %v1936 = vand.u32 %v1493, 4294901760
      %1937 = vmatmul.f32.gmra.mxu0 %v1936
      %v1938 = vpop.f32.mrf.mxu0
      %v1939 = vadd.f32 %v1899, %v1938
      %v1940 = vand.u32 %v1496, 4294901760
      %1941 = vmatmul.f32.gmra.mxu0 %v1940
      %v1942 = vpop.f32.mrf.mxu0
      %v1943 = vadd.f32 %v1905, %v1942
      %v1944 = vand.u32 %v1499, 4294901760
      %1945 = vmatmul.f32.gmra.mxu0 %v1944
      %v1946 = vpop.f32.mrf.mxu0
      %v1947 = vadd.f32 %v1911, %v1946
      %1948 = vdwg.mxu0
      %1949 = vmatpush.msra.mxu0 0.0
      %1950 = vmatpush.msra.mxu0 0.0
      %1951 = vmatpush.msra.mxu0 0.0
      %1952 = vmatpush.msra.mxu0 0.0
      %1953 = vmatpush.msra.mxu0 0.0
      %1954 = vmatpush.msra.mxu0 0.0
      %1955 = vmatpush.msra.mxu0 0.0
      %1956 = vmatpush.msra.mxu0 0.0
      %1957 = vmatpush.msra.mxu0 0.0
      %1958 = vmatpush.msra.mxu0 0.0
      %1959 = vmatpush.msra.mxu0 0.0
      %1960 = vmatpush.msra.mxu0 0.0
      %1961 = vmatpush.msra.mxu0 0.0
      %1962 = vmatpush.msra.mxu0 0.0
      %1963 = vmatpush.msra.mxu0 0.0
      %v1964 = vand.u32 %v1503, 4294901760
      %1965 = vmatpush.msra.mxu0 %v1964
      %v1966 = vand.u32 %v1490, 4294901760
      %1967 = vmatmul.f32.gmra.mxu0 %v1966
      %v1968 = vpop.f32.mrf.mxu0
      %v1969 = vadd.f32 %v1935, %v1968
      %v1970 = vand.u32 %v1493, 4294901760
      %1971 = vmatmul.f32.gmra.mxu0 %v1970
      %v1972 = vpop.f32.mrf.mxu0
      %v1973 = vadd.f32 %v1939, %v1972
      %v1974 = vand.u32 %v1496, 4294901760
      %1975 = vmatmul.f32.gmra.mxu0 %v1974
      %v1976 = vpop.f32.mrf.mxu0
      %v1977 = vadd.f32 %v1943, %v1976
      %v1978 = vand.u32 %v1499, 4294901760
      %1979 = vmatmul.f32.gmra.mxu0 %v1978
      %v1980 = vpop.f32.mrf.mxu0
      %v1981 = vadd.f32 %v1947, %v1980
      %1982 = vdwg.mxu0
      %v1983 = vld [vmem:[%s831] sm:$0xff]
      %v1984 = vld [vmem:[%s874] sm:$0xf]
      %1986 = vset.pattern.permute.xlu0 0
      %1987 = vperm.xlu0 %1986, %v1984
      %v1988 = vpop.permute.xlu0 %1987
      %v1990 = vunpack.c.l.s4 839922192
      %v1991 = vunpack.c.0.s8 %v1990
      %v1992 = vperm.slane %v1988, %v1991
      %v1994 = vmul.f32 %v1983, %v1992
      %1995 = vset.pattern.permute.xlu0 1
      %1996 = vperm.xlu0 %1995, %v1984
      %v1997 = vpop.permute.xlu0 %1996
      %v1999 = vunpack.c.l.s4 839922192
      %v2000 = vunpack.c.0.s8 %v1999
      %v2001 = vperm.slane %v1997, %v2000
      %v2003 = vadd.f32 %v1994, %v2001
      %vm2004 = vcmp.ge.f32.partialorder %v2003, 0.0
      %2005 = vset.pattern.permute.xlu0 2
      %2006 = vperm.xlu0 %2005, %v1984
      %v2007 = vpop.permute.xlu0 %2006
      %2010 = vst [vmem:[#allocation1] ss:$2 sm:$0xff] %v2003
      %v2011 = vld.sshfl [vmem:[#allocation1] sm:$0xff pattern:$0x75316420]
      %v2012 = vld.sshfl [vmem:[#allocation1 + $0x8] sm:$0xff pattern:$0x75316420]
      %v2015 = vmul.f32 %v2007, %v2011
      %v2016 = vmul.f32 %v2007, %v2012
      %v2019 = vrot.slane %v2016, 4
      %v2020 = vsel %vm934, %v2015, %v2019
      %v2022 = vsel %vm2004, %v2003, %v2020
      %v2023 = vld [vmem:[%s14] sm:$0xff]
      %v2024 = vld [vmem:[%s14 + $0x8] sm:$0xff]
      %v2025 = vld [vmem:[%s14 + $0x10] sm:$0xff]
      %v2026 = vld [vmem:[%s14 + $0x18] sm:$0xff]
      %2028 = vst [vmem:[#allocation1] ss:$2 sm:$0xff] %v2022
      %v2029 = vld.sshfl [vmem:[#allocation1] sm:$0xff pattern:$0x75316420]
      %v2030 = vld.sshfl [vmem:[#allocation1 + $0x8] sm:$0xff pattern:$0x75316420]
      %v2032 = vsel %vm990, %v2023, 0
      %v2035 = vsel %vm990, %v2024, 0
      %v2038 = vsel %vm990, %v2025, 0
      %v2041 = vsel %vm990, %v2026, 0
      %v2043 = vsel %vm934, %v2029, 0
      %v2045 = vsel %vm934, %v2030, 0
      %2047 = vmatpush.msra.mxu0 0.0
      %2048 = vmatpush.msra.mxu0 0.0
      %2049 = vmatpush.msra.mxu0 0.0
      %2050 = vmatpush.msra.mxu0 0.0
      %2051 = vmatpush.msra.mxu0 0.0
      %2052 = vmatpush.msra.mxu0 0.0
      %2053 = vmatpush.msra.mxu0 0.0
      %2054 = vmatpush.msra.mxu0 0.0
      %2055 = vmatpush.msra.mxu0 0.0
      %2056 = vmatpush.msra.mxu0 0.0
      %2057 = vmatpush.msra.mxu0 0.0
      %2058 = vmatpush.msra.mxu0 0.0
      %2059 = vmatpush.msra.mxu0 0.0
      %2060 = vmatpush.msra.mxu0 0.0
      %2061 = vmatpush.msra.mxu0 0.0
      %v2062 = vand.u32 %v2043, 4294901760
      %2063 = vmatpush.msra.mxu0 %v2062
      %v2064 = vand.u32 %v2032, 4294901760
      %v2065 = vsub.f32 %v2032, %v2064
      %v2066 = vand.u32 %v2065, 4294901760
      %v2067 = vsub.f32 %v2065, %v2066
      %v2068 = vand.u32 %v2067, 4294901760
      %2069 = vmatmul.f32.gmra.mxu0 %v2068
      %v2070 = vpop.f32.mrf.mxu0
      %v2071 = vadd.f32 0.0, %v2070
      %v2072 = vand.u32 %v2035, 4294901760
      %v2073 = vsub.f32 %v2035, %v2072
      %v2074 = vand.u32 %v2073, 4294901760
      %v2075 = vsub.f32 %v2073, %v2074
      %v2076 = vand.u32 %v2075, 4294901760
      %2077 = vmatmul.f32.gmra.mxu0 %v2076
      %v2078 = vpop.f32.mrf.mxu0
      %v2079 = vadd.f32 0.0, %v2078
      %v2080 = vand.u32 %v2038, 4294901760
      %v2081 = vsub.f32 %v2038, %v2080
      %v2082 = vand.u32 %v2081, 4294901760
      %v2083 = vsub.f32 %v2081, %v2082
      %v2084 = vand.u32 %v2083, 4294901760
      %2085 = vmatmul.f32.gmra.mxu0 %v2084
      %v2086 = vpop.f32.mrf.mxu0
      %v2087 = vadd.f32 0.0, %v2086
      %v2088 = vand.u32 %v2041, 4294901760
      %v2089 = vsub.f32 %v2041, %v2088
      %v2090 = vand.u32 %v2089, 4294901760
      %v2091 = vsub.f32 %v2089, %v2090
      %v2092 = vand.u32 %v2091, 4294901760
      %2093 = vmatmul.f32.gmra.mxu0 %v2092
      %v2094 = vpop.f32.mrf.mxu0
      %v2095 = vadd.f32 0.0, %v2094
      %2096 = vdwg.mxu0
      %2097 = vmatpush.msra.mxu0 0.0
      %2098 = vmatpush.msra.mxu0 0.0
      %2099 = vmatpush.msra.mxu0 0.0
      %2100 = vmatpush.msra.mxu0 0.0
      %2101 = vmatpush.msra.mxu0 0.0
      %2102 = vmatpush.msra.mxu0 0.0
      %2103 = vmatpush.msra.mxu0 0.0
      %2104 = vmatpush.msra.mxu0 0.0
      %2105 = vmatpush.msra.mxu0 0.0
      %2106 = vmatpush.msra.mxu0 0.0
      %2107 = vmatpush.msra.mxu0 0.0
      %2108 = vmatpush.msra.mxu0 0.0
      %2109 = vmatpush.msra.mxu0 0.0
      %2110 = vmatpush.msra.mxu0 0.0
      %2111 = vmatpush.msra.mxu0 0.0
      %v2112 = vand.u32 %v2043, 4294901760
      %v2113 = vsub.f32 %v2043, %v2112
      %v2114 = vand.u32 %v2113, 4294901760
      %v2115 = vsub.f32 %v2113, %v2114
      %v2116 = vand.u32 %v2115, 4294901760
      %2117 = vmatpush.msra.mxu0 %v2116
      %v2118 = vand.u32 %v2032, 4294901760
      %2119 = vmatmul.f32.gmra.mxu0 %v2118
      %v2120 = vpop.f32.mrf.mxu0
      %v2121 = vadd.f32 %v2071, %v2120
      %v2122 = vand.u32 %v2035, 4294901760
      %2123 = vmatmul.f32.gmra.mxu0 %v2122
      %v2124 = vpop.f32.mrf.mxu0
      %v2125 = vadd.f32 %v2079, %v2124
      %v2126 = vand.u32 %v2038, 4294901760
      %2127 = vmatmul.f32.gmra.mxu0 %v2126
      %v2128 = vpop.f32.mrf.mxu0
      %v2129 = vadd.f32 %v2087, %v2128
      %v2130 = vand.u32 %v2041, 4294901760
      %2131 = vmatmul.f32.gmra.mxu0 %v2130
      %v2132 = vpop.f32.mrf.mxu0
      %v2133 = vadd.f32 %v2095, %v2132
      %2134 = vdwg.mxu0
      %2135 = vmatpush.msra.mxu0 0.0
      %2136 = vmatpush.msra.mxu0 0.0
      %2137 = vmatpush.msra.mxu0 0.0
      %2138 = vmatpush.msra.mxu0 0.0
      %2139 = vmatpush.msra.mxu0 0.0
      %2140 = vmatpush.msra.mxu0 0.0
      %2141 = vmatpush.msra.mxu0 0.0
      %2142 = vmatpush.msra.mxu0 0.0
      %2143 = vmatpush.msra.mxu0 0.0
      %2144 = vmatpush.msra.mxu0 0.0
      %2145 = vmatpush.msra.mxu0 0.0
      %2146 = vmatpush.msra.mxu0 0.0
      %2147 = vmatpush.msra.mxu0 0.0
      %2148 = vmatpush.msra.mxu0 0.0
      %2149 = vmatpush.msra.mxu0 0.0
      %v2150 = vand.u32 %v2043, 4294901760
      %v2151 = vsub.f32 %v2043, %v2150
      %2152 = vmatpush.msra.mxu0 %v2151
      %v2153 = vand.u32 %v2032, 4294901760
      %v2154 = vsub.f32 %v2032, %v2153
      %2155 = vmatmul.f32.gmra.mxu0 %v2154
      %v2156 = vpop.f32.mrf.mxu0
      %v2157 = vadd.f32 %v2121, %v2156
      %v2158 = vand.u32 %v2035, 4294901760
      %v2159 = vsub.f32 %v2035, %v2158
      %2160 = vmatmul.f32.gmra.mxu0 %v2159
      %v2161 = vpop.f32.mrf.mxu0
      %v2162 = vadd.f32 %v2125, %v2161
      %v2163 = vand.u32 %v2038, 4294901760
      %v2164 = vsub.f32 %v2038, %v2163
      %2165 = vmatmul.f32.gmra.mxu0 %v2164
      %v2166 = vpop.f32.mrf.mxu0
      %v2167 = vadd.f32 %v2129, %v2166
      %v2168 = vand.u32 %v2041, 4294901760
      %v2169 = vsub.f32 %v2041, %v2168
      %2170 = vmatmul.f32.gmra.mxu0 %v2169
      %v2171 = vpop.f32.mrf.mxu0
      %v2172 = vadd.f32 %v2133, %v2171
      %2173 = vdwg.mxu0
      %2174 = vmatpush.msra.mxu0 0.0
      %2175 = vmatpush.msra.mxu0 0.0
      %2176 = vmatpush.msra.mxu0 0.0
      %2177 = vmatpush.msra.mxu0 0.0
      %2178 = vmatpush.msra.mxu0 0.0
      %2179 = vmatpush.msra.mxu0 0.0
      %2180 = vmatpush.msra.mxu0 0.0
      %2181 = vmatpush.msra.mxu0 0.0
      %2182 = vmatpush.msra.mxu0 0.0
      %2183 = vmatpush.msra.mxu0 0.0
      %2184 = vmatpush.msra.mxu0 0.0
      %2185 = vmatpush.msra.mxu0 0.0
      %2186 = vmatpush.msra.mxu0 0.0
      %2187 = vmatpush.msra.mxu0 0.0
      %2188 = vmatpush.msra.mxu0 0.0
      %v2189 = vand.u32 %v2043, 4294901760
      %2190 = vmatpush.msra.mxu0 %v2189
      %v2191 = vand.u32 %v2032, 4294901760
      %v2192 = vsub.f32 %v2032, %v2191
      %v2193 = vand.u32 %v2192, 4294901760
      %2194 = vmatmul.f32.gmra.mxu0 %v2193
      %v2195 = vpop.f32.mrf.mxu0
      %v2196 = vadd.f32 %v2157, %v2195
      %v2197 = vand.u32 %v2035, 4294901760
      %v2198 = vsub.f32 %v2035, %v2197
      %v2199 = vand.u32 %v2198, 4294901760
      %2200 = vmatmul.f32.gmra.mxu0 %v2199
      %v2201 = vpop.f32.mrf.mxu0
      %v2202 = vadd.f32 %v2162, %v2201
      %v2203 = vand.u32 %v2038, 4294901760
      %v2204 = vsub.f32 %v2038, %v2203
      %v2205 = vand.u32 %v2204, 4294901760
      %2206 = vmatmul.f32.gmra.mxu0 %v2205
      %v2207 = vpop.f32.mrf.mxu0
      %v2208 = vadd.f32 %v2167, %v2207
      %v2209 = vand.u32 %v2041, 4294901760
      %v2210 = vsub.f32 %v2041, %v2209
      %v2211 = vand.u32 %v2210, 4294901760
      %2212 = vmatmul.f32.gmra.mxu0 %v2211
      %v2213 = vpop.f32.mrf.mxu0
      %v2214 = vadd.f32 %v2172, %v2213
      %2215 = vdwg.mxu0
      %2216 = vmatpush.msra.mxu0 0.0
      %2217 = vmatpush.msra.mxu0 0.0
      %2218 = vmatpush.msra.mxu0 0.0
      %2219 = vmatpush.msra.mxu0 0.0
      %2220 = vmatpush.msra.mxu0 0.0
      %2221 = vmatpush.msra.mxu0 0.0
      %2222 = vmatpush.msra.mxu0 0.0
      %2223 = vmatpush.msra.mxu0 0.0
      %2224 = vmatpush.msra.mxu0 0.0
      %2225 = vmatpush.msra.mxu0 0.0
      %2226 = vmatpush.msra.mxu0 0.0
      %2227 = vmatpush.msra.mxu0 0.0
      %2228 = vmatpush.msra.mxu0 0.0
      %2229 = vmatpush.msra.mxu0 0.0
      %2230 = vmatpush.msra.mxu0 0.0
      %v2231 = vand.u32 %v2043, 4294901760
      %v2232 = vsub.f32 %v2043, %v2231
      %v2233 = vand.u32 %v2232, 4294901760
      %2234 = vmatpush.msra.mxu0 %v2233
      %v2235 = vand.u32 %v2032, 4294901760
      %2236 = vmatmul.f32.gmra.mxu0 %v2235
      %v2237 = vpop.f32.mrf.mxu0
      %v2238 = vadd.f32 %v2196, %v2237
      %v2239 = vand.u32 %v2035, 4294901760
      %2240 = vmatmul.f32.gmra.mxu0 %v2239
      %v2241 = vpop.f32.mrf.mxu0
      %v2242 = vadd.f32 %v2202, %v2241
      %v2243 = vand.u32 %v2038, 4294901760
      %2244 = vmatmul.f32.gmra.mxu0 %v2243
      %v2245 = vpop.f32.mrf.mxu0
      %v2246 = vadd.f32 %v2208, %v2245
      %v2247 = vand.u32 %v2041, 4294901760
      %2248 = vmatmul.f32.gmra.mxu0 %v2247
      %v2249 = vpop.f32.mrf.mxu0
      %v2250 = vadd.f32 %v2214, %v2249
      %2251 = vdwg.mxu0
      %2252 = vmatpush.msra.mxu0 0.0
      %2253 = vmatpush.msra.mxu0 0.0
      %2254 = vmatpush.msra.mxu0 0.0
      %2255 = vmatpush.msra.mxu0 0.0
      %2256 = vmatpush.msra.mxu0 0.0
      %2257 = vmatpush.msra.mxu0 0.0
      %2258 = vmatpush.msra.mxu0 0.0
      %2259 = vmatpush.msra.mxu0 0.0
      %2260 = vmatpush.msra.mxu0 0.0
      %2261 = vmatpush.msra.mxu0 0.0
      %2262 = vmatpush.msra.mxu0 0.0
      %2263 = vmatpush.msra.mxu0 0.0
      %2264 = vmatpush.msra.mxu0 0.0
      %2265 = vmatpush.msra.mxu0 0.0
      %2266 = vmatpush.msra.mxu0 0.0
      %v2267 = vand.u32 %v2043, 4294901760
      %2268 = vmatpush.msra.mxu0 %v2267
      %v2269 = vand.u32 %v2032, 4294901760
      %2270 = vmatmul.f32.gmra.mxu0 %v2269
      %v2271 = vpop.f32.mrf.mxu0
      %v2272 = vadd.f32 %v2238, %v2271
      %v2273 = vand.u32 %v2035, 4294901760
      %2274 = vmatmul.f32.gmra.mxu0 %v2273
      %v2275 = vpop.f32.mrf.mxu0
      %v2276 = vadd.f32 %v2242, %v2275
      %v2277 = vand.u32 %v2038, 4294901760
      %2278 = vmatmul.f32.gmra.mxu0 %v2277
      %v2279 = vpop.f32.mrf.mxu0
      %v2280 = vadd.f32 %v2246, %v2279
      %v2281 = vand.u32 %v2041, 4294901760
      %2282 = vmatmul.f32.gmra.mxu0 %v2281
      %v2283 = vpop.f32.mrf.mxu0
      %v2284 = vadd.f32 %v2250, %v2283
      %2285 = vdwg.mxu0
      %2286 = vmatpush.msra.mxu0 0.0
      %2287 = vmatpush.msra.mxu0 0.0
      %2288 = vmatpush.msra.mxu0 0.0
      %2289 = vmatpush.msra.mxu0 0.0
      %2290 = vmatpush.msra.mxu0 0.0
      %2291 = vmatpush.msra.mxu0 0.0
      %2292 = vmatpush.msra.mxu0 0.0
      %2293 = vmatpush.msra.mxu0 0.0
      %2294 = vmatpush.msra.mxu0 0.0
      %2295 = vmatpush.msra.mxu0 0.0
      %2296 = vmatpush.msra.mxu0 0.0
      %2297 = vmatpush.msra.mxu0 0.0
      %2298 = vmatpush.msra.mxu0 0.0
      %2299 = vmatpush.msra.mxu0 0.0
      %2300 = vmatpush.msra.mxu0 0.0
      %v2301 = vand.u32 %v2045, 4294901760
      %2302 = vmatpush.msra.mxu0 %v2301
      %v2303 = vand.u32 %v2032, 4294901760
      %v2304 = vsub.f32 %v2032, %v2303
      %v2305 = vand.u32 %v2304, 4294901760
      %v2306 = vsub.f32 %v2304, %v2305
      %v2307 = vand.u32 %v2306, 4294901760
      %2308 = vmatmul.f32.gmra.mxu0 %v2307
      %v2309 = vpop.f32.mrf.mxu0
      %v2310 = vadd.f32 0.0, %v2309
      %v2311 = vand.u32 %v2035, 4294901760
      %v2312 = vsub.f32 %v2035, %v2311
      %v2313 = vand.u32 %v2312, 4294901760
      %v2314 = vsub.f32 %v2312, %v2313
      %v2315 = vand.u32 %v2314, 4294901760
      %2316 = vmatmul.f32.gmra.mxu0 %v2315
      %v2317 = vpop.f32.mrf.mxu0
      %v2318 = vadd.f32 0.0, %v2317
      %v2319 = vand.u32 %v2038, 4294901760
      %v2320 = vsub.f32 %v2038, %v2319
      %v2321 = vand.u32 %v2320, 4294901760
      %v2322 = vsub.f32 %v2320, %v2321
      %v2323 = vand.u32 %v2322, 4294901760
      %2324 = vmatmul.f32.gmra.mxu0 %v2323
      %v2325 = vpop.f32.mrf.mxu0
      %v2326 = vadd.f32 0.0, %v2325
      %v2327 = vand.u32 %v2041, 4294901760
      %v2328 = vsub.f32 %v2041, %v2327
      %v2329 = vand.u32 %v2328, 4294901760
      %v2330 = vsub.f32 %v2328, %v2329
      %v2331 = vand.u32 %v2330, 4294901760
      %2332 = vmatmul.f32.gmra.mxu0 %v2331
      %v2333 = vpop.f32.mrf.mxu0
      %v2334 = vadd.f32 0.0, %v2333
      %2335 = vdwg.mxu0
      %2336 = vmatpush.msra.mxu0 0.0
      %2337 = vmatpush.msra.mxu0 0.0
      %2338 = vmatpush.msra.mxu0 0.0
      %2339 = vmatpush.msra.mxu0 0.0
      %2340 = vmatpush.msra.mxu0 0.0
      %2341 = vmatpush.msra.mxu0 0.0
      %2342 = vmatpush.msra.mxu0 0.0
      %2343 = vmatpush.msra.mxu0 0.0
      %2344 = vmatpush.msra.mxu0 0.0
      %2345 = vmatpush.msra.mxu0 0.0
      %2346 = vmatpush.msra.mxu0 0.0
      %2347 = vmatpush.msra.mxu0 0.0
      %2348 = vmatpush.msra.mxu0 0.0
      %2349 = vmatpush.msra.mxu0 0.0
      %2350 = vmatpush.msra.mxu0 0.0
      %v2351 = vand.u32 %v2045, 4294901760
      %v2352 = vsub.f32 %v2045, %v2351
      %v2353 = vand.u32 %v2352, 4294901760
      %v2354 = vsub.f32 %v2352, %v2353
      %v2355 = vand.u32 %v2354, 4294901760
      %2356 = vmatpush.msra.mxu0 %v2355
      %v2357 = vand.u32 %v2032, 4294901760
      %2358 = vmatmul.f32.gmra.mxu0 %v2357
      %v2359 = vpop.f32.mrf.mxu0
      %v2360 = vadd.f32 %v2310, %v2359
      %v2361 = vand.u32 %v2035, 4294901760
      %2362 = vmatmul.f32.gmra.mxu0 %v2361
      %v2363 = vpop.f32.mrf.mxu0
      %v2364 = vadd.f32 %v2318, %v2363
      %v2365 = vand.u32 %v2038, 4294901760
      %2366 = vmatmul.f32.gmra.mxu0 %v2365
      %v2367 = vpop.f32.mrf.mxu0
      %v2368 = vadd.f32 %v2326, %v2367
      %v2369 = vand.u32 %v2041, 4294901760
      %2370 = vmatmul.f32.gmra.mxu0 %v2369
      %v2371 = vpop.f32.mrf.mxu0
      %v2372 = vadd.f32 %v2334, %v2371
      %2373 = vdwg.mxu0
      %2374 = vmatpush.msra.mxu0 0.0
      %2375 = vmatpush.msra.mxu0 0.0
      %2376 = vmatpush.msra.mxu0 0.0
      %2377 = vmatpush.msra.mxu0 0.0
      %2378 = vmatpush.msra.mxu0 0.0
      %2379 = vmatpush.msra.mxu0 0.0
      %2380 = vmatpush.msra.mxu0 0.0
      %2381 = vmatpush.msra.mxu0 0.0
      %2382 = vmatpush.msra.mxu0 0.0
      %2383 = vmatpush.msra.mxu0 0.0
      %2384 = vmatpush.msra.mxu0 0.0
      %2385 = vmatpush.msra.mxu0 0.0
      %2386 = vmatpush.msra.mxu0 0.0
      %2387 = vmatpush.msra.mxu0 0.0
      %2388 = vmatpush.msra.mxu0 0.0
      %v2389 = vand.u32 %v2045, 4294901760
      %v2390 = vsub.f32 %v2045, %v2389
      %2391 = vmatpush.msra.mxu0 %v2390
      %v2392 = vand.u32 %v2032, 4294901760
      %v2393 = vsub.f32 %v2032, %v2392
      %2394 = vmatmul.f32.gmra.mxu0 %v2393
      %v2395 = vpop.f32.mrf.mxu0
      %v2396 = vadd.f32 %v2360, %v2395
      %v2397 = vand.u32 %v2035, 4294901760
      %v2398 = vsub.f32 %v2035, %v2397
      %2399 = vmatmul.f32.gmra.mxu0 %v2398
      %v2400 = vpop.f32.mrf.mxu0
      %v2401 = vadd.f32 %v2364, %v2400
      %v2402 = vand.u32 %v2038, 4294901760
      %v2403 = vsub.f32 %v2038, %v2402
      %2404 = vmatmul.f32.gmra.mxu0 %v2403
      %v2405 = vpop.f32.mrf.mxu0
      %v2406 = vadd.f32 %v2368, %v2405
      %v2407 = vand.u32 %v2041, 4294901760
      %v2408 = vsub.f32 %v2041, %v2407
      %2409 = vmatmul.f32.gmra.mxu0 %v2408
      %v2410 = vpop.f32.mrf.mxu0
      %v2411 = vadd.f32 %v2372, %v2410
      %2412 = vdwg.mxu0
      %2413 = vmatpush.msra.mxu0 0.0
      %2414 = vmatpush.msra.mxu0 0.0
      %2415 = vmatpush.msra.mxu0 0.0
      %2416 = vmatpush.msra.mxu0 0.0
      %2417 = vmatpush.msra.mxu0 0.0
      %2418 = vmatpush.msra.mxu0 0.0
      %2419 = vmatpush.msra.mxu0 0.0
      %2420 = vmatpush.msra.mxu0 0.0
      %2421 = vmatpush.msra.mxu0 0.0
      %2422 = vmatpush.msra.mxu0 0.0
      %2423 = vmatpush.msra.mxu0 0.0
      %2424 = vmatpush.msra.mxu0 0.0
      %2425 = vmatpush.msra.mxu0 0.0
      %2426 = vmatpush.msra.mxu0 0.0
      %2427 = vmatpush.msra.mxu0 0.0
      %v2428 = vand.u32 %v2045, 4294901760
      %2429 = vmatpush.msra.mxu0 %v2428
      %v2430 = vand.u32 %v2032, 4294901760
      %v2431 = vsub.f32 %v2032, %v2430
      %v2432 = vand.u32 %v2431, 4294901760
      %2433 = vmatmul.f32.gmra.mxu0 %v2432
      %v2434 = vpop.f32.mrf.mxu0
      %v2435 = vadd.f32 %v2396, %v2434
      %v2436 = vand.u32 %v2035, 4294901760
      %v2437 = vsub.f32 %v2035, %v2436
      %v2438 = vand.u32 %v2437, 4294901760
      %2439 = vmatmul.f32.gmra.mxu0 %v2438
      %v2440 = vpop.f32.mrf.mxu0
      %v2441 = vadd.f32 %v2401, %v2440
      %v2442 = vand.u32 %v2038, 4294901760
      %v2443 = vsub.f32 %v2038, %v2442
      %v2444 = vand.u32 %v2443, 4294901760
      %2445 = vmatmul.f32.gmra.mxu0 %v2444
      %v2446 = vpop.f32.mrf.mxu0
      %v2447 = vadd.f32 %v2406, %v2446
      %v2448 = vand.u32 %v2041, 4294901760
      %v2449 = vsub.f32 %v2041, %v2448
      %v2450 = vand.u32 %v2449, 4294901760
      %2451 = vmatmul.f32.gmra.mxu0 %v2450
      %v2452 = vpop.f32.mrf.mxu0
      %v2453 = vadd.f32 %v2411, %v2452
      %2454 = vdwg.mxu0
      %2455 = vmatpush.msra.mxu0 0.0
      %2456 = vmatpush.msra.mxu0 0.0
      %2457 = vmatpush.msra.mxu0 0.0
      %2458 = vmatpush.msra.mxu0 0.0
      %2459 = vmatpush.msra.mxu0 0.0
      %2460 = vmatpush.msra.mxu0 0.0
      %2461 = vmatpush.msra.mxu0 0.0
      %2462 = vmatpush.msra.mxu0 0.0
      %2463 = vmatpush.msra.mxu0 0.0
      %2464 = vmatpush.msra.mxu0 0.0
      %2465 = vmatpush.msra.mxu0 0.0
      %2466 = vmatpush.msra.mxu0 0.0
      %2467 = vmatpush.msra.mxu0 0.0
      %2468 = vmatpush.msra.mxu0 0.0
      %2469 = vmatpush.msra.mxu0 0.0
      %v2470 = vand.u32 %v2045, 4294901760
      %v2471 = vsub.f32 %v2045, %v2470
      %v2472 = vand.u32 %v2471, 4294901760
      %2473 = vmatpush.msra.mxu0 %v2472
      %v2474 = vand.u32 %v2032, 4294901760
      %2475 = vmatmul.f32.gmra.mxu0 %v2474
      %v2476 = vpop.f32.mrf.mxu0
      %v2477 = vadd.f32 %v2435, %v2476
      %v2478 = vand.u32 %v2035, 4294901760
      %2479 = vmatmul.f32.gmra.mxu0 %v2478
      %v2480 = vpop.f32.mrf.mxu0
      %v2481 = vadd.f32 %v2441, %v2480
      %v2482 = vand.u32 %v2038, 4294901760
      %2483 = vmatmul.f32.gmra.mxu0 %v2482
      %v2484 = vpop.f32.mrf.mxu0
      %v2485 = vadd.f32 %v2447, %v2484
      %v2486 = vand.u32 %v2041, 4294901760
      %2487 = vmatmul.f32.gmra.mxu0 %v2486
      %v2488 = vpop.f32.mrf.mxu0
      %v2489 = vadd.f32 %v2453, %v2488
      %2490 = vdwg.mxu0
      %2491 = vmatpush.msra.mxu0 0.0
      %2492 = vmatpush.msra.mxu0 0.0
      %2493 = vmatpush.msra.mxu0 0.0
      %2494 = vmatpush.msra.mxu0 0.0
      %2495 = vmatpush.msra.mxu0 0.0
      %2496 = vmatpush.msra.mxu0 0.0
      %2497 = vmatpush.msra.mxu0 0.0
      %2498 = vmatpush.msra.mxu0 0.0
      %2499 = vmatpush.msra.mxu0 0.0
      %2500 = vmatpush.msra.mxu0 0.0
      %2501 = vmatpush.msra.mxu0 0.0
      %2502 = vmatpush.msra.mxu0 0.0
      %2503 = vmatpush.msra.mxu0 0.0
      %2504 = vmatpush.msra.mxu0 0.0
      %2505 = vmatpush.msra.mxu0 0.0
      %v2506 = vand.u32 %v2045, 4294901760
      %2507 = vmatpush.msra.mxu0 %v2506
      %v2508 = vand.u32 %v2032, 4294901760
      %2509 = vmatmul.f32.gmra.mxu0 %v2508
      %v2510 = vpop.f32.mrf.mxu0
      %v2511 = vadd.f32 %v2477, %v2510
      %v2512 = vand.u32 %v2035, 4294901760
      %2513 = vmatmul.f32.gmra.mxu0 %v2512
      %v2514 = vpop.f32.mrf.mxu0
      %v2515 = vadd.f32 %v2481, %v2514
      %v2516 = vand.u32 %v2038, 4294901760
      %2517 = vmatmul.f32.gmra.mxu0 %v2516
      %v2518 = vpop.f32.mrf.mxu0
      %v2519 = vadd.f32 %v2485, %v2518
      %v2520 = vand.u32 %v2041, 4294901760
      %2521 = vmatmul.f32.gmra.mxu0 %v2520
      %v2522 = vpop.f32.mrf.mxu0
      %v2523 = vadd.f32 %v2489, %v2522
      %2524 = vdwg.mxu0
      %v2525 = vadd.f32 %v1730, %v2272
      %v2526 = vadd.f32 %v1969, %v2511
      %v2527 = vadd.f32 %v1734, %v2276
      %v2528 = vadd.f32 %v1973, %v2515
      %v2529 = vadd.f32 %v1738, %v2280
      %v2530 = vadd.f32 %v1977, %v2519
      %v2531 = vadd.f32 %v1742, %v2284
      %v2532 = vadd.f32 %v1981, %v2523
      %v2533 = vld [vmem:[%s841] sm:$0xff]
      %v2534 = vld [vmem:[%s878] sm:$0xf]
      %2536 = vset.pattern.permute.xlu0 0
      %2537 = vperm.xlu0 %2536, %v2534
      %v2538 = vpop.permute.xlu0 %2537
      %v2540 = vunpack.c.l.s4 839922192
      %v2541 = vunpack.c.0.s8 %v2540
      %v2542 = vperm.slane %v2538, %v2541
      %v2544 = vmul.f32 %v2533, %v2542
      %2545 = vset.pattern.permute.xlu0 1
      %2546 = vperm.xlu0 %2545, %v2534
      %v2547 = vpop.permute.xlu0 %2546
      %v2549 = vunpack.c.l.s4 839922192
      %v2550 = vunpack.c.0.s8 %v2549
      %v2551 = vperm.slane %v2547, %v2550
      %v2553 = vadd.f32 %v2544, %v2551
      %vm2554 = vcmp.ge.f32.partialorder %v2553, 0.0
      %2555 = vset.pattern.permute.xlu0 2
      %2556 = vperm.xlu0 %2555, %v2534
      %v2557 = vpop.permute.xlu0 %2556
      %2560 = vst [vmem:[#allocation1] ss:$2 sm:$0xff] %v2553
      %v2561 = vld.sshfl [vmem:[#allocation1] sm:$0xff pattern:$0x75316420]
      %v2562 = vld.sshfl [vmem:[#allocation1 + $0x8] sm:$0xff pattern:$0x75316420]
      %v2565 = vmul.f32 %v2557, %v2561
      %v2566 = vmul.f32 %v2557, %v2562
      %v2569 = vrot.slane %v2566, 4
      %v2570 = vsel %vm934, %v2565, %v2569
      %v2572 = vsel %vm2554, %v2553, %v2570
      %v2573 = vld [vmem:[%s15] sm:$0xff]
      %v2574 = vld [vmem:[%s15 + $0x8] sm:$0xff]
      %v2575 = vld [vmem:[%s15 + $0x10] sm:$0xff]
      %v2576 = vld [vmem:[%s15 + $0x18] sm:$0xff]
      %2578 = vst [vmem:[#allocation1] ss:$2 sm:$0xff] %v2572
      %v2579 = vld.sshfl [vmem:[#allocation1] sm:$0xff pattern:$0x75316420]
      %v2580 = vld.sshfl [vmem:[#allocation1 + $0x8] sm:$0xff pattern:$0x75316420]
      %v2582 = vsel %vm990, %v2573, 0
      %v2585 = vsel %vm990, %v2574, 0
      %v2588 = vsel %vm990, %v2575, 0
      %v2591 = vsel %vm990, %v2576, 0
      %v2593 = vsel %vm934, %v2579, 0
      %v2595 = vsel %vm934, %v2580, 0
      %2597 = vmatpush.msra.mxu0 0.0
      %2598 = vmatpush.msra.mxu0 0.0
      %2599 = vmatpush.msra.mxu0 0.0
      %2600 = vmatpush.msra.mxu0 0.0
      %2601 = vmatpush.msra.mxu0 0.0
      %2602 = vmatpush.msra.mxu0 0.0
      %2603 = vmatpush.msra.mxu0 0.0
      %2604 = vmatpush.msra.mxu0 0.0
      %2605 = vmatpush.msra.mxu0 0.0
      %2606 = vmatpush.msra.mxu0 0.0
      %2607 = vmatpush.msra.mxu0 0.0
      %2608 = vmatpush.msra.mxu0 0.0
      %2609 = vmatpush.msra.mxu0 0.0
      %2610 = vmatpush.msra.mxu0 0.0
      %2611 = vmatpush.msra.mxu0 0.0
      %v2612 = vand.u32 %v2593, 4294901760
      %2613 = vmatpush.msra.mxu0 %v2612
      %v2614 = vand.u32 %v2582, 4294901760
      %v2615 = vsub.f32 %v2582, %v2614
      %v2616 = vand.u32 %v2615, 4294901760
      %v2617 = vsub.f32 %v2615, %v2616
      %v2618 = vand.u32 %v2617, 4294901760
      %2619 = vmatmul.f32.gmra.mxu0 %v2618
      %v2620 = vpop.f32.mrf.mxu0
      %v2621 = vadd.f32 0.0, %v2620
      %v2622 = vand.u32 %v2585, 4294901760
      %v2623 = vsub.f32 %v2585, %v2622
      %v2624 = vand.u32 %v2623, 4294901760
      %v2625 = vsub.f32 %v2623, %v2624
      %v2626 = vand.u32 %v2625, 4294901760
      %2627 = vmatmul.f32.gmra.mxu0 %v2626
      %v2628 = vpop.f32.mrf.mxu0
      %v2629 = vadd.f32 0.0, %v2628
      %v2630 = vand.u32 %v2588, 4294901760
      %v2631 = vsub.f32 %v2588, %v2630
      %v2632 = vand.u32 %v2631, 4294901760
      %v2633 = vsub.f32 %v2631, %v2632
      %v2634 = vand.u32 %v2633, 4294901760
      %2635 = vmatmul.f32.gmra.mxu0 %v2634
      %v2636 = vpop.f32.mrf.mxu0
      %v2637 = vadd.f32 0.0, %v2636
      %v2638 = vand.u32 %v2591, 4294901760
      %v2639 = vsub.f32 %v2591, %v2638
      %v2640 = vand.u32 %v2639, 4294901760
      %v2641 = vsub.f32 %v2639, %v2640
      %v2642 = vand.u32 %v2641, 4294901760
      %2643 = vmatmul.f32.gmra.mxu0 %v2642
      %v2644 = vpop.f32.mrf.mxu0
      %v2645 = vadd.f32 0.0, %v2644
      %2646 = vdwg.mxu0
      %2647 = vmatpush.msra.mxu0 0.0
      %2648 = vmatpush.msra.mxu0 0.0
      %2649 = vmatpush.msra.mxu0 0.0
      %2650 = vmatpush.msra.mxu0 0.0
      %2651 = vmatpush.msra.mxu0 0.0
      %2652 = vmatpush.msra.mxu0 0.0
      %2653 = vmatpush.msra.mxu0 0.0
      %2654 = vmatpush.msra.mxu0 0.0
      %2655 = vmatpush.msra.mxu0 0.0
      %2656 = vmatpush.msra.mxu0 0.0
      %2657 = vmatpush.msra.mxu0 0.0
      %2658 = vmatpush.msra.mxu0 0.0
      %2659 = vmatpush.msra.mxu0 0.0
      %2660 = vmatpush.msra.mxu0 0.0
      %2661 = vmatpush.msra.mxu0 0.0
      %v2662 = vand.u32 %v2593, 4294901760
      %v2663 = vsub.f32 %v2593, %v2662
      %v2664 = vand.u32 %v2663, 4294901760
      %v2665 = vsub.f32 %v2663, %v2664
      %v2666 = vand.u32 %v2665, 4294901760
      %2667 = vmatpush.msra.mxu0 %v2666
      %v2668 = vand.u32 %v2582, 4294901760
      %2669 = vmatmul.f32.gmra.mxu0 %v2668
      %v2670 = vpop.f32.mrf.mxu0
      %v2671 = vadd.f32 %v2621, %v2670
      %v2672 = vand.u32 %v2585, 4294901760
      %2673 = vmatmul.f32.gmra.mxu0 %v2672
      %v2674 = vpop.f32.mrf.mxu0
      %v2675 = vadd.f32 %v2629, %v2674
      %v2676 = vand.u32 %v2588, 4294901760
      %2677 = vmatmul.f32.gmra.mxu0 %v2676
      %v2678 = vpop.f32.mrf.mxu0
      %v2679 = vadd.f32 %v2637, %v2678
      %v2680 = vand.u32 %v2591, 4294901760
      %2681 = vmatmul.f32.gmra.mxu0 %v2680
      %v2682 = vpop.f32.mrf.mxu0
      %v2683 = vadd.f32 %v2645, %v2682
      %2684 = vdwg.mxu0
      %2685 = vmatpush.msra.mxu0 0.0
      %2686 = vmatpush.msra.mxu0 0.0
      %2687 = vmatpush.msra.mxu0 0.0
      %2688 = vmatpush.msra.mxu0 0.0
      %2689 = vmatpush.msra.mxu0 0.0
      %2690 = vmatpush.msra.mxu0 0.0
      %2691 = vmatpush.msra.mxu0 0.0
      %2692 = vmatpush.msra.mxu0 0.0
      %2693 = vmatpush.msra.mxu0 0.0
      %2694 = vmatpush.msra.mxu0 0.0
      %2695 = vmatpush.msra.mxu0 0.0
      %2696 = vmatpush.msra.mxu0 0.0
      %2697 = vmatpush.msra.mxu0 0.0
      %2698 = vmatpush.msra.mxu0 0.0
      %2699 = vmatpush.msra.mxu0 0.0
      %v2700 = vand.u32 %v2593, 4294901760
      %v2701 = vsub.f32 %v2593, %v2700
      %2702 = vmatpush.msra.mxu0 %v2701
      %v2703 = vand.u32 %v2582, 4294901760
      %v2704 = vsub.f32 %v2582, %v2703
      %2705 = vmatmul.f32.gmra.mxu0 %v2704
      %v2706 = vpop.f32.mrf.mxu0
      %v2707 = vadd.f32 %v2671, %v2706
      %v2708 = vand.u32 %v2585, 4294901760
      %v2709 = vsub.f32 %v2585, %v2708
      %2710 = vmatmul.f32.gmra.mxu0 %v2709
      %v2711 = vpop.f32.mrf.mxu0
      %v2712 = vadd.f32 %v2675, %v2711
      %v2713 = vand.u32 %v2588, 4294901760
      %v2714 = vsub.f32 %v2588, %v2713
      %2715 = vmatmul.f32.gmra.mxu0 %v2714
      %v2716 = vpop.f32.mrf.mxu0
      %v2717 = vadd.f32 %v2679, %v2716
      %v2718 = vand.u32 %v2591, 4294901760
      %v2719 = vsub.f32 %v2591, %v2718
      %2720 = vmatmul.f32.gmra.mxu0 %v2719
      %v2721 = vpop.f32.mrf.mxu0
      %v2722 = vadd.f32 %v2683, %v2721
      %2723 = vdwg.mxu0
      %2724 = vmatpush.msra.mxu0 0.0
      %2725 = vmatpush.msra.mxu0 0.0
      %2726 = vmatpush.msra.mxu0 0.0
      %2727 = vmatpush.msra.mxu0 0.0
      %2728 = vmatpush.msra.mxu0 0.0
      %2729 = vmatpush.msra.mxu0 0.0
      %2730 = vmatpush.msra.mxu0 0.0
      %2731 = vmatpush.msra.mxu0 0.0
      %2732 = vmatpush.msra.mxu0 0.0
      %2733 = vmatpush.msra.mxu0 0.0
      %2734 = vmatpush.msra.mxu0 0.0
      %2735 = vmatpush.msra.mxu0 0.0
      %2736 = vmatpush.msra.mxu0 0.0
      %2737 = vmatpush.msra.mxu0 0.0
      %2738 = vmatpush.msra.mxu0 0.0
      %v2739 = vand.u32 %v2593, 4294901760
      %2740 = vmatpush.msra.mxu0 %v2739
      %v2741 = vand.u32 %v2582, 4294901760
      %v2742 = vsub.f32 %v2582, %v2741
      %v2743 = vand.u32 %v2742, 4294901760
      %2744 = vmatmul.f32.gmra.mxu0 %v2743
      %v2745 = vpop.f32.mrf.mxu0
      %v2746 = vadd.f32 %v2707, %v2745
      %v2747 = vand.u32 %v2585, 4294901760
      %v2748 = vsub.f32 %v2585, %v2747
      %v2749 = vand.u32 %v2748, 4294901760
      %2750 = vmatmul.f32.gmra.mxu0 %v2749
      %v2751 = vpop.f32.mrf.mxu0
      %v2752 = vadd.f32 %v2712, %v2751
      %v2753 = vand.u32 %v2588, 4294901760
      %v2754 = vsub.f32 %v2588, %v2753
      %v2755 = vand.u32 %v2754, 4294901760
      %2756 = vmatmul.f32.gmra.mxu0 %v2755
      %v2757 = vpop.f32.mrf.mxu0
      %v2758 = vadd.f32 %v2717, %v2757
      %v2759 = vand.u32 %v2591, 4294901760
      %v2760 = vsub.f32 %v2591, %v2759
      %v2761 = vand.u32 %v2760, 4294901760
      %2762 = vmatmul.f32.gmra.mxu0 %v2761
      %v2763 = vpop.f32.mrf.mxu0
      %v2764 = vadd.f32 %v2722, %v2763
      %2765 = vdwg.mxu0
      %2766 = vmatpush.msra.mxu0 0.0
      %2767 = vmatpush.msra.mxu0 0.0
      %2768 = vmatpush.msra.mxu0 0.0
      %2769 = vmatpush.msra.mxu0 0.0
      %2770 = vmatpush.msra.mxu0 0.0
      %2771 = vmatpush.msra.mxu0 0.0
      %2772 = vmatpush.msra.mxu0 0.0
      %2773 = vmatpush.msra.mxu0 0.0
      %2774 = vmatpush.msra.mxu0 0.0
      %2775 = vmatpush.msra.mxu0 0.0
      %2776 = vmatpush.msra.mxu0 0.0
      %2777 = vmatpush.msra.mxu0 0.0
      %2778 = vmatpush.msra.mxu0 0.0
      %2779 = vmatpush.msra.mxu0 0.0
      %2780 = vmatpush.msra.mxu0 0.0
      %v2781 = vand.u32 %v2593, 4294901760
      %v2782 = vsub.f32 %v2593, %v2781
      %v2783 = vand.u32 %v2782, 4294901760
      %2784 = vmatpush.msra.mxu0 %v2783
      %v2785 = vand.u32 %v2582, 4294901760
      %2786 = vmatmul.f32.gmra.mxu0 %v2785
      %v2787 = vpop.f32.mrf.mxu0
      %v2788 = vadd.f32 %v2746, %v2787
      %v2789 = vand.u32 %v2585, 4294901760
      %2790 = vmatmul.f32.gmra.mxu0 %v2789
      %v2791 = vpop.f32.mrf.mxu0
      %v2792 = vadd.f32 %v2752, %v2791
      %v2793 = vand.u32 %v2588, 4294901760
      %2794 = vmatmul.f32.gmra.mxu0 %v2793
      %v2795 = vpop.f32.mrf.mxu0
      %v2796 = vadd.f32 %v2758, %v2795
      %v2797 = vand.u32 %v2591, 4294901760
      %2798 = vmatmul.f32.gmra.mxu0 %v2797
      %v2799 = vpop.f32.mrf.mxu0
      %v2800 = vadd.f32 %v2764, %v2799
      %2801 = vdwg.mxu0
      %2802 = vmatpush.msra.mxu0 0.0
      %2803 = vmatpush.msra.mxu0 0.0
      %2804 = vmatpush.msra.mxu0 0.0
      %2805 = vmatpush.msra.mxu0 0.0
      %2806 = vmatpush.msra.mxu0 0.0
      %2807 = vmatpush.msra.mxu0 0.0
      %2808 = vmatpush.msra.mxu0 0.0
      %2809 = vmatpush.msra.mxu0 0.0
      %2810 = vmatpush.msra.mxu0 0.0
      %2811 = vmatpush.msra.mxu0 0.0
      %2812 = vmatpush.msra.mxu0 0.0
      %2813 = vmatpush.msra.mxu0 0.0
      %2814 = vmatpush.msra.mxu0 0.0
      %2815 = vmatpush.msra.mxu0 0.0
      %2816 = vmatpush.msra.mxu0 0.0
      %v2817 = vand.u32 %v2593, 4294901760
      %2818 = vmatpush.msra.mxu0 %v2817
      %v2819 = vand.u32 %v2582, 4294901760
      %2820 = vmatmul.f32.gmra.mxu0 %v2819
      %v2821 = vpop.f32.mrf.mxu0
      %v2822 = vadd.f32 %v2788, %v2821
      %v2823 = vand.u32 %v2585, 4294901760
      %2824 = vmatmul.f32.gmra.mxu0 %v2823
      %v2825 = vpop.f32.mrf.mxu0
      %v2826 = vadd.f32 %v2792, %v2825
      %v2827 = vand.u32 %v2588, 4294901760
      %2828 = vmatmul.f32.gmra.mxu0 %v2827
      %v2829 = vpop.f32.mrf.mxu0
      %v2830 = vadd.f32 %v2796, %v2829
      %v2831 = vand.u32 %v2591, 4294901760
      %2832 = vmatmul.f32.gmra.mxu0 %v2831
      %v2833 = vpop.f32.mrf.mxu0
      %v2834 = vadd.f32 %v2800, %v2833
      %2835 = vdwg.mxu0
      %2836 = vmatpush.msra.mxu0 0.0
      %2837 = vmatpush.msra.mxu0 0.0
      %2838 = vmatpush.msra.mxu0 0.0
      %2839 = vmatpush.msra.mxu0 0.0
      %2840 = vmatpush.msra.mxu0 0.0
      %2841 = vmatpush.msra.mxu0 0.0
      %2842 = vmatpush.msra.mxu0 0.0
      %2843 = vmatpush.msra.mxu0 0.0
      %2844 = vmatpush.msra.mxu0 0.0
      %2845 = vmatpush.msra.mxu0 0.0
      %2846 = vmatpush.msra.mxu0 0.0
      %2847 = vmatpush.msra.mxu0 0.0
      %2848 = vmatpush.msra.mxu0 0.0
      %2849 = vmatpush.msra.mxu0 0.0
      %2850 = vmatpush.msra.mxu0 0.0
      %v2851 = vand.u32 %v2595, 4294901760
      %2852 = vmatpush.msra.mxu0 %v2851
      %v2853 = vand.u32 %v2582, 4294901760
      %v2854 = vsub.f32 %v2582, %v2853
      %v2855 = vand.u32 %v2854, 4294901760
      %v2856 = vsub.f32 %v2854, %v2855
      %v2857 = vand.u32 %v2856, 4294901760
      %2858 = vmatmul.f32.gmra.mxu0 %v2857
      %v2859 = vpop.f32.mrf.mxu0
      %v2860 = vadd.f32 0.0, %v2859
      %v2861 = vand.u32 %v2585, 4294901760
      %v2862 = vsub.f32 %v2585, %v2861
      %v2863 = vand.u32 %v2862, 4294901760
      %v2864 = vsub.f32 %v2862, %v2863
      %v2865 = vand.u32 %v2864, 4294901760
      %2866 = vmatmul.f32.gmra.mxu0 %v2865
      %v2867 = vpop.f32.mrf.mxu0
      %v2868 = vadd.f32 0.0, %v2867
      %v2869 = vand.u32 %v2588, 4294901760
      %v2870 = vsub.f32 %v2588, %v2869
      %v2871 = vand.u32 %v2870, 4294901760
      %v2872 = vsub.f32 %v2870, %v2871
      %v2873 = vand.u32 %v2872, 4294901760
      %2874 = vmatmul.f32.gmra.mxu0 %v2873
      %v2875 = vpop.f32.mrf.mxu0
      %v2876 = vadd.f32 0.0, %v2875
      %v2877 = vand.u32 %v2591, 4294901760
      %v2878 = vsub.f32 %v2591, %v2877
      %v2879 = vand.u32 %v2878, 4294901760
      %v2880 = vsub.f32 %v2878, %v2879
      %v2881 = vand.u32 %v2880, 4294901760
      %2882 = vmatmul.f32.gmra.mxu0 %v2881
      %v2883 = vpop.f32.mrf.mxu0
      %v2884 = vadd.f32 0.0, %v2883
      %2885 = vdwg.mxu0
      %2886 = vmatpush.msra.mxu0 0.0
      %2887 = vmatpush.msra.mxu0 0.0
      %2888 = vmatpush.msra.mxu0 0.0
      %2889 = vmatpush.msra.mxu0 0.0
      %2890 = vmatpush.msra.mxu0 0.0
      %2891 = vmatpush.msra.mxu0 0.0
      %2892 = vmatpush.msra.mxu0 0.0
      %2893 = vmatpush.msra.mxu0 0.0
      %2894 = vmatpush.msra.mxu0 0.0
      %2895 = vmatpush.msra.mxu0 0.0
      %2896 = vmatpush.msra.mxu0 0.0
      %2897 = vmatpush.msra.mxu0 0.0
      %2898 = vmatpush.msra.mxu0 0.0
      %2899 = vmatpush.msra.mxu0 0.0
      %2900 = vmatpush.msra.mxu0 0.0
      %v2901 = vand.u32 %v2595, 4294901760
      %v2902 = vsub.f32 %v2595, %v2901
      %v2903 = vand.u32 %v2902, 4294901760
      %v2904 = vsub.f32 %v2902, %v2903
      %v2905 = vand.u32 %v2904, 4294901760
      %2906 = vmatpush.msra.mxu0 %v2905
      %v2907 = vand.u32 %v2582, 4294901760
      %2908 = vmatmul.f32.gmra.mxu0 %v2907
      %v2909 = vpop.f32.mrf.mxu0
      %v2910 = vadd.f32 %v2860, %v2909
      %v2911 = vand.u32 %v2585, 4294901760
      %2912 = vmatmul.f32.gmra.mxu0 %v2911
      %v2913 = vpop.f32.mrf.mxu0
      %v2914 = vadd.f32 %v2868, %v2913
      %v2915 = vand.u32 %v2588, 4294901760
      %2916 = vmatmul.f32.gmra.mxu0 %v2915
      %v2917 = vpop.f32.mrf.mxu0
      %v2918 = vadd.f32 %v2876, %v2917
      %v2919 = vand.u32 %v2591, 4294901760
      %2920 = vmatmul.f32.gmra.mxu0 %v2919
      %v2921 = vpop.f32.mrf.mxu0
      %v2922 = vadd.f32 %v2884, %v2921
      %2923 = vdwg.mxu0
      %2924 = vmatpush.msra.mxu0 0.0
      %2925 = vmatpush.msra.mxu0 0.0
      %2926 = vmatpush.msra.mxu0 0.0
      %2927 = vmatpush.msra.mxu0 0.0
      %2928 = vmatpush.msra.mxu0 0.0
      %2929 = vmatpush.msra.mxu0 0.0
      %2930 = vmatpush.msra.mxu0 0.0
      %2931 = vmatpush.msra.mxu0 0.0
      %2932 = vmatpush.msra.mxu0 0.0
      %2933 = vmatpush.msra.mxu0 0.0
      %2934 = vmatpush.msra.mxu0 0.0
      %2935 = vmatpush.msra.mxu0 0.0
      %2936 = vmatpush.msra.mxu0 0.0
      %2937 = vmatpush.msra.mxu0 0.0
      %2938 = vmatpush.msra.mxu0 0.0
      %v2939 = vand.u32 %v2595, 4294901760
      %v2940 = vsub.f32 %v2595, %v2939
      %2941 = vmatpush.msra.mxu0 %v2940
      %v2942 = vand.u32 %v2582, 4294901760
      %v2943 = vsub.f32 %v2582, %v2942
      %2944 = vmatmul.f32.gmra.mxu0 %v2943
      %v2945 = vpop.f32.mrf.mxu0
      %v2946 = vadd.f32 %v2910, %v2945
      %v2947 = vand.u32 %v2585, 4294901760
      %v2948 = vsub.f32 %v2585, %v2947
      %2949 = vmatmul.f32.gmra.mxu0 %v2948
      %v2950 = vpop.f32.mrf.mxu0
      %v2951 = vadd.f32 %v2914, %v2950
      %v2952 = vand.u32 %v2588, 4294901760
      %v2953 = vsub.f32 %v2588, %v2952
      %2954 = vmatmul.f32.gmra.mxu0 %v2953
      %v2955 = vpop.f32.mrf.mxu0
      %v2956 = vadd.f32 %v2918, %v2955
      %v2957 = vand.u32 %v2591, 4294901760
      %v2958 = vsub.f32 %v2591, %v2957
      %2959 = vmatmul.f32.gmra.mxu0 %v2958
      %v2960 = vpop.f32.mrf.mxu0
      %v2961 = vadd.f32 %v2922, %v2960
      %2962 = vdwg.mxu0
      %2963 = vmatpush.msra.mxu0 0.0
      %2964 = vmatpush.msra.mxu0 0.0
      %2965 = vmatpush.msra.mxu0 0.0
      %2966 = vmatpush.msra.mxu0 0.0
      %2967 = vmatpush.msra.mxu0 0.0
      %2968 = vmatpush.msra.mxu0 0.0
      %2969 = vmatpush.msra.mxu0 0.0
      %2970 = vmatpush.msra.mxu0 0.0
      %2971 = vmatpush.msra.mxu0 0.0
      %2972 = vmatpush.msra.mxu0 0.0
      %2973 = vmatpush.msra.mxu0 0.0
      %2974 = vmatpush.msra.mxu0 0.0
      %2975 = vmatpush.msra.mxu0 0.0
      %2976 = vmatpush.msra.mxu0 0.0
      %2977 = vmatpush.msra.mxu0 0.0
      %v2978 = vand.u32 %v2595, 4294901760
      %2979 = vmatpush.msra.mxu0 %v2978
      %v2980 = vand.u32 %v2582, 4294901760
      %v2981 = vsub.f32 %v2582, %v2980
      %v2982 = vand.u32 %v2981, 4294901760
      %2983 = vmatmul.f32.gmra.mxu0 %v2982
      %v2984 = vpop.f32.mrf.mxu0
      %v2985 = vadd.f32 %v2946, %v2984
      %v2986 = vand.u32 %v2585, 4294901760
      %v2987 = vsub.f32 %v2585, %v2986
      %v2988 = vand.u32 %v2987, 4294901760
      %2989 = vmatmul.f32.gmra.mxu0 %v2988
      %v2990 = vpop.f32.mrf.mxu0
      %v2991 = vadd.f32 %v2951, %v2990
      %v2992 = vand.u32 %v2588, 4294901760
      %v2993 = vsub.f32 %v2588, %v2992
      %v2994 = vand.u32 %v2993, 4294901760
      %2995 = vmatmul.f32.gmra.mxu0 %v2994
      %v2996 = vpop.f32.mrf.mxu0
      %v2997 = vadd.f32 %v2956, %v2996
      %v2998 = vand.u32 %v2591, 4294901760
      %v2999 = vsub.f32 %v2591, %v2998
      %v3000 = vand.u32 %v2999, 4294901760
      %3001 = vmatmul.f32.gmra.mxu0 %v3000
      %v3002 = vpop.f32.mrf.mxu0
      %v3003 = vadd.f32 %v2961, %v3002
      %3004 = vdwg.mxu0
      %3005 = vmatpush.msra.mxu0 0.0
      %3006 = vmatpush.msra.mxu0 0.0
      %3007 = vmatpush.msra.mxu0 0.0
      %3008 = vmatpush.msra.mxu0 0.0
      %3009 = vmatpush.msra.mxu0 0.0
      %3010 = vmatpush.msra.mxu0 0.0
      %3011 = vmatpush.msra.mxu0 0.0
      %3012 = vmatpush.msra.mxu0 0.0
      %3013 = vmatpush.msra.mxu0 0.0
      %3014 = vmatpush.msra.mxu0 0.0
      %3015 = vmatpush.msra.mxu0 0.0
      %3016 = vmatpush.msra.mxu0 0.0
      %3017 = vmatpush.msra.mxu0 0.0
      %3018 = vmatpush.msra.mxu0 0.0
      %3019 = vmatpush.msra.mxu0 0.0
      %v3020 = vand.u32 %v2595, 4294901760
      %v3021 = vsub.f32 %v2595, %v3020
      %v3022 = vand.u32 %v3021, 4294901760
      %3023 = vmatpush.msra.mxu0 %v3022
      %v3024 = vand.u32 %v2582, 4294901760
      %3025 = vmatmul.f32.gmra.mxu0 %v3024
      %v3026 = vpop.f32.mrf.mxu0
      %v3027 = vadd.f32 %v2985, %v3026
      %v3028 = vand.u32 %v2585, 4294901760
      %3029 = vmatmul.f32.gmra.mxu0 %v3028
      %v3030 = vpop.f32.mrf.mxu0
      %v3031 = vadd.f32 %v2991, %v3030
      %v3032 = vand.u32 %v2588, 4294901760
      %3033 = vmatmul.f32.gmra.mxu0 %v3032
      %v3034 = vpop.f32.mrf.mxu0
      %v3035 = vadd.f32 %v2997, %v3034
      %v3036 = vand.u32 %v2591, 4294901760
      %3037 = vmatmul.f32.gmra.mxu0 %v3036
      %v3038 = vpop.f32.mrf.mxu0
      %v3039 = vadd.f32 %v3003, %v3038
      %3040 = vdwg.mxu0
      %3041 = vmatpush.msra.mxu0 0.0
      %3042 = vmatpush.msra.mxu0 0.0
      %3043 = vmatpush.msra.mxu0 0.0
      %3044 = vmatpush.msra.mxu0 0.0
      %3045 = vmatpush.msra.mxu0 0.0
      %3046 = vmatpush.msra.mxu0 0.0
      %3047 = vmatpush.msra.mxu0 0.0
      %3048 = vmatpush.msra.mxu0 0.0
      %3049 = vmatpush.msra.mxu0 0.0
      %3050 = vmatpush.msra.mxu0 0.0
      %3051 = vmatpush.msra.mxu0 0.0
      %3052 = vmatpush.msra.mxu0 0.0
      %3053 = vmatpush.msra.mxu0 0.0
      %3054 = vmatpush.msra.mxu0 0.0
      %3055 = vmatpush.msra.mxu0 0.0
      %v3056 = vand.u32 %v2595, 4294901760
      %3057 = vmatpush.msra.mxu0 %v3056
      %v3058 = vand.u32 %v2582, 4294901760
      %3059 = vmatmul.f32.gmra.mxu0 %v3058
      %v3060 = vpop.f32.mrf.mxu0
      %v3061 = vadd.f32 %v3027, %v3060
      %v3062 = vand.u32 %v2585, 4294901760
      %3063 = vmatmul.f32.gmra.mxu0 %v3062
      %v3064 = vpop.f32.mrf.mxu0
      %v3065 = vadd.f32 %v3031, %v3064
      %v3066 = vand.u32 %v2588, 4294901760
      %3067 = vmatmul.f32.gmra.mxu0 %v3066
      %v3068 = vpop.f32.mrf.mxu0
      %v3069 = vadd.f32 %v3035, %v3068
      %v3070 = vand.u32 %v2591, 4294901760
      %3071 = vmatmul.f32.gmra.mxu0 %v3070
      %v3072 = vpop.f32.mrf.mxu0
      %v3073 = vadd.f32 %v3039, %v3072
      %3074 = vdwg.mxu0
      %v3075 = vadd.f32 %v2525, %v2822
      %v3076 = vadd.f32 %v2526, %v3061
      %v3077 = vadd.f32 %v2527, %v2826
      %v3078 = vadd.f32 %v2528, %v3065
      %v3079 = vadd.f32 %v2529, %v2830
      %v3080 = vadd.f32 %v2530, %v3069
      %v3081 = vadd.f32 %v2531, %v2834
      %v3082 = vadd.f32 %v2532, %v3073
      %v3083 = vld [vmem:[%s851] sm:$0xff]
      %v3084 = vld [vmem:[%s882] sm:$0xf]
      %3086 = vset.pattern.permute.xlu0 0
      %3087 = vperm.xlu0 %3086, %v3084
      %v3088 = vpop.permute.xlu0 %3087
      %v3090 = vunpack.c.l.s4 839922192
      %v3091 = vunpack.c.0.s8 %v3090
      %v3092 = vperm.slane %v3088, %v3091
      %v3094 = vmul.f32 %v3083, %v3092
      %3095 = vset.pattern.permute.xlu0 1
      %3096 = vperm.xlu0 %3095, %v3084
      %v3097 = vpop.permute.xlu0 %3096
      %v3099 = vunpack.c.l.s4 839922192
      %v3100 = vunpack.c.0.s8 %v3099
      %v3101 = vperm.slane %v3097, %v3100
      %v3103 = vadd.f32 %v3094, %v3101
      %vm3104 = vcmp.ge.f32.partialorder %v3103, 0.0
      %3105 = vset.pattern.permute.xlu0 2
      %3106 = vperm.xlu0 %3105, %v3084
      %v3107 = vpop.permute.xlu0 %3106
      %3110 = vst [vmem:[#allocation1] ss:$2 sm:$0xff] %v3103
      %v3111 = vld.sshfl [vmem:[#allocation1] sm:$0xff pattern:$0x75316420]
      %v3112 = vld.sshfl [vmem:[#allocation1 + $0x8] sm:$0xff pattern:$0x75316420]
      %v3115 = vmul.f32 %v3107, %v3111
      %v3116 = vmul.f32 %v3107, %v3112
      %v3119 = vrot.slane %v3116, 4
      %v3120 = vsel %vm934, %v3115, %v3119
      %v3122 = vsel %vm3104, %v3103, %v3120
      %v3123 = vld [vmem:[%s16] sm:$0xff]
      %v3124 = vld [vmem:[%s16 + $0x8] sm:$0xff]
      %v3125 = vld [vmem:[%s16 + $0x10] sm:$0xff]
      %v3126 = vld [vmem:[%s16 + $0x18] sm:$0xff]
      %3128 = vst [vmem:[#allocation1] ss:$2 sm:$0xff] %v3122
      %v3129 = vld.sshfl [vmem:[#allocation1] sm:$0xff pattern:$0x75316420]
      %v3130 = vld.sshfl [vmem:[#allocation1 + $0x8] sm:$0xff pattern:$0x75316420]
      %v3132 = vsel %vm990, %v3123, 0
      %v3135 = vsel %vm990, %v3124, 0
      %v3138 = vsel %vm990, %v3125, 0
      %v3141 = vsel %vm990, %v3126, 0
      %v3143 = vsel %vm934, %v3129, 0
      %v3145 = vsel %vm934, %v3130, 0
      %3147 = vmatpush.msra.mxu0 0.0
      %3148 = vmatpush.msra.mxu0 0.0
      %3149 = vmatpush.msra.mxu0 0.0
      %3150 = vmatpush.msra.mxu0 0.0
      %3151 = vmatpush.msra.mxu0 0.0
      %3152 = vmatpush.msra.mxu0 0.0
      %3153 = vmatpush.msra.mxu0 0.0
      %3154 = vmatpush.msra.mxu0 0.0
      %3155 = vmatpush.msra.mxu0 0.0
      %3156 = vmatpush.msra.mxu0 0.0
      %3157 = vmatpush.msra.mxu0 0.0
      %3158 = vmatpush.msra.mxu0 0.0
      %3159 = vmatpush.msra.mxu0 0.0
      %3160 = vmatpush.msra.mxu0 0.0
      %3161 = vmatpush.msra.mxu0 0.0
      %v3162 = vand.u32 %v3143, 4294901760
      %3163 = vmatpush.msra.mxu0 %v3162
      %v3164 = vand.u32 %v3132, 4294901760
      %v3165 = vsub.f32 %v3132, %v3164
      %v3166 = vand.u32 %v3165, 4294901760
      %v3167 = vsub.f32 %v3165, %v3166
      %v3168 = vand.u32 %v3167, 4294901760
      %3169 = vmatmul.f32.gmra.mxu0 %v3168
      %v3170 = vpop.f32.mrf.mxu0
      %v3171 = vadd.f32 0.0, %v3170
      %v3172 = vand.u32 %v3135, 4294901760
      %v3173 = vsub.f32 %v3135, %v3172
      %v3174 = vand.u32 %v3173, 4294901760
      %v3175 = vsub.f32 %v3173, %v3174
      %v3176 = vand.u32 %v3175, 4294901760
      %3177 = vmatmul.f32.gmra.mxu0 %v3176
      %v3178 = vpop.f32.mrf.mxu0
      %v3179 = vadd.f32 0.0, %v3178
      %v3180 = vand.u32 %v3138, 4294901760
      %v3181 = vsub.f32 %v3138, %v3180
      %v3182 = vand.u32 %v3181, 4294901760
      %v3183 = vsub.f32 %v3181, %v3182
      %v3184 = vand.u32 %v3183, 4294901760
      %3185 = vmatmul.f32.gmra.mxu0 %v3184
      %v3186 = vpop.f32.mrf.mxu0
      %v3187 = vadd.f32 0.0, %v3186
      %v3188 = vand.u32 %v3141, 4294901760
      %v3189 = vsub.f32 %v3141, %v3188
      %v3190 = vand.u32 %v3189, 4294901760
      %v3191 = vsub.f32 %v3189, %v3190
      %v3192 = vand.u32 %v3191, 4294901760
      %3193 = vmatmul.f32.gmra.mxu0 %v3192
      %v3194 = vpop.f32.mrf.mxu0
      %v3195 = vadd.f32 0.0, %v3194
      %3196 = vdwg.mxu0
      %3197 = vmatpush.msra.mxu0 0.0
      %3198 = vmatpush.msra.mxu0 0.0
      %3199 = vmatpush.msra.mxu0 0.0
      %3200 = vmatpush.msra.mxu0 0.0
      %3201 = vmatpush.msra.mxu0 0.0
      %3202 = vmatpush.msra.mxu0 0.0
      %3203 = vmatpush.msra.mxu0 0.0
      %3204 = vmatpush.msra.mxu0 0.0
      %3205 = vmatpush.msra.mxu0 0.0
      %3206 = vmatpush.msra.mxu0 0.0
      %3207 = vmatpush.msra.mxu0 0.0
      %3208 = vmatpush.msra.mxu0 0.0
      %3209 = vmatpush.msra.mxu0 0.0
      %3210 = vmatpush.msra.mxu0 0.0
      %3211 = vmatpush.msra.mxu0 0.0
      %v3212 = vand.u32 %v3143, 4294901760
      %v3213 = vsub.f32 %v3143, %v3212
      %v3214 = vand.u32 %v3213, 4294901760
      %v3215 = vsub.f32 %v3213, %v3214
      %v3216 = vand.u32 %v3215, 4294901760
      %3217 = vmatpush.msra.mxu0 %v3216
      %v3218 = vand.u32 %v3132, 4294901760
      %3219 = vmatmul.f32.gmra.mxu0 %v3218
      %v3220 = vpop.f32.mrf.mxu0
      %v3221 = vadd.f32 %v3171, %v3220
      %v3222 = vand.u32 %v3135, 4294901760
      %3223 = vmatmul.f32.gmra.mxu0 %v3222
      %v3224 = vpop.f32.mrf.mxu0
      %v3225 = vadd.f32 %v3179, %v3224
      %v3226 = vand.u32 %v3138, 4294901760
      %3227 = vmatmul.f32.gmra.mxu0 %v3226
      %v3228 = vpop.f32.mrf.mxu0
      %v3229 = vadd.f32 %v3187, %v3228
      %v3230 = vand.u32 %v3141, 4294901760
      %3231 = vmatmul.f32.gmra.mxu0 %v3230
      %v3232 = vpop.f32.mrf.mxu0
      %v3233 = vadd.f32 %v3195, %v3232
      %3234 = vdwg.mxu0
      %3235 = vmatpush.msra.mxu0 0.0
      %3236 = vmatpush.msra.mxu0 0.0
      %3237 = vmatpush.msra.mxu0 0.0
      %3238 = vmatpush.msra.mxu0 0.0
      %3239 = vmatpush.msra.mxu0 0.0
      %3240 = vmatpush.msra.mxu0 0.0
      %3241 = vmatpush.msra.mxu0 0.0
      %3242 = vmatpush.msra.mxu0 0.0
      %3243 = vmatpush.msra.mxu0 0.0
      %3244 = vmatpush.msra.mxu0 0.0
      %3245 = vmatpush.msra.mxu0 0.0
      %3246 = vmatpush.msra.mxu0 0.0
      %3247 = vmatpush.msra.mxu0 0.0
      %3248 = vmatpush.msra.mxu0 0.0
      %3249 = vmatpush.msra.mxu0 0.0
      %v3250 = vand.u32 %v3143, 4294901760
      %v3251 = vsub.f32 %v3143, %v3250
      %3252 = vmatpush.msra.mxu0 %v3251
      %v3253 = vand.u32 %v3132, 4294901760
      %v3254 = vsub.f32 %v3132, %v3253
      %3255 = vmatmul.f32.gmra.mxu0 %v3254
      %v3256 = vpop.f32.mrf.mxu0
      %v3257 = vadd.f32 %v3221, %v3256
      %v3258 = vand.u32 %v3135, 4294901760
      %v3259 = vsub.f32 %v3135, %v3258
      %3260 = vmatmul.f32.gmra.mxu0 %v3259
      %v3261 = vpop.f32.mrf.mxu0
      %v3262 = vadd.f32 %v3225, %v3261
      %v3263 = vand.u32 %v3138, 4294901760
      %v3264 = vsub.f32 %v3138, %v3263
      %3265 = vmatmul.f32.gmra.mxu0 %v3264
      %v3266 = vpop.f32.mrf.mxu0
      %v3267 = vadd.f32 %v3229, %v3266
      %v3268 = vand.u32 %v3141, 4294901760
      %v3269 = vsub.f32 %v3141, %v3268
      %3270 = vmatmul.f32.gmra.mxu0 %v3269
      %v3271 = vpop.f32.mrf.mxu0
      %v3272 = vadd.f32 %v3233, %v3271
      %3273 = vdwg.mxu0
      %3274 = vmatpush.msra.mxu0 0.0
      %3275 = vmatpush.msra.mxu0 0.0
      %3276 = vmatpush.msra.mxu0 0.0
      %3277 = vmatpush.msra.mxu0 0.0
      %3278 = vmatpush.msra.mxu0 0.0
      %3279 = vmatpush.msra.mxu0 0.0
      %3280 = vmatpush.msra.mxu0 0.0
      %3281 = vmatpush.msra.mxu0 0.0
      %3282 = vmatpush.msra.mxu0 0.0
      %3283 = vmatpush.msra.mxu0 0.0
      %3284 = vmatpush.msra.mxu0 0.0
      %3285 = vmatpush.msra.mxu0 0.0
      %3286 = vmatpush.msra.mxu0 0.0
      %3287 = vmatpush.msra.mxu0 0.0
      %3288 = vmatpush.msra.mxu0 0.0
      %v3289 = vand.u32 %v3143, 4294901760
      %3290 = vmatpush.msra.mxu0 %v3289
      %v3291 = vand.u32 %v3132, 4294901760
      %v3292 = vsub.f32 %v3132, %v3291
      %v3293 = vand.u32 %v3292, 4294901760
      %3294 = vmatmul.f32.gmra.mxu0 %v3293
      %v3295 = vpop.f32.mrf.mxu0
      %v3296 = vadd.f32 %v3257, %v3295
      %v3297 = vand.u32 %v3135, 4294901760
      %v3298 = vsub.f32 %v3135, %v3297
      %v3299 = vand.u32 %v3298, 4294901760
      %3300 = vmatmul.f32.gmra.mxu0 %v3299
      %v3301 = vpop.f32.mrf.mxu0
      %v3302 = vadd.f32 %v3262, %v3301
      %v3303 = vand.u32 %v3138, 4294901760
      %v3304 = vsub.f32 %v3138, %v3303
      %v3305 = vand.u32 %v3304, 4294901760
      %3306 = vmatmul.f32.gmra.mxu0 %v3305
      %v3307 = vpop.f32.mrf.mxu0
      %v3308 = vadd.f32 %v3267, %v3307
      %v3309 = vand.u32 %v3141, 4294901760
      %v3310 = vsub.f32 %v3141, %v3309
      %v3311 = vand.u32 %v3310, 4294901760
      %3312 = vmatmul.f32.gmra.mxu0 %v3311
      %v3313 = vpop.f32.mrf.mxu0
      %v3314 = vadd.f32 %v3272, %v3313
      %3315 = vdwg.mxu0
      %3316 = vmatpush.msra.mxu0 0.0
      %3317 = vmatpush.msra.mxu0 0.0
      %3318 = vmatpush.msra.mxu0 0.0
      %3319 = vmatpush.msra.mxu0 0.0
      %3320 = vmatpush.msra.mxu0 0.0
      %3321 = vmatpush.msra.mxu0 0.0
      %3322 = vmatpush.msra.mxu0 0.0
      %3323 = vmatpush.msra.mxu0 0.0
      %3324 = vmatpush.msra.mxu0 0.0
      %3325 = vmatpush.msra.mxu0 0.0
      %3326 = vmatpush.msra.mxu0 0.0
      %3327 = vmatpush.msra.mxu0 0.0
      %3328 = vmatpush.msra.mxu0 0.0
      %3329 = vmatpush.msra.mxu0 0.0
      %3330 = vmatpush.msra.mxu0 0.0
      %v3331 = vand.u32 %v3143, 4294901760
      %v3332 = vsub.f32 %v3143, %v3331
      %v3333 = vand.u32 %v3332, 4294901760
      %3334 = vmatpush.msra.mxu0 %v3333
      %v3335 = vand.u32 %v3132, 4294901760
      %3336 = vmatmul.f32.gmra.mxu0 %v3335
      %v3337 = vpop.f32.mrf.mxu0
      %v3338 = vadd.f32 %v3296, %v3337
      %v3339 = vand.u32 %v3135, 4294901760
      %3340 = vmatmul.f32.gmra.mxu0 %v3339
      %v3341 = vpop.f32.mrf.mxu0
      %v3342 = vadd.f32 %v3302, %v3341
      %v3343 = vand.u32 %v3138, 4294901760
      %3344 = vmatmul.f32.gmra.mxu0 %v3343
      %v3345 = vpop.f32.mrf.mxu0
      %v3346 = vadd.f32 %v3308, %v3345
      %v3347 = vand.u32 %v3141, 4294901760
      %3348 = vmatmul.f32.gmra.mxu0 %v3347
      %v3349 = vpop.f32.mrf.mxu0
      %v3350 = vadd.f32 %v3314, %v3349
      %3351 = vdwg.mxu0
      %3352 = vmatpush.msra.mxu0 0.0
      %3353 = vmatpush.msra.mxu0 0.0
      %3354 = vmatpush.msra.mxu0 0.0
      %3355 = vmatpush.msra.mxu0 0.0
      %3356 = vmatpush.msra.mxu0 0.0
      %3357 = vmatpush.msra.mxu0 0.0
      %3358 = vmatpush.msra.mxu0 0.0
      %3359 = vmatpush.msra.mxu0 0.0
      %3360 = vmatpush.msra.mxu0 0.0
      %3361 = vmatpush.msra.mxu0 0.0
      %3362 = vmatpush.msra.mxu0 0.0
      %3363 = vmatpush.msra.mxu0 0.0
      %3364 = vmatpush.msra.mxu0 0.0
      %3365 = vmatpush.msra.mxu0 0.0
      %3366 = vmatpush.msra.mxu0 0.0
      %v3367 = vand.u32 %v3143, 4294901760
      %3368 = vmatpush.msra.mxu0 %v3367
      %v3369 = vand.u32 %v3132, 4294901760
      %3370 = vmatmul.f32.gmra.mxu0 %v3369
      %v3371 = vpop.f32.mrf.mxu0
      %v3372 = vadd.f32 %v3338, %v3371
      %v3373 = vand.u32 %v3135, 4294901760
      %3374 = vmatmul.f32.gmra.mxu0 %v3373
      %v3375 = vpop.f32.mrf.mxu0
      %v3376 = vadd.f32 %v3342, %v3375
      %v3377 = vand.u32 %v3138, 4294901760
      %3378 = vmatmul.f32.gmra.mxu0 %v3377
      %v3379 = vpop.f32.mrf.mxu0
      %v3380 = vadd.f32 %v3346, %v3379
      %v3381 = vand.u32 %v3141, 4294901760
      %3382 = vmatmul.f32.gmra.mxu0 %v3381
      %v3383 = vpop.f32.mrf.mxu0
      %v3384 = vadd.f32 %v3350, %v3383
      %3385 = vdwg.mxu0
      %3386 = vmatpush.msra.mxu0 0.0
      %3387 = vmatpush.msra.mxu0 0.0
      %3388 = vmatpush.msra.mxu0 0.0
      %3389 = vmatpush.msra.mxu0 0.0
      %3390 = vmatpush.msra.mxu0 0.0
      %3391 = vmatpush.msra.mxu0 0.0
      %3392 = vmatpush.msra.mxu0 0.0
      %3393 = vmatpush.msra.mxu0 0.0
      %3394 = vmatpush.msra.mxu0 0.0
      %3395 = vmatpush.msra.mxu0 0.0
      %3396 = vmatpush.msra.mxu0 0.0
      %3397 = vmatpush.msra.mxu0 0.0
      %3398 = vmatpush.msra.mxu0 0.0
      %3399 = vmatpush.msra.mxu0 0.0
      %3400 = vmatpush.msra.mxu0 0.0
      %v3401 = vand.u32 %v3145, 4294901760
      %3402 = vmatpush.msra.mxu0 %v3401
      %v3403 = vand.u32 %v3132, 4294901760
      %v3404 = vsub.f32 %v3132, %v3403
      %v3405 = vand.u32 %v3404, 4294901760
      %v3406 = vsub.f32 %v3404, %v3405
      %v3407 = vand.u32 %v3406, 4294901760
      %3408 = vmatmul.f32.gmra.mxu0 %v3407
      %v3409 = vpop.f32.mrf.mxu0
      %v3410 = vadd.f32 0.0, %v3409
      %v3411 = vand.u32 %v3135, 4294901760
      %v3412 = vsub.f32 %v3135, %v3411
      %v3413 = vand.u32 %v3412, 4294901760
      %v3414 = vsub.f32 %v3412, %v3413
      %v3415 = vand.u32 %v3414, 4294901760
      %3416 = vmatmul.f32.gmra.mxu0 %v3415
      %v3417 = vpop.f32.mrf.mxu0
      %v3418 = vadd.f32 0.0, %v3417
      %v3419 = vand.u32 %v3138, 4294901760
      %v3420 = vsub.f32 %v3138, %v3419
      %v3421 = vand.u32 %v3420, 4294901760
      %v3422 = vsub.f32 %v3420, %v3421
      %v3423 = vand.u32 %v3422, 4294901760
      %3424 = vmatmul.f32.gmra.mxu0 %v3423
      %v3425 = vpop.f32.mrf.mxu0
      %v3426 = vadd.f32 0.0, %v3425
      %v3427 = vand.u32 %v3141, 4294901760
      %v3428 = vsub.f32 %v3141, %v3427
      %v3429 = vand.u32 %v3428, 4294901760
      %v3430 = vsub.f32 %v3428, %v3429
      %v3431 = vand.u32 %v3430, 4294901760
      %3432 = vmatmul.f32.gmra.mxu0 %v3431
      %v3433 = vpop.f32.mrf.mxu0
      %v3434 = vadd.f32 0.0, %v3433
      %3435 = vdwg.mxu0
      %3436 = vmatpush.msra.mxu0 0.0
      %3437 = vmatpush.msra.mxu0 0.0
      %3438 = vmatpush.msra.mxu0 0.0
      %3439 = vmatpush.msra.mxu0 0.0
      %3440 = vmatpush.msra.mxu0 0.0
      %3441 = vmatpush.msra.mxu0 0.0
      %3442 = vmatpush.msra.mxu0 0.0
      %3443 = vmatpush.msra.mxu0 0.0
      %3444 = vmatpush.msra.mxu0 0.0
      %3445 = vmatpush.msra.mxu0 0.0
      %3446 = vmatpush.msra.mxu0 0.0
      %3447 = vmatpush.msra.mxu0 0.0
      %3448 = vmatpush.msra.mxu0 0.0
      %3449 = vmatpush.msra.mxu0 0.0
      %3450 = vmatpush.msra.mxu0 0.0
      %v3451 = vand.u32 %v3145, 4294901760
      %v3452 = vsub.f32 %v3145, %v3451
      %v3453 = vand.u32 %v3452, 4294901760
      %v3454 = vsub.f32 %v3452, %v3453
      %v3455 = vand.u32 %v3454, 4294901760
      %3456 = vmatpush.msra.mxu0 %v3455
      %v3457 = vand.u32 %v3132, 4294901760
      %3458 = vmatmul.f32.gmra.mxu0 %v3457
      %v3459 = vpop.f32.mrf.mxu0
      %v3460 = vadd.f32 %v3410, %v3459
      %v3461 = vand.u32 %v3135, 4294901760
      %3462 = vmatmul.f32.gmra.mxu0 %v3461
      %v3463 = vpop.f32.mrf.mxu0
      %v3464 = vadd.f32 %v3418, %v3463
      %v3465 = vand.u32 %v3138, 4294901760
      %3466 = vmatmul.f32.gmra.mxu0 %v3465
      %v3467 = vpop.f32.mrf.mxu0
      %v3468 = vadd.f32 %v3426, %v3467
      %v3469 = vand.u32 %v3141, 4294901760
      %3470 = vmatmul.f32.gmra.mxu0 %v3469
      %v3471 = vpop.f32.mrf.mxu0
      %v3472 = vadd.f32 %v3434, %v3471
      %3473 = vdwg.mxu0
      %3474 = vmatpush.msra.mxu0 0.0
      %3475 = vmatpush.msra.mxu0 0.0
      %3476 = vmatpush.msra.mxu0 0.0
      %3477 = vmatpush.msra.mxu0 0.0
      %3478 = vmatpush.msra.mxu0 0.0
      %3479 = vmatpush.msra.mxu0 0.0
      %3480 = vmatpush.msra.mxu0 0.0
      %3481 = vmatpush.msra.mxu0 0.0
      %3482 = vmatpush.msra.mxu0 0.0
      %3483 = vmatpush.msra.mxu0 0.0
      %3484 = vmatpush.msra.mxu0 0.0
      %3485 = vmatpush.msra.mxu0 0.0
      %3486 = vmatpush.msra.mxu0 0.0
      %3487 = vmatpush.msra.mxu0 0.0
      %3488 = vmatpush.msra.mxu0 0.0
      %v3489 = vand.u32 %v3145, 4294901760
      %v3490 = vsub.f32 %v3145, %v3489
      %3491 = vmatpush.msra.mxu0 %v3490
      %v3492 = vand.u32 %v3132, 4294901760
      %v3493 = vsub.f32 %v3132, %v3492
      %3494 = vmatmul.f32.gmra.mxu0 %v3493
      %v3495 = vpop.f32.mrf.mxu0
      %v3496 = vadd.f32 %v3460, %v3495
      %v3497 = vand.u32 %v3135, 4294901760
      %v3498 = vsub.f32 %v3135, %v3497
      %3499 = vmatmul.f32.gmra.mxu0 %v3498
      %v3500 = vpop.f32.mrf.mxu0
      %v3501 = vadd.f32 %v3464, %v3500
      %v3502 = vand.u32 %v3138, 4294901760
      %v3503 = vsub.f32 %v3138, %v3502
      %3504 = vmatmul.f32.gmra.mxu0 %v3503
      %v3505 = vpop.f32.mrf.mxu0
      %v3506 = vadd.f32 %v3468, %v3505
      %v3507 = vand.u32 %v3141, 4294901760
      %v3508 = vsub.f32 %v3141, %v3507
      %3509 = vmatmul.f32.gmra.mxu0 %v3508
      %v3510 = vpop.f32.mrf.mxu0
      %v3511 = vadd.f32 %v3472, %v3510
      %3512 = vdwg.mxu0
      %3513 = vmatpush.msra.mxu0 0.0
      %3514 = vmatpush.msra.mxu0 0.0
      %3515 = vmatpush.msra.mxu0 0.0
      %3516 = vmatpush.msra.mxu0 0.0
      %3517 = vmatpush.msra.mxu0 0.0
      %3518 = vmatpush.msra.mxu0 0.0
      %3519 = vmatpush.msra.mxu0 0.0
      %3520 = vmatpush.msra.mxu0 0.0
      %3521 = vmatpush.msra.mxu0 0.0
      %3522 = vmatpush.msra.mxu0 0.0
      %3523 = vmatpush.msra.mxu0 0.0
      %3524 = vmatpush.msra.mxu0 0.0
      %3525 = vmatpush.msra.mxu0 0.0
      %3526 = vmatpush.msra.mxu0 0.0
      %3527 = vmatpush.msra.mxu0 0.0
      %v3528 = vand.u32 %v3145, 4294901760
      %3529 = vmatpush.msra.mxu0 %v3528
      %v3530 = vand.u32 %v3132, 4294901760
      %v3531 = vsub.f32 %v3132, %v3530
      %v3532 = vand.u32 %v3531, 4294901760
      %3533 = vmatmul.f32.gmra.mxu0 %v3532
      %v3534 = vpop.f32.mrf.mxu0
      %v3535 = vadd.f32 %v3496, %v3534
      %v3536 = vand.u32 %v3135, 4294901760
      %v3537 = vsub.f32 %v3135, %v3536
      %v3538 = vand.u32 %v3537, 4294901760
      %3539 = vmatmul.f32.gmra.mxu0 %v3538
      %v3540 = vpop.f32.mrf.mxu0
      %v3541 = vadd.f32 %v3501, %v3540
      %v3542 = vand.u32 %v3138, 4294901760
      %v3543 = vsub.f32 %v3138, %v3542
      %v3544 = vand.u32 %v3543, 4294901760
      %3545 = vmatmul.f32.gmra.mxu0 %v3544
      %v3546 = vpop.f32.mrf.mxu0
      %v3547 = vadd.f32 %v3506, %v3546
      %v3548 = vand.u32 %v3141, 4294901760
      %v3549 = vsub.f32 %v3141, %v3548
      %v3550 = vand.u32 %v3549, 4294901760
      %3551 = vmatmul.f32.gmra.mxu0 %v3550
      %v3552 = vpop.f32.mrf.mxu0
      %v3553 = vadd.f32 %v3511, %v3552
      %3554 = vdwg.mxu0
      %3555 = vmatpush.msra.mxu0 0.0
      %3556 = vmatpush.msra.mxu0 0.0
      %3557 = vmatpush.msra.mxu0 0.0
      %3558 = vmatpush.msra.mxu0 0.0
      %3559 = vmatpush.msra.mxu0 0.0
      %3560 = vmatpush.msra.mxu0 0.0
      %3561 = vmatpush.msra.mxu0 0.0
      %3562 = vmatpush.msra.mxu0 0.0
      %3563 = vmatpush.msra.mxu0 0.0
      %3564 = vmatpush.msra.mxu0 0.0
      %3565 = vmatpush.msra.mxu0 0.0
      %3566 = vmatpush.msra.mxu0 0.0
      %3567 = vmatpush.msra.mxu0 0.0
      %3568 = vmatpush.msra.mxu0 0.0
      %3569 = vmatpush.msra.mxu0 0.0
      %v3570 = vand.u32 %v3145, 4294901760
      %v3571 = vsub.f32 %v3145, %v3570
      %v3572 = vand.u32 %v3571, 4294901760
      %3573 = vmatpush.msra.mxu0 %v3572
      %v3574 = vand.u32 %v3132, 4294901760
      %3575 = vmatmul.f32.gmra.mxu0 %v3574
      %v3576 = vpop.f32.mrf.mxu0
      %v3577 = vadd.f32 %v3535, %v3576
      %v3578 = vand.u32 %v3135, 4294901760
      %3579 = vmatmul.f32.gmra.mxu0 %v3578
      %v3580 = vpop.f32.mrf.mxu0
      %v3581 = vadd.f32 %v3541, %v3580
      %v3582 = vand.u32 %v3138, 4294901760
      %3583 = vmatmul.f32.gmra.mxu0 %v3582
      %v3584 = vpop.f32.mrf.mxu0
      %v3585 = vadd.f32 %v3547, %v3584
      %v3586 = vand.u32 %v3141, 4294901760
      %3587 = vmatmul.f32.gmra.mxu0 %v3586
      %v3588 = vpop.f32.mrf.mxu0
      %v3589 = vadd.f32 %v3553, %v3588
      %3590 = vdwg.mxu0
      %3591 = vmatpush.msra.mxu0 0.0
      %3592 = vmatpush.msra.mxu0 0.0
      %3593 = vmatpush.msra.mxu0 0.0
      %3594 = vmatpush.msra.mxu0 0.0
      %3595 = vmatpush.msra.mxu0 0.0
      %3596 = vmatpush.msra.mxu0 0.0
      %3597 = vmatpush.msra.mxu0 0.0
      %3598 = vmatpush.msra.mxu0 0.0
      %3599 = vmatpush.msra.mxu0 0.0
      %3600 = vmatpush.msra.mxu0 0.0
      %3601 = vmatpush.msra.mxu0 0.0
      %3602 = vmatpush.msra.mxu0 0.0
      %3603 = vmatpush.msra.mxu0 0.0
      %3604 = vmatpush.msra.mxu0 0.0
      %3605 = vmatpush.msra.mxu0 0.0
      %v3606 = vand.u32 %v3145, 4294901760
      %3607 = vmatpush.msra.mxu0 %v3606
      %v3608 = vand.u32 %v3132, 4294901760
      %3609 = vmatmul.f32.gmra.mxu0 %v3608
      %v3610 = vpop.f32.mrf.mxu0
      %v3611 = vadd.f32 %v3577, %v3610
      %v3612 = vand.u32 %v3135, 4294901760
      %3613 = vmatmul.f32.gmra.mxu0 %v3612
      %v3614 = vpop.f32.mrf.mxu0
      %v3615 = vadd.f32 %v3581, %v3614
      %v3616 = vand.u32 %v3138, 4294901760
      %3617 = vmatmul.f32.gmra.mxu0 %v3616
      %v3618 = vpop.f32.mrf.mxu0
      %v3619 = vadd.f32 %v3585, %v3618
      %v3620 = vand.u32 %v3141, 4294901760
      %3621 = vmatmul.f32.gmra.mxu0 %v3620
      %v3622 = vpop.f32.mrf.mxu0
      %v3623 = vadd.f32 %v3589, %v3622
      %3624 = vdwg.mxu0
      %v3625 = vadd.f32 %v3075, %v3372
      %v3626 = vadd.f32 %v3076, %v3611
      %v3627 = vadd.f32 %v3077, %v3376
      %v3628 = vadd.f32 %v3078, %v3615
      %v3629 = vadd.f32 %v3079, %v3380
      %v3630 = vadd.f32 %v3080, %v3619
      %v3631 = vadd.f32 %v3081, %v3384
      %v3632 = vadd.f32 %v3082, %v3623
      %v3633 = vld [vmem:[%s861] sm:$0xff]
      %v3634 = vld [vmem:[%s886] sm:$0xf]
      %3636 = vset.pattern.permute.xlu0 0
      %3637 = vperm.xlu0 %3636, %v3634
      %v3638 = vpop.permute.xlu0 %3637
      %v3640 = vunpack.c.l.s4 839922192
      %v3641 = vunpack.c.0.s8 %v3640
      %v3642 = vperm.slane %v3638, %v3641
      %v3644 = vmul.f32 %v3633, %v3642
      %3645 = vset.pattern.permute.xlu0 1
      %3646 = vperm.xlu0 %3645, %v3634
      %v3647 = vpop.permute.xlu0 %3646
      %v3649 = vunpack.c.l.s4 839922192
      %v3650 = vunpack.c.0.s8 %v3649
      %v3651 = vperm.slane %v3647, %v3650
      %v3653 = vadd.f32 %v3644, %v3651
      %vm3654 = vcmp.ge.f32.partialorder %v3653, 0.0
      %3655 = vset.pattern.permute.xlu0 2
      %3656 = vperm.xlu0 %3655, %v3634
      %v3657 = vpop.permute.xlu0 %3656
      %3660 = vst [vmem:[#allocation1] ss:$2 sm:$0xff] %v3653
      %v3661 = vld.sshfl [vmem:[#allocation1] sm:$0xff pattern:$0x75316420]
      %v3662 = vld.sshfl [vmem:[#allocation1 + $0x8] sm:$0xff pattern:$0x75316420]
      %v3665 = vmul.f32 %v3657, %v3661
      %v3666 = vmul.f32 %v3657, %v3662
      %v3669 = vrot.slane %v3666, 4
      %v3670 = vsel %vm934, %v3665, %v3669
      %v3672 = vsel %vm3654, %v3653, %v3670
      %v3673 = vld [vmem:[%s17] sm:$0xff]
      %v3674 = vld [vmem:[%s17 + $0x8] sm:$0xff]
      %v3675 = vld [vmem:[%s17 + $0x10] sm:$0xff]
      %v3676 = vld [vmem:[%s17 + $0x18] sm:$0xff]
      %3678 = vst [vmem:[#allocation1] ss:$2 sm:$0xff] %v3672
      %v3679 = vld.sshfl [vmem:[#allocation1] sm:$0xff pattern:$0x75316420]
      %v3680 = vld.sshfl [vmem:[#allocation1 + $0x8] sm:$0xff pattern:$0x75316420]
      %v3682 = vsel %vm990, %v3673, 0
      %v3685 = vsel %vm990, %v3674, 0
      %v3688 = vsel %vm990, %v3675, 0
      %v3691 = vsel %vm990, %v3676, 0
      %v3693 = vsel %vm934, %v3679, 0
      %v3695 = vsel %vm934, %v3680, 0
      %3697 = vmatpush.msra.mxu0 0.0
      %3698 = vmatpush.msra.mxu0 0.0
      %3699 = vmatpush.msra.mxu0 0.0
      %3700 = vmatpush.msra.mxu0 0.0
      %3701 = vmatpush.msra.mxu0 0.0
      %3702 = vmatpush.msra.mxu0 0.0
      %3703 = vmatpush.msra.mxu0 0.0
      %3704 = vmatpush.msra.mxu0 0.0
      %3705 = vmatpush.msra.mxu0 0.0
      %3706 = vmatpush.msra.mxu0 0.0
      %3707 = vmatpush.msra.mxu0 0.0
      %3708 = vmatpush.msra.mxu0 0.0
      %3709 = vmatpush.msra.mxu0 0.0
      %3710 = vmatpush.msra.mxu0 0.0
      %3711 = vmatpush.msra.mxu0 0.0
      %v3712 = vand.u32 %v3693, 4294901760
      %3713 = vmatpush.msra.mxu0 %v3712
      %v3714 = vand.u32 %v3682, 4294901760
      %v3715 = vsub.f32 %v3682, %v3714
      %v3716 = vand.u32 %v3715, 4294901760
      %v3717 = vsub.f32 %v3715, %v3716
      %v3718 = vand.u32 %v3717, 4294901760
      %3719 = vmatmul.f32.gmra.mxu0 %v3718
      %v3720 = vpop.f32.mrf.mxu0
      %v3721 = vadd.f32 0.0, %v3720
      %v3722 = vand.u32 %v3685, 4294901760
      %v3723 = vsub.f32 %v3685, %v3722
      %v3724 = vand.u32 %v3723, 4294901760
      %v3725 = vsub.f32 %v3723, %v3724
      %v3726 = vand.u32 %v3725, 4294901760
      %3727 = vmatmul.f32.gmra.mxu0 %v3726
      %v3728 = vpop.f32.mrf.mxu0
      %v3729 = vadd.f32 0.0, %v3728
      %v3730 = vand.u32 %v3688, 4294901760
      %v3731 = vsub.f32 %v3688, %v3730
      %v3732 = vand.u32 %v3731, 4294901760
      %v3733 = vsub.f32 %v3731, %v3732
      %v3734 = vand.u32 %v3733, 4294901760
      %3735 = vmatmul.f32.gmra.mxu0 %v3734
      %v3736 = vpop.f32.mrf.mxu0
      %v3737 = vadd.f32 0.0, %v3736
      %v3738 = vand.u32 %v3691, 4294901760
      %v3739 = vsub.f32 %v3691, %v3738
      %v3740 = vand.u32 %v3739, 4294901760
      %v3741 = vsub.f32 %v3739, %v3740
      %v3742 = vand.u32 %v3741, 4294901760
      %3743 = vmatmul.f32.gmra.mxu0 %v3742
      %v3744 = vpop.f32.mrf.mxu0
      %v3745 = vadd.f32 0.0, %v3744
      %3746 = vdwg.mxu0
      %3747 = vmatpush.msra.mxu0 0.0
      %3748 = vmatpush.msra.mxu0 0.0
      %3749 = vmatpush.msra.mxu0 0.0
      %3750 = vmatpush.msra.mxu0 0.0
      %3751 = vmatpush.msra.mxu0 0.0
      %3752 = vmatpush.msra.mxu0 0.0
      %3753 = vmatpush.msra.mxu0 0.0
      %3754 = vmatpush.msra.mxu0 0.0
      %3755 = vmatpush.msra.mxu0 0.0
      %3756 = vmatpush.msra.mxu0 0.0
      %3757 = vmatpush.msra.mxu0 0.0
      %3758 = vmatpush.msra.mxu0 0.0
      %3759 = vmatpush.msra.mxu0 0.0
      %3760 = vmatpush.msra.mxu0 0.0
      %3761 = vmatpush.msra.mxu0 0.0
      %v3762 = vand.u32 %v3693, 4294901760
      %v3763 = vsub.f32 %v3693, %v3762
      %v3764 = vand.u32 %v3763, 4294901760
      %v3765 = vsub.f32 %v3763, %v3764
      %v3766 = vand.u32 %v3765, 4294901760
      %3767 = vmatpush.msra.mxu0 %v3766
      %v3768 = vand.u32 %v3682, 4294901760
      %3769 = vmatmul.f32.gmra.mxu0 %v3768
      %v3770 = vpop.f32.mrf.mxu0
      %v3771 = vadd.f32 %v3721, %v3770
      %v3772 = vand.u32 %v3685, 4294901760
      %3773 = vmatmul.f32.gmra.mxu0 %v3772
      %v3774 = vpop.f32.mrf.mxu0
      %v3775 = vadd.f32 %v3729, %v3774
      %v3776 = vand.u32 %v3688, 4294901760
      %3777 = vmatmul.f32.gmra.mxu0 %v3776
      %v3778 = vpop.f32.mrf.mxu0
      %v3779 = vadd.f32 %v3737, %v3778
      %v3780 = vand.u32 %v3691, 4294901760
      %3781 = vmatmul.f32.gmra.mxu0 %v3780
      %v3782 = vpop.f32.mrf.mxu0
      %v3783 = vadd.f32 %v3745, %v3782
      %3784 = vdwg.mxu0
      %3785 = vmatpush.msra.mxu0 0.0
      %3786 = vmatpush.msra.mxu0 0.0
      %3787 = vmatpush.msra.mxu0 0.0
      %3788 = vmatpush.msra.mxu0 0.0
      %3789 = vmatpush.msra.mxu0 0.0
      %3790 = vmatpush.msra.mxu0 0.0
      %3791 = vmatpush.msra.mxu0 0.0
      %3792 = vmatpush.msra.mxu0 0.0
      %3793 = vmatpush.msra.mxu0 0.0
      %3794 = vmatpush.msra.mxu0 0.0
      %3795 = vmatpush.msra.mxu0 0.0
      %3796 = vmatpush.msra.mxu0 0.0
      %3797 = vmatpush.msra.mxu0 0.0
      %3798 = vmatpush.msra.mxu0 0.0
      %3799 = vmatpush.msra.mxu0 0.0
      %v3800 = vand.u32 %v3693, 4294901760
      %v3801 = vsub.f32 %v3693, %v3800
      %3802 = vmatpush.msra.mxu0 %v3801
      %v3803 = vand.u32 %v3682, 4294901760
      %v3804 = vsub.f32 %v3682, %v3803
      %3805 = vmatmul.f32.gmra.mxu0 %v3804
      %v3806 = vpop.f32.mrf.mxu0
      %v3807 = vadd.f32 %v3771, %v3806
      %v3808 = vand.u32 %v3685, 4294901760
      %v3809 = vsub.f32 %v3685, %v3808
      %3810 = vmatmul.f32.gmra.mxu0 %v3809
      %v3811 = vpop.f32.mrf.mxu0
      %v3812 = vadd.f32 %v3775, %v3811
      %v3813 = vand.u32 %v3688, 4294901760
      %v3814 = vsub.f32 %v3688, %v3813
      %3815 = vmatmul.f32.gmra.mxu0 %v3814
      %v3816 = vpop.f32.mrf.mxu0
      %v3817 = vadd.f32 %v3779, %v3816
      %v3818 = vand.u32 %v3691, 4294901760
      %v3819 = vsub.f32 %v3691, %v3818
      %3820 = vmatmul.f32.gmra.mxu0 %v3819
      %v3821 = vpop.f32.mrf.mxu0
      %v3822 = vadd.f32 %v3783, %v3821
      %3823 = vdwg.mxu0
      %3824 = vmatpush.msra.mxu0 0.0
      %3825 = vmatpush.msra.mxu0 0.0
      %3826 = vmatpush.msra.mxu0 0.0
      %3827 = vmatpush.msra.mxu0 0.0
      %3828 = vmatpush.msra.mxu0 0.0
      %3829 = vmatpush.msra.mxu0 0.0
      %3830 = vmatpush.msra.mxu0 0.0
      %3831 = vmatpush.msra.mxu0 0.0
      %3832 = vmatpush.msra.mxu0 0.0
      %3833 = vmatpush.msra.mxu0 0.0
      %3834 = vmatpush.msra.mxu0 0.0
      %3835 = vmatpush.msra.mxu0 0.0
      %3836 = vmatpush.msra.mxu0 0.0
      %3837 = vmatpush.msra.mxu0 0.0
      %3838 = vmatpush.msra.mxu0 0.0
      %v3839 = vand.u32 %v3693, 4294901760
      %3840 = vmatpush.msra.mxu0 %v3839
      %v3841 = vand.u32 %v3682, 4294901760
      %v3842 = vsub.f32 %v3682, %v3841
      %v3843 = vand.u32 %v3842, 4294901760
      %3844 = vmatmul.f32.gmra.mxu0 %v3843
      %v3845 = vpop.f32.mrf.mxu0
      %v3846 = vadd.f32 %v3807, %v3845
      %v3847 = vand.u32 %v3685, 4294901760
      %v3848 = vsub.f32 %v3685, %v3847
      %v3849 = vand.u32 %v3848, 4294901760
      %3850 = vmatmul.f32.gmra.mxu0 %v3849
      %v3851 = vpop.f32.mrf.mxu0
      %v3852 = vadd.f32 %v3812, %v3851
      %v3853 = vand.u32 %v3688, 4294901760
      %v3854 = vsub.f32 %v3688, %v3853
      %v3855 = vand.u32 %v3854, 4294901760
      %3856 = vmatmul.f32.gmra.mxu0 %v3855
      %v3857 = vpop.f32.mrf.mxu0
      %v3858 = vadd.f32 %v3817, %v3857
      %v3859 = vand.u32 %v3691, 4294901760
      %v3860 = vsub.f32 %v3691, %v3859
      %v3861 = vand.u32 %v3860, 4294901760
      %3862 = vmatmul.f32.gmra.mxu0 %v3861
      %v3863 = vpop.f32.mrf.mxu0
      %v3864 = vadd.f32 %v3822, %v3863
      %3865 = vdwg.mxu0
      %3866 = vmatpush.msra.mxu0 0.0
      %3867 = vmatpush.msra.mxu0 0.0
      %3868 = vmatpush.msra.mxu0 0.0
      %3869 = vmatpush.msra.mxu0 0.0
      %3870 = vmatpush.msra.mxu0 0.0
      %3871 = vmatpush.msra.mxu0 0.0
      %3872 = vmatpush.msra.mxu0 0.0
      %3873 = vmatpush.msra.mxu0 0.0
      %3874 = vmatpush.msra.mxu0 0.0
      %3875 = vmatpush.msra.mxu0 0.0
      %3876 = vmatpush.msra.mxu0 0.0
      %3877 = vmatpush.msra.mxu0 0.0
      %3878 = vmatpush.msra.mxu0 0.0
      %3879 = vmatpush.msra.mxu0 0.0
      %3880 = vmatpush.msra.mxu0 0.0
      %v3881 = vand.u32 %v3693, 4294901760
      %v3882 = vsub.f32 %v3693, %v3881
      %v3883 = vand.u32 %v3882, 4294901760
      %3884 = vmatpush.msra.mxu0 %v3883
      %v3885 = vand.u32 %v3682, 4294901760
      %3886 = vmatmul.f32.gmra.mxu0 %v3885
      %v3887 = vpop.f32.mrf.mxu0
      %v3888 = vadd.f32 %v3846, %v3887
      %v3889 = vand.u32 %v3685, 4294901760
      %3890 = vmatmul.f32.gmra.mxu0 %v3889
      %v3891 = vpop.f32.mrf.mxu0
      %v3892 = vadd.f32 %v3852, %v3891
      %v3893 = vand.u32 %v3688, 4294901760
      %3894 = vmatmul.f32.gmra.mxu0 %v3893
      %v3895 = vpop.f32.mrf.mxu0
      %v3896 = vadd.f32 %v3858, %v3895
      %v3897 = vand.u32 %v3691, 4294901760
      %3898 = vmatmul.f32.gmra.mxu0 %v3897
      %v3899 = vpop.f32.mrf.mxu0
      %v3900 = vadd.f32 %v3864, %v3899
      %3901 = vdwg.mxu0
      %3902 = vmatpush.msra.mxu0 0.0
      %3903 = vmatpush.msra.mxu0 0.0
      %3904 = vmatpush.msra.mxu0 0.0
      %3905 = vmatpush.msra.mxu0 0.0
      %3906 = vmatpush.msra.mxu0 0.0
      %3907 = vmatpush.msra.mxu0 0.0
      %3908 = vmatpush.msra.mxu0 0.0
      %3909 = vmatpush.msra.mxu0 0.0
      %3910 = vmatpush.msra.mxu0 0.0
      %3911 = vmatpush.msra.mxu0 0.0
      %3912 = vmatpush.msra.mxu0 0.0
      %3913 = vmatpush.msra.mxu0 0.0
      %3914 = vmatpush.msra.mxu0 0.0
      %3915 = vmatpush.msra.mxu0 0.0
      %3916 = vmatpush.msra.mxu0 0.0
      %v3917 = vand.u32 %v3693, 4294901760
      %3918 = vmatpush.msra.mxu0 %v3917
      %v3919 = vand.u32 %v3682, 4294901760
      %3920 = vmatmul.f32.gmra.mxu0 %v3919
      %v3921 = vpop.f32.mrf.mxu0
      %v3922 = vadd.f32 %v3888, %v3921
      %v3923 = vand.u32 %v3685, 4294901760
      %3924 = vmatmul.f32.gmra.mxu0 %v3923
      %v3925 = vpop.f32.mrf.mxu0
      %v3926 = vadd.f32 %v3892, %v3925
      %v3927 = vand.u32 %v3688, 4294901760
      %3928 = vmatmul.f32.gmra.mxu0 %v3927
      %v3929 = vpop.f32.mrf.mxu0
      %v3930 = vadd.f32 %v3896, %v3929
      %v3931 = vand.u32 %v3691, 4294901760
      %3932 = vmatmul.f32.gmra.mxu0 %v3931
      %v3933 = vpop.f32.mrf.mxu0
      %v3934 = vadd.f32 %v3900, %v3933
      %3935 = vdwg.mxu0
      %3936 = vmatpush.msra.mxu0 0.0
      %3937 = vmatpush.msra.mxu0 0.0
      %3938 = vmatpush.msra.mxu0 0.0
      %3939 = vmatpush.msra.mxu0 0.0
      %3940 = vmatpush.msra.mxu0 0.0
      %3941 = vmatpush.msra.mxu0 0.0
      %3942 = vmatpush.msra.mxu0 0.0
      %3943 = vmatpush.msra.mxu0 0.0
      %3944 = vmatpush.msra.mxu0 0.0
      %3945 = vmatpush.msra.mxu0 0.0
      %3946 = vmatpush.msra.mxu0 0.0
      %3947 = vmatpush.msra.mxu0 0.0
      %3948 = vmatpush.msra.mxu0 0.0
      %3949 = vmatpush.msra.mxu0 0.0
      %3950 = vmatpush.msra.mxu0 0.0
      %v3951 = vand.u32 %v3695, 4294901760
      %3952 = vmatpush.msra.mxu0 %v3951
      %v3953 = vand.u32 %v3682, 4294901760
      %v3954 = vsub.f32 %v3682, %v3953
      %v3955 = vand.u32 %v3954, 4294901760
      %v3956 = vsub.f32 %v3954, %v3955
      %v3957 = vand.u32 %v3956, 4294901760
      %3958 = vmatmul.f32.gmra.mxu0 %v3957
      %v3959 = vpop.f32.mrf.mxu0
      %v3960 = vadd.f32 0.0, %v3959
      %v3961 = vand.u32 %v3685, 4294901760
      %v3962 = vsub.f32 %v3685, %v3961
      %v3963 = vand.u32 %v3962, 4294901760
      %v3964 = vsub.f32 %v3962, %v3963
      %v3965 = vand.u32 %v3964, 4294901760
      %3966 = vmatmul.f32.gmra.mxu0 %v3965
      %v3967 = vpop.f32.mrf.mxu0
      %v3968 = vadd.f32 0.0, %v3967
      %v3969 = vand.u32 %v3688, 4294901760
      %v3970 = vsub.f32 %v3688, %v3969
      %v3971 = vand.u32 %v3970, 4294901760
      %v3972 = vsub.f32 %v3970, %v3971
      %v3973 = vand.u32 %v3972, 4294901760
      %3974 = vmatmul.f32.gmra.mxu0 %v3973
      %v3975 = vpop.f32.mrf.mxu0
      %v3976 = vadd.f32 0.0, %v3975
      %v3977 = vand.u32 %v3691, 4294901760
      %v3978 = vsub.f32 %v3691, %v3977
      %v3979 = vand.u32 %v3978, 4294901760
      %v3980 = vsub.f32 %v3978, %v3979
      %v3981 = vand.u32 %v3980, 4294901760
      %3982 = vmatmul.f32.gmra.mxu0 %v3981
      %v3983 = vpop.f32.mrf.mxu0
      %v3984 = vadd.f32 0.0, %v3983
      %3985 = vdwg.mxu0
      %3986 = vmatpush.msra.mxu0 0.0
      %3987 = vmatpush.msra.mxu0 0.0
      %3988 = vmatpush.msra.mxu0 0.0
      %3989 = vmatpush.msra.mxu0 0.0
      %3990 = vmatpush.msra.mxu0 0.0
      %3991 = vmatpush.msra.mxu0 0.0
      %3992 = vmatpush.msra.mxu0 0.0
      %3993 = vmatpush.msra.mxu0 0.0
      %3994 = vmatpush.msra.mxu0 0.0
      %3995 = vmatpush.msra.mxu0 0.0
      %3996 = vmatpush.msra.mxu0 0.0
      %3997 = vmatpush.msra.mxu0 0.0
      %3998 = vmatpush.msra.mxu0 0.0
      %3999 = vmatpush.msra.mxu0 0.0
      %4000 = vmatpush.msra.mxu0 0.0
      %v4001 = vand.u32 %v3695, 4294901760
      %v4002 = vsub.f32 %v3695, %v4001
      %v4003 = vand.u32 %v4002, 4294901760
      %v4004 = vsub.f32 %v4002, %v4003
      %v4005 = vand.u32 %v4004, 4294901760
      %4006 = vmatpush.msra.mxu0 %v4005
      %v4007 = vand.u32 %v3682, 4294901760
      %4008 = vmatmul.f32.gmra.mxu0 %v4007
      %v4009 = vpop.f32.mrf.mxu0
      %v4010 = vadd.f32 %v3960, %v4009
      %v4011 = vand.u32 %v3685, 4294901760
      %4012 = vmatmul.f32.gmra.mxu0 %v4011
      %v4013 = vpop.f32.mrf.mxu0
      %v4014 = vadd.f32 %v3968, %v4013
      %v4015 = vand.u32 %v3688, 4294901760
      %4016 = vmatmul.f32.gmra.mxu0 %v4015
      %v4017 = vpop.f32.mrf.mxu0
      %v4018 = vadd.f32 %v3976, %v4017
      %v4019 = vand.u32 %v3691, 4294901760
      %4020 = vmatmul.f32.gmra.mxu0 %v4019
      %v4021 = vpop.f32.mrf.mxu0
      %v4022 = vadd.f32 %v3984, %v4021
      %4023 = vdwg.mxu0
      %4024 = vmatpush.msra.mxu0 0.0
      %4025 = vmatpush.msra.mxu0 0.0
      %4026 = vmatpush.msra.mxu0 0.0
      %4027 = vmatpush.msra.mxu0 0.0
      %4028 = vmatpush.msra.mxu0 0.0
      %4029 = vmatpush.msra.mxu0 0.0
      %4030 = vmatpush.msra.mxu0 0.0
      %4031 = vmatpush.msra.mxu0 0.0
      %4032 = vmatpush.msra.mxu0 0.0
      %4033 = vmatpush.msra.mxu0 0.0
      %4034 = vmatpush.msra.mxu0 0.0
      %4035 = vmatpush.msra.mxu0 0.0
      %4036 = vmatpush.msra.mxu0 0.0
      %4037 = vmatpush.msra.mxu0 0.0
      %4038 = vmatpush.msra.mxu0 0.0
      %v4039 = vand.u32 %v3695, 4294901760
      %v4040 = vsub.f32 %v3695, %v4039
      %4041 = vmatpush.msra.mxu0 %v4040
      %v4042 = vand.u32 %v3682, 4294901760
      %v4043 = vsub.f32 %v3682, %v4042
      %4044 = vmatmul.f32.gmra.mxu0 %v4043
      %v4045 = vpop.f32.mrf.mxu0
      %v4046 = vadd.f32 %v4010, %v4045
      %v4047 = vand.u32 %v3685, 4294901760
      %v4048 = vsub.f32 %v3685, %v4047
      %4049 = vmatmul.f32.gmra.mxu0 %v4048
      %v4050 = vpop.f32.mrf.mxu0
      %v4051 = vadd.f32 %v4014, %v4050
      %v4052 = vand.u32 %v3688, 4294901760
      %v4053 = vsub.f32 %v3688, %v4052
      %4054 = vmatmul.f32.gmra.mxu0 %v4053
      %v4055 = vpop.f32.mrf.mxu0
      %v4056 = vadd.f32 %v4018, %v4055
      %v4057 = vand.u32 %v3691, 4294901760
      %v4058 = vsub.f32 %v3691, %v4057
      %4059 = vmatmul.f32.gmra.mxu0 %v4058
      %v4060 = vpop.f32.mrf.mxu0
      %v4061 = vadd.f32 %v4022, %v4060
      %4062 = vdwg.mxu0
      %4063 = vmatpush.msra.mxu0 0.0
      %4064 = vmatpush.msra.mxu0 0.0
      %4065 = vmatpush.msra.mxu0 0.0
      %4066 = vmatpush.msra.mxu0 0.0
      %4067 = vmatpush.msra.mxu0 0.0
      %4068 = vmatpush.msra.mxu0 0.0
      %4069 = vmatpush.msra.mxu0 0.0
      %4070 = vmatpush.msra.mxu0 0.0
      %4071 = vmatpush.msra.mxu0 0.0
      %4072 = vmatpush.msra.mxu0 0.0
      %4073 = vmatpush.msra.mxu0 0.0
      %4074 = vmatpush.msra.mxu0 0.0
      %4075 = vmatpush.msra.mxu0 0.0
      %4076 = vmatpush.msra.mxu0 0.0
      %4077 = vmatpush.msra.mxu0 0.0
      %v4078 = vand.u32 %v3695, 4294901760
      %4079 = vmatpush.msra.mxu0 %v4078
      %v4080 = vand.u32 %v3682, 4294901760
      %v4081 = vsub.f32 %v3682, %v4080
      %v4082 = vand.u32 %v4081, 4294901760
      %4083 = vmatmul.f32.gmra.mxu0 %v4082
      %v4084 = vpop.f32.mrf.mxu0
      %v4085 = vadd.f32 %v4046, %v4084
      %v4086 = vand.u32 %v3685, 4294901760
      %v4087 = vsub.f32 %v3685, %v4086
      %v4088 = vand.u32 %v4087, 4294901760
      %4089 = vmatmul.f32.gmra.mxu0 %v4088
      %v4090 = vpop.f32.mrf.mxu0
      %v4091 = vadd.f32 %v4051, %v4090
      %v4092 = vand.u32 %v3688, 4294901760
      %v4093 = vsub.f32 %v3688, %v4092
      %v4094 = vand.u32 %v4093, 4294901760
      %4095 = vmatmul.f32.gmra.mxu0 %v4094
      %v4096 = vpop.f32.mrf.mxu0
      %v4097 = vadd.f32 %v4056, %v4096
      %v4098 = vand.u32 %v3691, 4294901760
      %v4099 = vsub.f32 %v3691, %v4098
      %v4100 = vand.u32 %v4099, 4294901760
      %4101 = vmatmul.f32.gmra.mxu0 %v4100
      %v4102 = vpop.f32.mrf.mxu0
      %v4103 = vadd.f32 %v4061, %v4102
      %4104 = vdwg.mxu0
      %4105 = vmatpush.msra.mxu0 0.0
      %4106 = vmatpush.msra.mxu0 0.0
      %4107 = vmatpush.msra.mxu0 0.0
      %4108 = vmatpush.msra.mxu0 0.0
      %4109 = vmatpush.msra.mxu0 0.0
      %4110 = vmatpush.msra.mxu0 0.0
      %4111 = vmatpush.msra.mxu0 0.0
      %4112 = vmatpush.msra.mxu0 0.0
      %4113 = vmatpush.msra.mxu0 0.0
      %4114 = vmatpush.msra.mxu0 0.0
      %4115 = vmatpush.msra.mxu0 0.0
      %4116 = vmatpush.msra.mxu0 0.0
      %4117 = vmatpush.msra.mxu0 0.0
      %4118 = vmatpush.msra.mxu0 0.0
      %4119 = vmatpush.msra.mxu0 0.0
      %v4120 = vand.u32 %v3695, 4294901760
      %v4121 = vsub.f32 %v3695, %v4120
      %v4122 = vand.u32 %v4121, 4294901760
      %4123 = vmatpush.msra.mxu0 %v4122
      %v4124 = vand.u32 %v3682, 4294901760
      %4125 = vmatmul.f32.gmra.mxu0 %v4124
      %v4126 = vpop.f32.mrf.mxu0
      %v4127 = vadd.f32 %v4085, %v4126
      %v4128 = vand.u32 %v3685, 4294901760
      %4129 = vmatmul.f32.gmra.mxu0 %v4128
      %v4130 = vpop.f32.mrf.mxu0
      %v4131 = vadd.f32 %v4091, %v4130
      %v4132 = vand.u32 %v3688, 4294901760
      %4133 = vmatmul.f32.gmra.mxu0 %v4132
      %v4134 = vpop.f32.mrf.mxu0
      %v4135 = vadd.f32 %v4097, %v4134
      %v4136 = vand.u32 %v3691, 4294901760
      %4137 = vmatmul.f32.gmra.mxu0 %v4136
      %v4138 = vpop.f32.mrf.mxu0
      %v4139 = vadd.f32 %v4103, %v4138
      %4140 = vdwg.mxu0
      %4141 = vmatpush.msra.mxu0 0.0
      %4142 = vmatpush.msra.mxu0 0.0
      %4143 = vmatpush.msra.mxu0 0.0
      %4144 = vmatpush.msra.mxu0 0.0
      %4145 = vmatpush.msra.mxu0 0.0
      %4146 = vmatpush.msra.mxu0 0.0
      %4147 = vmatpush.msra.mxu0 0.0
      %4148 = vmatpush.msra.mxu0 0.0
      %4149 = vmatpush.msra.mxu0 0.0
      %4150 = vmatpush.msra.mxu0 0.0
      %4151 = vmatpush.msra.mxu0 0.0
      %4152 = vmatpush.msra.mxu0 0.0
      %4153 = vmatpush.msra.mxu0 0.0
      %4154 = vmatpush.msra.mxu0 0.0
      %4155 = vmatpush.msra.mxu0 0.0
      %v4156 = vand.u32 %v3695, 4294901760
      %4157 = vmatpush.msra.mxu0 %v4156
      %v4158 = vand.u32 %v3682, 4294901760
      %4159 = vmatmul.f32.gmra.mxu0 %v4158
      %v4160 = vpop.f32.mrf.mxu0
      %v4161 = vadd.f32 %v4127, %v4160
      %v4162 = vand.u32 %v3685, 4294901760
      %4163 = vmatmul.f32.gmra.mxu0 %v4162
      %v4164 = vpop.f32.mrf.mxu0
      %v4165 = vadd.f32 %v4131, %v4164
      %v4166 = vand.u32 %v3688, 4294901760
      %4167 = vmatmul.f32.gmra.mxu0 %v4166
      %v4168 = vpop.f32.mrf.mxu0
      %v4169 = vadd.f32 %v4135, %v4168
      %v4170 = vand.u32 %v3691, 4294901760
      %4171 = vmatmul.f32.gmra.mxu0 %v4170
      %v4172 = vpop.f32.mrf.mxu0
      %v4173 = vadd.f32 %v4139, %v4172
      %4174 = vdwg.mxu0
      %v4175 = vadd.f32 %v3625, %v3922
      %v4176 = vadd.f32 %v3626, %v4161
      %v4177 = vadd.f32 %v3627, %v3926
      %v4178 = vadd.f32 %v3628, %v4165
      %v4179 = vadd.f32 %v3629, %v3930
      %v4180 = vadd.f32 %v3630, %v4169
      %v4181 = vadd.f32 %v3631, %v3934
      %v4182 = vadd.f32 %v3632, %v4173
      %4183 = vst [vmem:[%s895] sm:$0xff] %v4175
      %4184 = vst [vmem:[%s895 + $0x8] sm:$0xff] %v4176
      %4185 = vst [vmem:[%s895 + $0x10] sm:$0xff] %v4177
      %4186 = vst [vmem:[%s895 + $0x18] sm:$0xff] %v4178
      %4187 = vst [vmem:[%s895 + $0x20] sm:$0xff] %v4179
      %4188 = vst [vmem:[%s895 + $0x28] sm:$0xff] %v4180
      %4189 = vst [vmem:[%s895 + $0x30] sm:$0xff] %v4181
      %4190 = vst [vmem:[%s895 + $0x38] sm:$0xff] %v4182
      %s4191 = smul.u32 2, %s34
      %p4192 = scmp.lt.s32.totalorder %s33, 1
      %s4193 = scalar_select %p4192, %s33, 1
      %p4194 = scmp.lt.s32.totalorder %s4191, 1
      %s4195 = scalar_select %p4194, %s4191, 1
      %s4196 = smul.addr %s4193, 8
      %s4197 = sadd.s32 %s4195, %s4196
      %s4198 = smul.addr %s4197, 8
      %s4199 = scalar_lea.vmem %s18, %s4198
      // Predicated region
      $region93: #{ffm_b2.3} parent=91 // pred_check
        %p4200 = pneg %p511
      $region94: #{ffm_b2.3} parent=91 // pred_check_branch
        %4202 = sbr.rel (%p4200) target = $region96
      $region95: #{ffm_b2.3} parent=91 // pred_region
        %s4203 = smul.u32 2, %s34
      $region96: #{ffm_b2.3} parent=91 // pred_fallthru
        _
    $region92: #{ffm_b2.3} parent=5 // pred_fallthru
      _
    %p4204 = scmp.le.s32.totalorder 2, %s24
    // Predicated region
    $region97: #{ffm_b2.3} parent=5 // pred_check
      %p4205 = pneg %p4204
    $region98: #{ffm_b2.3} parent=5 // pred_check_branch
      %4207 = sbr.rel (%p4205) target = $region100
    $region99: #{ffm_b2.3} parent=5 // pred_region
      %s4208 = ssub.s32 %s24, 2
      // Predicated region
      $region101: #{ffm_b2.3} parent=99 // pred_check
        %p4209 = pneg %p517
      $region102: #{ffm_b2.3} parent=99 // pred_check_branch
        %4211 = sbr.rel (%p4209) target = $region104
      $region103: #{ffm_b2.3} parent=99 // pred_region
        %s4212 = smul.u32 2, %s36
        %p4213 = scmp.lt.s32.totalorder %s35, 1
        %s4214 = scalar_select %p4213, %s35, 1
        %p4215 = scmp.lt.s32.totalorder %s4212, 1
        %s4216 = scalar_select %p4215, %s4212, 1
        %s4217 = smul.addr %s4214, 8
        %s4218 = sadd.s32 %s4216, %s4217
        %s4219 = smul.addr %s4218, 8
        %s4220 = scalar_lea.vmem %s18, %s4219
      $region104: #{ffm_b2.3} parent=99 // pred_fallthru
        _
    $region100: #{ffm_b2.3} parent=5 // pred_fallthru
      _
  $region6: #{ffm_b2.3} parent=0 // loop_footer
    %s28 = sadd.s32 1, %s24
  $region7: #{ffm_b2.3} parent=0 // loop_footer_branch
    %23 = sbr.rel target = $region3
  $region8: #{ffm_b2.3} parent=0 // loop_exit
    _

</llo_original>
